<compile_context>
chip_gen: v6e
topology: v6e:2x2x1
jax: 0.10.0
libtpu: 0.0.40
codegen_flags: <defaults>
</compile_context>

<pallas_src>
import jax
import jax.numpy as jnp
from jax.experimental import pallas as pl
from jax.experimental.pallas import tpu as pltpu

IN_FEATURES = 3072
HIDDEN = 512
OUT_FEATURES = 10
OUT_PAD = 128  # lane-dense padded output width


def _round_up(n, m):
    return ((n + m - 1) // m) * m


def _pick_tm(B):
    # Small batch: one tile, rounded to 16 rows (bf16 packs 16 rows per vreg).
    if B <= 128:
        return _round_up(B, 16)
    # Medium batch: TM=128 gives >=2 grid steps (feeds both v7x TensorCores via the
    # "parallel" axis) and keeps the f32 x tile (1.5 MiB) small for v5e scoped VMEM.
    if B <= 2048:
        return 128
    # Throughput batch: bigger tile amortizes per-grid-step overhead.
    return 256


def _mlp_kernel(x_ref,
                w1_ref, b1_ref,
                w2_ref, b2_ref,
                w3_ref, b3_ref,
                w4_ref, b4_ref,
                w5_ref, b5_ref,
                o_ref):
    # x tile arrives as f32 (TM, 3072); cast to bf16 here (VPU cast hides under the
    # fc1 matmul, and reading f32 directly halves the input HBM traffic vs a wrapper cast).
    x = x_ref[...].astype(jnp.bfloat16)

    # relu(fc1(x))
    h = jnp.dot(x, w1_ref[...], preferred_element_type=jnp.float32) + b1_ref[...]
    h = jnp.maximum(h, 0.0).astype(jnp.bfloat16)

    # fc2(drop(x)); drop2(relu(.))   (dropout == identity at inference)
    # TODO(synk): nn.Dropout(0.5) is identity at eval; training-mode dropout not implemented.
    h = jnp.dot(h, w2_ref[...], preferred_element_type=jnp.float32) + b2_ref[...]
    h = jnp.maximum(h, 0.0).astype(jnp.bfloat16)

    # relu(fc3(x))
    h = jnp.dot(h, w3_ref[...], preferred_element_type=jnp.float32) + b3_ref[...]
    h = jnp.maximum(h, 0.0).astype(jnp.bfloat16)

    # fc4(drop3(x)); drop4(relu(.))
    h = jnp.dot(h, w4_ref[...], preferred_element_type=jnp.float32) + b4_ref[...]
    h = jnp.maximum(h, 0.0).astype(jnp.bfloat16)

    # fc5(x)  -- lane-padded to 128 output columns (zero weight/bias columns beyond 10)
    o_ref[...] = (jnp.dot(h, w5_ref[...], preferred_element_type=jnp.float32)
                  + b5_ref[...]).astype(o_ref.dtype)


def _const_spec(shape):
    # Whole array as one block, same block for every grid step -> stays VMEM-resident.
    return pl.BlockSpec(shape, lambda i: (0,) * len(shape))


def prepare_params(params):
    """One-time prep OUTSIDE the hot path: bf16 weights, fc5 lane-padded to 128.

    Biases stay f32 (added after the f32 MXU accumulation)."""
    # TODO(synk): optional v7x follow-up -- fp8(e4m3) weights + per-tensor scale would
    # halve the weight-DMA floor; needs accuracy validation vs the f32 PyTorch model.
    return {
        "w1": params["w1"].astype(jnp.bfloat16),
        "w2": params["w2"].astype(jnp.bfloat16),
        "w3": params["w3"].astype(jnp.bfloat16),
        "w4": params["w4"].astype(jnp.bfloat16),
        "w5": jnp.pad(params["w5"],
                      ((0, 0), (0, OUT_PAD - OUT_FEATURES))).astype(jnp.bfloat16),
        "b1": params["b1"],
        "b2": params["b2"],
        "b3": params["b3"],
        "b4": params["b4"],
        "b5": jnp.pad(params["b5"], ((0, 0), (0, OUT_PAD - OUT_FEATURES))),
    }


@jax.jit
def mod4_forward(x, prepped):
    """x: (B, 3, 32, 32) float32 (NCHW). prepped: output of prepare_params.
    Returns (B, 10) float32."""
    B = x.shape[0]
    x2 = x.reshape(B, -1)  # (B, 3072) f32 -- flatten(x, 1); bf16 cast happens in-kernel

    TM = _pick_tm(B)
    B_pad = _round_up(B, TM)
    if B_pad != B:
        x2 = jnp.pad(x2, ((0, B_pad - B), (0, 0)))

    args = (x2,
            prepped["w1"], prepped["b1"],
            prepped["w2"], prepped["b2"],
            prepped["w3"], prepped["b3"],
            prepped["w4"], prepped["b4"],
            prepped["w5"], prepped["b5"])

    in_specs = [pl.BlockSpec((TM, IN_FEATURES), lambda i: (i, 0))]
    in_specs += [_const_spec(a.shape) for a in args[1:]]

    # Traffic after pre-casting: bf16 weights + f32 biases + f32 input + f32 (padded) output.
    flops = 2 * B_pad * (IN_FEATURES * HIDDEN + 3 * HIDDEN * HIDDEN + HIDDEN * OUT_PAD)
    weight_bytes = 2 * (IN_FEATURES * HIDDEN + 3 * HIDDEN * HIDDEN + HIDDEN * OUT_PAD)
    bias_bytes = 4 * (4 * HIDDEN + OUT_PAD)
    bytes_accessed = (weight_bytes + bias_bytes
                      + B_pad * IN_FEATURES * 4      # f32 input
                      + B_pad * OUT_PAD * 4)         # f32 output

    out = pl.pallas_call(
        _mlp_kernel,
        out_shape=jax.ShapeDtypeStruct((B_pad, OUT_PAD), jnp.float32),
        grid=(B_pad // TM,),
        in_specs=in_specs,
        out_specs=pl.BlockSpec((TM, OUT_PAD), lambda i: (i, 0)),
        compiler_params=pltpu.CompilerParams(
            dimension_semantics=("parallel",),
            # Explicit bound: covers v5e's 16 MiB default scoped VMEM when TM=256
            # (weights double-buffered ~9.3 MiB + 6 MiB x tiles); no-op on v6e/v7x.
            vmem_limit_bytes=32 * 1024 * 1024,
        ),
        cost_estimate=pl.CostEstimate(
            flops=flops, transcendentals=0, bytes_accessed=bytes_accessed),
    )(*args)

    return out[:B, :OUT_FEATURES]


def init_params(key):
    """Deterministic init matching nn.Linear default: U(-1/sqrt(fan_in), 1/sqrt(fan_in)).
    Weights stored as (in_features, out_features); biases as (1, out_features), f32."""
    dims = [(IN_FEATURES, HIDDEN), (HIDDEN, HIDDEN), (HIDDEN, HIDDEN),
            (HIDDEN, HIDDEN), (HIDDEN, OUT_FEATURES)]
    params = {}
    keys = jax.random.split(key, 2 * len(dims))
    for idx, (fan_in, fan_out) in enumerate(dims):
        bound = 1.0 / jnp.sqrt(float(fan_in))
        wk, bk = keys[2 * idx], keys[2 * idx + 1]
        params[f"w{idx + 1}"] = jax.random.uniform(
            wk, (fan_in, fan_out), jnp.float32, minval=-bound, maxval=bound)
        params[f"b{idx + 1}"] = jax.random.uniform(
            bk, (1, fan_out), jnp.float32, minval=-bound, maxval=bound)
    return params


if __name__ == "__main__":
    key = jax.random.PRNGKey(0)
    pkey, xkey = jax.random.split(key)

    params = init_params(pkey)          # f32, PyTorch-Linear-style params
    prepped = prepare_params(params)    # one-time bf16 cast + fc5 lane padding (off hot path)

    # CIFAR-like input consistent with fc1's 3072 = 3*32*32 input features.
    x = jax.random.normal(xkey, (2, 3, 32, 32), dtype=jnp.float32)

    out = mod4_forward(x, prepped)
    jax.block_until_ready(out)

    assert out.shape == (2, OUT_FEATURES), out.shape
    assert out.dtype == jnp.float32

    # Plain-JAX reference of the same forward pass with the same bf16-weight compute.
    def ref(x, p):
        def lin(h, w, b):
            return jnp.dot(h.astype(jnp.bfloat16), w.astype(jnp.bfloat16),
                           preferred_element_type=jnp.float32) + b
        h = x.reshape(x.shape[0], -1)
        h = jnp.maximum(lin(h, p["w1"], p["b1"]), 0.0)   # relu(fc1)
        h = jnp.maximum(lin(h, p["w2"], p["b2"]), 0.0)   # fc2 ; relu
        h = jnp.maximum(lin(h, p["w3"], p["b3"]), 0.0)   # relu(fc3)
        h = jnp.maximum(lin(h, p["w4"], p["b4"]), 0.0)   # fc4 ; relu
        return lin(h, p["w5"], p["b5"])                  # fc5

    r = ref(x, params)
    assert jnp.allclose(out, r, atol=2e-2, rtol=2e-2), float(jnp.max(jnp.abs(out - r)))

    print("KERNEL_OK")
</pallas_src>

<mosaic_0001>
module attributes {stable_mosaic.version = 11 : i64} {
  func.func @_mlp_kernel(%arg0: i32, %arg1: memref<16x3072xf32, #tpu.memory_space<vmem>>, %arg2: memref<3072x512xbf16, #tpu.memory_space<vmem>>, %arg3: memref<1x512xf32, #tpu.memory_space<vmem>>, %arg4: memref<512x512xbf16, #tpu.memory_space<vmem>>, %arg5: memref<1x512xf32, #tpu.memory_space<vmem>>, %arg6: memref<512x512xbf16, #tpu.memory_space<vmem>>, %arg7: memref<1x512xf32, #tpu.memory_space<vmem>>, %arg8: memref<512x512xbf16, #tpu.memory_space<vmem>>, %arg9: memref<1x512xf32, #tpu.memory_space<vmem>>, %arg10: memref<512x128xbf16, #tpu.memory_space<vmem>>, %arg11: memref<1x128xf32, #tpu.memory_space<vmem>>, %arg12: memref<16x128xf32, #tpu.memory_space<vmem>>) attributes {dimension_semantics = [#tpu.dimension_semantics<parallel>], iteration_bounds = array<i64: 1>, scalar_prefetch = 0 : i64, scratch_operands = 0 : i64, tpu.core_type = #tpu.core_type<tc>, window_params = [{transform_indices = @transform_0, window_bounds = array<i64: 16, 3072>}, {pipeline_mode = #tpu.pipeline_mode<synchronous>, transform_indices = @transform_1, window_bounds = array<i64: 3072, 512>}, {pipeline_mode = #tpu.pipeline_mode<synchronous>, transform_indices = @transform_2, window_bounds = array<i64: 1, 512>}, {pipeline_mode = #tpu.pipeline_mode<synchronous>, transform_indices = @transform_3, window_bounds = array<i64: 512, 512>}, {pipeline_mode = #tpu.pipeline_mode<synchronous>, transform_indices = @transform_4, window_bounds = array<i64: 1, 512>}, {pipeline_mode = #tpu.pipeline_mode<synchronous>, transform_indices = @transform_5, window_bounds = array<i64: 512, 512>}, {pipeline_mode = #tpu.pipeline_mode<synchronous>, transform_indices = @transform_6, window_bounds = array<i64: 1, 512>}, {pipeline_mode = #tpu.pipeline_mode<synchronous>, transform_indices = @transform_7, window_bounds = array<i64: 512, 512>}, {pipeline_mode = #tpu.pipeline_mode<synchronous>, transform_indices = @transform_8, window_bounds = array<i64: 1, 512>}, {pipeline_mode = #tpu.pipeline_mode<synchronous>, transform_indices = @transform_9, window_bounds = array<i64: 512, 128>}, {pipeline_mode = #tpu.pipeline_mode<synchronous>, transform_indices = @transform_10, window_bounds = array<i64: 1, 128>}, {transform_indices = @transform_11, window_bounds = array<i64: 16, 128>}]} {
    %c0 = arith.constant 0 : index
    %c0_0 = arith.constant 0 : index
    %0 = vector.load %arg1[%c0, %c0_0] : memref<16x3072xf32, #tpu.memory_space<vmem>>, vector<16x3072xf32>
    %1 = arith.truncf %0 : vector<16x3072xf32> to vector<16x3072xbf16>
    %c0_1 = arith.constant 0 : index
    %c0_2 = arith.constant 0 : index
    %2 = vector.load %arg2[%c0_1, %c0_2] : memref<3072x512xbf16, #tpu.memory_space<vmem>>, vector<3072x512xbf16>
    %cst = arith.constant dense<0.000000e+00> : vector<16x512xf32>
    %3 = tpu.matmul %1, %2, %cst {dimension_numbers = #tpu.dot_dimension_numbers<[1], [0], [0], [1], [0, 0, 1, 1], [], []>} : vector<16x3072xbf16>, vector<3072x512xbf16>, vector<16x512xf32> -> vector<16x512xf32>
    %c0_3 = arith.constant 0 : index
    %c0_4 = arith.constant 0 : index
    %4 = vector.load %arg3[%c0_3, %c0_4] : memref<1x512xf32, #tpu.memory_space<vmem>>, vector<1x512xf32>
    %5 = vector.broadcast %4 : vector<1x512xf32> to vector<16x512xf32>
    %6 = arith.addf %3, %5 : vector<16x512xf32>
    %cst_5 = arith.constant 0.000000e+00 : f32
    %7 = vector.broadcast %cst_5 : f32 to vector<16x512xf32>
    %8 = arith.maximumf %6, %7 : vector<16x512xf32>
    %9 = arith.truncf %8 : vector<16x512xf32> to vector<16x512xbf16>
    %c0_6 = arith.constant 0 : index
    %c0_7 = arith.constant 0 : index
    %10 = vector.load %arg4[%c0_6, %c0_7] : memref<512x512xbf16, #tpu.memory_space<vmem>>, vector<512x512xbf16>
    %cst_8 = arith.constant dense<0.000000e+00> : vector<16x512xf32>
    %11 = tpu.matmul %9, %10, %cst_8 {dimension_numbers = #tpu.dot_dimension_numbers<[1], [0], [0], [1], [0, 0, 1, 1], [], []>} : vector<16x512xbf16>, vector<512x512xbf16>, vector<16x512xf32> -> vector<16x512xf32>
    %c0_9 = arith.constant 0 : index
    %c0_10 = arith.constant 0 : index
    %12 = vector.load %arg5[%c0_9, %c0_10] : memref<1x512xf32, #tpu.memory_space<vmem>>, vector<1x512xf32>
    %13 = vector.broadcast %12 : vector<1x512xf32> to vector<16x512xf32>
    %14 = arith.addf %11, %13 : vector<16x512xf32>
    %cst_11 = arith.constant 0.000000e+00 : f32
    %15 = vector.broadcast %cst_11 : f32 to vector<16x512xf32>
    %16 = arith.maximumf %14, %15 : vector<16x512xf32>
    %17 = arith.truncf %16 : vector<16x512xf32> to vector<16x512xbf16>
    %c0_12 = arith.constant 0 : index
    %c0_13 = arith.constant 0 : index
    %18 = vector.load %arg6[%c0_12, %c0_13] : memref<512x512xbf16, #tpu.memory_space<vmem>>, vector<512x512xbf16>
    %cst_14 = arith.constant dense<0.000000e+00> : vector<16x512xf32>
    %19 = tpu.matmul %17, %18, %cst_14 {dimension_numbers = #tpu.dot_dimension_numbers<[1], [0], [0], [1], [0, 0, 1, 1], [], []>} : vector<16x512xbf16>, vector<512x512xbf16>, vector<16x512xf32> -> vector<16x512xf32>
    %c0_15 = arith.constant 0 : index
    %c0_16 = arith.constant 0 : index
    %20 = vector.load %arg7[%c0_15, %c0_16] : memref<1x512xf32, #tpu.memory_space<vmem>>, vector<1x512xf32>
    %21 = vector.broadcast %20 : vector<1x512xf32> to vector<16x512xf32>
    %22 = arith.addf %19, %21 : vector<16x512xf32>
    %cst_17 = arith.constant 0.000000e+00 : f32
    %23 = vector.broadcast %cst_17 : f32 to vector<16x512xf32>
    %24 = arith.maximumf %22, %23 : vector<16x512xf32>
    %25 = arith.truncf %24 : vector<16x512xf32> to vector<16x512xbf16>
    %c0_18 = arith.constant 0 : index
    %c0_19 = arith.constant 0 : index
    %26 = vector.load %arg8[%c0_18, %c0_19] : memref<512x512xbf16, #tpu.memory_space<vmem>>, vector<512x512xbf16>
    %cst_20 = arith.constant dense<0.000000e+00> : vector<16x512xf32>
    %27 = tpu.matmul %25, %26, %cst_20 {dimension_numbers = #tpu.dot_dimension_numbers<[1], [0], [0], [1], [0, 0, 1, 1], [], []>} : vector<16x512xbf16>, vector<512x512xbf16>, vector<16x512xf32> -> vector<16x512xf32>
    %c0_21 = arith.constant 0 : index
    %c0_22 = arith.constant 0 : index
    %28 = vector.load %arg9[%c0_21, %c0_22] : memref<1x512xf32, #tpu.memory_space<vmem>>, vector<1x512xf32>
    %29 = vector.broadcast %28 : vector<1x512xf32> to vector<16x512xf32>
    %30 = arith.addf %27, %29 : vector<16x512xf32>
    %cst_23 = arith.constant 0.000000e+00 : f32
    %31 = vector.broadcast %cst_23 : f32 to vector<16x512xf32>
    %32 = arith.maximumf %30, %31 : vector<16x512xf32>
    %33 = arith.truncf %32 : vector<16x512xf32> to vector<16x512xbf16>
    %c0_24 = arith.constant 0 : index
    %c0_25 = arith.constant 0 : index
    %34 = vector.load %arg10[%c0_24, %c0_25] : memref<512x128xbf16, #tpu.memory_space<vmem>>, vector<512x128xbf16>
    %cst_26 = arith.constant dense<0.000000e+00> : vector<16x128xf32>
    %35 = tpu.matmul %33, %34, %cst_26 {dimension_numbers = #tpu.dot_dimension_numbers<[1], [0], [0], [1], [0, 0, 1, 1], [], []>} : vector<16x512xbf16>, vector<512x128xbf16>, vector<16x128xf32> -> vector<16x128xf32>
    %c0_27 = arith.constant 0 : index
    %c0_28 = arith.constant 0 : index
    %36 = vector.load %arg11[%c0_27, %c0_28] : memref<1x128xf32, #tpu.memory_space<vmem>>, vector<1x128xf32>
    %37 = vector.broadcast %36 : vector<1x128xf32> to vector<16x128xf32>
    %38 = arith.addf %35, %37 : vector<16x128xf32>
    %c0_29 = arith.constant 0 : index
    %c0_30 = arith.constant 0 : index
    %39 = vector.load %arg12[%c0_29, %c0_30] : memref<16x128xf32, #tpu.memory_space<vmem>>, vector<16x128xf32>
    tpu.vector_store %arg12[%c0_29, %c0_30], %38 {strides = array<i32>} : memref<16x128xf32, #tpu.memory_space<vmem>>, vector<16x128xf32>,
    return
  }
  func.func @transform_0(%arg0: i32) -> (i32, i32) {
    %c0_i32 = arith.constant 0 : i32
    %c0_i32_0 = arith.constant 0 : i32
    return %arg0, %c0_i32 : i32, i32
  }
  func.func @transform_1(%arg0: i32) -> (i32, i32) {
    %c0_i32 = arith.constant 0 : i32
    %c0_i32_0 = arith.constant 0 : i32
    %c0_i32_1 = arith.constant 0 : i32
    return %c0_i32, %c0_i32_0 : i32, i32
  }
  func.func @transform_2(%arg0: i32) -> (i32, i32) {
    %c0_i32 = arith.constant 0 : i32
    %c0_i32_0 = arith.constant 0 : i32
    %c0_i32_1 = arith.constant 0 : i32
    return %c0_i32, %c0_i32_0 : i32, i32
  }
  func.func @transform_3(%arg0: i32) -> (i32, i32) {
    %c0_i32 = arith.constant 0 : i32
    %c0_i32_0 = arith.constant 0 : i32
    %c0_i32_1 = arith.constant 0 : i32
    return %c0_i32, %c0_i32_0 : i32, i32
  }
  func.func @transform_4(%arg0: i32) -> (i32, i32) {
    %c0_i32 = arith.constant 0 : i32
    %c0_i32_0 = arith.constant 0 : i32
    %c0_i32_1 = arith.constant 0 : i32
    return %c0_i32, %c0_i32_0 : i32, i32
  }
  func.func @transform_5(%arg0: i32) -> (i32, i32) {
    %c0_i32 = arith.constant 0 : i32
    %c0_i32_0 = arith.constant 0 : i32
    %c0_i32_1 = arith.constant 0 : i32
    return %c0_i32, %c0_i32_0 : i32, i32
  }
  func.func @transform_6(%arg0: i32) -> (i32, i32) {
    %c0_i32 = arith.constant 0 : i32
    %c0_i32_0 = arith.constant 0 : i32
    %c0_i32_1 = arith.constant 0 : i32
    return %c0_i32, %c0_i32_0 : i32, i32
  }
  func.func @transform_7(%arg0: i32) -> (i32, i32) {
    %c0_i32 = arith.constant 0 : i32
    %c0_i32_0 = arith.constant 0 : i32
    %c0_i32_1 = arith.constant 0 : i32
    return %c0_i32, %c0_i32_0 : i32, i32
  }
  func.func @transform_8(%arg0: i32) -> (i32, i32) {
    %c0_i32 = arith.constant 0 : i32
    %c0_i32_0 = arith.constant 0 : i32
    %c0_i32_1 = arith.constant 0 : i32
    return %c0_i32, %c0_i32_0 : i32, i32
  }
  func.func @transform_9(%arg0: i32) -> (i32, i32) {
    %c0_i32 = arith.constant 0 : i32
    %c0_i32_0 = arith.constant 0 : i32
    %c0_i32_1 = arith.constant 0 : i32
    return %c0_i32, %c0_i32_0 : i32, i32
  }
  func.func @transform_10(%arg0: i32) -> (i32, i32) {
    %c0_i32 = arith.constant 0 : i32
    %c0_i32_0 = arith.constant 0 : i32
    %c0_i32_1 = arith.constant 0 : i32
    return %c0_i32, %c0_i32_0 : i32, i32
  }
  func.func @transform_11(%arg0: i32) -> (i32, i32) {
    %c0_i32 = arith.constant 0 : i32
    %c0_i32_0 = arith.constant 0 : i32
    return %arg0, %c0_i32 : i32, i32
  }
}

</mosaic_0001>

<llo_original>
// kernel: mod4_forward.1
$region0: #{mod4_forward.1}
  #allocation0 [shape = 'u32[]', space=smem, size = 0x4, offset = 0x4, fixed_abs, tag = 'smem constant byte address 0x4 - core index']
  #allocation1 [shape = 'u32[144,128]{1,0:T(1,128)}', space=vmem, size = 0x12000, scoped, tag = 'internal scratch']
  %s0 = inlined_call_operand.vmem [shape: f32[16,3072], index: 0, kind: input, shape index: {}]
  %s1 = inlined_call_operand.hbm [shape: bf16[3072,512], index: 1, kind: input, shape index: {}]
  %s2 = inlined_call_operand.hbm [shape: f32[1,512], index: 2, kind: input, shape index: {}]
  %s3 = inlined_call_operand.hbm [shape: bf16[512,512], index: 3, kind: input, shape index: {}]
  %s4 = inlined_call_operand.hbm [shape: f32[1,512], index: 4, kind: input, shape index: {}]
  %s5 = inlined_call_operand.hbm [shape: bf16[512,512], index: 5, kind: input, shape index: {}]
  %s6 = inlined_call_operand.hbm [shape: f32[1,512], index: 6, kind: input, shape index: {}]
  %s7 = inlined_call_operand.hbm [shape: bf16[512,512], index: 7, kind: input, shape index: {}]
  %s8 = inlined_call_operand.hbm [shape: f32[1,512], index: 8, kind: input, shape index: {}]
  %s9 = inlined_call_operand.hbm [shape: bf16[512,128], index: 9, kind: input, shape index: {}]
  %s10 = inlined_call_operand.hbm [shape: f32[1,128], index: 10, kind: input, shape index: {}]
  %s11 = inlined_call_operand.vmem [shape: f32[16,128], index: 11, kind: output, shape index: {}]
  %s12 = sld [smem:[#allocation0]]
  $region94: #{mod4_forward.1} parent=0
    _
  %s14 = ssub.s32 1, %s12
  %s15 = scalar_select 0, %s14, %s12
  $region1: #{mod4_forward.1} parent=0
    #allocation2 [shape = 'u8[3145728]{0}', space=vmem, size = 0x300000, scoped, tag = 'input window, operand 1, single buffered']
    #allocation3 [shape = 's32[1]{0}', space=sflag, size = 0x4, scoped, tag = 'scoped memory for mod4_forward.1']
    #allocation4 [shape = 'u8[2048]{0}', space=vmem, size = 0x800, scoped, tag = 'input window, operand 2, single buffered']
    #allocation5 [shape = 's32[1]{0}', space=sflag, size = 0x4, scoped, tag = 'scoped memory for mod4_forward.1']
    #allocation6 [shape = 'u8[524288]{0}', space=vmem, size = 0x80000, scoped, tag = 'input window, operand 3, single buffered']
    #allocation7 [shape = 'u8[2048]{0}', space=vmem, size = 0x800, scoped, tag = 'input window, operand 4, single buffered']
    #allocation8 [shape = 's32[1]{0}', space=sflag, size = 0x4, scoped, tag = 'scoped memory for mod4_forward.1']
    #allocation9 [shape = 'u8[524288]{0}', space=vmem, size = 0x80000, scoped, tag = 'input window, operand 5, single buffered']
    #allocation10 [shape = 'u8[2048]{0}', space=vmem, size = 0x800, scoped, tag = 'input window, operand 6, single buffered']
    #allocation11 [shape = 's32[1]{0}', space=sflag, size = 0x4, scoped, tag = 'scoped memory for mod4_forward.1']
    #allocation12 [shape = 'u8[524288]{0}', space=vmem, size = 0x80000, scoped, tag = 'input window, operand 7, single buffered']
    #allocation13 [shape = 'u8[2048]{0}', space=vmem, size = 0x800, scoped, tag = 'input window, operand 8, single buffered']
    #allocation14 [shape = 's32[1]{0}', space=sflag, size = 0x4, scoped, tag = 'scoped memory for mod4_forward.1']
    #allocation15 [shape = 'u8[131072]{0}', space=vmem, size = 0x20000, scoped, tag = 'input window, operand 9, single buffered']
    #allocation16 [shape = 'u8[512]{0}', space=vmem, size = 0x400, scoped, tag = 'input window, operand 10, single buffered']
    #allocation17 [shape = 's32[1]{0}', space=sflag, size = 0x4, scoped, tag = 'scoped memory for mod4_forward.1']
    %16 = vsyncpa [#allocation3], 0
    %17 = vsyncpa [#allocation5], 0
    %18 = vsyncpa [#allocation8], 0
    %19 = vsyncpa [#allocation11], 0
    %20 = vsyncpa [#allocation14], 0
    %21 = vsyncpa [#allocation17], 0
    // Predicated region
    $region2: #{mod4_forward.1} parent=1 // pred_check
      _
    $region3: #{mod4_forward.1} parent=1 // pred_check_branch
      %23 = sbr.rel (0) target = $region5
    $region4: #{mod4_forward.1} parent=1 // pred_region
      _
    $region5: #{mod4_forward.1} parent=1 // pred_fallthru
      _
    // Predicated region
    $region6: #{mod4_forward.1} parent=1 // pred_check
      _
    $region7: #{mod4_forward.1} parent=1 // pred_check_branch
      %25 = sbr.rel (0) target = $region9
    $region8: #{mod4_forward.1} parent=1 // pred_region
      %s27 = ssub.s32 98304, 98304
      %28 = vsyncadd [#allocation3], %s27
      %s29 = sshll.u32 [#allocation2], 4
      %s30 = int_to_ptr.vmem [resolvable:$true] %s29
      %35 = dma.hbm_to_vmem [thread:$0]  %s1, 98304, %s30, [#allocation3], 256, 256, 16
    $region9: #{mod4_forward.1} parent=1 // pred_fallthru
      _
    // Predicated region
    $region10: #{mod4_forward.1} parent=1 // pred_check
      _
    $region11: #{mod4_forward.1} parent=1 // pred_check_branch
      %37 = sbr.rel (0) target = $region13
    $region12: #{mod4_forward.1} parent=1 // pred_region
      %s39 = ssub.s32 64, 64
      %40 = vsyncadd [#allocation5], %s39
      %s42 = sshll.u32 [#allocation4], 4
      %s43 = int_to_ptr.vmem [resolvable:$true] %s42
      %45 = dma.hbm_to_vmem [thread:$0]  %s2, 64, %s43, [#allocation5]
    $region13: #{mod4_forward.1} parent=1 // pred_fallthru
      _
    // Predicated region
    $region14: #{mod4_forward.1} parent=1 // pred_check
      _
    $region15: #{mod4_forward.1} parent=1 // pred_check_branch
      %47 = sbr.rel (0) target = $region17
    $region16: #{mod4_forward.1} parent=1 // pred_region
      %s49 = ssub.s32 16384, 16384
      %50 = vsyncadd [#allocation5], %s49
      %s51 = sshll.u32 [#allocation6], 4
      %s52 = int_to_ptr.vmem [resolvable:$true] %s51
      %57 = dma.hbm_to_vmem [thread:$0]  %s3, 16384, %s52, [#allocation5], 256, 256, 16
    $region17: #{mod4_forward.1} parent=1 // pred_fallthru
      _
    // Predicated region
    $region18: #{mod4_forward.1} parent=1 // pred_check
      _
    $region19: #{mod4_forward.1} parent=1 // pred_check_branch
      %59 = sbr.rel (0) target = $region21
    $region20: #{mod4_forward.1} parent=1 // pred_region
      %s61 = ssub.s32 64, 64
      %62 = vsyncadd [#allocation8], %s61
      %s64 = sshll.u32 [#allocation7], 4
      %s65 = int_to_ptr.vmem [resolvable:$true] %s64
      %67 = dma.hbm_to_vmem [thread:$0]  %s4, 64, %s65, [#allocation8]
    $region21: #{mod4_forward.1} parent=1 // pred_fallthru
      _
    // Predicated region
    $region22: #{mod4_forward.1} parent=1 // pred_check
      _
    $region23: #{mod4_forward.1} parent=1 // pred_check_branch
      %69 = sbr.rel (0) target = $region25
    $region24: #{mod4_forward.1} parent=1 // pred_region
      %s71 = ssub.s32 16384, 16384
      %72 = vsyncadd [#allocation8], %s71
      %s73 = sshll.u32 [#allocation9], 4
      %s74 = int_to_ptr.vmem [resolvable:$true] %s73
      %79 = dma.hbm_to_vmem [thread:$0]  %s5, 16384, %s74, [#allocation8], 256, 256, 16
    $region25: #{mod4_forward.1} parent=1 // pred_fallthru
      _
    // Predicated region
    $region26: #{mod4_forward.1} parent=1 // pred_check
      _
    $region27: #{mod4_forward.1} parent=1 // pred_check_branch
      %81 = sbr.rel (0) target = $region29
    $region28: #{mod4_forward.1} parent=1 // pred_region
      %s83 = ssub.s32 64, 64
      %84 = vsyncadd [#allocation11], %s83
      %s86 = sshll.u32 [#allocation10], 4
      %s87 = int_to_ptr.vmem [resolvable:$true] %s86
      %89 = dma.hbm_to_vmem [thread:$0]  %s6, 64, %s87, [#allocation11]
    $region29: #{mod4_forward.1} parent=1 // pred_fallthru
      _
    // Predicated region
    $region30: #{mod4_forward.1} parent=1 // pred_check
      _
    $region31: #{mod4_forward.1} parent=1 // pred_check_branch
      %91 = sbr.rel (0) target = $region33
    $region32: #{mod4_forward.1} parent=1 // pred_region
      %s93 = ssub.s32 16384, 16384
      %94 = vsyncadd [#allocation11], %s93
      %s95 = sshll.u32 [#allocation12], 4
      %s96 = int_to_ptr.vmem [resolvable:$true] %s95
      %101 = dma.hbm_to_vmem [thread:$0]  %s7, 16384, %s96, [#allocation11], 256, 256, 16
    $region33: #{mod4_forward.1} parent=1 // pred_fallthru
      _
    // Predicated region
    $region34: #{mod4_forward.1} parent=1 // pred_check
      _
    $region35: #{mod4_forward.1} parent=1 // pred_check_branch
      %103 = sbr.rel (0) target = $region37
    $region36: #{mod4_forward.1} parent=1 // pred_region
      %s105 = ssub.s32 64, 64
      %106 = vsyncadd [#allocation14], %s105
      %s108 = sshll.u32 [#allocation13], 4
      %s109 = int_to_ptr.vmem [resolvable:$true] %s108
      %111 = dma.hbm_to_vmem [thread:$0]  %s8, 64, %s109, [#allocation14]
    $region37: #{mod4_forward.1} parent=1 // pred_fallthru
      _
    // Predicated region
    $region38: #{mod4_forward.1} parent=1 // pred_check
      _
    $region39: #{mod4_forward.1} parent=1 // pred_check_branch
      %113 = sbr.rel (0) target = $region41
    $region40: #{mod4_forward.1} parent=1 // pred_region
      %s115 = ssub.s32 4096, 4096
      %116 = vsyncadd [#allocation14], %s115
      %s117 = sshll.u32 [#allocation15], 4
      %s118 = int_to_ptr.vmem [resolvable:$true] %s117
      %123 = dma.hbm_to_vmem [thread:$0]  %s9, 4096, %s118, [#allocation14], 64, 64, 4
    $region41: #{mod4_forward.1} parent=1 // pred_fallthru
      _
    // Predicated region
    $region42: #{mod4_forward.1} parent=1 // pred_check
      _
    $region43: #{mod4_forward.1} parent=1 // pred_check_branch
      %125 = sbr.rel (0) target = $region45
    $region44: #{mod4_forward.1} parent=1 // pred_region
      %s127 = ssub.s32 16, 16
      %128 = vsyncadd [#allocation17], %s127
      %s130 = sshll.u32 [#allocation16], 4
      %s131 = int_to_ptr.vmem [resolvable:$true] %s130
      %133 = dma.hbm_to_vmem [thread:$0]  %s10, 16, %s131, [#allocation17]
    $region45: #{mod4_forward.1} parent=1 // pred_fallthru
      _
    // Predicated region
    $region46: #{mod4_forward.1} parent=1 // pred_check
      _
    $region47: #{mod4_forward.1} parent=1 // pred_check_branch
      %135 = sbr.rel (0) target = $region49
    $region48: #{mod4_forward.1} parent=1 // pred_region
      %136 = dma.done [#allocation3], 98304
    $region49: #{mod4_forward.1} parent=1 // pred_fallthru
      _
    // Predicated region
    $region50: #{mod4_forward.1} parent=1 // pred_check
      _
    $region51: #{mod4_forward.1} parent=1 // pred_check_branch
      %138 = sbr.rel (0) target = $region53
    $region52: #{mod4_forward.1} parent=1 // pred_region
      %139 = dma.done [#allocation5], 64
    $region53: #{mod4_forward.1} parent=1 // pred_fallthru
      _
    // Predicated region
    $region54: #{mod4_forward.1} parent=1 // pred_check
      _
    $region55: #{mod4_forward.1} parent=1 // pred_check_branch
      %141 = sbr.rel (0) target = $region57
    $region56: #{mod4_forward.1} parent=1 // pred_region
      %142 = dma.done [#allocation5], 16384
    $region57: #{mod4_forward.1} parent=1 // pred_fallthru
      _
    // Predicated region
    $region58: #{mod4_forward.1} parent=1 // pred_check
      _
    $region59: #{mod4_forward.1} parent=1 // pred_check_branch
      %144 = sbr.rel (0) target = $region61
    $region60: #{mod4_forward.1} parent=1 // pred_region
      %145 = dma.done [#allocation8], 64
    $region61: #{mod4_forward.1} parent=1 // pred_fallthru
      _
    // Predicated region
    $region62: #{mod4_forward.1} parent=1 // pred_check
      _
    $region63: #{mod4_forward.1} parent=1 // pred_check_branch
      %147 = sbr.rel (0) target = $region65
    $region64: #{mod4_forward.1} parent=1 // pred_region
      %148 = dma.done [#allocation8], 16384
    $region65: #{mod4_forward.1} parent=1 // pred_fallthru
      _
    // Predicated region
    $region66: #{mod4_forward.1} parent=1 // pred_check
      _
    $region67: #{mod4_forward.1} parent=1 // pred_check_branch
      %150 = sbr.rel (0) target = $region69
    $region68: #{mod4_forward.1} parent=1 // pred_region
      %151 = dma.done [#allocation11], 64
    $region69: #{mod4_forward.1} parent=1 // pred_fallthru
      _
    // Predicated region
    $region70: #{mod4_forward.1} parent=1 // pred_check
      _
    $region71: #{mod4_forward.1} parent=1 // pred_check_branch
      %153 = sbr.rel (0) target = $region73
    $region72: #{mod4_forward.1} parent=1 // pred_region
      %154 = dma.done [#allocation11], 16384
    $region73: #{mod4_forward.1} parent=1 // pred_fallthru
      _
    // Predicated region
    $region74: #{mod4_forward.1} parent=1 // pred_check
      _
    $region75: #{mod4_forward.1} parent=1 // pred_check_branch
      %156 = sbr.rel (0) target = $region77
    $region76: #{mod4_forward.1} parent=1 // pred_region
      %157 = dma.done [#allocation14], 64
    $region77: #{mod4_forward.1} parent=1 // pred_fallthru
      _
    // Predicated region
    $region78: #{mod4_forward.1} parent=1 // pred_check
      _
    $region79: #{mod4_forward.1} parent=1 // pred_check_branch
      %159 = sbr.rel (0) target = $region81
    $region80: #{mod4_forward.1} parent=1 // pred_region
      %160 = dma.done [#allocation14], 4096
    $region81: #{mod4_forward.1} parent=1 // pred_fallthru
      _
    // Predicated region
    $region82: #{mod4_forward.1} parent=1 // pred_check
      _
    $region83: #{mod4_forward.1} parent=1 // pred_check_branch
      %162 = sbr.rel (0) target = $region85
    $region84: #{mod4_forward.1} parent=1 // pred_region
      %163 = dma.done [#allocation17], 16
    $region85: #{mod4_forward.1} parent=1 // pred_fallthru
      _
    %v165 = vld [vmem:[%s0] sm:$0xff]
    %v166 = vld [vmem:[%s0 + $0x8] sm:$0xff]
    %v167 = vld [vmem:[%s0 + $0x10] sm:$0xff]
    %v168 = vld [vmem:[%s0 + $0x18] sm:$0xff]
    %v169 = vld [vmem:[%s0 + $0x20] sm:$0xff]
    %v170 = vld [vmem:[%s0 + $0x28] sm:$0xff]
    %v171 = vld [vmem:[%s0 + $0x30] sm:$0xff]
    %v172 = vld [vmem:[%s0 + $0x38] sm:$0xff]
    %v173 = vld [vmem:[%s0 + $0x40] sm:$0xff]
    %v174 = vld [vmem:[%s0 + $0x48] sm:$0xff]
    %v175 = vld [vmem:[%s0 + $0x50] sm:$0xff]
    %v176 = vld [vmem:[%s0 + $0x58] sm:$0xff]
    %v177 = vld [vmem:[%s0 + $0x60] sm:$0xff]
    %v178 = vld [vmem:[%s0 + $0x68] sm:$0xff]
    %v179 = vld [vmem:[%s0 + $0x70] sm:$0xff]
    %v180 = vld [vmem:[%s0 + $0x78] sm:$0xff]
    %v181 = vld [vmem:[%s0 + $0x80] sm:$0xff]
    %v182 = vld [vmem:[%s0 + $0x88] sm:$0xff]
    %v183 = vld [vmem:[%s0 + $0x90] sm:$0xff]
    %v184 = vld [vmem:[%s0 + $0x98] sm:$0xff]
    %v185 = vld [vmem:[%s0 + $0xa0] sm:$0xff]
    %v186 = vld [vmem:[%s0 + $0xa8] sm:$0xff]
    %v187 = vld [vmem:[%s0 + $0xb0] sm:$0xff]
    %v188 = vld [vmem:[%s0 + $0xb8] sm:$0xff]
    %v189 = vld [vmem:[%s0 + $0xc0] sm:$0xff]
    %v190 = vld [vmem:[%s0 + $0xc8] sm:$0xff]
    %v191 = vld [vmem:[%s0 + $0xd0] sm:$0xff]
    %v192 = vld [vmem:[%s0 + $0xd8] sm:$0xff]
    %v193 = vld [vmem:[%s0 + $0xe0] sm:$0xff]
    %v194 = vld [vmem:[%s0 + $0xe8] sm:$0xff]
    %v195 = vld [vmem:[%s0 + $0xf0] sm:$0xff]
    %v196 = vld [vmem:[%s0 + $0xf8] sm:$0xff]
    %v197 = vld [vmem:[%s0 + $0x100] sm:$0xff]
    %v198 = vld [vmem:[%s0 + $0x108] sm:$0xff]
    %v199 = vld [vmem:[%s0 + $0x110] sm:$0xff]
    %v200 = vld [vmem:[%s0 + $0x118] sm:$0xff]
    %v201 = vld [vmem:[%s0 + $0x120] sm:$0xff]
    %v202 = vld [vmem:[%s0 + $0x128] sm:$0xff]
    %v203 = vld [vmem:[%s0 + $0x130] sm:$0xff]
    %v204 = vld [vmem:[%s0 + $0x138] sm:$0xff]
    %v205 = vld [vmem:[%s0 + $0x140] sm:$0xff]
    %v206 = vld [vmem:[%s0 + $0x148] sm:$0xff]
    %v207 = vld [vmem:[%s0 + $0x150] sm:$0xff]
    %v208 = vld [vmem:[%s0 + $0x158] sm:$0xff]
    %v209 = vld [vmem:[%s0 + $0x160] sm:$0xff]
    %v210 = vld [vmem:[%s0 + $0x168] sm:$0xff]
    %v211 = vld [vmem:[%s0 + $0x170] sm:$0xff]
    %v212 = vld [vmem:[%s0 + $0x178] sm:$0xff]
    %v213 = vpack.c.bf16 %v189, %v165
    %v214 = vpack.c.bf16 %v190, %v166
    %v215 = vpack.c.bf16 %v191, %v167
    %v216 = vpack.c.bf16 %v192, %v168
    %v217 = vpack.c.bf16 %v193, %v169
    %v218 = vpack.c.bf16 %v194, %v170
    %v219 = vpack.c.bf16 %v195, %v171
    %v220 = vpack.c.bf16 %v196, %v172
    %v221 = vpack.c.bf16 %v197, %v173
    %v222 = vpack.c.bf16 %v198, %v174
    %v223 = vpack.c.bf16 %v199, %v175
    %v224 = vpack.c.bf16 %v200, %v176
    %v225 = vpack.c.bf16 %v201, %v177
    %v226 = vpack.c.bf16 %v202, %v178
    %v227 = vpack.c.bf16 %v203, %v179
    %v228 = vpack.c.bf16 %v204, %v180
    %v229 = vpack.c.bf16 %v205, %v181
    %v230 = vpack.c.bf16 %v206, %v182
    %v231 = vpack.c.bf16 %v207, %v183
    %v232 = vpack.c.bf16 %v208, %v184
    %v233 = vpack.c.bf16 %v209, %v185
    %v234 = vpack.c.bf16 %v210, %v186
    %v235 = vpack.c.bf16 %v211, %v187
    %v236 = vpack.c.bf16 %v212, %v188
    %v237 = vld [vmem:[#allocation2] sm:$0xff]
    %v238 = vld [vmem:[#allocation2 + $0x8] sm:$0xff]
    %v239 = vld [vmem:[#allocation2 + $0x10] sm:$0xff]
    %v240 = vld [vmem:[#allocation2 + $0x18] sm:$0xff]
    %v241 = vld [vmem:[#allocation2 + $0x20] sm:$0xff]
    %v242 = vld [vmem:[#allocation2 + $0x28] sm:$0xff]
    %v243 = vld [vmem:[#allocation2 + $0x30] sm:$0xff]
    %v244 = vld [vmem:[#allocation2 + $0x38] sm:$0xff]
    %v245 = vld [vmem:[#allocation2 + $0x40] sm:$0xff]
    %v246 = vld [vmem:[#allocation2 + $0x48] sm:$0xff]
    %v247 = vld [vmem:[#allocation2 + $0x50] sm:$0xff]
    %v248 = vld [vmem:[#allocation2 + $0x58] sm:$0xff]
    %v249 = vld [vmem:[#allocation2 + $0x60] sm:$0xff]
    %v250 = vld [vmem:[#allocation2 + $0x68] sm:$0xff]
    %v251 = vld [vmem:[#allocation2 + $0x70] sm:$0xff]
    %v252 = vld [vmem:[#allocation2 + $0x78] sm:$0xff]
    %v253 = vld [vmem:[#allocation2 + $0x80] sm:$0xff]
    %v254 = vld [vmem:[#allocation2 + $0x88] sm:$0xff]
    %v255 = vld [vmem:[#allocation2 + $0x90] sm:$0xff]
    %v256 = vld [vmem:[#allocation2 + $0x98] sm:$0xff]
    %v257 = vld [vmem:[#allocation2 + $0xa0] sm:$0xff]
    %v258 = vld [vmem:[#allocation2 + $0xa8] sm:$0xff]
    %v259 = vld [vmem:[#allocation2 + $0xb0] sm:$0xff]
    %v260 = vld [vmem:[#allocation2 + $0xb8] sm:$0xff]
    %v261 = vld [vmem:[#allocation2 + $0xc0] sm:$0xff]
    %v262 = vld [vmem:[#allocation2 + $0xc8] sm:$0xff]
    %v263 = vld [vmem:[#allocation2 + $0xd0] sm:$0xff]
    %v264 = vld [vmem:[#allocation2 + $0xd8] sm:$0xff]
    %v265 = vld [vmem:[#allocation2 + $0xe0] sm:$0xff]
    %v266 = vld [vmem:[#allocation2 + $0xe8] sm:$0xff]
    %v267 = vld [vmem:[#allocation2 + $0xf0] sm:$0xff]
    %v268 = vld [vmem:[#allocation2 + $0xf8] sm:$0xff]
    %v269 = vld [vmem:[#allocation2 + $0x100] sm:$0xff]
    %v270 = vld [vmem:[#allocation2 + $0x108] sm:$0xff]
    %v271 = vld [vmem:[#allocation2 + $0x110] sm:$0xff]
    %v272 = vld [vmem:[#allocation2 + $0x118] sm:$0xff]
    %v273 = vld [vmem:[#allocation2 + $0x120] sm:$0xff]
    %v274 = vld [vmem:[#allocation2 + $0x128] sm:$0xff]
    %v275 = vld [vmem:[#allocation2 + $0x130] sm:$0xff]
    %v276 = vld [vmem:[#allocation2 + $0x138] sm:$0xff]
    %v277 = vld [vmem:[#allocation2 + $0x140] sm:$0xff]
    %v278 = vld [vmem:[#allocation2 + $0x148] sm:$0xff]
    %v279 = vld [vmem:[#allocation2 + $0x150] sm:$0xff]
    %v280 = vld [vmem:[#allocation2 + $0x158] sm:$0xff]
    %v281 = vld [vmem:[#allocation2 + $0x160] sm:$0xff]
    %v282 = vld [vmem:[#allocation2 + $0x168] sm:$0xff]
    %v283 = vld [vmem:[#allocation2 + $0x170] sm:$0xff]
    %v284 = vld [vmem:[#allocation2 + $0x178] sm:$0xff]
    %v285 = vld [vmem:[#allocation2 + $0x180] sm:$0xff]
    %v286 = vld [vmem:[#allocation2 + $0x188] sm:$0xff]
    %v287 = vld [vmem:[#allocation2 + $0x190] sm:$0xff]
    %v288 = vld [vmem:[#allocation2 + $0x198] sm:$0xff]
    %v289 = vld [vmem:[#allocation2 + $0x1a0] sm:$0xff]
    %v290 = vld [vmem:[#allocation2 + $0x1a8] sm:$0xff]
    %v291 = vld [vmem:[#allocation2 + $0x1b0] sm:$0xff]
    %v292 = vld [vmem:[#allocation2 + $0x1b8] sm:$0xff]
    %v293 = vld [vmem:[#allocation2 + $0x1c0] sm:$0xff]
    %v294 = vld [vmem:[#allocation2 + $0x1c8] sm:$0xff]
    %v295 = vld [vmem:[#allocation2 + $0x1d0] sm:$0xff]
    %v296 = vld [vmem:[#allocation2 + $0x1d8] sm:$0xff]
    %v297 = vld [vmem:[#allocation2 + $0x1e0] sm:$0xff]
    %v298 = vld [vmem:[#allocation2 + $0x1e8] sm:$0xff]
    %v299 = vld [vmem:[#allocation2 + $0x1f0] sm:$0xff]
    %v300 = vld [vmem:[#allocation2 + $0x1f8] sm:$0xff]
    %v301 = vld [vmem:[#allocation2 + $0x200] sm:$0xff]
    %v302 = vld [vmem:[#allocation2 + $0x208] sm:$0xff]
    %v303 = vld [vmem:[#allocation2 + $0x210] sm:$0xff]
    %v304 = vld [vmem:[#allocation2 + $0x218] sm:$0xff]
    %v305 = vld [vmem:[#allocation2 + $0x220] sm:$0xff]
    %v306 = vld [vmem:[#allocation2 + $0x228] sm:$0xff]
    %v307 = vld [vmem:[#allocation2 + $0x230] sm:$0xff]
    %v308 = vld [vmem:[#allocation2 + $0x238] sm:$0xff]
    %v309 = vld [vmem:[#allocation2 + $0x240] sm:$0xff]
    %v310 = vld [vmem:[#allocation2 + $0x248] sm:$0xff]
    %v311 = vld [vmem:[#allocation2 + $0x250] sm:$0xff]
    %v312 = vld [vmem:[#allocation2 + $0x258] sm:$0xff]
    %v313 = vld [vmem:[#allocation2 + $0x260] sm:$0xff]
    %v314 = vld [vmem:[#allocation2 + $0x268] sm:$0xff]
    %v315 = vld [vmem:[#allocation2 + $0x270] sm:$0xff]
    %v316 = vld [vmem:[#allocation2 + $0x278] sm:$0xff]
    %v317 = vld [vmem:[#allocation2 + $0x280] sm:$0xff]
    %v318 = vld [vmem:[#allocation2 + $0x288] sm:$0xff]
    %v319 = vld [vmem:[#allocation2 + $0x290] sm:$0xff]
    %v320 = vld [vmem:[#allocation2 + $0x298] sm:$0xff]
    %v321 = vld [vmem:[#allocation2 + $0x2a0] sm:$0xff]
    %v322 = vld [vmem:[#allocation2 + $0x2a8] sm:$0xff]
    %v323 = vld [vmem:[#allocation2 + $0x2b0] sm:$0xff]
    %v324 = vld [vmem:[#allocation2 + $0x2b8] sm:$0xff]
    %v325 = vld [vmem:[#allocation2 + $0x2c0] sm:$0xff]
    %v326 = vld [vmem:[#allocation2 + $0x2c8] sm:$0xff]
    %v327 = vld [vmem:[#allocation2 + $0x2d0] sm:$0xff]
    %v328 = vld [vmem:[#allocation2 + $0x2d8] sm:$0xff]
    %v329 = vld [vmem:[#allocation2 + $0x2e0] sm:$0xff]
    %v330 = vld [vmem:[#allocation2 + $0x2e8] sm:$0xff]
    %v331 = vld [vmem:[#allocation2 + $0x2f0] sm:$0xff]
    %v332 = vld [vmem:[#allocation2 + $0x2f8] sm:$0xff]
    %v333 = vld [vmem:[#allocation2 + $0x300] sm:$0xff]
    %v334 = vld [vmem:[#allocation2 + $0x308] sm:$0xff]
    %v335 = vld [vmem:[#allocation2 + $0x310] sm:$0xff]
    %v336 = vld [vmem:[#allocation2 + $0x318] sm:$0xff]
    %v337 = vld [vmem:[#allocation2 + $0x320] sm:$0xff]
    %v338 = vld [vmem:[#allocation2 + $0x328] sm:$0xff]
    %v339 = vld [vmem:[#allocation2 + $0x330] sm:$0xff]
    %v340 = vld [vmem:[#allocation2 + $0x338] sm:$0xff]
    %v341 = vld [vmem:[#allocation2 + $0x340] sm:$0xff]
    %v342 = vld [vmem:[#allocation2 + $0x348] sm:$0xff]
    %v343 = vld [vmem:[#allocation2 + $0x350] sm:$0xff]
    %v344 = vld [vmem:[#allocation2 + $0x358] sm:$0xff]
    %v345 = vld [vmem:[#allocation2 + $0x360] sm:$0xff]
    %v346 = vld [vmem:[#allocation2 + $0x368] sm:$0xff]
    %v347 = vld [vmem:[#allocation2 + $0x370] sm:$0xff]
    %v348 = vld [vmem:[#allocation2 + $0x378] sm:$0xff]
    %v349 = vld [vmem:[#allocation2 + $0x380] sm:$0xff]
    %v350 = vld [vmem:[#allocation2 + $0x388] sm:$0xff]
    %v351 = vld [vmem:[#allocation2 + $0x390] sm:$0xff]
    %v352 = vld [vmem:[#allocation2 + $0x398] sm:$0xff]
    %v353 = vld [vmem:[#allocation2 + $0x3a0] sm:$0xff]
    %v354 = vld [vmem:[#allocation2 + $0x3a8] sm:$0xff]
    %v355 = vld [vmem:[#allocation2 + $0x3b0] sm:$0xff]
    %v356 = vld [vmem:[#allocation2 + $0x3b8] sm:$0xff]
    %v357 = vld [vmem:[#allocation2 + $0x3c0] sm:$0xff]
    %v358 = vld [vmem:[#allocation2 + $0x3c8] sm:$0xff]
    %v359 = vld [vmem:[#allocation2 + $0x3d0] sm:$0xff]
    %v360 = vld [vmem:[#allocation2 + $0x3d8] sm:$0xff]
    %v361 = vld [vmem:[#allocation2 + $0x3e0] sm:$0xff]
    %v362 = vld [vmem:[#allocation2 + $0x3e8] sm:$0xff]
    %v363 = vld [vmem:[#allocation2 + $0x3f0] sm:$0xff]
    %v364 = vld [vmem:[#allocation2 + $0x3f8] sm:$0xff]
    %v365 = vld [vmem:[#allocation2 + $0x400] sm:$0xff]
    %v366 = vld [vmem:[#allocation2 + $0x408] sm:$0xff]
    %v367 = vld [vmem:[#allocation2 + $0x410] sm:$0xff]
    %v368 = vld [vmem:[#allocation2 + $0x418] sm:$0xff]
    %v369 = vld [vmem:[#allocation2 + $0x420] sm:$0xff]
    %v370 = vld [vmem:[#allocation2 + $0x428] sm:$0xff]
    %v371 = vld [vmem:[#allocation2 + $0x430] sm:$0xff]
    %v372 = vld [vmem:[#allocation2 + $0x438] sm:$0xff]
    %v373 = vld [vmem:[#allocation2 + $0x440] sm:$0xff]
    %v374 = vld [vmem:[#allocation2 + $0x448] sm:$0xff]
    %v375 = vld [vmem:[#allocation2 + $0x450] sm:$0xff]
    %v376 = vld [vmem:[#allocation2 + $0x458] sm:$0xff]
    %v377 = vld [vmem:[#allocation2 + $0x460] sm:$0xff]
    %v378 = vld [vmem:[#allocation2 + $0x468] sm:$0xff]
    %v379 = vld [vmem:[#allocation2 + $0x470] sm:$0xff]
    %v380 = vld [vmem:[#allocation2 + $0x478] sm:$0xff]
    %v381 = vld [vmem:[#allocation2 + $0x480] sm:$0xff]
    %v382 = vld [vmem:[#allocation2 + $0x488] sm:$0xff]
    %v383 = vld [vmem:[#allocation2 + $0x490] sm:$0xff]
    %v384 = vld [vmem:[#allocation2 + $0x498] sm:$0xff]
    %v385 = vld [vmem:[#allocation2 + $0x4a0] sm:$0xff]
    %v386 = vld [vmem:[#allocation2 + $0x4a8] sm:$0xff]
    %v387 = vld [vmem:[#allocation2 + $0x4b0] sm:$0xff]
    %v388 = vld [vmem:[#allocation2 + $0x4b8] sm:$0xff]
    %v389 = vld [vmem:[#allocation2 + $0x4c0] sm:$0xff]
    %v390 = vld [vmem:[#allocation2 + $0x4c8] sm:$0xff]
    %v391 = vld [vmem:[#allocation2 + $0x4d0] sm:$0xff]
    %v392 = vld [vmem:[#allocation2 + $0x4d8] sm:$0xff]
    %v393 = vld [vmem:[#allocation2 + $0x4e0] sm:$0xff]
    %v394 = vld [vmem:[#allocation2 + $0x4e8] sm:$0xff]
    %v395 = vld [vmem:[#allocation2 + $0x4f0] sm:$0xff]
    %v396 = vld [vmem:[#allocation2 + $0x4f8] sm:$0xff]
    %v397 = vld [vmem:[#allocation2 + $0x500] sm:$0xff]
    %v398 = vld [vmem:[#allocation2 + $0x508] sm:$0xff]
    %v399 = vld [vmem:[#allocation2 + $0x510] sm:$0xff]
    %v400 = vld [vmem:[#allocation2 + $0x518] sm:$0xff]
    %v401 = vld [vmem:[#allocation2 + $0x520] sm:$0xff]
    %v402 = vld [vmem:[#allocation2 + $0x528] sm:$0xff]
    %v403 = vld [vmem:[#allocation2 + $0x530] sm:$0xff]
    %v404 = vld [vmem:[#allocation2 + $0x538] sm:$0xff]
    %v405 = vld [vmem:[#allocation2 + $0x540] sm:$0xff]
    %v406 = vld [vmem:[#allocation2 + $0x548] sm:$0xff]
    %v407 = vld [vmem:[#allocation2 + $0x550] sm:$0xff]
    %v408 = vld [vmem:[#allocation2 + $0x558] sm:$0xff]
    %v409 = vld [vmem:[#allocation2 + $0x560] sm:$0xff]
    %v410 = vld [vmem:[#allocation2 + $0x568] sm:$0xff]
    %v411 = vld [vmem:[#allocation2 + $0x570] sm:$0xff]
    %v412 = vld [vmem:[#allocation2 + $0x578] sm:$0xff]
    %v413 = vld [vmem:[#allocation2 + $0x580] sm:$0xff]
    %v414 = vld [vmem:[#allocation2 + $0x588] sm:$0xff]
    %v415 = vld [vmem:[#allocation2 + $0x590] sm:$0xff]
    %v416 = vld [vmem:[#allocation2 + $0x598] sm:$0xff]
    %v417 = vld [vmem:[#allocation2 + $0x5a0] sm:$0xff]
    %v418 = vld [vmem:[#allocation2 + $0x5a8] sm:$0xff]
    %v419 = vld [vmem:[#allocation2 + $0x5b0] sm:$0xff]
    %v420 = vld [vmem:[#allocation2 + $0x5b8] sm:$0xff]
    %v421 = vld [vmem:[#allocation2 + $0x5c0] sm:$0xff]
    %v422 = vld [vmem:[#allocation2 + $0x5c8] sm:$0xff]
    %v423 = vld [vmem:[#allocation2 + $0x5d0] sm:$0xff]
    %v424 = vld [vmem:[#allocation2 + $0x5d8] sm:$0xff]
    %v425 = vld [vmem:[#allocation2 + $0x5e0] sm:$0xff]
    %v426 = vld [vmem:[#allocation2 + $0x5e8] sm:$0xff]
    %v427 = vld [vmem:[#allocation2 + $0x5f0] sm:$0xff]
    %v428 = vld [vmem:[#allocation2 + $0x5f8] sm:$0xff]
    %v429 = vld [vmem:[#allocation2 + $0x600] sm:$0xff]
    %v430 = vld [vmem:[#allocation2 + $0x608] sm:$0xff]
    %v431 = vld [vmem:[#allocation2 + $0x610] sm:$0xff]
    %v432 = vld [vmem:[#allocation2 + $0x618] sm:$0xff]
    %v433 = vld [vmem:[#allocation2 + $0x620] sm:$0xff]
    %v434 = vld [vmem:[#allocation2 + $0x628] sm:$0xff]
    %v435 = vld [vmem:[#allocation2 + $0x630] sm:$0xff]
    %v436 = vld [vmem:[#allocation2 + $0x638] sm:$0xff]
    %v437 = vld [vmem:[#allocation2 + $0x640] sm:$0xff]
    %v438 = vld [vmem:[#allocation2 + $0x648] sm:$0xff]
    %v439 = vld [vmem:[#allocation2 + $0x650] sm:$0xff]
    %v440 = vld [vmem:[#allocation2 + $0x658] sm:$0xff]
    %v441 = vld [vmem:[#allocation2 + $0x660] sm:$0xff]
    %v442 = vld [vmem:[#allocation2 + $0x668] sm:$0xff]
    %v443 = vld [vmem:[#allocation2 + $0x670] sm:$0xff]
    %v444 = vld [vmem:[#allocation2 + $0x678] sm:$0xff]
    %v445 = vld [vmem:[#allocation2 + $0x680] sm:$0xff]
    %v446 = vld [vmem:[#allocation2 + $0x688] sm:$0xff]
    %v447 = vld [vmem:[#allocation2 + $0x690] sm:$0xff]
    %v448 = vld [vmem:[#allocation2 + $0x698] sm:$0xff]
    %v449 = vld [vmem:[#allocation2 + $0x6a0] sm:$0xff]
    %v450 = vld [vmem:[#allocation2 + $0x6a8] sm:$0xff]
    %v451 = vld [vmem:[#allocation2 + $0x6b0] sm:$0xff]
    %v452 = vld [vmem:[#allocation2 + $0x6b8] sm:$0xff]
    %v453 = vld [vmem:[#allocation2 + $0x6c0] sm:$0xff]
    %v454 = vld [vmem:[#allocation2 + $0x6c8] sm:$0xff]
    %v455 = vld [vmem:[#allocation2 + $0x6d0] sm:$0xff]
    %v456 = vld [vmem:[#allocation2 + $0x6d8] sm:$0xff]
    %v457 = vld [vmem:[#allocation2 + $0x6e0] sm:$0xff]
    %v458 = vld [vmem:[#allocation2 + $0x6e8] sm:$0xff]
    %v459 = vld [vmem:[#allocation2 + $0x6f0] sm:$0xff]
    %v460 = vld [vmem:[#allocation2 + $0x6f8] sm:$0xff]
    %v461 = vld [vmem:[#allocation2 + $0x700] sm:$0xff]
    %v462 = vld [vmem:[#allocation2 + $0x708] sm:$0xff]
    %v463 = vld [vmem:[#allocation2 + $0x710] sm:$0xff]
    %v464 = vld [vmem:[#allocation2 + $0x718] sm:$0xff]
    %v465 = vld [vmem:[#allocation2 + $0x720] sm:$0xff]
    %v466 = vld [vmem:[#allocation2 + $0x728] sm:$0xff]
    %v467 = vld [vmem:[#allocation2 + $0x730] sm:$0xff]
    %v468 = vld [vmem:[#allocation2 + $0x738] sm:$0xff]
    %v469 = vld [vmem:[#allocation2 + $0x740] sm:$0xff]
    %v470 = vld [vmem:[#allocation2 + $0x748] sm:$0xff]
    %v471 = vld [vmem:[#allocation2 + $0x750] sm:$0xff]
    %v472 = vld [vmem:[#allocation2 + $0x758] sm:$0xff]
    %v473 = vld [vmem:[#allocation2 + $0x760] sm:$0xff]
    %v474 = vld [vmem:[#allocation2 + $0x768] sm:$0xff]
    %v475 = vld [vmem:[#allocation2 + $0x770] sm:$0xff]
    %v476 = vld [vmem:[#allocation2 + $0x778] sm:$0xff]
    %v477 = vld [vmem:[#allocation2 + $0x780] sm:$0xff]
    %v478 = vld [vmem:[#allocation2 + $0x788] sm:$0xff]
    %v479 = vld [vmem:[#allocation2 + $0x790] sm:$0xff]
    %v480 = vld [vmem:[#allocation2 + $0x798] sm:$0xff]
    %v481 = vld [vmem:[#allocation2 + $0x7a0] sm:$0xff]
    %v482 = vld [vmem:[#allocation2 + $0x7a8] sm:$0xff]
    %v483 = vld [vmem:[#allocation2 + $0x7b0] sm:$0xff]
    %v484 = vld [vmem:[#allocation2 + $0x7b8] sm:$0xff]
    %v485 = vld [vmem:[#allocation2 + $0x7c0] sm:$0xff]
    %v486 = vld [vmem:[#allocation2 + $0x7c8] sm:$0xff]
    %v487 = vld [vmem:[#allocation2 + $0x7d0] sm:$0xff]
    %v488 = vld [vmem:[#allocation2 + $0x7d8] sm:$0xff]
    %v489 = vld [vmem:[#allocation2 + $0x7e0] sm:$0xff]
    %v490 = vld [vmem:[#allocation2 + $0x7e8] sm:$0xff]
    %v491 = vld [vmem:[#allocation2 + $0x7f0] sm:$0xff]
    %v492 = vld [vmem:[#allocation2 + $0x7f8] sm:$0xff]
    %v493 = vld [vmem:[#allocation2 + $0x800] sm:$0xff]
    %v494 = vld [vmem:[#allocation2 + $0x808] sm:$0xff]
    %v495 = vld [vmem:[#allocation2 + $0x810] sm:$0xff]
    %v496 = vld [vmem:[#allocation2 + $0x818] sm:$0xff]
    %v497 = vld [vmem:[#allocation2 + $0x820] sm:$0xff]
    %v498 = vld [vmem:[#allocation2 + $0x828] sm:$0xff]
    %v499 = vld [vmem:[#allocation2 + $0x830] sm:$0xff]
    %v500 = vld [vmem:[#allocation2 + $0x838] sm:$0xff]
    %v501 = vld [vmem:[#allocation2 + $0x840] sm:$0xff]
    %v502 = vld [vmem:[#allocation2 + $0x848] sm:$0xff]
    %v503 = vld [vmem:[#allocation2 + $0x850] sm:$0xff]
    %v504 = vld [vmem:[#allocation2 + $0x858] sm:$0xff]
    %v505 = vld [vmem:[#allocation2 + $0x860] sm:$0xff]
    %v506 = vld [vmem:[#allocation2 + $0x868] sm:$0xff]
    %v507 = vld [vmem:[#allocation2 + $0x870] sm:$0xff]
    %v508 = vld [vmem:[#allocation2 + $0x878] sm:$0xff]
    %v509 = vld [vmem:[#allocation2 + $0x880] sm:$0xff]
    %v510 = vld [vmem:[#allocation2 + $0x888] sm:$0xff]
    %v511 = vld [vmem:[#allocation2 + $0x890] sm:$0xff]
    %v512 = vld [vmem:[#allocation2 + $0x898] sm:$0xff]
    %v513 = vld [vmem:[#allocation2 + $0x8a0] sm:$0xff]
    %v514 = vld [vmem:[#allocation2 + $0x8a8] sm:$0xff]
    %v515 = vld [vmem:[#allocation2 + $0x8b0] sm:$0xff]
    %v516 = vld [vmem:[#allocation2 + $0x8b8] sm:$0xff]
    %v517 = vld [vmem:[#allocation2 + $0x8c0] sm:$0xff]
    %v518 = vld [vmem:[#allocation2 + $0x8c8] sm:$0xff]
    %v519 = vld [vmem:[#allocation2 + $0x8d0] sm:$0xff]
    %v520 = vld [vmem:[#allocation2 + $0x8d8] sm:$0xff]
    %v521 = vld [vmem:[#allocation2 + $0x8e0] sm:$0xff]
    %v522 = vld [vmem:[#allocation2 + $0x8e8] sm:$0xff]
    %v523 = vld [vmem:[#allocation2 + $0x8f0] sm:$0xff]
    %v524 = vld [vmem:[#allocation2 + $0x8f8] sm:$0xff]
    %v525 = vld [vmem:[#allocation2 + $0x900] sm:$0xff]
    %v526 = vld [vmem:[#allocation2 + $0x908] sm:$0xff]
    %v527 = vld [vmem:[#allocation2 + $0x910] sm:$0xff]
    %v528 = vld [vmem:[#allocation2 + $0x918] sm:$0xff]
    %v529 = vld [vmem:[#allocation2 + $0x920] sm:$0xff]
    %v530 = vld [vmem:[#allocation2 + $0x928] sm:$0xff]
    %v531 = vld [vmem:[#allocation2 + $0x930] sm:$0xff]
    %v532 = vld [vmem:[#allocation2 + $0x938] sm:$0xff]
    %v533 = vld [vmem:[#allocation2 + $0x940] sm:$0xff]
    %v534 = vld [vmem:[#allocation2 + $0x948] sm:$0xff]
    %v535 = vld [vmem:[#allocation2 + $0x950] sm:$0xff]
    %v536 = vld [vmem:[#allocation2 + $0x958] sm:$0xff]
    %v537 = vld [vmem:[#allocation2 + $0x960] sm:$0xff]
    %v538 = vld [vmem:[#allocation2 + $0x968] sm:$0xff]
    %v539 = vld [vmem:[#allocation2 + $0x970] sm:$0xff]
    %v540 = vld [vmem:[#allocation2 + $0x978] sm:$0xff]
    %v541 = vld [vmem:[#allocation2 + $0x980] sm:$0xff]
    %v542 = vld [vmem:[#allocation2 + $0x988] sm:$0xff]
    %v543 = vld [vmem:[#allocation2 + $0x990] sm:$0xff]
    %v544 = vld [vmem:[#allocation2 + $0x998] sm:$0xff]
    %v545 = vld [vmem:[#allocation2 + $0x9a0] sm:$0xff]
    %v546 = vld [vmem:[#allocation2 + $0x9a8] sm:$0xff]
    %v547 = vld [vmem:[#allocation2 + $0x9b0] sm:$0xff]
    %v548 = vld [vmem:[#allocation2 + $0x9b8] sm:$0xff]
    %v549 = vld [vmem:[#allocation2 + $0x9c0] sm:$0xff]
    %v550 = vld [vmem:[#allocation2 + $0x9c8] sm:$0xff]
    %v551 = vld [vmem:[#allocation2 + $0x9d0] sm:$0xff]
    %v552 = vld [vmem:[#allocation2 + $0x9d8] sm:$0xff]
    %v553 = vld [vmem:[#allocation2 + $0x9e0] sm:$0xff]
    %v554 = vld [vmem:[#allocation2 + $0x9e8] sm:$0xff]
    %v555 = vld [vmem:[#allocation2 + $0x9f0] sm:$0xff]
    %v556 = vld [vmem:[#allocation2 + $0x9f8] sm:$0xff]
    %v557 = vld [vmem:[#allocation2 + $0xa00] sm:$0xff]
    %v558 = vld [vmem:[#allocation2 + $0xa08] sm:$0xff]
    %v559 = vld [vmem:[#allocation2 + $0xa10] sm:$0xff]
    %v560 = vld [vmem:[#allocation2 + $0xa18] sm:$0xff]
    %v561 = vld [vmem:[#allocation2 + $0xa20] sm:$0xff]
    %v562 = vld [vmem:[#allocation2 + $0xa28] sm:$0xff]
    %v563 = vld [vmem:[#allocation2 + $0xa30] sm:$0xff]
    %v564 = vld [vmem:[#allocation2 + $0xa38] sm:$0xff]
    %v565 = vld [vmem:[#allocation2 + $0xa40] sm:$0xff]
    %v566 = vld [vmem:[#allocation2 + $0xa48] sm:$0xff]
    %v567 = vld [vmem:[#allocation2 + $0xa50] sm:$0xff]
    %v568 = vld [vmem:[#allocation2 + $0xa58] sm:$0xff]
    %v569 = vld [vmem:[#allocation2 + $0xa60] sm:$0xff]
    %v570 = vld [vmem:[#allocation2 + $0xa68] sm:$0xff]
    %v571 = vld [vmem:[#allocation2 + $0xa70] sm:$0xff]
    %v572 = vld [vmem:[#allocation2 + $0xa78] sm:$0xff]
    %v573 = vld [vmem:[#allocation2 + $0xa80] sm:$0xff]
    %v574 = vld [vmem:[#allocation2 + $0xa88] sm:$0xff]
    %v575 = vld [vmem:[#allocation2 + $0xa90] sm:$0xff]
    %v576 = vld [vmem:[#allocation2 + $0xa98] sm:$0xff]
    %v577 = vld [vmem:[#allocation2 + $0xaa0] sm:$0xff]
    %v578 = vld [vmem:[#allocation2 + $0xaa8] sm:$0xff]
    %v579 = vld [vmem:[#allocation2 + $0xab0] sm:$0xff]
    %v580 = vld [vmem:[#allocation2 + $0xab8] sm:$0xff]
    %v581 = vld [vmem:[#allocation2 + $0xac0] sm:$0xff]
    %v582 = vld [vmem:[#allocation2 + $0xac8] sm:$0xff]
    %v583 = vld [vmem:[#allocation2 + $0xad0] sm:$0xff]
    %v584 = vld [vmem:[#allocation2 + $0xad8] sm:$0xff]
    %v585 = vld [vmem:[#allocation2 + $0xae0] sm:$0xff]
    %v586 = vld [vmem:[#allocation2 + $0xae8] sm:$0xff]
    %v587 = vld [vmem:[#allocation2 + $0xaf0] sm:$0xff]
    %v588 = vld [vmem:[#allocation2 + $0xaf8] sm:$0xff]
    %v589 = vld [vmem:[#allocation2 + $0xb00] sm:$0xff]
    %v590 = vld [vmem:[#allocation2 + $0xb08] sm:$0xff]
    %v591 = vld [vmem:[#allocation2 + $0xb10] sm:$0xff]
    %v592 = vld [vmem:[#allocation2 + $0xb18] sm:$0xff]
    %v593 = vld [vmem:[#allocation2 + $0xb20] sm:$0xff]
    %v594 = vld [vmem:[#allocation2 + $0xb28] sm:$0xff]
    %v595 = vld [vmem:[#allocation2 + $0xb30] sm:$0xff]
    %v596 = vld [vmem:[#allocation2 + $0xb38] sm:$0xff]
    %v597 = vld [vmem:[#allocation2 + $0xb40] sm:$0xff]
    %v598 = vld [vmem:[#allocation2 + $0xb48] sm:$0xff]
    %v599 = vld [vmem:[#allocation2 + $0xb50] sm:$0xff]
    %v600 = vld [vmem:[#allocation2 + $0xb58] sm:$0xff]
    %v601 = vld [vmem:[#allocation2 + $0xb60] sm:$0xff]
    %v602 = vld [vmem:[#allocation2 + $0xb68] sm:$0xff]
    %v603 = vld [vmem:[#allocation2 + $0xb70] sm:$0xff]
    %v604 = vld [vmem:[#allocation2 + $0xb78] sm:$0xff]
    %v605 = vld [vmem:[#allocation2 + $0xb80] sm:$0xff]
    %v606 = vld [vmem:[#allocation2 + $0xb88] sm:$0xff]
    %v607 = vld [vmem:[#allocation2 + $0xb90] sm:$0xff]
    %v608 = vld [vmem:[#allocation2 + $0xb98] sm:$0xff]
    %v609 = vld [vmem:[#allocation2 + $0xba0] sm:$0xff]
    %v610 = vld [vmem:[#allocation2 + $0xba8] sm:$0xff]
    %v611 = vld [vmem:[#allocation2 + $0xbb0] sm:$0xff]
    %v612 = vld [vmem:[#allocation2 + $0xbb8] sm:$0xff]
    %v613 = vld [vmem:[#allocation2 + $0xbc0] sm:$0xff]
    %v614 = vld [vmem:[#allocation2 + $0xbc8] sm:$0xff]
    %v615 = vld [vmem:[#allocation2 + $0xbd0] sm:$0xff]
    %v616 = vld [vmem:[#allocation2 + $0xbd8] sm:$0xff]
    %v617 = vld [vmem:[#allocation2 + $0xbe0] sm:$0xff]
    %v618 = vld [vmem:[#allocation2 + $0xbe8] sm:$0xff]
    %v619 = vld [vmem:[#allocation2 + $0xbf0] sm:$0xff]
    %v620 = vld [vmem:[#allocation2 + $0xbf8] sm:$0xff]
    %v621 = vld [vmem:[#allocation2 + $0xc00] sm:$0xff]
    %v622 = vld [vmem:[#allocation2 + $0xc08] sm:$0xff]
    %v623 = vld [vmem:[#allocation2 + $0xc10] sm:$0xff]
    %v624 = vld [vmem:[#allocation2 + $0xc18] sm:$0xff]
    %v625 = vld [vmem:[#allocation2 + $0xc20] sm:$0xff]
    %v626 = vld [vmem:[#allocation2 + $0xc28] sm:$0xff]
    %v627 = vld [vmem:[#allocation2 + $0xc30] sm:$0xff]
    %v628 = vld [vmem:[#allocation2 + $0xc38] sm:$0xff]
    %v629 = vld [vmem:[#allocation2 + $0xc40] sm:$0xff]
    %v630 = vld [vmem:[#allocation2 + $0xc48] sm:$0xff]
    %v631 = vld [vmem:[#allocation2 + $0xc50] sm:$0xff]
    %v632 = vld [vmem:[#allocation2 + $0xc58] sm:$0xff]
    %v633 = vld [vmem:[#allocation2 + $0xc60] sm:$0xff]
    %v634 = vld [vmem:[#allocation2 + $0xc68] sm:$0xff]
    %v635 = vld [vmem:[#allocation2 + $0xc70] sm:$0xff]
    %v636 = vld [vmem:[#allocation2 + $0xc78] sm:$0xff]
    %v637 = vld [vmem:[#allocation2 + $0xc80] sm:$0xff]
    %v638 = vld [vmem:[#allocation2 + $0xc88] sm:$0xff]
    %v639 = vld [vmem:[#allocation2 + $0xc90] sm:$0xff]
    %v640 = vld [vmem:[#allocation2 + $0xc98] sm:$0xff]
    %v641 = vld [vmem:[#allocation2 + $0xca0] sm:$0xff]
    %v642 = vld [vmem:[#allocation2 + $0xca8] sm:$0xff]
    %v643 = vld [vmem:[#allocation2 + $0xcb0] sm:$0xff]
    %v644 = vld [vmem:[#allocation2 + $0xcb8] sm:$0xff]
    %v645 = vld [vmem:[#allocation2 + $0xcc0] sm:$0xff]
    %v646 = vld [vmem:[#allocation2 + $0xcc8] sm:$0xff]
    %v647 = vld [vmem:[#allocation2 + $0xcd0] sm:$0xff]
    %v648 = vld [vmem:[#allocation2 + $0xcd8] sm:$0xff]
    %v649 = vld [vmem:[#allocation2 + $0xce0] sm:$0xff]
    %v650 = vld [vmem:[#allocation2 + $0xce8] sm:$0xff]
    %v651 = vld [vmem:[#allocation2 + $0xcf0] sm:$0xff]
    %v652 = vld [vmem:[#allocation2 + $0xcf8] sm:$0xff]
    %v653 = vld [vmem:[#allocation2 + $0xd00] sm:$0xff]
    %v654 = vld [vmem:[#allocation2 + $0xd08] sm:$0xff]
    %v655 = vld [vmem:[#allocation2 + $0xd10] sm:$0xff]
    %v656 = vld [vmem:[#allocation2 + $0xd18] sm:$0xff]
    %v657 = vld [vmem:[#allocation2 + $0xd20] sm:$0xff]
    %v658 = vld [vmem:[#allocation2 + $0xd28] sm:$0xff]
    %v659 = vld [vmem:[#allocation2 + $0xd30] sm:$0xff]
    %v660 = vld [vmem:[#allocation2 + $0xd38] sm:$0xff]
    %v661 = vld [vmem:[#allocation2 + $0xd40] sm:$0xff]
    %v662 = vld [vmem:[#allocation2 + $0xd48] sm:$0xff]
    %v663 = vld [vmem:[#allocation2 + $0xd50] sm:$0xff]
    %v664 = vld [vmem:[#allocation2 + $0xd58] sm:$0xff]
    %v665 = vld [vmem:[#allocation2 + $0xd60] sm:$0xff]
    %v666 = vld [vmem:[#allocation2 + $0xd68] sm:$0xff]
    %v667 = vld [vmem:[#allocation2 + $0xd70] sm:$0xff]
    %v668 = vld [vmem:[#allocation2 + $0xd78] sm:$0xff]
    %v669 = vld [vmem:[#allocation2 + $0xd80] sm:$0xff]
    %v670 = vld [vmem:[#allocation2 + $0xd88] sm:$0xff]
    %v671 = vld [vmem:[#allocation2 + $0xd90] sm:$0xff]
    %v672 = vld [vmem:[#allocation2 + $0xd98] sm:$0xff]
    %v673 = vld [vmem:[#allocation2 + $0xda0] sm:$0xff]
    %v674 = vld [vmem:[#allocation2 + $0xda8] sm:$0xff]
    %v675 = vld [vmem:[#allocation2 + $0xdb0] sm:$0xff]
    %v676 = vld [vmem:[#allocation2 + $0xdb8] sm:$0xff]
    %v677 = vld [vmem:[#allocation2 + $0xdc0] sm:$0xff]
    %v678 = vld [vmem:[#allocation2 + $0xdc8] sm:$0xff]
    %v679 = vld [vmem:[#allocation2 + $0xdd0] sm:$0xff]
    %v680 = vld [vmem:[#allocation2 + $0xdd8] sm:$0xff]
    %v681 = vld [vmem:[#allocation2 + $0xde0] sm:$0xff]
    %v682 = vld [vmem:[#allocation2 + $0xde8] sm:$0xff]
    %v683 = vld [vmem:[#allocation2 + $0xdf0] sm:$0xff]
    %v684 = vld [vmem:[#allocation2 + $0xdf8] sm:$0xff]
    %v685 = vld [vmem:[#allocation2 + $0xe00] sm:$0xff]
    %v686 = vld [vmem:[#allocation2 + $0xe08] sm:$0xff]
    %v687 = vld [vmem:[#allocation2 + $0xe10] sm:$0xff]
    %v688 = vld [vmem:[#allocation2 + $0xe18] sm:$0xff]
    %v689 = vld [vmem:[#allocation2 + $0xe20] sm:$0xff]
    %v690 = vld [vmem:[#allocation2 + $0xe28] sm:$0xff]
    %v691 = vld [vmem:[#allocation2 + $0xe30] sm:$0xff]
    %v692 = vld [vmem:[#allocation2 + $0xe38] sm:$0xff]
    %v693 = vld [vmem:[#allocation2 + $0xe40] sm:$0xff]
    %v694 = vld [vmem:[#allocation2 + $0xe48] sm:$0xff]
    %v695 = vld [vmem:[#allocation2 + $0xe50] sm:$0xff]
    %v696 = vld [vmem:[#allocation2 + $0xe58] sm:$0xff]
    %v697 = vld [vmem:[#allocation2 + $0xe60] sm:$0xff]
    %v698 = vld [vmem:[#allocation2 + $0xe68] sm:$0xff]
    %v699 = vld [vmem:[#allocation2 + $0xe70] sm:$0xff]
    %v700 = vld [vmem:[#allocation2 + $0xe78] sm:$0xff]
    %v701 = vld [vmem:[#allocation2 + $0xe80] sm:$0xff]
    %v702 = vld [vmem:[#allocation2 + $0xe88] sm:$0xff]
    %v703 = vld [vmem:[#allocation2 + $0xe90] sm:$0xff]
    %v704 = vld [vmem:[#allocation2 + $0xe98] sm:$0xff]
    %v705 = vld [vmem:[#allocation2 + $0xea0] sm:$0xff]
    %v706 = vld [vmem:[#allocation2 + $0xea8] sm:$0xff]
    %v707 = vld [vmem:[#allocation2 + $0xeb0] sm:$0xff]
    %v708 = vld [vmem:[#allocation2 + $0xeb8] sm:$0xff]
    %v709 = vld [vmem:[#allocation2 + $0xec0] sm:$0xff]
    %v710 = vld [vmem:[#allocation2 + $0xec8] sm:$0xff]
    %v711 = vld [vmem:[#allocation2 + $0xed0] sm:$0xff]
    %v712 = vld [vmem:[#allocation2 + $0xed8] sm:$0xff]
    %v713 = vld [vmem:[#allocation2 + $0xee0] sm:$0xff]
    %v714 = vld [vmem:[#allocation2 + $0xee8] sm:$0xff]
    %v715 = vld [vmem:[#allocation2 + $0xef0] sm:$0xff]
    %v716 = vld [vmem:[#allocation2 + $0xef8] sm:$0xff]
    %v717 = vld [vmem:[#allocation2 + $0xf00] sm:$0xff]
    %v718 = vld [vmem:[#allocation2 + $0xf08] sm:$0xff]
    %v719 = vld [vmem:[#allocation2 + $0xf10] sm:$0xff]
    %v720 = vld [vmem:[#allocation2 + $0xf18] sm:$0xff]
    %v721 = vld [vmem:[#allocation2 + $0xf20] sm:$0xff]
    %v722 = vld [vmem:[#allocation2 + $0xf28] sm:$0xff]
    %v723 = vld [vmem:[#allocation2 + $0xf30] sm:$0xff]
    %v724 = vld [vmem:[#allocation2 + $0xf38] sm:$0xff]
    %v725 = vld [vmem:[#allocation2 + $0xf40] sm:$0xff]
    %v726 = vld [vmem:[#allocation2 + $0xf48] sm:$0xff]
    %v727 = vld [vmem:[#allocation2 + $0xf50] sm:$0xff]
    %v728 = vld [vmem:[#allocation2 + $0xf58] sm:$0xff]
    %v729 = vld [vmem:[#allocation2 + $0xf60] sm:$0xff]
    %v730 = vld [vmem:[#allocation2 + $0xf68] sm:$0xff]
    %v731 = vld [vmem:[#allocation2 + $0xf70] sm:$0xff]
    %v732 = vld [vmem:[#allocation2 + $0xf78] sm:$0xff]
    %v733 = vld [vmem:[#allocation2 + $0xf80] sm:$0xff]
    %v734 = vld [vmem:[#allocation2 + $0xf88] sm:$0xff]
    %v735 = vld [vmem:[#allocation2 + $0xf90] sm:$0xff]
    %v736 = vld [vmem:[#allocation2 + $0xf98] sm:$0xff]
    %v737 = vld [vmem:[#allocation2 + $0xfa0] sm:$0xff]
    %v738 = vld [vmem:[#allocation2 + $0xfa8] sm:$0xff]
    %v739 = vld [vmem:[#allocation2 + $0xfb0] sm:$0xff]
    %v740 = vld [vmem:[#allocation2 + $0xfb8] sm:$0xff]
    %v741 = vld [vmem:[#allocation2 + $0xfc0] sm:$0xff]
    %v742 = vld [vmem:[#allocation2 + $0xfc8] sm:$0xff]
    %v743 = vld [vmem:[#allocation2 + $0xfd0] sm:$0xff]
    %v744 = vld [vmem:[#allocation2 + $0xfd8] sm:$0xff]
    %v745 = vld [vmem:[#allocation2 + $0xfe0] sm:$0xff]
    %v746 = vld [vmem:[#allocation2 + $0xfe8] sm:$0xff]
    %v747 = vld [vmem:[#allocation2 + $0xff0] sm:$0xff]
    %v748 = vld [vmem:[#allocation2 + $0xff8] sm:$0xff]
    %v749 = vld [vmem:[#allocation2 + $0x1000] sm:$0xff]
    %v750 = vld [vmem:[#allocation2 + $0x1008] sm:$0xff]
    %v751 = vld [vmem:[#allocation2 + $0x1010] sm:$0xff]
    %v752 = vld [vmem:[#allocation2 + $0x1018] sm:$0xff]
    %v753 = vld [vmem:[#allocation2 + $0x1020] sm:$0xff]
    %v754 = vld [vmem:[#allocation2 + $0x1028] sm:$0xff]
    %v755 = vld [vmem:[#allocation2 + $0x1030] sm:$0xff]
    %v756 = vld [vmem:[#allocation2 + $0x1038] sm:$0xff]
    %v757 = vld [vmem:[#allocation2 + $0x1040] sm:$0xff]
    %v758 = vld [vmem:[#allocation2 + $0x1048] sm:$0xff]
    %v759 = vld [vmem:[#allocation2 + $0x1050] sm:$0xff]
    %v760 = vld [vmem:[#allocation2 + $0x1058] sm:$0xff]
    %v761 = vld [vmem:[#allocation2 + $0x1060] sm:$0xff]
    %v762 = vld [vmem:[#allocation2 + $0x1068] sm:$0xff]
    %v763 = vld [vmem:[#allocation2 + $0x1070] sm:$0xff]
    %v764 = vld [vmem:[#allocation2 + $0x1078] sm:$0xff]
    %v765 = vld [vmem:[#allocation2 + $0x1080] sm:$0xff]
    %v766 = vld [vmem:[#allocation2 + $0x1088] sm:$0xff]
    %v767 = vld [vmem:[#allocation2 + $0x1090] sm:$0xff]
    %v768 = vld [vmem:[#allocation2 + $0x1098] sm:$0xff]
    %v769 = vld [vmem:[#allocation2 + $0x10a0] sm:$0xff]
    %v770 = vld [vmem:[#allocation2 + $0x10a8] sm:$0xff]
    %v771 = vld [vmem:[#allocation2 + $0x10b0] sm:$0xff]
    %v772 = vld [vmem:[#allocation2 + $0x10b8] sm:$0xff]
    %v773 = vld [vmem:[#allocation2 + $0x10c0] sm:$0xff]
    %v774 = vld [vmem:[#allocation2 + $0x10c8] sm:$0xff]
    %v775 = vld [vmem:[#allocation2 + $0x10d0] sm:$0xff]
    %v776 = vld [vmem:[#allocation2 + $0x10d8] sm:$0xff]
    %v777 = vld [vmem:[#allocation2 + $0x10e0] sm:$0xff]
    %v778 = vld [vmem:[#allocation2 + $0x10e8] sm:$0xff]
    %v779 = vld [vmem:[#allocation2 + $0x10f0] sm:$0xff]
    %v780 = vld [vmem:[#allocation2 + $0x10f8] sm:$0xff]
    %v781 = vld [vmem:[#allocation2 + $0x1100] sm:$0xff]
    %v782 = vld [vmem:[#allocation2 + $0x1108] sm:$0xff]
    %v783 = vld [vmem:[#allocation2 + $0x1110] sm:$0xff]
    %v784 = vld [vmem:[#allocation2 + $0x1118] sm:$0xff]
    %v785 = vld [vmem:[#allocation2 + $0x1120] sm:$0xff]
    %v786 = vld [vmem:[#allocation2 + $0x1128] sm:$0xff]
    %v787 = vld [vmem:[#allocation2 + $0x1130] sm:$0xff]
    %v788 = vld [vmem:[#allocation2 + $0x1138] sm:$0xff]
    %v789 = vld [vmem:[#allocation2 + $0x1140] sm:$0xff]
    %v790 = vld [vmem:[#allocation2 + $0x1148] sm:$0xff]
    %v791 = vld [vmem:[#allocation2 + $0x1150] sm:$0xff]
    %v792 = vld [vmem:[#allocation2 + $0x1158] sm:$0xff]
    %v793 = vld [vmem:[#allocation2 + $0x1160] sm:$0xff]
    %v794 = vld [vmem:[#allocation2 + $0x1168] sm:$0xff]
    %v795 = vld [vmem:[#allocation2 + $0x1170] sm:$0xff]
    %v796 = vld [vmem:[#allocation2 + $0x1178] sm:$0xff]
    %v797 = vld [vmem:[#allocation2 + $0x1180] sm:$0xff]
    %v798 = vld [vmem:[#allocation2 + $0x1188] sm:$0xff]
    %v799 = vld [vmem:[#allocation2 + $0x1190] sm:$0xff]
    %v800 = vld [vmem:[#allocation2 + $0x1198] sm:$0xff]
    %v801 = vld [vmem:[#allocation2 + $0x11a0] sm:$0xff]
    %v802 = vld [vmem:[#allocation2 + $0x11a8] sm:$0xff]
    %v803 = vld [vmem:[#allocation2 + $0x11b0] sm:$0xff]
    %v804 = vld [vmem:[#allocation2 + $0x11b8] sm:$0xff]
    %v805 = vld [vmem:[#allocation2 + $0x11c0] sm:$0xff]
    %v806 = vld [vmem:[#allocation2 + $0x11c8] sm:$0xff]
    %v807 = vld [vmem:[#allocation2 + $0x11d0] sm:$0xff]
    %v808 = vld [vmem:[#allocation2 + $0x11d8] sm:$0xff]
    %v809 = vld [vmem:[#allocation2 + $0x11e0] sm:$0xff]
    %v810 = vld [vmem:[#allocation2 + $0x11e8] sm:$0xff]
    %v811 = vld [vmem:[#allocation2 + $0x11f0] sm:$0xff]
    %v812 = vld [vmem:[#allocation2 + $0x11f8] sm:$0xff]
    %v813 = vld [vmem:[#allocation2 + $0x1200] sm:$0xff]
    %v814 = vld [vmem:[#allocation2 + $0x1208] sm:$0xff]
    %v815 = vld [vmem:[#allocation2 + $0x1210] sm:$0xff]
    %v816 = vld [vmem:[#allocation2 + $0x1218] sm:$0xff]
    %v817 = vld [vmem:[#allocation2 + $0x1220] sm:$0xff]
    %v818 = vld [vmem:[#allocation2 + $0x1228] sm:$0xff]
    %v819 = vld [vmem:[#allocation2 + $0x1230] sm:$0xff]
    %v820 = vld [vmem:[#allocation2 + $0x1238] sm:$0xff]
    %v821 = vld [vmem:[#allocation2 + $0x1240] sm:$0xff]
    %v822 = vld [vmem:[#allocation2 + $0x1248] sm:$0xff]
    %v823 = vld [vmem:[#allocation2 + $0x1250] sm:$0xff]
    %v824 = vld [vmem:[#allocation2 + $0x1258] sm:$0xff]
    %v825 = vld [vmem:[#allocation2 + $0x1260] sm:$0xff]
    %v826 = vld [vmem:[#allocation2 + $0x1268] sm:$0xff]
    %v827 = vld [vmem:[#allocation2 + $0x1270] sm:$0xff]
    %v828 = vld [vmem:[#allocation2 + $0x1278] sm:$0xff]
    %v829 = vld [vmem:[#allocation2 + $0x1280] sm:$0xff]
    %v830 = vld [vmem:[#allocation2 + $0x1288] sm:$0xff]
    %v831 = vld [vmem:[#allocation2 + $0x1290] sm:$0xff]
    %v832 = vld [vmem:[#allocation2 + $0x1298] sm:$0xff]
    %v833 = vld [vmem:[#allocation2 + $0x12a0] sm:$0xff]
    %v834 = vld [vmem:[#allocation2 + $0x12a8] sm:$0xff]
    %v835 = vld [vmem:[#allocation2 + $0x12b0] sm:$0xff]
    %v836 = vld [vmem:[#allocation2 + $0x12b8] sm:$0xff]
    %v837 = vld [vmem:[#allocation2 + $0x12c0] sm:$0xff]
    %v838 = vld [vmem:[#allocation2 + $0x12c8] sm:$0xff]
    %v839 = vld [vmem:[#allocation2 + $0x12d0] sm:$0xff]
    %v840 = vld [vmem:[#allocation2 + $0x12d8] sm:$0xff]
    %v841 = vld [vmem:[#allocation2 + $0x12e0] sm:$0xff]
    %v842 = vld [vmem:[#allocation2 + $0x12e8] sm:$0xff]
    %v843 = vld [vmem:[#allocation2 + $0x12f0] sm:$0xff]
    %v844 = vld [vmem:[#allocation2 + $0x12f8] sm:$0xff]
    %v845 = vld [vmem:[#allocation2 + $0x1300] sm:$0xff]
    %v846 = vld [vmem:[#allocation2 + $0x1308] sm:$0xff]
    %v847 = vld [vmem:[#allocation2 + $0x1310] sm:$0xff]
    %v848 = vld [vmem:[#allocation2 + $0x1318] sm:$0xff]
    %v849 = vld [vmem:[#allocation2 + $0x1320] sm:$0xff]
    %v850 = vld [vmem:[#allocation2 + $0x1328] sm:$0xff]
    %v851 = vld [vmem:[#allocation2 + $0x1330] sm:$0xff]
    %v852 = vld [vmem:[#allocation2 + $0x1338] sm:$0xff]
    %v853 = vld [vmem:[#allocation2 + $0x1340] sm:$0xff]
    %v854 = vld [vmem:[#allocation2 + $0x1348] sm:$0xff]
    %v855 = vld [vmem:[#allocation2 + $0x1350] sm:$0xff]
    %v856 = vld [vmem:[#allocation2 + $0x1358] sm:$0xff]
    %v857 = vld [vmem:[#allocation2 + $0x1360] sm:$0xff]
    %v858 = vld [vmem:[#allocation2 + $0x1368] sm:$0xff]
    %v859 = vld [vmem:[#allocation2 + $0x1370] sm:$0xff]
    %v860 = vld [vmem:[#allocation2 + $0x1378] sm:$0xff]
    %v861 = vld [vmem:[#allocation2 + $0x1380] sm:$0xff]
    %v862 = vld [vmem:[#allocation2 + $0x1388] sm:$0xff]
    %v863 = vld [vmem:[#allocation2 + $0x1390] sm:$0xff]
    %v864 = vld [vmem:[#allocation2 + $0x1398] sm:$0xff]
    %v865 = vld [vmem:[#allocation2 + $0x13a0] sm:$0xff]
    %v866 = vld [vmem:[#allocation2 + $0x13a8] sm:$0xff]
    %v867 = vld [vmem:[#allocation2 + $0x13b0] sm:$0xff]
    %v868 = vld [vmem:[#allocation2 + $0x13b8] sm:$0xff]
    %v869 = vld [vmem:[#allocation2 + $0x13c0] sm:$0xff]
    %v870 = vld [vmem:[#allocation2 + $0x13c8] sm:$0xff]
    %v871 = vld [vmem:[#allocation2 + $0x13d0] sm:$0xff]
    %v872 = vld [vmem:[#allocation2 + $0x13d8] sm:$0xff]
    %v873 = vld [vmem:[#allocation2 + $0x13e0] sm:$0xff]
    %v874 = vld [vmem:[#allocation2 + $0x13e8] sm:$0xff]
    %v875 = vld [vmem:[#allocation2 + $0x13f0] sm:$0xff]
    %v876 = vld [vmem:[#allocation2 + $0x13f8] sm:$0xff]
    %v877 = vld [vmem:[#allocation2 + $0x1400] sm:$0xff]
    %v878 = vld [vmem:[#allocation2 + $0x1408] sm:$0xff]
    %v879 = vld [vmem:[#allocation2 + $0x1410] sm:$0xff]
    %v880 = vld [vmem:[#allocation2 + $0x1418] sm:$0xff]
    %v881 = vld [vmem:[#allocation2 + $0x1420] sm:$0xff]
    %v882 = vld [vmem:[#allocation2 + $0x1428] sm:$0xff]
    %v883 = vld [vmem:[#allocation2 + $0x1430] sm:$0xff]
    %v884 = vld [vmem:[#allocation2 + $0x1438] sm:$0xff]
    %v885 = vld [vmem:[#allocation2 + $0x1440] sm:$0xff]
    %v886 = vld [vmem:[#allocation2 + $0x1448] sm:$0xff]
    %v887 = vld [vmem:[#allocation2 + $0x1450] sm:$0xff]
    %v888 = vld [vmem:[#allocation2 + $0x1458] sm:$0xff]
    %v889 = vld [vmem:[#allocation2 + $0x1460] sm:$0xff]
    %v890 = vld [vmem:[#allocation2 + $0x1468] sm:$0xff]
    %v891 = vld [vmem:[#allocation2 + $0x1470] sm:$0xff]
    %v892 = vld [vmem:[#allocation2 + $0x1478] sm:$0xff]
    %v893 = vld [vmem:[#allocation2 + $0x1480] sm:$0xff]
    %v894 = vld [vmem:[#allocation2 + $0x1488] sm:$0xff]
    %v895 = vld [vmem:[#allocation2 + $0x1490] sm:$0xff]
    %v896 = vld [vmem:[#allocation2 + $0x1498] sm:$0xff]
    %v897 = vld [vmem:[#allocation2 + $0x14a0] sm:$0xff]
    %v898 = vld [vmem:[#allocation2 + $0x14a8] sm:$0xff]
    %v899 = vld [vmem:[#allocation2 + $0x14b0] sm:$0xff]
    %v900 = vld [vmem:[#allocation2 + $0x14b8] sm:$0xff]
    %v901 = vld [vmem:[#allocation2 + $0x14c0] sm:$0xff]
    %v902 = vld [vmem:[#allocation2 + $0x14c8] sm:$0xff]
    %v903 = vld [vmem:[#allocation2 + $0x14d0] sm:$0xff]
    %v904 = vld [vmem:[#allocation2 + $0x14d8] sm:$0xff]
    %v905 = vld [vmem:[#allocation2 + $0x14e0] sm:$0xff]
    %v906 = vld [vmem:[#allocation2 + $0x14e8] sm:$0xff]
    %v907 = vld [vmem:[#allocation2 + $0x14f0] sm:$0xff]
    %v908 = vld [vmem:[#allocation2 + $0x14f8] sm:$0xff]
    %v909 = vld [vmem:[#allocation2 + $0x1500] sm:$0xff]
    %v910 = vld [vmem:[#allocation2 + $0x1508] sm:$0xff]
    %v911 = vld [vmem:[#allocation2 + $0x1510] sm:$0xff]
    %v912 = vld [vmem:[#allocation2 + $0x1518] sm:$0xff]
    %v913 = vld [vmem:[#allocation2 + $0x1520] sm:$0xff]
    %v914 = vld [vmem:[#allocation2 + $0x1528] sm:$0xff]
    %v915 = vld [vmem:[#allocation2 + $0x1530] sm:$0xff]
    %v916 = vld [vmem:[#allocation2 + $0x1538] sm:$0xff]
    %v917 = vld [vmem:[#allocation2 + $0x1540] sm:$0xff]
    %v918 = vld [vmem:[#allocation2 + $0x1548] sm:$0xff]
    %v919 = vld [vmem:[#allocation2 + $0x1550] sm:$0xff]
    %v920 = vld [vmem:[#allocation2 + $0x1558] sm:$0xff]
    %v921 = vld [vmem:[#allocation2 + $0x1560] sm:$0xff]
    %v922 = vld [vmem:[#allocation2 + $0x1568] sm:$0xff]
    %v923 = vld [vmem:[#allocation2 + $0x1570] sm:$0xff]
    %v924 = vld [vmem:[#allocation2 + $0x1578] sm:$0xff]
    %v925 = vld [vmem:[#allocation2 + $0x1580] sm:$0xff]
    %v926 = vld [vmem:[#allocation2 + $0x1588] sm:$0xff]
    %v927 = vld [vmem:[#allocation2 + $0x1590] sm:$0xff]
    %v928 = vld [vmem:[#allocation2 + $0x1598] sm:$0xff]
    %v929 = vld [vmem:[#allocation2 + $0x15a0] sm:$0xff]
    %v930 = vld [vmem:[#allocation2 + $0x15a8] sm:$0xff]
    %v931 = vld [vmem:[#allocation2 + $0x15b0] sm:$0xff]
    %v932 = vld [vmem:[#allocation2 + $0x15b8] sm:$0xff]
    %v933 = vld [vmem:[#allocation2 + $0x15c0] sm:$0xff]
    %v934 = vld [vmem:[#allocation2 + $0x15c8] sm:$0xff]
    %v935 = vld [vmem:[#allocation2 + $0x15d0] sm:$0xff]
    %v936 = vld [vmem:[#allocation2 + $0x15d8] sm:$0xff]
    %v937 = vld [vmem:[#allocation2 + $0x15e0] sm:$0xff]
    %v938 = vld [vmem:[#allocation2 + $0x15e8] sm:$0xff]
    %v939 = vld [vmem:[#allocation2 + $0x15f0] sm:$0xff]
    %v940 = vld [vmem:[#allocation2 + $0x15f8] sm:$0xff]
    %v941 = vld [vmem:[#allocation2 + $0x1600] sm:$0xff]
    %v942 = vld [vmem:[#allocation2 + $0x1608] sm:$0xff]
    %v943 = vld [vmem:[#allocation2 + $0x1610] sm:$0xff]
    %v944 = vld [vmem:[#allocation2 + $0x1618] sm:$0xff]
    %v945 = vld [vmem:[#allocation2 + $0x1620] sm:$0xff]
    %v946 = vld [vmem:[#allocation2 + $0x1628] sm:$0xff]
    %v947 = vld [vmem:[#allocation2 + $0x1630] sm:$0xff]
    %v948 = vld [vmem:[#allocation2 + $0x1638] sm:$0xff]
    %v949 = vld [vmem:[#allocation2 + $0x1640] sm:$0xff]
    %v950 = vld [vmem:[#allocation2 + $0x1648] sm:$0xff]
    %v951 = vld [vmem:[#allocation2 + $0x1650] sm:$0xff]
    %v952 = vld [vmem:[#allocation2 + $0x1658] sm:$0xff]
    %v953 = vld [vmem:[#allocation2 + $0x1660] sm:$0xff]
    %v954 = vld [vmem:[#allocation2 + $0x1668] sm:$0xff]
    %v955 = vld [vmem:[#allocation2 + $0x1670] sm:$0xff]
    %v956 = vld [vmem:[#allocation2 + $0x1678] sm:$0xff]
    %v957 = vld [vmem:[#allocation2 + $0x1680] sm:$0xff]
    %v958 = vld [vmem:[#allocation2 + $0x1688] sm:$0xff]
    %v959 = vld [vmem:[#allocation2 + $0x1690] sm:$0xff]
    %v960 = vld [vmem:[#allocation2 + $0x1698] sm:$0xff]
    %v961 = vld [vmem:[#allocation2 + $0x16a0] sm:$0xff]
    %v962 = vld [vmem:[#allocation2 + $0x16a8] sm:$0xff]
    %v963 = vld [vmem:[#allocation2 + $0x16b0] sm:$0xff]
    %v964 = vld [vmem:[#allocation2 + $0x16b8] sm:$0xff]
    %v965 = vld [vmem:[#allocation2 + $0x16c0] sm:$0xff]
    %v966 = vld [vmem:[#allocation2 + $0x16c8] sm:$0xff]
    %v967 = vld [vmem:[#allocation2 + $0x16d0] sm:$0xff]
    %v968 = vld [vmem:[#allocation2 + $0x16d8] sm:$0xff]
    %v969 = vld [vmem:[#allocation2 + $0x16e0] sm:$0xff]
    %v970 = vld [vmem:[#allocation2 + $0x16e8] sm:$0xff]
    %v971 = vld [vmem:[#allocation2 + $0x16f0] sm:$0xff]
    %v972 = vld [vmem:[#allocation2 + $0x16f8] sm:$0xff]
    %v973 = vld [vmem:[#allocation2 + $0x1700] sm:$0xff]
    %v974 = vld [vmem:[#allocation2 + $0x1708] sm:$0xff]
    %v975 = vld [vmem:[#allocation2 + $0x1710] sm:$0xff]
    %v976 = vld [vmem:[#allocation2 + $0x1718] sm:$0xff]
    %v977 = vld [vmem:[#allocation2 + $0x1720] sm:$0xff]
    %v978 = vld [vmem:[#allocation2 + $0x1728] sm:$0xff]
    %v979 = vld [vmem:[#allocation2 + $0x1730] sm:$0xff]
    %v980 = vld [vmem:[#allocation2 + $0x1738] sm:$0xff]
    %v981 = vld [vmem:[#allocation2 + $0x1740] sm:$0xff]
    %v982 = vld [vmem:[#allocation2 + $0x1748] sm:$0xff]
    %v983 = vld [vmem:[#allocation2 + $0x1750] sm:$0xff]
    %v984 = vld [vmem:[#allocation2 + $0x1758] sm:$0xff]
    %v985 = vld [vmem:[#allocation2 + $0x1760] sm:$0xff]
    %v986 = vld [vmem:[#allocation2 + $0x1768] sm:$0xff]
    %v987 = vld [vmem:[#allocation2 + $0x1770] sm:$0xff]
    %v988 = vld [vmem:[#allocation2 + $0x1778] sm:$0xff]
    %v989 = vld [vmem:[#allocation2 + $0x1780] sm:$0xff]
    %v990 = vld [vmem:[#allocation2 + $0x1788] sm:$0xff]
    %v991 = vld [vmem:[#allocation2 + $0x1790] sm:$0xff]
    %v992 = vld [vmem:[#allocation2 + $0x1798] sm:$0xff]
    %v993 = vld [vmem:[#allocation2 + $0x17a0] sm:$0xff]
    %v994 = vld [vmem:[#allocation2 + $0x17a8] sm:$0xff]
    %v995 = vld [vmem:[#allocation2 + $0x17b0] sm:$0xff]
    %v996 = vld [vmem:[#allocation2 + $0x17b8] sm:$0xff]
    %v997 = vld [vmem:[#allocation2 + $0x17c0] sm:$0xff]
    %v998 = vld [vmem:[#allocation2 + $0x17c8] sm:$0xff]
    %v999 = vld [vmem:[#allocation2 + $0x17d0] sm:$0xff]
    %v1000 = vld [vmem:[#allocation2 + $0x17d8] sm:$0xff]
    %v1001 = vld [vmem:[#allocation2 + $0x17e0] sm:$0xff]
    %v1002 = vld [vmem:[#allocation2 + $0x17e8] sm:$0xff]
    %v1003 = vld [vmem:[#allocation2 + $0x17f0] sm:$0xff]
    %v1004 = vld [vmem:[#allocation2 + $0x17f8] sm:$0xff]
    %v1005 = vld [vmem:[#allocation4] sm:$0xf]
    %v1007 = vlaneseq
    %v1008 = vshrl.u32 %v1007, 7
    %v1009 = vsub.s32 0, %v1008
    %v1010 = vrot.slane %v1005, %v1009
    %v1011 = vlaneseq
    %v1012 = vshrl.u32 %v1011, 7
    %v1013 = vsub.s32 1, %v1012
    %v1014 = vrot.slane %v1005, %v1013
    %v1015 = vlaneseq
    %v1016 = vshrl.u32 %v1015, 7
    %v1017 = vsub.s32 2, %v1016
    %v1018 = vrot.slane %v1005, %v1017
    %v1019 = vlaneseq
    %v1020 = vshrl.u32 %v1019, 7
    %v1021 = vsub.s32 3, %v1020
    %v1022 = vrot.slane %v1005, %v1021
    %v1795 = vunpack.c.l.b16 %v237
    %v1796 = vunpack.c.h.b16 %v237
    %v1797 = vunpack.c.l.b16 %v238
    %v1798 = vunpack.c.h.b16 %v238
    %v1799 = vunpack.c.l.b16 %v239
    %v1800 = vunpack.c.h.b16 %v239
    %v1801 = vunpack.c.l.b16 %v240
    %v1802 = vunpack.c.h.b16 %v240
    %v1803 = vunpack.c.l.b16 %v241
    %v1804 = vunpack.c.h.b16 %v241
    %v1805 = vunpack.c.l.b16 %v242
    %v1806 = vunpack.c.h.b16 %v242
    %v1807 = vunpack.c.l.b16 %v243
    %v1808 = vunpack.c.h.b16 %v243
    %v1809 = vunpack.c.l.b16 %v244
    %v1810 = vunpack.c.h.b16 %v244
    %v1811 = vunpack.c.l.b16 %v245
    %v1812 = vunpack.c.h.b16 %v245
    %v1813 = vunpack.c.l.b16 %v246
    %v1814 = vunpack.c.h.b16 %v246
    %v1815 = vunpack.c.l.b16 %v247
    %v1816 = vunpack.c.h.b16 %v247
    %v1817 = vunpack.c.l.b16 %v248
    %v1818 = vunpack.c.h.b16 %v248
    %v1819 = vunpack.c.l.b16 %v249
    %v1820 = vunpack.c.h.b16 %v249
    %v1821 = vunpack.c.l.b16 %v250
    %v1822 = vunpack.c.h.b16 %v250
    %v1823 = vunpack.c.l.b16 %v251
    %v1824 = vunpack.c.h.b16 %v251
    %v1825 = vunpack.c.l.b16 %v252
    %v1826 = vunpack.c.h.b16 %v252
    %v1827 = vunpack.c.l.b16 %v253
    %v1828 = vunpack.c.h.b16 %v253
    %v1829 = vunpack.c.l.b16 %v254
    %v1830 = vunpack.c.h.b16 %v254
    %v1831 = vunpack.c.l.b16 %v255
    %v1832 = vunpack.c.h.b16 %v255
    %v1833 = vunpack.c.l.b16 %v256
    %v1834 = vunpack.c.h.b16 %v256
    %v1835 = vunpack.c.l.b16 %v257
    %v1836 = vunpack.c.h.b16 %v257
    %v1837 = vunpack.c.l.b16 %v258
    %v1838 = vunpack.c.h.b16 %v258
    %v1839 = vunpack.c.l.b16 %v259
    %v1840 = vunpack.c.h.b16 %v259
    %v1841 = vunpack.c.l.b16 %v260
    %v1842 = vunpack.c.h.b16 %v260
    %v1843 = vunpack.c.l.b16 %v261
    %v1844 = vunpack.c.h.b16 %v261
    %v1845 = vunpack.c.l.b16 %v262
    %v1846 = vunpack.c.h.b16 %v262
    %v1847 = vunpack.c.l.b16 %v263
    %v1848 = vunpack.c.h.b16 %v263
    %v1849 = vunpack.c.l.b16 %v264
    %v1850 = vunpack.c.h.b16 %v264
    %v1851 = vunpack.c.l.b16 %v265
    %v1852 = vunpack.c.h.b16 %v265
    %v1853 = vunpack.c.l.b16 %v266
    %v1854 = vunpack.c.h.b16 %v266
    %v1855 = vunpack.c.l.b16 %v267
    %v1856 = vunpack.c.h.b16 %v267
    %v1857 = vunpack.c.l.b16 %v268
    %v1858 = vunpack.c.h.b16 %v268
    %v1859 = vunpack.c.l.b16 %v269
    %v1860 = vunpack.c.h.b16 %v269
    %v1861 = vunpack.c.l.b16 %v270
    %v1862 = vunpack.c.h.b16 %v270
    %v1863 = vunpack.c.l.b16 %v271
    %v1864 = vunpack.c.h.b16 %v271
    %v1865 = vunpack.c.l.b16 %v272
    %v1866 = vunpack.c.h.b16 %v272
    %v1867 = vunpack.c.l.b16 %v273
    %v1868 = vunpack.c.h.b16 %v273
    %v1869 = vunpack.c.l.b16 %v274
    %v1870 = vunpack.c.h.b16 %v274
    %v1871 = vunpack.c.l.b16 %v275
    %v1872 = vunpack.c.h.b16 %v275
    %v1873 = vunpack.c.l.b16 %v276
    %v1874 = vunpack.c.h.b16 %v276
    %v1875 = vunpack.c.l.b16 %v277
    %v1876 = vunpack.c.h.b16 %v277
    %v1877 = vunpack.c.l.b16 %v278
    %v1878 = vunpack.c.h.b16 %v278
    %v1879 = vunpack.c.l.b16 %v279
    %v1880 = vunpack.c.h.b16 %v279
    %v1881 = vunpack.c.l.b16 %v280
    %v1882 = vunpack.c.h.b16 %v280
    %v1883 = vunpack.c.l.b16 %v281
    %v1884 = vunpack.c.h.b16 %v281
    %v1885 = vunpack.c.l.b16 %v282
    %v1886 = vunpack.c.h.b16 %v282
    %v1887 = vunpack.c.l.b16 %v283
    %v1888 = vunpack.c.h.b16 %v283
    %v1889 = vunpack.c.l.b16 %v284
    %v1890 = vunpack.c.h.b16 %v284
    %v1891 = vunpack.c.l.b16 %v285
    %v1892 = vunpack.c.h.b16 %v285
    %v1893 = vunpack.c.l.b16 %v286
    %v1894 = vunpack.c.h.b16 %v286
    %v1895 = vunpack.c.l.b16 %v287
    %v1896 = vunpack.c.h.b16 %v287
    %v1897 = vunpack.c.l.b16 %v288
    %v1898 = vunpack.c.h.b16 %v288
    %v1899 = vunpack.c.l.b16 %v289
    %v1900 = vunpack.c.h.b16 %v289
    %v1901 = vunpack.c.l.b16 %v290
    %v1902 = vunpack.c.h.b16 %v290
    %v1903 = vunpack.c.l.b16 %v291
    %v1904 = vunpack.c.h.b16 %v291
    %v1905 = vunpack.c.l.b16 %v292
    %v1906 = vunpack.c.h.b16 %v292
    %v1907 = vunpack.c.l.b16 %v293
    %v1908 = vunpack.c.h.b16 %v293
    %v1909 = vunpack.c.l.b16 %v294
    %v1910 = vunpack.c.h.b16 %v294
    %v1911 = vunpack.c.l.b16 %v295
    %v1912 = vunpack.c.h.b16 %v295
    %v1913 = vunpack.c.l.b16 %v296
    %v1914 = vunpack.c.h.b16 %v296
    %v1915 = vunpack.c.l.b16 %v297
    %v1916 = vunpack.c.h.b16 %v297
    %v1917 = vunpack.c.l.b16 %v298
    %v1918 = vunpack.c.h.b16 %v298
    %v1919 = vunpack.c.l.b16 %v299
    %v1920 = vunpack.c.h.b16 %v299
    %v1921 = vunpack.c.l.b16 %v300
    %v1922 = vunpack.c.h.b16 %v300
    %v1923 = vunpack.c.l.b16 %v301
    %v1924 = vunpack.c.h.b16 %v301
    %v1925 = vunpack.c.l.b16 %v302
    %v1926 = vunpack.c.h.b16 %v302
    %v1927 = vunpack.c.l.b16 %v303
    %v1928 = vunpack.c.h.b16 %v303
    %v1929 = vunpack.c.l.b16 %v304
    %v1930 = vunpack.c.h.b16 %v304
    %v1931 = vunpack.c.l.b16 %v305
    %v1932 = vunpack.c.h.b16 %v305
    %v1933 = vunpack.c.l.b16 %v306
    %v1934 = vunpack.c.h.b16 %v306
    %v1935 = vunpack.c.l.b16 %v307
    %v1936 = vunpack.c.h.b16 %v307
    %v1937 = vunpack.c.l.b16 %v308
    %v1938 = vunpack.c.h.b16 %v308
    %v1939 = vunpack.c.l.b16 %v309
    %v1940 = vunpack.c.h.b16 %v309
    %v1941 = vunpack.c.l.b16 %v310
    %v1942 = vunpack.c.h.b16 %v310
    %v1943 = vunpack.c.l.b16 %v311
    %v1944 = vunpack.c.h.b16 %v311
    %v1945 = vunpack.c.l.b16 %v312
    %v1946 = vunpack.c.h.b16 %v312
    %v1947 = vunpack.c.l.b16 %v313
    %v1948 = vunpack.c.h.b16 %v313
    %v1949 = vunpack.c.l.b16 %v314
    %v1950 = vunpack.c.h.b16 %v314
    %v1951 = vunpack.c.l.b16 %v315
    %v1952 = vunpack.c.h.b16 %v315
    %v1953 = vunpack.c.l.b16 %v316
    %v1954 = vunpack.c.h.b16 %v316
    %v1955 = vunpack.c.l.b16 %v317
    %v1956 = vunpack.c.h.b16 %v317
    %v1957 = vunpack.c.l.b16 %v318
    %v1958 = vunpack.c.h.b16 %v318
    %v1959 = vunpack.c.l.b16 %v319
    %v1960 = vunpack.c.h.b16 %v319
    %v1961 = vunpack.c.l.b16 %v320
    %v1962 = vunpack.c.h.b16 %v320
    %v1963 = vunpack.c.l.b16 %v321
    %v1964 = vunpack.c.h.b16 %v321
    %v1965 = vunpack.c.l.b16 %v322
    %v1966 = vunpack.c.h.b16 %v322
    %v1967 = vunpack.c.l.b16 %v323
    %v1968 = vunpack.c.h.b16 %v323
    %v1969 = vunpack.c.l.b16 %v324
    %v1970 = vunpack.c.h.b16 %v324
    %v1971 = vunpack.c.l.b16 %v325
    %v1972 = vunpack.c.h.b16 %v325
    %v1973 = vunpack.c.l.b16 %v326
    %v1974 = vunpack.c.h.b16 %v326
    %v1975 = vunpack.c.l.b16 %v327
    %v1976 = vunpack.c.h.b16 %v327
    %v1977 = vunpack.c.l.b16 %v328
    %v1978 = vunpack.c.h.b16 %v328
    %v1979 = vunpack.c.l.b16 %v329
    %v1980 = vunpack.c.h.b16 %v329
    %v1981 = vunpack.c.l.b16 %v330
    %v1982 = vunpack.c.h.b16 %v330
    %v1983 = vunpack.c.l.b16 %v331
    %v1984 = vunpack.c.h.b16 %v331
    %v1985 = vunpack.c.l.b16 %v332
    %v1986 = vunpack.c.h.b16 %v332
    %v1987 = vunpack.c.l.b16 %v333
    %v1988 = vunpack.c.h.b16 %v333
    %v1989 = vunpack.c.l.b16 %v334
    %v1990 = vunpack.c.h.b16 %v334
    %v1991 = vunpack.c.l.b16 %v335
    %v1992 = vunpack.c.h.b16 %v335
    %v1993 = vunpack.c.l.b16 %v336
    %v1994 = vunpack.c.h.b16 %v336
    %v1995 = vunpack.c.l.b16 %v337
    %v1996 = vunpack.c.h.b16 %v337
    %v1997 = vunpack.c.l.b16 %v338
    %v1998 = vunpack.c.h.b16 %v338
    %v1999 = vunpack.c.l.b16 %v339
    %v2000 = vunpack.c.h.b16 %v339
    %v2001 = vunpack.c.l.b16 %v340
    %v2002 = vunpack.c.h.b16 %v340
    %v2003 = vunpack.c.l.b16 %v341
    %v2004 = vunpack.c.h.b16 %v341
    %v2005 = vunpack.c.l.b16 %v342
    %v2006 = vunpack.c.h.b16 %v342
    %v2007 = vunpack.c.l.b16 %v343
    %v2008 = vunpack.c.h.b16 %v343
    %v2009 = vunpack.c.l.b16 %v344
    %v2010 = vunpack.c.h.b16 %v344
    %v2011 = vunpack.c.l.b16 %v345
    %v2012 = vunpack.c.h.b16 %v345
    %v2013 = vunpack.c.l.b16 %v346
    %v2014 = vunpack.c.h.b16 %v346
    %v2015 = vunpack.c.l.b16 %v347
    %v2016 = vunpack.c.h.b16 %v347
    %v2017 = vunpack.c.l.b16 %v348
    %v2018 = vunpack.c.h.b16 %v348
    %v2019 = vunpack.c.l.b16 %v349
    %v2020 = vunpack.c.h.b16 %v349
    %v2021 = vunpack.c.l.b16 %v350
    %v2022 = vunpack.c.h.b16 %v350
    %v2023 = vunpack.c.l.b16 %v351
    %v2024 = vunpack.c.h.b16 %v351
    %v2025 = vunpack.c.l.b16 %v352
    %v2026 = vunpack.c.h.b16 %v352
    %v2027 = vunpack.c.l.b16 %v353
    %v2028 = vunpack.c.h.b16 %v353
    %v2029 = vunpack.c.l.b16 %v354
    %v2030 = vunpack.c.h.b16 %v354
    %v2031 = vunpack.c.l.b16 %v355
    %v2032 = vunpack.c.h.b16 %v355
    %v2033 = vunpack.c.l.b16 %v356
    %v2034 = vunpack.c.h.b16 %v356
    %v2035 = vunpack.c.l.b16 %v357
    %v2036 = vunpack.c.h.b16 %v357
    %v2037 = vunpack.c.l.b16 %v358
    %v2038 = vunpack.c.h.b16 %v358
    %v2039 = vunpack.c.l.b16 %v359
    %v2040 = vunpack.c.h.b16 %v359
    %v2041 = vunpack.c.l.b16 %v360
    %v2042 = vunpack.c.h.b16 %v360
    %v2043 = vunpack.c.l.b16 %v361
    %v2044 = vunpack.c.h.b16 %v361
    %v2045 = vunpack.c.l.b16 %v362
    %v2046 = vunpack.c.h.b16 %v362
    %v2047 = vunpack.c.l.b16 %v363
    %v2048 = vunpack.c.h.b16 %v363
    %v2049 = vunpack.c.l.b16 %v364
    %v2050 = vunpack.c.h.b16 %v364
    %v2051 = vunpack.c.l.b16 %v365
    %v2052 = vunpack.c.h.b16 %v365
    %v2053 = vunpack.c.l.b16 %v366
    %v2054 = vunpack.c.h.b16 %v366
    %v2055 = vunpack.c.l.b16 %v367
    %v2056 = vunpack.c.h.b16 %v367
    %v2057 = vunpack.c.l.b16 %v368
    %v2058 = vunpack.c.h.b16 %v368
    %v2059 = vunpack.c.l.b16 %v369
    %v2060 = vunpack.c.h.b16 %v369
    %v2061 = vunpack.c.l.b16 %v370
    %v2062 = vunpack.c.h.b16 %v370
    %v2063 = vunpack.c.l.b16 %v371
    %v2064 = vunpack.c.h.b16 %v371
    %v2065 = vunpack.c.l.b16 %v372
    %v2066 = vunpack.c.h.b16 %v372
    %v2067 = vunpack.c.l.b16 %v373
    %v2068 = vunpack.c.h.b16 %v373
    %v2069 = vunpack.c.l.b16 %v374
    %v2070 = vunpack.c.h.b16 %v374
    %v2071 = vunpack.c.l.b16 %v375
    %v2072 = vunpack.c.h.b16 %v375
    %v2073 = vunpack.c.l.b16 %v376
    %v2074 = vunpack.c.h.b16 %v376
    %v2075 = vunpack.c.l.b16 %v377
    %v2076 = vunpack.c.h.b16 %v377
    %v2077 = vunpack.c.l.b16 %v378
    %v2078 = vunpack.c.h.b16 %v378
    %v2079 = vunpack.c.l.b16 %v379
    %v2080 = vunpack.c.h.b16 %v379
    %v2081 = vunpack.c.l.b16 %v380
    %v2082 = vunpack.c.h.b16 %v380
    %v2083 = vunpack.c.l.b16 %v381
    %v2084 = vunpack.c.h.b16 %v381
    %v2085 = vunpack.c.l.b16 %v382
    %v2086 = vunpack.c.h.b16 %v382
    %v2087 = vunpack.c.l.b16 %v383
    %v2088 = vunpack.c.h.b16 %v383
    %v2089 = vunpack.c.l.b16 %v384
    %v2090 = vunpack.c.h.b16 %v384
    %v2091 = vunpack.c.l.b16 %v385
    %v2092 = vunpack.c.h.b16 %v385
    %v2093 = vunpack.c.l.b16 %v386
    %v2094 = vunpack.c.h.b16 %v386
    %v2095 = vunpack.c.l.b16 %v387
    %v2096 = vunpack.c.h.b16 %v387
    %v2097 = vunpack.c.l.b16 %v388
    %v2098 = vunpack.c.h.b16 %v388
    %v2099 = vunpack.c.l.b16 %v389
    %v2100 = vunpack.c.h.b16 %v389
    %v2101 = vunpack.c.l.b16 %v390
    %v2102 = vunpack.c.h.b16 %v390
    %v2103 = vunpack.c.l.b16 %v391
    %v2104 = vunpack.c.h.b16 %v391
    %v2105 = vunpack.c.l.b16 %v392
    %v2106 = vunpack.c.h.b16 %v392
    %v2107 = vunpack.c.l.b16 %v393
    %v2108 = vunpack.c.h.b16 %v393
    %v2109 = vunpack.c.l.b16 %v394
    %v2110 = vunpack.c.h.b16 %v394
    %v2111 = vunpack.c.l.b16 %v395
    %v2112 = vunpack.c.h.b16 %v395
    %v2113 = vunpack.c.l.b16 %v396
    %v2114 = vunpack.c.h.b16 %v396
    %v2115 = vunpack.c.l.b16 %v397
    %v2116 = vunpack.c.h.b16 %v397
    %v2117 = vunpack.c.l.b16 %v398
    %v2118 = vunpack.c.h.b16 %v398
    %v2119 = vunpack.c.l.b16 %v399
    %v2120 = vunpack.c.h.b16 %v399
    %v2121 = vunpack.c.l.b16 %v400
    %v2122 = vunpack.c.h.b16 %v400
    %v2123 = vunpack.c.l.b16 %v401
    %v2124 = vunpack.c.h.b16 %v401
    %v2125 = vunpack.c.l.b16 %v402
    %v2126 = vunpack.c.h.b16 %v402
    %v2127 = vunpack.c.l.b16 %v403
    %v2128 = vunpack.c.h.b16 %v403
    %v2129 = vunpack.c.l.b16 %v404
    %v2130 = vunpack.c.h.b16 %v404
    %v2131 = vunpack.c.l.b16 %v405
    %v2132 = vunpack.c.h.b16 %v405
    %v2133 = vunpack.c.l.b16 %v406
    %v2134 = vunpack.c.h.b16 %v406
    %v2135 = vunpack.c.l.b16 %v407
    %v2136 = vunpack.c.h.b16 %v407
    %v2137 = vunpack.c.l.b16 %v408
    %v2138 = vunpack.c.h.b16 %v408
    %v2139 = vunpack.c.l.b16 %v409
    %v2140 = vunpack.c.h.b16 %v409
    %v2141 = vunpack.c.l.b16 %v410
    %v2142 = vunpack.c.h.b16 %v410
    %v2143 = vunpack.c.l.b16 %v411
    %v2144 = vunpack.c.h.b16 %v411
    %v2145 = vunpack.c.l.b16 %v412
    %v2146 = vunpack.c.h.b16 %v412
    %v2147 = vunpack.c.l.b16 %v413
    %v2148 = vunpack.c.h.b16 %v413
    %v2149 = vunpack.c.l.b16 %v414
    %v2150 = vunpack.c.h.b16 %v414
    %v2151 = vunpack.c.l.b16 %v415
    %v2152 = vunpack.c.h.b16 %v415
    %v2153 = vunpack.c.l.b16 %v416
    %v2154 = vunpack.c.h.b16 %v416
    %v2155 = vunpack.c.l.b16 %v417
    %v2156 = vunpack.c.h.b16 %v417
    %v2157 = vunpack.c.l.b16 %v418
    %v2158 = vunpack.c.h.b16 %v418
    %v2159 = vunpack.c.l.b16 %v419
    %v2160 = vunpack.c.h.b16 %v419
    %v2161 = vunpack.c.l.b16 %v420
    %v2162 = vunpack.c.h.b16 %v420
    %v2163 = vunpack.c.l.b16 %v421
    %v2164 = vunpack.c.h.b16 %v421
    %v2165 = vunpack.c.l.b16 %v422
    %v2166 = vunpack.c.h.b16 %v422
    %v2167 = vunpack.c.l.b16 %v423
    %v2168 = vunpack.c.h.b16 %v423
    %v2169 = vunpack.c.l.b16 %v424
    %v2170 = vunpack.c.h.b16 %v424
    %v2171 = vunpack.c.l.b16 %v425
    %v2172 = vunpack.c.h.b16 %v425
    %v2173 = vunpack.c.l.b16 %v426
    %v2174 = vunpack.c.h.b16 %v426
    %v2175 = vunpack.c.l.b16 %v427
    %v2176 = vunpack.c.h.b16 %v427
    %v2177 = vunpack.c.l.b16 %v428
    %v2178 = vunpack.c.h.b16 %v428
    %v2179 = vunpack.c.l.b16 %v429
    %v2180 = vunpack.c.h.b16 %v429
    %v2181 = vunpack.c.l.b16 %v430
    %v2182 = vunpack.c.h.b16 %v430
    %v2183 = vunpack.c.l.b16 %v431
    %v2184 = vunpack.c.h.b16 %v431
    %v2185 = vunpack.c.l.b16 %v432
    %v2186 = vunpack.c.h.b16 %v432
    %v2187 = vunpack.c.l.b16 %v433
    %v2188 = vunpack.c.h.b16 %v433
    %v2189 = vunpack.c.l.b16 %v434
    %v2190 = vunpack.c.h.b16 %v434
    %v2191 = vunpack.c.l.b16 %v435
    %v2192 = vunpack.c.h.b16 %v435
    %v2193 = vunpack.c.l.b16 %v436
    %v2194 = vunpack.c.h.b16 %v436
    %v2195 = vunpack.c.l.b16 %v437
    %v2196 = vunpack.c.h.b16 %v437
    %v2197 = vunpack.c.l.b16 %v438
    %v2198 = vunpack.c.h.b16 %v438
    %v2199 = vunpack.c.l.b16 %v439
    %v2200 = vunpack.c.h.b16 %v439
    %v2201 = vunpack.c.l.b16 %v440
    %v2202 = vunpack.c.h.b16 %v440
    %v2203 = vunpack.c.l.b16 %v441
    %v2204 = vunpack.c.h.b16 %v441
    %v2205 = vunpack.c.l.b16 %v442
    %v2206 = vunpack.c.h.b16 %v442
    %v2207 = vunpack.c.l.b16 %v443
    %v2208 = vunpack.c.h.b16 %v443
    %v2209 = vunpack.c.l.b16 %v444
    %v2210 = vunpack.c.h.b16 %v444
    %v2211 = vunpack.c.l.b16 %v445
    %v2212 = vunpack.c.h.b16 %v445
    %v2213 = vunpack.c.l.b16 %v446
    %v2214 = vunpack.c.h.b16 %v446
    %v2215 = vunpack.c.l.b16 %v447
    %v2216 = vunpack.c.h.b16 %v447
    %v2217 = vunpack.c.l.b16 %v448
    %v2218 = vunpack.c.h.b16 %v448
    %v2219 = vunpack.c.l.b16 %v449
    %v2220 = vunpack.c.h.b16 %v449
    %v2221 = vunpack.c.l.b16 %v450
    %v2222 = vunpack.c.h.b16 %v450
    %v2223 = vunpack.c.l.b16 %v451
    %v2224 = vunpack.c.h.b16 %v451
    %v2225 = vunpack.c.l.b16 %v452
    %v2226 = vunpack.c.h.b16 %v452
    %v2227 = vunpack.c.l.b16 %v453
    %v2228 = vunpack.c.h.b16 %v453
    %v2229 = vunpack.c.l.b16 %v454
    %v2230 = vunpack.c.h.b16 %v454
    %v2231 = vunpack.c.l.b16 %v455
    %v2232 = vunpack.c.h.b16 %v455
    %v2233 = vunpack.c.l.b16 %v456
    %v2234 = vunpack.c.h.b16 %v456
    %v2235 = vunpack.c.l.b16 %v457
    %v2236 = vunpack.c.h.b16 %v457
    %v2237 = vunpack.c.l.b16 %v458
    %v2238 = vunpack.c.h.b16 %v458
    %v2239 = vunpack.c.l.b16 %v459
    %v2240 = vunpack.c.h.b16 %v459
    %v2241 = vunpack.c.l.b16 %v460
    %v2242 = vunpack.c.h.b16 %v460
    %v2243 = vunpack.c.l.b16 %v461
    %v2244 = vunpack.c.h.b16 %v461
    %v2245 = vunpack.c.l.b16 %v462
    %v2246 = vunpack.c.h.b16 %v462
    %v2247 = vunpack.c.l.b16 %v463
    %v2248 = vunpack.c.h.b16 %v463
    %v2249 = vunpack.c.l.b16 %v464
    %v2250 = vunpack.c.h.b16 %v464
    %v2251 = vunpack.c.l.b16 %v465
    %v2252 = vunpack.c.h.b16 %v465
    %v2253 = vunpack.c.l.b16 %v466
    %v2254 = vunpack.c.h.b16 %v466
    %v2255 = vunpack.c.l.b16 %v467
    %v2256 = vunpack.c.h.b16 %v467
    %v2257 = vunpack.c.l.b16 %v468
    %v2258 = vunpack.c.h.b16 %v468
    %v2259 = vunpack.c.l.b16 %v469
    %v2260 = vunpack.c.h.b16 %v469
    %v2261 = vunpack.c.l.b16 %v470
    %v2262 = vunpack.c.h.b16 %v470
    %v2263 = vunpack.c.l.b16 %v471
    %v2264 = vunpack.c.h.b16 %v471
    %v2265 = vunpack.c.l.b16 %v472
    %v2266 = vunpack.c.h.b16 %v472
    %v2267 = vunpack.c.l.b16 %v473
    %v2268 = vunpack.c.h.b16 %v473
    %v2269 = vunpack.c.l.b16 %v474
    %v2270 = vunpack.c.h.b16 %v474
    %v2271 = vunpack.c.l.b16 %v475
    %v2272 = vunpack.c.h.b16 %v475
    %v2273 = vunpack.c.l.b16 %v476
    %v2274 = vunpack.c.h.b16 %v476
    %v2275 = vunpack.c.l.b16 %v477
    %v2276 = vunpack.c.h.b16 %v477
    %v2277 = vunpack.c.l.b16 %v478
    %v2278 = vunpack.c.h.b16 %v478
    %v2279 = vunpack.c.l.b16 %v479
    %v2280 = vunpack.c.h.b16 %v479
    %v2281 = vunpack.c.l.b16 %v480
    %v2282 = vunpack.c.h.b16 %v480
    %v2283 = vunpack.c.l.b16 %v481
    %v2284 = vunpack.c.h.b16 %v481
    %v2285 = vunpack.c.l.b16 %v482
    %v2286 = vunpack.c.h.b16 %v482
    %v2287 = vunpack.c.l.b16 %v483
    %v2288 = vunpack.c.h.b16 %v483
    %v2289 = vunpack.c.l.b16 %v484
    %v2290 = vunpack.c.h.b16 %v484
    %v2291 = vunpack.c.l.b16 %v485
    %v2292 = vunpack.c.h.b16 %v485
    %v2293 = vunpack.c.l.b16 %v486
    %v2294 = vunpack.c.h.b16 %v486
    %v2295 = vunpack.c.l.b16 %v487
    %v2296 = vunpack.c.h.b16 %v487
    %v2297 = vunpack.c.l.b16 %v488
    %v2298 = vunpack.c.h.b16 %v488
    %v2299 = vunpack.c.l.b16 %v489
    %v2300 = vunpack.c.h.b16 %v489
    %v2301 = vunpack.c.l.b16 %v490
    %v2302 = vunpack.c.h.b16 %v490
    %v2303 = vunpack.c.l.b16 %v491
    %v2304 = vunpack.c.h.b16 %v491
    %v2305 = vunpack.c.l.b16 %v492
    %v2306 = vunpack.c.h.b16 %v492
    %v2307 = vunpack.c.l.b16 %v493
    %v2308 = vunpack.c.h.b16 %v493
    %v2309 = vunpack.c.l.b16 %v494
    %v2310 = vunpack.c.h.b16 %v494
    %v2311 = vunpack.c.l.b16 %v495
    %v2312 = vunpack.c.h.b16 %v495
    %v2313 = vunpack.c.l.b16 %v496
    %v2314 = vunpack.c.h.b16 %v496
    %v2315 = vunpack.c.l.b16 %v497
    %v2316 = vunpack.c.h.b16 %v497
    %v2317 = vunpack.c.l.b16 %v498
    %v2318 = vunpack.c.h.b16 %v498
    %v2319 = vunpack.c.l.b16 %v499
    %v2320 = vunpack.c.h.b16 %v499
    %v2321 = vunpack.c.l.b16 %v500
    %v2322 = vunpack.c.h.b16 %v500
    %v2323 = vunpack.c.l.b16 %v501
    %v2324 = vunpack.c.h.b16 %v501
    %v2325 = vunpack.c.l.b16 %v502
    %v2326 = vunpack.c.h.b16 %v502
    %v2327 = vunpack.c.l.b16 %v503
    %v2328 = vunpack.c.h.b16 %v503
    %v2329 = vunpack.c.l.b16 %v504
    %v2330 = vunpack.c.h.b16 %v504
    %v2331 = vunpack.c.l.b16 %v505
    %v2332 = vunpack.c.h.b16 %v505
    %v2333 = vunpack.c.l.b16 %v506
    %v2334 = vunpack.c.h.b16 %v506
    %v2335 = vunpack.c.l.b16 %v507
    %v2336 = vunpack.c.h.b16 %v507
    %v2337 = vunpack.c.l.b16 %v508
    %v2338 = vunpack.c.h.b16 %v508
    %v2339 = vunpack.c.l.b16 %v509
    %v2340 = vunpack.c.h.b16 %v509
    %v2341 = vunpack.c.l.b16 %v510
    %v2342 = vunpack.c.h.b16 %v510
    %v2343 = vunpack.c.l.b16 %v511
    %v2344 = vunpack.c.h.b16 %v511
    %v2345 = vunpack.c.l.b16 %v512
    %v2346 = vunpack.c.h.b16 %v512
    %v2347 = vunpack.c.l.b16 %v513
    %v2348 = vunpack.c.h.b16 %v513
    %v2349 = vunpack.c.l.b16 %v514
    %v2350 = vunpack.c.h.b16 %v514
    %v2351 = vunpack.c.l.b16 %v515
    %v2352 = vunpack.c.h.b16 %v515
    %v2353 = vunpack.c.l.b16 %v516
    %v2354 = vunpack.c.h.b16 %v516
    %v2355 = vunpack.c.l.b16 %v517
    %v2356 = vunpack.c.h.b16 %v517
    %v2357 = vunpack.c.l.b16 %v518
    %v2358 = vunpack.c.h.b16 %v518
    %v2359 = vunpack.c.l.b16 %v519
    %v2360 = vunpack.c.h.b16 %v519
    %v2361 = vunpack.c.l.b16 %v520
    %v2362 = vunpack.c.h.b16 %v520
    %v2363 = vunpack.c.l.b16 %v521
    %v2364 = vunpack.c.h.b16 %v521
    %v2365 = vunpack.c.l.b16 %v522
    %v2366 = vunpack.c.h.b16 %v522
    %v2367 = vunpack.c.l.b16 %v523
    %v2368 = vunpack.c.h.b16 %v523
    %v2369 = vunpack.c.l.b16 %v524
    %v2370 = vunpack.c.h.b16 %v524
    %v2371 = vunpack.c.l.b16 %v525
    %v2372 = vunpack.c.h.b16 %v525
    %v2373 = vunpack.c.l.b16 %v526
    %v2374 = vunpack.c.h.b16 %v526
    %v2375 = vunpack.c.l.b16 %v527
    %v2376 = vunpack.c.h.b16 %v527
    %v2377 = vunpack.c.l.b16 %v528
    %v2378 = vunpack.c.h.b16 %v528
    %v2379 = vunpack.c.l.b16 %v529
    %v2380 = vunpack.c.h.b16 %v529
    %v2381 = vunpack.c.l.b16 %v530
    %v2382 = vunpack.c.h.b16 %v530
    %v2383 = vunpack.c.l.b16 %v531
    %v2384 = vunpack.c.h.b16 %v531
    %v2385 = vunpack.c.l.b16 %v532
    %v2386 = vunpack.c.h.b16 %v532
    %v2387 = vunpack.c.l.b16 %v533
    %v2388 = vunpack.c.h.b16 %v533
    %v2389 = vunpack.c.l.b16 %v534
    %v2390 = vunpack.c.h.b16 %v534
    %v2391 = vunpack.c.l.b16 %v535
    %v2392 = vunpack.c.h.b16 %v535
    %v2393 = vunpack.c.l.b16 %v536
    %v2394 = vunpack.c.h.b16 %v536
    %v2395 = vunpack.c.l.b16 %v537
    %v2396 = vunpack.c.h.b16 %v537
    %v2397 = vunpack.c.l.b16 %v538
    %v2398 = vunpack.c.h.b16 %v538
    %v2399 = vunpack.c.l.b16 %v539
    %v2400 = vunpack.c.h.b16 %v539
    %v2401 = vunpack.c.l.b16 %v540
    %v2402 = vunpack.c.h.b16 %v540
    %v2403 = vunpack.c.l.b16 %v541
    %v2404 = vunpack.c.h.b16 %v541
    %v2405 = vunpack.c.l.b16 %v542
    %v2406 = vunpack.c.h.b16 %v542
    %v2407 = vunpack.c.l.b16 %v543
    %v2408 = vunpack.c.h.b16 %v543
    %v2409 = vunpack.c.l.b16 %v544
    %v2410 = vunpack.c.h.b16 %v544
    %v2411 = vunpack.c.l.b16 %v545
    %v2412 = vunpack.c.h.b16 %v545
    %v2413 = vunpack.c.l.b16 %v546
    %v2414 = vunpack.c.h.b16 %v546
    %v2415 = vunpack.c.l.b16 %v547
    %v2416 = vunpack.c.h.b16 %v547
    %v2417 = vunpack.c.l.b16 %v548
    %v2418 = vunpack.c.h.b16 %v548
    %v2419 = vunpack.c.l.b16 %v549
    %v2420 = vunpack.c.h.b16 %v549
    %v2421 = vunpack.c.l.b16 %v550
    %v2422 = vunpack.c.h.b16 %v550
    %v2423 = vunpack.c.l.b16 %v551
    %v2424 = vunpack.c.h.b16 %v551
    %v2425 = vunpack.c.l.b16 %v552
    %v2426 = vunpack.c.h.b16 %v552
    %v2427 = vunpack.c.l.b16 %v553
    %v2428 = vunpack.c.h.b16 %v553
    %v2429 = vunpack.c.l.b16 %v554
    %v2430 = vunpack.c.h.b16 %v554
    %v2431 = vunpack.c.l.b16 %v555
    %v2432 = vunpack.c.h.b16 %v555
    %v2433 = vunpack.c.l.b16 %v556
    %v2434 = vunpack.c.h.b16 %v556
    %v2435 = vunpack.c.l.b16 %v557
    %v2436 = vunpack.c.h.b16 %v557
    %v2437 = vunpack.c.l.b16 %v558
    %v2438 = vunpack.c.h.b16 %v558
    %v2439 = vunpack.c.l.b16 %v559
    %v2440 = vunpack.c.h.b16 %v559
    %v2441 = vunpack.c.l.b16 %v560
    %v2442 = vunpack.c.h.b16 %v560
    %v2443 = vunpack.c.l.b16 %v561
    %v2444 = vunpack.c.h.b16 %v561
    %v2445 = vunpack.c.l.b16 %v562
    %v2446 = vunpack.c.h.b16 %v562
    %v2447 = vunpack.c.l.b16 %v563
    %v2448 = vunpack.c.h.b16 %v563
    %v2449 = vunpack.c.l.b16 %v564
    %v2450 = vunpack.c.h.b16 %v564
    %v2451 = vunpack.c.l.b16 %v565
    %v2452 = vunpack.c.h.b16 %v565
    %v2453 = vunpack.c.l.b16 %v566
    %v2454 = vunpack.c.h.b16 %v566
    %v2455 = vunpack.c.l.b16 %v567
    %v2456 = vunpack.c.h.b16 %v567
    %v2457 = vunpack.c.l.b16 %v568
    %v2458 = vunpack.c.h.b16 %v568
    %v2459 = vunpack.c.l.b16 %v569
    %v2460 = vunpack.c.h.b16 %v569
    %v2461 = vunpack.c.l.b16 %v570
    %v2462 = vunpack.c.h.b16 %v570
    %v2463 = vunpack.c.l.b16 %v571
    %v2464 = vunpack.c.h.b16 %v571
    %v2465 = vunpack.c.l.b16 %v572
    %v2466 = vunpack.c.h.b16 %v572
    %v2467 = vunpack.c.l.b16 %v573
    %v2468 = vunpack.c.h.b16 %v573
    %v2469 = vunpack.c.l.b16 %v574
    %v2470 = vunpack.c.h.b16 %v574
    %v2471 = vunpack.c.l.b16 %v575
    %v2472 = vunpack.c.h.b16 %v575
    %v2473 = vunpack.c.l.b16 %v576
    %v2474 = vunpack.c.h.b16 %v576
    %v2475 = vunpack.c.l.b16 %v577
    %v2476 = vunpack.c.h.b16 %v577
    %v2477 = vunpack.c.l.b16 %v578
    %v2478 = vunpack.c.h.b16 %v578
    %v2479 = vunpack.c.l.b16 %v579
    %v2480 = vunpack.c.h.b16 %v579
    %v2481 = vunpack.c.l.b16 %v580
    %v2482 = vunpack.c.h.b16 %v580
    %v2483 = vunpack.c.l.b16 %v581
    %v2484 = vunpack.c.h.b16 %v581
    %v2485 = vunpack.c.l.b16 %v582
    %v2486 = vunpack.c.h.b16 %v582
    %v2487 = vunpack.c.l.b16 %v583
    %v2488 = vunpack.c.h.b16 %v583
    %v2489 = vunpack.c.l.b16 %v584
    %v2490 = vunpack.c.h.b16 %v584
    %v2491 = vunpack.c.l.b16 %v585
    %v2492 = vunpack.c.h.b16 %v585
    %v2493 = vunpack.c.l.b16 %v586
    %v2494 = vunpack.c.h.b16 %v586
    %v2495 = vunpack.c.l.b16 %v587
    %v2496 = vunpack.c.h.b16 %v587
    %v2497 = vunpack.c.l.b16 %v588
    %v2498 = vunpack.c.h.b16 %v588
    %v2499 = vunpack.c.l.b16 %v589
    %v2500 = vunpack.c.h.b16 %v589
    %v2501 = vunpack.c.l.b16 %v590
    %v2502 = vunpack.c.h.b16 %v590
    %v2503 = vunpack.c.l.b16 %v591
    %v2504 = vunpack.c.h.b16 %v591
    %v2505 = vunpack.c.l.b16 %v592
    %v2506 = vunpack.c.h.b16 %v592
    %v2507 = vunpack.c.l.b16 %v593
    %v2508 = vunpack.c.h.b16 %v593
    %v2509 = vunpack.c.l.b16 %v594
    %v2510 = vunpack.c.h.b16 %v594
    %v2511 = vunpack.c.l.b16 %v595
    %v2512 = vunpack.c.h.b16 %v595
    %v2513 = vunpack.c.l.b16 %v596
    %v2514 = vunpack.c.h.b16 %v596
    %v2515 = vunpack.c.l.b16 %v597
    %v2516 = vunpack.c.h.b16 %v597
    %v2517 = vunpack.c.l.b16 %v598
    %v2518 = vunpack.c.h.b16 %v598
    %v2519 = vunpack.c.l.b16 %v599
    %v2520 = vunpack.c.h.b16 %v599
    %v2521 = vunpack.c.l.b16 %v600
    %v2522 = vunpack.c.h.b16 %v600
    %v2523 = vunpack.c.l.b16 %v601
    %v2524 = vunpack.c.h.b16 %v601
    %v2525 = vunpack.c.l.b16 %v602
    %v2526 = vunpack.c.h.b16 %v602
    %v2527 = vunpack.c.l.b16 %v603
    %v2528 = vunpack.c.h.b16 %v603
    %v2529 = vunpack.c.l.b16 %v604
    %v2530 = vunpack.c.h.b16 %v604
    %v2531 = vunpack.c.l.b16 %v605
    %v2532 = vunpack.c.h.b16 %v605
    %v2533 = vunpack.c.l.b16 %v606
    %v2534 = vunpack.c.h.b16 %v606
    %v2535 = vunpack.c.l.b16 %v607
    %v2536 = vunpack.c.h.b16 %v607
    %v2537 = vunpack.c.l.b16 %v608
    %v2538 = vunpack.c.h.b16 %v608
    %v2539 = vunpack.c.l.b16 %v609
    %v2540 = vunpack.c.h.b16 %v609
    %v2541 = vunpack.c.l.b16 %v610
    %v2542 = vunpack.c.h.b16 %v610
    %v2543 = vunpack.c.l.b16 %v611
    %v2544 = vunpack.c.h.b16 %v611
    %v2545 = vunpack.c.l.b16 %v612
    %v2546 = vunpack.c.h.b16 %v612
    %v2547 = vunpack.c.l.b16 %v613
    %v2548 = vunpack.c.h.b16 %v613
    %v2549 = vunpack.c.l.b16 %v614
    %v2550 = vunpack.c.h.b16 %v614
    %v2551 = vunpack.c.l.b16 %v615
    %v2552 = vunpack.c.h.b16 %v615
    %v2553 = vunpack.c.l.b16 %v616
    %v2554 = vunpack.c.h.b16 %v616
    %v2555 = vunpack.c.l.b16 %v617
    %v2556 = vunpack.c.h.b16 %v617
    %v2557 = vunpack.c.l.b16 %v618
    %v2558 = vunpack.c.h.b16 %v618
    %v2559 = vunpack.c.l.b16 %v619
    %v2560 = vunpack.c.h.b16 %v619
    %v2561 = vunpack.c.l.b16 %v620
    %v2562 = vunpack.c.h.b16 %v620
    %v2563 = vunpack.c.l.b16 %v621
    %v2564 = vunpack.c.h.b16 %v621
    %v2565 = vunpack.c.l.b16 %v622
    %v2566 = vunpack.c.h.b16 %v622
    %v2567 = vunpack.c.l.b16 %v623
    %v2568 = vunpack.c.h.b16 %v623
    %v2569 = vunpack.c.l.b16 %v624
    %v2570 = vunpack.c.h.b16 %v624
    %v2571 = vunpack.c.l.b16 %v625
    %v2572 = vunpack.c.h.b16 %v625
    %v2573 = vunpack.c.l.b16 %v626
    %v2574 = vunpack.c.h.b16 %v626
    %v2575 = vunpack.c.l.b16 %v627
    %v2576 = vunpack.c.h.b16 %v627
    %v2577 = vunpack.c.l.b16 %v628
    %v2578 = vunpack.c.h.b16 %v628
    %v2579 = vunpack.c.l.b16 %v629
    %v2580 = vunpack.c.h.b16 %v629
    %v2581 = vunpack.c.l.b16 %v630
    %v2582 = vunpack.c.h.b16 %v630
    %v2583 = vunpack.c.l.b16 %v631
    %v2584 = vunpack.c.h.b16 %v631
    %v2585 = vunpack.c.l.b16 %v632
    %v2586 = vunpack.c.h.b16 %v632
    %v2587 = vunpack.c.l.b16 %v633
    %v2588 = vunpack.c.h.b16 %v633
    %v2589 = vunpack.c.l.b16 %v634
    %v2590 = vunpack.c.h.b16 %v634
    %v2591 = vunpack.c.l.b16 %v635
    %v2592 = vunpack.c.h.b16 %v635
    %v2593 = vunpack.c.l.b16 %v636
    %v2594 = vunpack.c.h.b16 %v636
    %v2595 = vunpack.c.l.b16 %v637
    %v2596 = vunpack.c.h.b16 %v637
    %v2597 = vunpack.c.l.b16 %v638
    %v2598 = vunpack.c.h.b16 %v638
    %v2599 = vunpack.c.l.b16 %v639
    %v2600 = vunpack.c.h.b16 %v639
    %v2601 = vunpack.c.l.b16 %v640
    %v2602 = vunpack.c.h.b16 %v640
    %v2603 = vunpack.c.l.b16 %v641
    %v2604 = vunpack.c.h.b16 %v641
    %v2605 = vunpack.c.l.b16 %v642
    %v2606 = vunpack.c.h.b16 %v642
    %v2607 = vunpack.c.l.b16 %v643
    %v2608 = vunpack.c.h.b16 %v643
    %v2609 = vunpack.c.l.b16 %v644
    %v2610 = vunpack.c.h.b16 %v644
    %v2611 = vunpack.c.l.b16 %v645
    %v2612 = vunpack.c.h.b16 %v645
    %v2613 = vunpack.c.l.b16 %v646
    %v2614 = vunpack.c.h.b16 %v646
    %v2615 = vunpack.c.l.b16 %v647
    %v2616 = vunpack.c.h.b16 %v647
    %v2617 = vunpack.c.l.b16 %v648
    %v2618 = vunpack.c.h.b16 %v648
    %v2619 = vunpack.c.l.b16 %v649
    %v2620 = vunpack.c.h.b16 %v649
    %v2621 = vunpack.c.l.b16 %v650
    %v2622 = vunpack.c.h.b16 %v650
    %v2623 = vunpack.c.l.b16 %v651
    %v2624 = vunpack.c.h.b16 %v651
    %v2625 = vunpack.c.l.b16 %v652
    %v2626 = vunpack.c.h.b16 %v652
    %v2627 = vunpack.c.l.b16 %v653
    %v2628 = vunpack.c.h.b16 %v653
    %v2629 = vunpack.c.l.b16 %v654
    %v2630 = vunpack.c.h.b16 %v654
    %v2631 = vunpack.c.l.b16 %v655
    %v2632 = vunpack.c.h.b16 %v655
    %v2633 = vunpack.c.l.b16 %v656
    %v2634 = vunpack.c.h.b16 %v656
    %v2635 = vunpack.c.l.b16 %v657
    %v2636 = vunpack.c.h.b16 %v657
    %v2637 = vunpack.c.l.b16 %v658
    %v2638 = vunpack.c.h.b16 %v658
    %v2639 = vunpack.c.l.b16 %v659
    %v2640 = vunpack.c.h.b16 %v659
    %v2641 = vunpack.c.l.b16 %v660
    %v2642 = vunpack.c.h.b16 %v660
    %v2643 = vunpack.c.l.b16 %v661
    %v2644 = vunpack.c.h.b16 %v661
    %v2645 = vunpack.c.l.b16 %v662
    %v2646 = vunpack.c.h.b16 %v662
    %v2647 = vunpack.c.l.b16 %v663
    %v2648 = vunpack.c.h.b16 %v663
    %v2649 = vunpack.c.l.b16 %v664
    %v2650 = vunpack.c.h.b16 %v664
    %v2651 = vunpack.c.l.b16 %v665
    %v2652 = vunpack.c.h.b16 %v665
    %v2653 = vunpack.c.l.b16 %v666
    %v2654 = vunpack.c.h.b16 %v666
    %v2655 = vunpack.c.l.b16 %v667
    %v2656 = vunpack.c.h.b16 %v667
    %v2657 = vunpack.c.l.b16 %v668
    %v2658 = vunpack.c.h.b16 %v668
    %v2659 = vunpack.c.l.b16 %v669
    %v2660 = vunpack.c.h.b16 %v669
    %v2661 = vunpack.c.l.b16 %v670
    %v2662 = vunpack.c.h.b16 %v670
    %v2663 = vunpack.c.l.b16 %v671
    %v2664 = vunpack.c.h.b16 %v671
    %v2665 = vunpack.c.l.b16 %v672
    %v2666 = vunpack.c.h.b16 %v672
    %v2667 = vunpack.c.l.b16 %v673
    %v2668 = vunpack.c.h.b16 %v673
    %v2669 = vunpack.c.l.b16 %v674
    %v2670 = vunpack.c.h.b16 %v674
    %v2671 = vunpack.c.l.b16 %v675
    %v2672 = vunpack.c.h.b16 %v675
    %v2673 = vunpack.c.l.b16 %v676
    %v2674 = vunpack.c.h.b16 %v676
    %v2675 = vunpack.c.l.b16 %v677
    %v2676 = vunpack.c.h.b16 %v677
    %v2677 = vunpack.c.l.b16 %v678
    %v2678 = vunpack.c.h.b16 %v678
    %v2679 = vunpack.c.l.b16 %v679
    %v2680 = vunpack.c.h.b16 %v679
    %v2681 = vunpack.c.l.b16 %v680
    %v2682 = vunpack.c.h.b16 %v680
    %v2683 = vunpack.c.l.b16 %v681
    %v2684 = vunpack.c.h.b16 %v681
    %v2685 = vunpack.c.l.b16 %v682
    %v2686 = vunpack.c.h.b16 %v682
    %v2687 = vunpack.c.l.b16 %v683
    %v2688 = vunpack.c.h.b16 %v683
    %v2689 = vunpack.c.l.b16 %v684
    %v2690 = vunpack.c.h.b16 %v684
    %v2691 = vunpack.c.l.b16 %v685
    %v2692 = vunpack.c.h.b16 %v685
    %v2693 = vunpack.c.l.b16 %v686
    %v2694 = vunpack.c.h.b16 %v686
    %v2695 = vunpack.c.l.b16 %v687
    %v2696 = vunpack.c.h.b16 %v687
    %v2697 = vunpack.c.l.b16 %v688
    %v2698 = vunpack.c.h.b16 %v688
    %v2699 = vunpack.c.l.b16 %v689
    %v2700 = vunpack.c.h.b16 %v689
    %v2701 = vunpack.c.l.b16 %v690
    %v2702 = vunpack.c.h.b16 %v690
    %v2703 = vunpack.c.l.b16 %v691
    %v2704 = vunpack.c.h.b16 %v691
    %v2705 = vunpack.c.l.b16 %v692
    %v2706 = vunpack.c.h.b16 %v692
    %v2707 = vunpack.c.l.b16 %v693
    %v2708 = vunpack.c.h.b16 %v693
    %v2709 = vunpack.c.l.b16 %v694
    %v2710 = vunpack.c.h.b16 %v694
    %v2711 = vunpack.c.l.b16 %v695
    %v2712 = vunpack.c.h.b16 %v695
    %v2713 = vunpack.c.l.b16 %v696
    %v2714 = vunpack.c.h.b16 %v696
    %v2715 = vunpack.c.l.b16 %v697
    %v2716 = vunpack.c.h.b16 %v697
    %v2717 = vunpack.c.l.b16 %v698
    %v2718 = vunpack.c.h.b16 %v698
    %v2719 = vunpack.c.l.b16 %v699
    %v2720 = vunpack.c.h.b16 %v699
    %v2721 = vunpack.c.l.b16 %v700
    %v2722 = vunpack.c.h.b16 %v700
    %v2723 = vunpack.c.l.b16 %v701
    %v2724 = vunpack.c.h.b16 %v701
    %v2725 = vunpack.c.l.b16 %v702
    %v2726 = vunpack.c.h.b16 %v702
    %v2727 = vunpack.c.l.b16 %v703
    %v2728 = vunpack.c.h.b16 %v703
    %v2729 = vunpack.c.l.b16 %v704
    %v2730 = vunpack.c.h.b16 %v704
    %v2731 = vunpack.c.l.b16 %v705
    %v2732 = vunpack.c.h.b16 %v705
    %v2733 = vunpack.c.l.b16 %v706
    %v2734 = vunpack.c.h.b16 %v706
    %v2735 = vunpack.c.l.b16 %v707
    %v2736 = vunpack.c.h.b16 %v707
    %v2737 = vunpack.c.l.b16 %v708
    %v2738 = vunpack.c.h.b16 %v708
    %v2739 = vunpack.c.l.b16 %v709
    %v2740 = vunpack.c.h.b16 %v709
    %v2741 = vunpack.c.l.b16 %v710
    %v2742 = vunpack.c.h.b16 %v710
    %v2743 = vunpack.c.l.b16 %v711
    %v2744 = vunpack.c.h.b16 %v711
    %v2745 = vunpack.c.l.b16 %v712
    %v2746 = vunpack.c.h.b16 %v712
    %v2747 = vunpack.c.l.b16 %v713
    %v2748 = vunpack.c.h.b16 %v713
    %v2749 = vunpack.c.l.b16 %v714
    %v2750 = vunpack.c.h.b16 %v714
    %v2751 = vunpack.c.l.b16 %v715
    %v2752 = vunpack.c.h.b16 %v715
    %v2753 = vunpack.c.l.b16 %v716
    %v2754 = vunpack.c.h.b16 %v716
    %v2755 = vunpack.c.l.b16 %v717
    %v2756 = vunpack.c.h.b16 %v717
    %v2757 = vunpack.c.l.b16 %v718
    %v2758 = vunpack.c.h.b16 %v718
    %v2759 = vunpack.c.l.b16 %v719
    %v2760 = vunpack.c.h.b16 %v719
    %v2761 = vunpack.c.l.b16 %v720
    %v2762 = vunpack.c.h.b16 %v720
    %v2763 = vunpack.c.l.b16 %v721
    %v2764 = vunpack.c.h.b16 %v721
    %v2765 = vunpack.c.l.b16 %v722
    %v2766 = vunpack.c.h.b16 %v722
    %v2767 = vunpack.c.l.b16 %v723
    %v2768 = vunpack.c.h.b16 %v723
    %v2769 = vunpack.c.l.b16 %v724
    %v2770 = vunpack.c.h.b16 %v724
    %v2771 = vunpack.c.l.b16 %v725
    %v2772 = vunpack.c.h.b16 %v725
    %v2773 = vunpack.c.l.b16 %v726
    %v2774 = vunpack.c.h.b16 %v726
    %v2775 = vunpack.c.l.b16 %v727
    %v2776 = vunpack.c.h.b16 %v727
    %v2777 = vunpack.c.l.b16 %v728
    %v2778 = vunpack.c.h.b16 %v728
    %v2779 = vunpack.c.l.b16 %v729
    %v2780 = vunpack.c.h.b16 %v729
    %v2781 = vunpack.c.l.b16 %v730
    %v2782 = vunpack.c.h.b16 %v730
    %v2783 = vunpack.c.l.b16 %v731
    %v2784 = vunpack.c.h.b16 %v731
    %v2785 = vunpack.c.l.b16 %v732
    %v2786 = vunpack.c.h.b16 %v732
    %v2787 = vunpack.c.l.b16 %v733
    %v2788 = vunpack.c.h.b16 %v733
    %v2789 = vunpack.c.l.b16 %v734
    %v2790 = vunpack.c.h.b16 %v734
    %v2791 = vunpack.c.l.b16 %v735
    %v2792 = vunpack.c.h.b16 %v735
    %v2793 = vunpack.c.l.b16 %v736
    %v2794 = vunpack.c.h.b16 %v736
    %v2795 = vunpack.c.l.b16 %v737
    %v2796 = vunpack.c.h.b16 %v737
    %v2797 = vunpack.c.l.b16 %v738
    %v2798 = vunpack.c.h.b16 %v738
    %v2799 = vunpack.c.l.b16 %v739
    %v2800 = vunpack.c.h.b16 %v739
    %v2801 = vunpack.c.l.b16 %v740
    %v2802 = vunpack.c.h.b16 %v740
    %v2803 = vunpack.c.l.b16 %v741
    %v2804 = vunpack.c.h.b16 %v741
    %v2805 = vunpack.c.l.b16 %v742
    %v2806 = vunpack.c.h.b16 %v742
    %v2807 = vunpack.c.l.b16 %v743
    %v2808 = vunpack.c.h.b16 %v743
    %v2809 = vunpack.c.l.b16 %v744
    %v2810 = vunpack.c.h.b16 %v744
    %v2811 = vunpack.c.l.b16 %v745
    %v2812 = vunpack.c.h.b16 %v745
    %v2813 = vunpack.c.l.b16 %v746
    %v2814 = vunpack.c.h.b16 %v746
    %v2815 = vunpack.c.l.b16 %v747
    %v2816 = vunpack.c.h.b16 %v747
    %v2817 = vunpack.c.l.b16 %v748
    %v2818 = vunpack.c.h.b16 %v748
    %v2819 = vunpack.c.l.b16 %v749
    %v2820 = vunpack.c.h.b16 %v749
    %v2821 = vunpack.c.l.b16 %v750
    %v2822 = vunpack.c.h.b16 %v750
    %v2823 = vunpack.c.l.b16 %v751
    %v2824 = vunpack.c.h.b16 %v751
    %v2825 = vunpack.c.l.b16 %v752
    %v2826 = vunpack.c.h.b16 %v752
    %v2827 = vunpack.c.l.b16 %v753
    %v2828 = vunpack.c.h.b16 %v753
    %v2829 = vunpack.c.l.b16 %v754
    %v2830 = vunpack.c.h.b16 %v754
    %v2831 = vunpack.c.l.b16 %v755
    %v2832 = vunpack.c.h.b16 %v755
    %v2833 = vunpack.c.l.b16 %v756
    %v2834 = vunpack.c.h.b16 %v756
    %v2835 = vunpack.c.l.b16 %v757
    %v2836 = vunpack.c.h.b16 %v757
    %v2837 = vunpack.c.l.b16 %v758
    %v2838 = vunpack.c.h.b16 %v758
    %v2839 = vunpack.c.l.b16 %v759
    %v2840 = vunpack.c.h.b16 %v759
    %v2841 = vunpack.c.l.b16 %v760
    %v2842 = vunpack.c.h.b16 %v760
    %v2843 = vunpack.c.l.b16 %v761
    %v2844 = vunpack.c.h.b16 %v761
    %v2845 = vunpack.c.l.b16 %v762
    %v2846 = vunpack.c.h.b16 %v762
    %v2847 = vunpack.c.l.b16 %v763
    %v2848 = vunpack.c.h.b16 %v763
    %v2849 = vunpack.c.l.b16 %v764
    %v2850 = vunpack.c.h.b16 %v764
    %v2851 = vunpack.c.l.b16 %v765
    %v2852 = vunpack.c.h.b16 %v765
    %v2853 = vunpack.c.l.b16 %v766
    %v2854 = vunpack.c.h.b16 %v766
    %v2855 = vunpack.c.l.b16 %v767
    %v2856 = vunpack.c.h.b16 %v767
    %v2857 = vunpack.c.l.b16 %v768
    %v2858 = vunpack.c.h.b16 %v768
    %v2859 = vunpack.c.l.b16 %v769
    %v2860 = vunpack.c.h.b16 %v769
    %v2861 = vunpack.c.l.b16 %v770
    %v2862 = vunpack.c.h.b16 %v770
    %v2863 = vunpack.c.l.b16 %v771
    %v2864 = vunpack.c.h.b16 %v771
    %v2865 = vunpack.c.l.b16 %v772
    %v2866 = vunpack.c.h.b16 %v772
    %v2867 = vunpack.c.l.b16 %v773
    %v2868 = vunpack.c.h.b16 %v773
    %v2869 = vunpack.c.l.b16 %v774
    %v2870 = vunpack.c.h.b16 %v774
    %v2871 = vunpack.c.l.b16 %v775
    %v2872 = vunpack.c.h.b16 %v775
    %v2873 = vunpack.c.l.b16 %v776
    %v2874 = vunpack.c.h.b16 %v776
    %v2875 = vunpack.c.l.b16 %v777
    %v2876 = vunpack.c.h.b16 %v777
    %v2877 = vunpack.c.l.b16 %v778
    %v2878 = vunpack.c.h.b16 %v778
    %v2879 = vunpack.c.l.b16 %v779
    %v2880 = vunpack.c.h.b16 %v779
    %v2881 = vunpack.c.l.b16 %v780
    %v2882 = vunpack.c.h.b16 %v780
    %v2883 = vunpack.c.l.b16 %v781
    %v2884 = vunpack.c.h.b16 %v781
    %v2885 = vunpack.c.l.b16 %v782
    %v2886 = vunpack.c.h.b16 %v782
    %v2887 = vunpack.c.l.b16 %v783
    %v2888 = vunpack.c.h.b16 %v783
    %v2889 = vunpack.c.l.b16 %v784
    %v2890 = vunpack.c.h.b16 %v784
    %v2891 = vunpack.c.l.b16 %v785
    %v2892 = vunpack.c.h.b16 %v785
    %v2893 = vunpack.c.l.b16 %v786
    %v2894 = vunpack.c.h.b16 %v786
    %v2895 = vunpack.c.l.b16 %v787
    %v2896 = vunpack.c.h.b16 %v787
    %v2897 = vunpack.c.l.b16 %v788
    %v2898 = vunpack.c.h.b16 %v788
    %v2899 = vunpack.c.l.b16 %v789
    %v2900 = vunpack.c.h.b16 %v789
    %v2901 = vunpack.c.l.b16 %v790
    %v2902 = vunpack.c.h.b16 %v790
    %v2903 = vunpack.c.l.b16 %v791
    %v2904 = vunpack.c.h.b16 %v791
    %v2905 = vunpack.c.l.b16 %v792
    %v2906 = vunpack.c.h.b16 %v792
    %v2907 = vunpack.c.l.b16 %v793
    %v2908 = vunpack.c.h.b16 %v793
    %v2909 = vunpack.c.l.b16 %v794
    %v2910 = vunpack.c.h.b16 %v794
    %v2911 = vunpack.c.l.b16 %v795
    %v2912 = vunpack.c.h.b16 %v795
    %v2913 = vunpack.c.l.b16 %v796
    %v2914 = vunpack.c.h.b16 %v796
    %v2915 = vunpack.c.l.b16 %v797
    %v2916 = vunpack.c.h.b16 %v797
    %v2917 = vunpack.c.l.b16 %v798
    %v2918 = vunpack.c.h.b16 %v798
    %v2919 = vunpack.c.l.b16 %v799
    %v2920 = vunpack.c.h.b16 %v799
    %v2921 = vunpack.c.l.b16 %v800
    %v2922 = vunpack.c.h.b16 %v800
    %v2923 = vunpack.c.l.b16 %v801
    %v2924 = vunpack.c.h.b16 %v801
    %v2925 = vunpack.c.l.b16 %v802
    %v2926 = vunpack.c.h.b16 %v802
    %v2927 = vunpack.c.l.b16 %v803
    %v2928 = vunpack.c.h.b16 %v803
    %v2929 = vunpack.c.l.b16 %v804
    %v2930 = vunpack.c.h.b16 %v804
    %v2931 = vunpack.c.l.b16 %v805
    %v2932 = vunpack.c.h.b16 %v805
    %v2933 = vunpack.c.l.b16 %v806
    %v2934 = vunpack.c.h.b16 %v806
    %v2935 = vunpack.c.l.b16 %v807
    %v2936 = vunpack.c.h.b16 %v807
    %v2937 = vunpack.c.l.b16 %v808
    %v2938 = vunpack.c.h.b16 %v808
    %v2939 = vunpack.c.l.b16 %v809
    %v2940 = vunpack.c.h.b16 %v809
    %v2941 = vunpack.c.l.b16 %v810
    %v2942 = vunpack.c.h.b16 %v810
    %v2943 = vunpack.c.l.b16 %v811
    %v2944 = vunpack.c.h.b16 %v811
    %v2945 = vunpack.c.l.b16 %v812
    %v2946 = vunpack.c.h.b16 %v812
    %v2947 = vunpack.c.l.b16 %v813
    %v2948 = vunpack.c.h.b16 %v813
    %v2949 = vunpack.c.l.b16 %v814
    %v2950 = vunpack.c.h.b16 %v814
    %v2951 = vunpack.c.l.b16 %v815
    %v2952 = vunpack.c.h.b16 %v815
    %v2953 = vunpack.c.l.b16 %v816
    %v2954 = vunpack.c.h.b16 %v816
    %v2955 = vunpack.c.l.b16 %v817
    %v2956 = vunpack.c.h.b16 %v817
    %v2957 = vunpack.c.l.b16 %v818
    %v2958 = vunpack.c.h.b16 %v818
    %v2959 = vunpack.c.l.b16 %v819
    %v2960 = vunpack.c.h.b16 %v819
    %v2961 = vunpack.c.l.b16 %v820
    %v2962 = vunpack.c.h.b16 %v820
    %v2963 = vunpack.c.l.b16 %v821
    %v2964 = vunpack.c.h.b16 %v821
    %v2965 = vunpack.c.l.b16 %v822
    %v2966 = vunpack.c.h.b16 %v822
    %v2967 = vunpack.c.l.b16 %v823
    %v2968 = vunpack.c.h.b16 %v823
    %v2969 = vunpack.c.l.b16 %v824
    %v2970 = vunpack.c.h.b16 %v824
    %v2971 = vunpack.c.l.b16 %v825
    %v2972 = vunpack.c.h.b16 %v825
    %v2973 = vunpack.c.l.b16 %v826
    %v2974 = vunpack.c.h.b16 %v826
    %v2975 = vunpack.c.l.b16 %v827
    %v2976 = vunpack.c.h.b16 %v827
    %v2977 = vunpack.c.l.b16 %v828
    %v2978 = vunpack.c.h.b16 %v828
    %v2979 = vunpack.c.l.b16 %v829
    %v2980 = vunpack.c.h.b16 %v829
    %v2981 = vunpack.c.l.b16 %v830
    %v2982 = vunpack.c.h.b16 %v830
    %v2983 = vunpack.c.l.b16 %v831
    %v2984 = vunpack.c.h.b16 %v831
    %v2985 = vunpack.c.l.b16 %v832
    %v2986 = vunpack.c.h.b16 %v832
    %v2987 = vunpack.c.l.b16 %v833
    %v2988 = vunpack.c.h.b16 %v833
    %v2989 = vunpack.c.l.b16 %v834
    %v2990 = vunpack.c.h.b16 %v834
    %v2991 = vunpack.c.l.b16 %v835
    %v2992 = vunpack.c.h.b16 %v835
    %v2993 = vunpack.c.l.b16 %v836
    %v2994 = vunpack.c.h.b16 %v836
    %v2995 = vunpack.c.l.b16 %v837
    %v2996 = vunpack.c.h.b16 %v837
    %v2997 = vunpack.c.l.b16 %v838
    %v2998 = vunpack.c.h.b16 %v838
    %v2999 = vunpack.c.l.b16 %v839
    %v3000 = vunpack.c.h.b16 %v839
    %v3001 = vunpack.c.l.b16 %v840
    %v3002 = vunpack.c.h.b16 %v840
    %v3003 = vunpack.c.l.b16 %v841
    %v3004 = vunpack.c.h.b16 %v841
    %v3005 = vunpack.c.l.b16 %v842
    %v3006 = vunpack.c.h.b16 %v842
    %v3007 = vunpack.c.l.b16 %v843
    %v3008 = vunpack.c.h.b16 %v843
    %v3009 = vunpack.c.l.b16 %v844
    %v3010 = vunpack.c.h.b16 %v844
    %v3011 = vunpack.c.l.b16 %v845
    %v3012 = vunpack.c.h.b16 %v845
    %v3013 = vunpack.c.l.b16 %v846
    %v3014 = vunpack.c.h.b16 %v846
    %v3015 = vunpack.c.l.b16 %v847
    %v3016 = vunpack.c.h.b16 %v847
    %v3017 = vunpack.c.l.b16 %v848
    %v3018 = vunpack.c.h.b16 %v848
    %v3019 = vunpack.c.l.b16 %v849
    %v3020 = vunpack.c.h.b16 %v849
    %v3021 = vunpack.c.l.b16 %v850
    %v3022 = vunpack.c.h.b16 %v850
    %v3023 = vunpack.c.l.b16 %v851
    %v3024 = vunpack.c.h.b16 %v851
    %v3025 = vunpack.c.l.b16 %v852
    %v3026 = vunpack.c.h.b16 %v852
    %v3027 = vunpack.c.l.b16 %v853
    %v3028 = vunpack.c.h.b16 %v853
    %v3029 = vunpack.c.l.b16 %v854
    %v3030 = vunpack.c.h.b16 %v854
    %v3031 = vunpack.c.l.b16 %v855
    %v3032 = vunpack.c.h.b16 %v855
    %v3033 = vunpack.c.l.b16 %v856
    %v3034 = vunpack.c.h.b16 %v856
    %v3035 = vunpack.c.l.b16 %v857
    %v3036 = vunpack.c.h.b16 %v857
    %v3037 = vunpack.c.l.b16 %v858
    %v3038 = vunpack.c.h.b16 %v858
    %v3039 = vunpack.c.l.b16 %v859
    %v3040 = vunpack.c.h.b16 %v859
    %v3041 = vunpack.c.l.b16 %v860
    %v3042 = vunpack.c.h.b16 %v860
    %v3043 = vunpack.c.l.b16 %v861
    %v3044 = vunpack.c.h.b16 %v861
    %v3045 = vunpack.c.l.b16 %v862
    %v3046 = vunpack.c.h.b16 %v862
    %v3047 = vunpack.c.l.b16 %v863
    %v3048 = vunpack.c.h.b16 %v863
    %v3049 = vunpack.c.l.b16 %v864
    %v3050 = vunpack.c.h.b16 %v864
    %v3051 = vunpack.c.l.b16 %v865
    %v3052 = vunpack.c.h.b16 %v865
    %v3053 = vunpack.c.l.b16 %v866
    %v3054 = vunpack.c.h.b16 %v866
    %v3055 = vunpack.c.l.b16 %v867
    %v3056 = vunpack.c.h.b16 %v867
    %v3057 = vunpack.c.l.b16 %v868
    %v3058 = vunpack.c.h.b16 %v868
    %v3059 = vunpack.c.l.b16 %v869
    %v3060 = vunpack.c.h.b16 %v869
    %v3061 = vunpack.c.l.b16 %v870
    %v3062 = vunpack.c.h.b16 %v870
    %v3063 = vunpack.c.l.b16 %v871
    %v3064 = vunpack.c.h.b16 %v871
    %v3065 = vunpack.c.l.b16 %v872
    %v3066 = vunpack.c.h.b16 %v872
    %v3067 = vunpack.c.l.b16 %v873
    %v3068 = vunpack.c.h.b16 %v873
    %v3069 = vunpack.c.l.b16 %v874
    %v3070 = vunpack.c.h.b16 %v874
    %v3071 = vunpack.c.l.b16 %v875
    %v3072 = vunpack.c.h.b16 %v875
    %v3073 = vunpack.c.l.b16 %v876
    %v3074 = vunpack.c.h.b16 %v876
    %v3075 = vunpack.c.l.b16 %v877
    %v3076 = vunpack.c.h.b16 %v877
    %v3077 = vunpack.c.l.b16 %v878
    %v3078 = vunpack.c.h.b16 %v878
    %v3079 = vunpack.c.l.b16 %v879
    %v3080 = vunpack.c.h.b16 %v879
    %v3081 = vunpack.c.l.b16 %v880
    %v3082 = vunpack.c.h.b16 %v880
    %v3083 = vunpack.c.l.b16 %v881
    %v3084 = vunpack.c.h.b16 %v881
    %v3085 = vunpack.c.l.b16 %v882
    %v3086 = vunpack.c.h.b16 %v882
    %v3087 = vunpack.c.l.b16 %v883
    %v3088 = vunpack.c.h.b16 %v883
    %v3089 = vunpack.c.l.b16 %v884
    %v3090 = vunpack.c.h.b16 %v884
    %v3091 = vunpack.c.l.b16 %v885
    %v3092 = vunpack.c.h.b16 %v885
    %v3093 = vunpack.c.l.b16 %v886
    %v3094 = vunpack.c.h.b16 %v886
    %v3095 = vunpack.c.l.b16 %v887
    %v3096 = vunpack.c.h.b16 %v887
    %v3097 = vunpack.c.l.b16 %v888
    %v3098 = vunpack.c.h.b16 %v888
    %v3099 = vunpack.c.l.b16 %v889
    %v3100 = vunpack.c.h.b16 %v889
    %v3101 = vunpack.c.l.b16 %v890
    %v3102 = vunpack.c.h.b16 %v890
    %v3103 = vunpack.c.l.b16 %v891
    %v3104 = vunpack.c.h.b16 %v891
    %v3105 = vunpack.c.l.b16 %v892
    %v3106 = vunpack.c.h.b16 %v892
    %v3107 = vunpack.c.l.b16 %v893
    %v3108 = vunpack.c.h.b16 %v893
    %v3109 = vunpack.c.l.b16 %v894
    %v3110 = vunpack.c.h.b16 %v894
    %v3111 = vunpack.c.l.b16 %v895
    %v3112 = vunpack.c.h.b16 %v895
    %v3113 = vunpack.c.l.b16 %v896
    %v3114 = vunpack.c.h.b16 %v896
    %v3115 = vunpack.c.l.b16 %v897
    %v3116 = vunpack.c.h.b16 %v897
    %v3117 = vunpack.c.l.b16 %v898
    %v3118 = vunpack.c.h.b16 %v898
    %v3119 = vunpack.c.l.b16 %v899
    %v3120 = vunpack.c.h.b16 %v899
    %v3121 = vunpack.c.l.b16 %v900
    %v3122 = vunpack.c.h.b16 %v900
    %v3123 = vunpack.c.l.b16 %v901
    %v3124 = vunpack.c.h.b16 %v901
    %v3125 = vunpack.c.l.b16 %v902
    %v3126 = vunpack.c.h.b16 %v902
    %v3127 = vunpack.c.l.b16 %v903
    %v3128 = vunpack.c.h.b16 %v903
    %v3129 = vunpack.c.l.b16 %v904
    %v3130 = vunpack.c.h.b16 %v904
    %v3131 = vunpack.c.l.b16 %v905
    %v3132 = vunpack.c.h.b16 %v905
    %v3133 = vunpack.c.l.b16 %v906
    %v3134 = vunpack.c.h.b16 %v906
    %v3135 = vunpack.c.l.b16 %v907
    %v3136 = vunpack.c.h.b16 %v907
    %v3137 = vunpack.c.l.b16 %v908
    %v3138 = vunpack.c.h.b16 %v908
    %v3139 = vunpack.c.l.b16 %v909
    %v3140 = vunpack.c.h.b16 %v909
    %v3141 = vunpack.c.l.b16 %v910
    %v3142 = vunpack.c.h.b16 %v910
    %v3143 = vunpack.c.l.b16 %v911
    %v3144 = vunpack.c.h.b16 %v911
    %v3145 = vunpack.c.l.b16 %v912
    %v3146 = vunpack.c.h.b16 %v912
    %v3147 = vunpack.c.l.b16 %v913
    %v3148 = vunpack.c.h.b16 %v913
    %v3149 = vunpack.c.l.b16 %v914
    %v3150 = vunpack.c.h.b16 %v914
    %v3151 = vunpack.c.l.b16 %v915
    %v3152 = vunpack.c.h.b16 %v915
    %v3153 = vunpack.c.l.b16 %v916
    %v3154 = vunpack.c.h.b16 %v916
    %v3155 = vunpack.c.l.b16 %v917
    %v3156 = vunpack.c.h.b16 %v917
    %v3157 = vunpack.c.l.b16 %v918
    %v3158 = vunpack.c.h.b16 %v918
    %v3159 = vunpack.c.l.b16 %v919
    %v3160 = vunpack.c.h.b16 %v919
    %v3161 = vunpack.c.l.b16 %v920
    %v3162 = vunpack.c.h.b16 %v920
    %v3163 = vunpack.c.l.b16 %v921
    %v3164 = vunpack.c.h.b16 %v921
    %v3165 = vunpack.c.l.b16 %v922
    %v3166 = vunpack.c.h.b16 %v922
    %v3167 = vunpack.c.l.b16 %v923
    %v3168 = vunpack.c.h.b16 %v923
    %v3169 = vunpack.c.l.b16 %v924
    %v3170 = vunpack.c.h.b16 %v924
    %v3171 = vunpack.c.l.b16 %v925
    %v3172 = vunpack.c.h.b16 %v925
    %v3173 = vunpack.c.l.b16 %v926
    %v3174 = vunpack.c.h.b16 %v926
    %v3175 = vunpack.c.l.b16 %v927
    %v3176 = vunpack.c.h.b16 %v927
    %v3177 = vunpack.c.l.b16 %v928
    %v3178 = vunpack.c.h.b16 %v928
    %v3179 = vunpack.c.l.b16 %v929
    %v3180 = vunpack.c.h.b16 %v929
    %v3181 = vunpack.c.l.b16 %v930
    %v3182 = vunpack.c.h.b16 %v930
    %v3183 = vunpack.c.l.b16 %v931
    %v3184 = vunpack.c.h.b16 %v931
    %v3185 = vunpack.c.l.b16 %v932
    %v3186 = vunpack.c.h.b16 %v932
    %v3187 = vunpack.c.l.b16 %v933
    %v3188 = vunpack.c.h.b16 %v933
    %v3189 = vunpack.c.l.b16 %v934
    %v3190 = vunpack.c.h.b16 %v934
    %v3191 = vunpack.c.l.b16 %v935
    %v3192 = vunpack.c.h.b16 %v935
    %v3193 = vunpack.c.l.b16 %v936
    %v3194 = vunpack.c.h.b16 %v936
    %v3195 = vunpack.c.l.b16 %v937
    %v3196 = vunpack.c.h.b16 %v937
    %v3197 = vunpack.c.l.b16 %v938
    %v3198 = vunpack.c.h.b16 %v938
    %v3199 = vunpack.c.l.b16 %v939
    %v3200 = vunpack.c.h.b16 %v939
    %v3201 = vunpack.c.l.b16 %v940
    %v3202 = vunpack.c.h.b16 %v940
    %v3203 = vunpack.c.l.b16 %v941
    %v3204 = vunpack.c.h.b16 %v941
    %v3205 = vunpack.c.l.b16 %v942
    %v3206 = vunpack.c.h.b16 %v942
    %v3207 = vunpack.c.l.b16 %v943
    %v3208 = vunpack.c.h.b16 %v943
    %v3209 = vunpack.c.l.b16 %v944
    %v3210 = vunpack.c.h.b16 %v944
    %v3211 = vunpack.c.l.b16 %v945
    %v3212 = vunpack.c.h.b16 %v945
    %v3213 = vunpack.c.l.b16 %v946
    %v3214 = vunpack.c.h.b16 %v946
    %v3215 = vunpack.c.l.b16 %v947
    %v3216 = vunpack.c.h.b16 %v947
    %v3217 = vunpack.c.l.b16 %v948
    %v3218 = vunpack.c.h.b16 %v948
    %v3219 = vunpack.c.l.b16 %v949
    %v3220 = vunpack.c.h.b16 %v949
    %v3221 = vunpack.c.l.b16 %v950
    %v3222 = vunpack.c.h.b16 %v950
    %v3223 = vunpack.c.l.b16 %v951
    %v3224 = vunpack.c.h.b16 %v951
    %v3225 = vunpack.c.l.b16 %v952
    %v3226 = vunpack.c.h.b16 %v952
    %v3227 = vunpack.c.l.b16 %v953
    %v3228 = vunpack.c.h.b16 %v953
    %v3229 = vunpack.c.l.b16 %v954
    %v3230 = vunpack.c.h.b16 %v954
    %v3231 = vunpack.c.l.b16 %v955
    %v3232 = vunpack.c.h.b16 %v955
    %v3233 = vunpack.c.l.b16 %v956
    %v3234 = vunpack.c.h.b16 %v956
    %v3235 = vunpack.c.l.b16 %v957
    %v3236 = vunpack.c.h.b16 %v957
    %v3237 = vunpack.c.l.b16 %v958
    %v3238 = vunpack.c.h.b16 %v958
    %v3239 = vunpack.c.l.b16 %v959
    %v3240 = vunpack.c.h.b16 %v959
    %v3241 = vunpack.c.l.b16 %v960
    %v3242 = vunpack.c.h.b16 %v960
    %v3243 = vunpack.c.l.b16 %v961
    %v3244 = vunpack.c.h.b16 %v961
    %v3245 = vunpack.c.l.b16 %v962
    %v3246 = vunpack.c.h.b16 %v962
    %v3247 = vunpack.c.l.b16 %v963
    %v3248 = vunpack.c.h.b16 %v963
    %v3249 = vunpack.c.l.b16 %v964
    %v3250 = vunpack.c.h.b16 %v964
    %v3251 = vunpack.c.l.b16 %v965
    %v3252 = vunpack.c.h.b16 %v965
    %v3253 = vunpack.c.l.b16 %v966
    %v3254 = vunpack.c.h.b16 %v966
    %v3255 = vunpack.c.l.b16 %v967
    %v3256 = vunpack.c.h.b16 %v967
    %v3257 = vunpack.c.l.b16 %v968
    %v3258 = vunpack.c.h.b16 %v968
    %v3259 = vunpack.c.l.b16 %v969
    %v3260 = vunpack.c.h.b16 %v969
    %v3261 = vunpack.c.l.b16 %v970
    %v3262 = vunpack.c.h.b16 %v970
    %v3263 = vunpack.c.l.b16 %v971
    %v3264 = vunpack.c.h.b16 %v971
    %v3265 = vunpack.c.l.b16 %v972
    %v3266 = vunpack.c.h.b16 %v972
    %v3267 = vunpack.c.l.b16 %v973
    %v3268 = vunpack.c.h.b16 %v973
    %v3269 = vunpack.c.l.b16 %v974
    %v3270 = vunpack.c.h.b16 %v974
    %v3271 = vunpack.c.l.b16 %v975
    %v3272 = vunpack.c.h.b16 %v975
    %v3273 = vunpack.c.l.b16 %v976
    %v3274 = vunpack.c.h.b16 %v976
    %v3275 = vunpack.c.l.b16 %v977
    %v3276 = vunpack.c.h.b16 %v977
    %v3277 = vunpack.c.l.b16 %v978
    %v3278 = vunpack.c.h.b16 %v978
    %v3279 = vunpack.c.l.b16 %v979
    %v3280 = vunpack.c.h.b16 %v979
    %v3281 = vunpack.c.l.b16 %v980
    %v3282 = vunpack.c.h.b16 %v980
    %v3283 = vunpack.c.l.b16 %v981
    %v3284 = vunpack.c.h.b16 %v981
    %v3285 = vunpack.c.l.b16 %v982
    %v3286 = vunpack.c.h.b16 %v982
    %v3287 = vunpack.c.l.b16 %v983
    %v3288 = vunpack.c.h.b16 %v983
    %v3289 = vunpack.c.l.b16 %v984
    %v3290 = vunpack.c.h.b16 %v984
    %v3291 = vunpack.c.l.b16 %v985
    %v3292 = vunpack.c.h.b16 %v985
    %v3293 = vunpack.c.l.b16 %v986
    %v3294 = vunpack.c.h.b16 %v986
    %v3295 = vunpack.c.l.b16 %v987
    %v3296 = vunpack.c.h.b16 %v987
    %v3297 = vunpack.c.l.b16 %v988
    %v3298 = vunpack.c.h.b16 %v988
    %v3299 = vunpack.c.l.b16 %v989
    %v3300 = vunpack.c.h.b16 %v989
    %v3301 = vunpack.c.l.b16 %v990
    %v3302 = vunpack.c.h.b16 %v990
    %v3303 = vunpack.c.l.b16 %v991
    %v3304 = vunpack.c.h.b16 %v991
    %v3305 = vunpack.c.l.b16 %v992
    %v3306 = vunpack.c.h.b16 %v992
    %v3307 = vunpack.c.l.b16 %v993
    %v3308 = vunpack.c.h.b16 %v993
    %v3309 = vunpack.c.l.b16 %v994
    %v3310 = vunpack.c.h.b16 %v994
    %v3311 = vunpack.c.l.b16 %v995
    %v3312 = vunpack.c.h.b16 %v995
    %v3313 = vunpack.c.l.b16 %v996
    %v3314 = vunpack.c.h.b16 %v996
    %v3315 = vunpack.c.l.b16 %v997
    %v3316 = vunpack.c.h.b16 %v997
    %v3317 = vunpack.c.l.b16 %v998
    %v3318 = vunpack.c.h.b16 %v998
    %v3319 = vunpack.c.l.b16 %v999
    %v3320 = vunpack.c.h.b16 %v999
    %v3321 = vunpack.c.l.b16 %v1000
    %v3322 = vunpack.c.h.b16 %v1000
    %v3323 = vunpack.c.l.b16 %v1001
    %v3324 = vunpack.c.h.b16 %v1001
    %v3325 = vunpack.c.l.b16 %v1002
    %v3326 = vunpack.c.h.b16 %v1002
    %v3327 = vunpack.c.l.b16 %v1003
    %v3328 = vunpack.c.h.b16 %v1003
    %v3329 = vunpack.c.l.b16 %v1004
    %v3330 = vunpack.c.h.b16 %v1004
    %v3331 = vpack.c.b16 %v1799, %v1795
    %v3332 = vpack.c.b16 %v1800, %v1796
    %v3333 = vpack.c.b16 %v1801, %v1797
    %v3334 = vpack.c.b16 %v1802, %v1798
    %v3335 = vpack.c.b16 %v1807, %v1803
    %v3336 = vpack.c.b16 %v1808, %v1804
    %v3337 = vpack.c.b16 %v1809, %v1805
    %v3338 = vpack.c.b16 %v1810, %v1806
    %v3339 = vpack.c.b16 %v1815, %v1811
    %v3340 = vpack.c.b16 %v1816, %v1812
    %v3341 = vpack.c.b16 %v1817, %v1813
    %v3342 = vpack.c.b16 %v1818, %v1814
    %v3343 = vpack.c.b16 %v1823, %v1819
    %v3344 = vpack.c.b16 %v1824, %v1820
    %v3345 = vpack.c.b16 %v1825, %v1821
    %v3346 = vpack.c.b16 %v1826, %v1822
    %v3347 = vpack.c.b16 %v1831, %v1827
    %v3348 = vpack.c.b16 %v1832, %v1828
    %v3349 = vpack.c.b16 %v1833, %v1829
    %v3350 = vpack.c.b16 %v1834, %v1830
    %v3351 = vpack.c.b16 %v1839, %v1835
    %v3352 = vpack.c.b16 %v1840, %v1836
    %v3353 = vpack.c.b16 %v1841, %v1837
    %v3354 = vpack.c.b16 %v1842, %v1838
    %v3355 = vpack.c.b16 %v1847, %v1843
    %v3356 = vpack.c.b16 %v1848, %v1844
    %v3357 = vpack.c.b16 %v1849, %v1845
    %v3358 = vpack.c.b16 %v1850, %v1846
    %v3359 = vpack.c.b16 %v1855, %v1851
    %v3360 = vpack.c.b16 %v1856, %v1852
    %v3361 = vpack.c.b16 %v1857, %v1853
    %v3362 = vpack.c.b16 %v1858, %v1854
    %v3363 = vpack.c.b16 %v1863, %v1859
    %v3364 = vpack.c.b16 %v1864, %v1860
    %v3365 = vpack.c.b16 %v1865, %v1861
    %v3366 = vpack.c.b16 %v1866, %v1862
    %v3367 = vpack.c.b16 %v1871, %v1867
    %v3368 = vpack.c.b16 %v1872, %v1868
    %v3369 = vpack.c.b16 %v1873, %v1869
    %v3370 = vpack.c.b16 %v1874, %v1870
    %v3371 = vpack.c.b16 %v1879, %v1875
    %v3372 = vpack.c.b16 %v1880, %v1876
    %v3373 = vpack.c.b16 %v1881, %v1877
    %v3374 = vpack.c.b16 %v1882, %v1878
    %v3375 = vpack.c.b16 %v1887, %v1883
    %v3376 = vpack.c.b16 %v1888, %v1884
    %v3377 = vpack.c.b16 %v1889, %v1885
    %v3378 = vpack.c.b16 %v1890, %v1886
    %v3379 = vpack.c.b16 %v1895, %v1891
    %v3380 = vpack.c.b16 %v1896, %v1892
    %v3381 = vpack.c.b16 %v1897, %v1893
    %v3382 = vpack.c.b16 %v1898, %v1894
    %v3383 = vpack.c.b16 %v1903, %v1899
    %v3384 = vpack.c.b16 %v1904, %v1900
    %v3385 = vpack.c.b16 %v1905, %v1901
    %v3386 = vpack.c.b16 %v1906, %v1902
    %v3387 = vpack.c.b16 %v1911, %v1907
    %v3388 = vpack.c.b16 %v1912, %v1908
    %v3389 = vpack.c.b16 %v1913, %v1909
    %v3390 = vpack.c.b16 %v1914, %v1910
    %v3391 = vpack.c.b16 %v1919, %v1915
    %v3392 = vpack.c.b16 %v1920, %v1916
    %v3393 = vpack.c.b16 %v1921, %v1917
    %v3394 = vpack.c.b16 %v1922, %v1918
    %v3395 = vpack.c.b16 %v1927, %v1923
    %v3396 = vpack.c.b16 %v1928, %v1924
    %v3397 = vpack.c.b16 %v1929, %v1925
    %v3398 = vpack.c.b16 %v1930, %v1926
    %v3399 = vpack.c.b16 %v1935, %v1931
    %v3400 = vpack.c.b16 %v1936, %v1932
    %v3401 = vpack.c.b16 %v1937, %v1933
    %v3402 = vpack.c.b16 %v1938, %v1934
    %v3403 = vpack.c.b16 %v1943, %v1939
    %v3404 = vpack.c.b16 %v1944, %v1940
    %v3405 = vpack.c.b16 %v1945, %v1941
    %v3406 = vpack.c.b16 %v1946, %v1942
    %v3407 = vpack.c.b16 %v1951, %v1947
    %v3408 = vpack.c.b16 %v1952, %v1948
    %v3409 = vpack.c.b16 %v1953, %v1949
    %v3410 = vpack.c.b16 %v1954, %v1950
    %v3411 = vpack.c.b16 %v1959, %v1955
    %v3412 = vpack.c.b16 %v1960, %v1956
    %v3413 = vpack.c.b16 %v1961, %v1957
    %v3414 = vpack.c.b16 %v1962, %v1958
    %v3415 = vpack.c.b16 %v1967, %v1963
    %v3416 = vpack.c.b16 %v1968, %v1964
    %v3417 = vpack.c.b16 %v1969, %v1965
    %v3418 = vpack.c.b16 %v1970, %v1966
    %v3419 = vpack.c.b16 %v1975, %v1971
    %v3420 = vpack.c.b16 %v1976, %v1972
    %v3421 = vpack.c.b16 %v1977, %v1973
    %v3422 = vpack.c.b16 %v1978, %v1974
    %v3423 = vpack.c.b16 %v1983, %v1979
    %v3424 = vpack.c.b16 %v1984, %v1980
    %v3425 = vpack.c.b16 %v1985, %v1981
    %v3426 = vpack.c.b16 %v1986, %v1982
    %v3427 = vpack.c.b16 %v1991, %v1987
    %v3428 = vpack.c.b16 %v1992, %v1988
    %v3429 = vpack.c.b16 %v1993, %v1989
    %v3430 = vpack.c.b16 %v1994, %v1990
    %v3431 = vpack.c.b16 %v1999, %v1995
    %v3432 = vpack.c.b16 %v2000, %v1996
    %v3433 = vpack.c.b16 %v2001, %v1997
    %v3434 = vpack.c.b16 %v2002, %v1998
    %v3435 = vpack.c.b16 %v2007, %v2003
    %v3436 = vpack.c.b16 %v2008, %v2004
    %v3437 = vpack.c.b16 %v2009, %v2005
    %v3438 = vpack.c.b16 %v2010, %v2006
    %v3439 = vpack.c.b16 %v2015, %v2011
    %v3440 = vpack.c.b16 %v2016, %v2012
    %v3441 = vpack.c.b16 %v2017, %v2013
    %v3442 = vpack.c.b16 %v2018, %v2014
    %v3443 = vpack.c.b16 %v2023, %v2019
    %v3444 = vpack.c.b16 %v2024, %v2020
    %v3445 = vpack.c.b16 %v2025, %v2021
    %v3446 = vpack.c.b16 %v2026, %v2022
    %v3447 = vpack.c.b16 %v2031, %v2027
    %v3448 = vpack.c.b16 %v2032, %v2028
    %v3449 = vpack.c.b16 %v2033, %v2029
    %v3450 = vpack.c.b16 %v2034, %v2030
    %v3451 = vpack.c.b16 %v2039, %v2035
    %v3452 = vpack.c.b16 %v2040, %v2036
    %v3453 = vpack.c.b16 %v2041, %v2037
    %v3454 = vpack.c.b16 %v2042, %v2038
    %v3455 = vpack.c.b16 %v2047, %v2043
    %v3456 = vpack.c.b16 %v2048, %v2044
    %v3457 = vpack.c.b16 %v2049, %v2045
    %v3458 = vpack.c.b16 %v2050, %v2046
    %v3459 = vpack.c.b16 %v2055, %v2051
    %v3460 = vpack.c.b16 %v2056, %v2052
    %v3461 = vpack.c.b16 %v2057, %v2053
    %v3462 = vpack.c.b16 %v2058, %v2054
    %v3463 = vpack.c.b16 %v2063, %v2059
    %v3464 = vpack.c.b16 %v2064, %v2060
    %v3465 = vpack.c.b16 %v2065, %v2061
    %v3466 = vpack.c.b16 %v2066, %v2062
    %v3467 = vpack.c.b16 %v2071, %v2067
    %v3468 = vpack.c.b16 %v2072, %v2068
    %v3469 = vpack.c.b16 %v2073, %v2069
    %v3470 = vpack.c.b16 %v2074, %v2070
    %v3471 = vpack.c.b16 %v2079, %v2075
    %v3472 = vpack.c.b16 %v2080, %v2076
    %v3473 = vpack.c.b16 %v2081, %v2077
    %v3474 = vpack.c.b16 %v2082, %v2078
    %v3475 = vpack.c.b16 %v2087, %v2083
    %v3476 = vpack.c.b16 %v2088, %v2084
    %v3477 = vpack.c.b16 %v2089, %v2085
    %v3478 = vpack.c.b16 %v2090, %v2086
    %v3479 = vpack.c.b16 %v2095, %v2091
    %v3480 = vpack.c.b16 %v2096, %v2092
    %v3481 = vpack.c.b16 %v2097, %v2093
    %v3482 = vpack.c.b16 %v2098, %v2094
    %v3483 = vpack.c.b16 %v2103, %v2099
    %v3484 = vpack.c.b16 %v2104, %v2100
    %v3485 = vpack.c.b16 %v2105, %v2101
    %v3486 = vpack.c.b16 %v2106, %v2102
    %v3487 = vpack.c.b16 %v2111, %v2107
    %v3488 = vpack.c.b16 %v2112, %v2108
    %v3489 = vpack.c.b16 %v2113, %v2109
    %v3490 = vpack.c.b16 %v2114, %v2110
    %v3491 = vpack.c.b16 %v2119, %v2115
    %v3492 = vpack.c.b16 %v2120, %v2116
    %v3493 = vpack.c.b16 %v2121, %v2117
    %v3494 = vpack.c.b16 %v2122, %v2118
    %v3495 = vpack.c.b16 %v2127, %v2123
    %v3496 = vpack.c.b16 %v2128, %v2124
    %v3497 = vpack.c.b16 %v2129, %v2125
    %v3498 = vpack.c.b16 %v2130, %v2126
    %v3499 = vpack.c.b16 %v2135, %v2131
    %v3500 = vpack.c.b16 %v2136, %v2132
    %v3501 = vpack.c.b16 %v2137, %v2133
    %v3502 = vpack.c.b16 %v2138, %v2134
    %v3503 = vpack.c.b16 %v2143, %v2139
    %v3504 = vpack.c.b16 %v2144, %v2140
    %v3505 = vpack.c.b16 %v2145, %v2141
    %v3506 = vpack.c.b16 %v2146, %v2142
    %v3507 = vpack.c.b16 %v2151, %v2147
    %v3508 = vpack.c.b16 %v2152, %v2148
    %v3509 = vpack.c.b16 %v2153, %v2149
    %v3510 = vpack.c.b16 %v2154, %v2150
    %v3511 = vpack.c.b16 %v2159, %v2155
    %v3512 = vpack.c.b16 %v2160, %v2156
    %v3513 = vpack.c.b16 %v2161, %v2157
    %v3514 = vpack.c.b16 %v2162, %v2158
    %v3515 = vpack.c.b16 %v2167, %v2163
    %v3516 = vpack.c.b16 %v2168, %v2164
    %v3517 = vpack.c.b16 %v2169, %v2165
    %v3518 = vpack.c.b16 %v2170, %v2166
    %v3519 = vpack.c.b16 %v2175, %v2171
    %v3520 = vpack.c.b16 %v2176, %v2172
    %v3521 = vpack.c.b16 %v2177, %v2173
    %v3522 = vpack.c.b16 %v2178, %v2174
    %v3523 = vpack.c.b16 %v2183, %v2179
    %v3524 = vpack.c.b16 %v2184, %v2180
    %v3525 = vpack.c.b16 %v2185, %v2181
    %v3526 = vpack.c.b16 %v2186, %v2182
    %v3527 = vpack.c.b16 %v2191, %v2187
    %v3528 = vpack.c.b16 %v2192, %v2188
    %v3529 = vpack.c.b16 %v2193, %v2189
    %v3530 = vpack.c.b16 %v2194, %v2190
    %v3531 = vpack.c.b16 %v2199, %v2195
    %v3532 = vpack.c.b16 %v2200, %v2196
    %v3533 = vpack.c.b16 %v2201, %v2197
    %v3534 = vpack.c.b16 %v2202, %v2198
    %v3535 = vpack.c.b16 %v2207, %v2203
    %v3536 = vpack.c.b16 %v2208, %v2204
    %v3537 = vpack.c.b16 %v2209, %v2205
    %v3538 = vpack.c.b16 %v2210, %v2206
    %v3539 = vpack.c.b16 %v2215, %v2211
    %v3540 = vpack.c.b16 %v2216, %v2212
    %v3541 = vpack.c.b16 %v2217, %v2213
    %v3542 = vpack.c.b16 %v2218, %v2214
    %v3543 = vpack.c.b16 %v2223, %v2219
    %v3544 = vpack.c.b16 %v2224, %v2220
    %v3545 = vpack.c.b16 %v2225, %v2221
    %v3546 = vpack.c.b16 %v2226, %v2222
    %v3547 = vpack.c.b16 %v2231, %v2227
    %v3548 = vpack.c.b16 %v2232, %v2228
    %v3549 = vpack.c.b16 %v2233, %v2229
    %v3550 = vpack.c.b16 %v2234, %v2230
    %v3551 = vpack.c.b16 %v2239, %v2235
    %v3552 = vpack.c.b16 %v2240, %v2236
    %v3553 = vpack.c.b16 %v2241, %v2237
    %v3554 = vpack.c.b16 %v2242, %v2238
    %v3555 = vpack.c.b16 %v2247, %v2243
    %v3556 = vpack.c.b16 %v2248, %v2244
    %v3557 = vpack.c.b16 %v2249, %v2245
    %v3558 = vpack.c.b16 %v2250, %v2246
    %v3559 = vpack.c.b16 %v2255, %v2251
    %v3560 = vpack.c.b16 %v2256, %v2252
    %v3561 = vpack.c.b16 %v2257, %v2253
    %v3562 = vpack.c.b16 %v2258, %v2254
    %v3563 = vpack.c.b16 %v2263, %v2259
    %v3564 = vpack.c.b16 %v2264, %v2260
    %v3565 = vpack.c.b16 %v2265, %v2261
    %v3566 = vpack.c.b16 %v2266, %v2262
    %v3567 = vpack.c.b16 %v2271, %v2267
    %v3568 = vpack.c.b16 %v2272, %v2268
    %v3569 = vpack.c.b16 %v2273, %v2269
    %v3570 = vpack.c.b16 %v2274, %v2270
    %v3571 = vpack.c.b16 %v2279, %v2275
    %v3572 = vpack.c.b16 %v2280, %v2276
    %v3573 = vpack.c.b16 %v2281, %v2277
    %v3574 = vpack.c.b16 %v2282, %v2278
    %v3575 = vpack.c.b16 %v2287, %v2283
    %v3576 = vpack.c.b16 %v2288, %v2284
    %v3577 = vpack.c.b16 %v2289, %v2285
    %v3578 = vpack.c.b16 %v2290, %v2286
    %v3579 = vpack.c.b16 %v2295, %v2291
    %v3580 = vpack.c.b16 %v2296, %v2292
    %v3581 = vpack.c.b16 %v2297, %v2293
    %v3582 = vpack.c.b16 %v2298, %v2294
    %v3583 = vpack.c.b16 %v2303, %v2299
    %v3584 = vpack.c.b16 %v2304, %v2300
    %v3585 = vpack.c.b16 %v2305, %v2301
    %v3586 = vpack.c.b16 %v2306, %v2302
    %v3587 = vpack.c.b16 %v2311, %v2307
    %v3588 = vpack.c.b16 %v2312, %v2308
    %v3589 = vpack.c.b16 %v2313, %v2309
    %v3590 = vpack.c.b16 %v2314, %v2310
    %v3591 = vpack.c.b16 %v2319, %v2315
    %v3592 = vpack.c.b16 %v2320, %v2316
    %v3593 = vpack.c.b16 %v2321, %v2317
    %v3594 = vpack.c.b16 %v2322, %v2318
    %v3595 = vpack.c.b16 %v2327, %v2323
    %v3596 = vpack.c.b16 %v2328, %v2324
    %v3597 = vpack.c.b16 %v2329, %v2325
    %v3598 = vpack.c.b16 %v2330, %v2326
    %v3599 = vpack.c.b16 %v2335, %v2331
    %v3600 = vpack.c.b16 %v2336, %v2332
    %v3601 = vpack.c.b16 %v2337, %v2333
    %v3602 = vpack.c.b16 %v2338, %v2334
    %v3603 = vpack.c.b16 %v2343, %v2339
    %v3604 = vpack.c.b16 %v2344, %v2340
    %v3605 = vpack.c.b16 %v2345, %v2341
    %v3606 = vpack.c.b16 %v2346, %v2342
    %v3607 = vpack.c.b16 %v2351, %v2347
    %v3608 = vpack.c.b16 %v2352, %v2348
    %v3609 = vpack.c.b16 %v2353, %v2349
    %v3610 = vpack.c.b16 %v2354, %v2350
    %v3611 = vpack.c.b16 %v2359, %v2355
    %v3612 = vpack.c.b16 %v2360, %v2356
    %v3613 = vpack.c.b16 %v2361, %v2357
    %v3614 = vpack.c.b16 %v2362, %v2358
    %v3615 = vpack.c.b16 %v2367, %v2363
    %v3616 = vpack.c.b16 %v2368, %v2364
    %v3617 = vpack.c.b16 %v2369, %v2365
    %v3618 = vpack.c.b16 %v2370, %v2366
    %v3619 = vpack.c.b16 %v2375, %v2371
    %v3620 = vpack.c.b16 %v2376, %v2372
    %v3621 = vpack.c.b16 %v2377, %v2373
    %v3622 = vpack.c.b16 %v2378, %v2374
    %v3623 = vpack.c.b16 %v2383, %v2379
    %v3624 = vpack.c.b16 %v2384, %v2380
    %v3625 = vpack.c.b16 %v2385, %v2381
    %v3626 = vpack.c.b16 %v2386, %v2382
    %v3627 = vpack.c.b16 %v2391, %v2387
    %v3628 = vpack.c.b16 %v2392, %v2388
    %v3629 = vpack.c.b16 %v2393, %v2389
    %v3630 = vpack.c.b16 %v2394, %v2390
    %v3631 = vpack.c.b16 %v2399, %v2395
    %v3632 = vpack.c.b16 %v2400, %v2396
    %v3633 = vpack.c.b16 %v2401, %v2397
    %v3634 = vpack.c.b16 %v2402, %v2398
    %v3635 = vpack.c.b16 %v2407, %v2403
    %v3636 = vpack.c.b16 %v2408, %v2404
    %v3637 = vpack.c.b16 %v2409, %v2405
    %v3638 = vpack.c.b16 %v2410, %v2406
    %v3639 = vpack.c.b16 %v2415, %v2411
    %v3640 = vpack.c.b16 %v2416, %v2412
    %v3641 = vpack.c.b16 %v2417, %v2413
    %v3642 = vpack.c.b16 %v2418, %v2414
    %v3643 = vpack.c.b16 %v2423, %v2419
    %v3644 = vpack.c.b16 %v2424, %v2420
    %v3645 = vpack.c.b16 %v2425, %v2421
    %v3646 = vpack.c.b16 %v2426, %v2422
    %v3647 = vpack.c.b16 %v2431, %v2427
    %v3648 = vpack.c.b16 %v2432, %v2428
    %v3649 = vpack.c.b16 %v2433, %v2429
    %v3650 = vpack.c.b16 %v2434, %v2430
    %v3651 = vpack.c.b16 %v2439, %v2435
    %v3652 = vpack.c.b16 %v2440, %v2436
    %v3653 = vpack.c.b16 %v2441, %v2437
    %v3654 = vpack.c.b16 %v2442, %v2438
    %v3655 = vpack.c.b16 %v2447, %v2443
    %v3656 = vpack.c.b16 %v2448, %v2444
    %v3657 = vpack.c.b16 %v2449, %v2445
    %v3658 = vpack.c.b16 %v2450, %v2446
    %v3659 = vpack.c.b16 %v2455, %v2451
    %v3660 = vpack.c.b16 %v2456, %v2452
    %v3661 = vpack.c.b16 %v2457, %v2453
    %v3662 = vpack.c.b16 %v2458, %v2454
    %v3663 = vpack.c.b16 %v2463, %v2459
    %v3664 = vpack.c.b16 %v2464, %v2460
    %v3665 = vpack.c.b16 %v2465, %v2461
    %v3666 = vpack.c.b16 %v2466, %v2462
    %v3667 = vpack.c.b16 %v2471, %v2467
    %v3668 = vpack.c.b16 %v2472, %v2468
    %v3669 = vpack.c.b16 %v2473, %v2469
    %v3670 = vpack.c.b16 %v2474, %v2470
    %v3671 = vpack.c.b16 %v2479, %v2475
    %v3672 = vpack.c.b16 %v2480, %v2476
    %v3673 = vpack.c.b16 %v2481, %v2477
    %v3674 = vpack.c.b16 %v2482, %v2478
    %v3675 = vpack.c.b16 %v2487, %v2483
    %v3676 = vpack.c.b16 %v2488, %v2484
    %v3677 = vpack.c.b16 %v2489, %v2485
    %v3678 = vpack.c.b16 %v2490, %v2486
    %v3679 = vpack.c.b16 %v2495, %v2491
    %v3680 = vpack.c.b16 %v2496, %v2492
    %v3681 = vpack.c.b16 %v2497, %v2493
    %v3682 = vpack.c.b16 %v2498, %v2494
    %v3683 = vpack.c.b16 %v2503, %v2499
    %v3684 = vpack.c.b16 %v2504, %v2500
    %v3685 = vpack.c.b16 %v2505, %v2501
    %v3686 = vpack.c.b16 %v2506, %v2502
    %v3687 = vpack.c.b16 %v2511, %v2507
    %v3688 = vpack.c.b16 %v2512, %v2508
    %v3689 = vpack.c.b16 %v2513, %v2509
    %v3690 = vpack.c.b16 %v2514, %v2510
    %v3691 = vpack.c.b16 %v2519, %v2515
    %v3692 = vpack.c.b16 %v2520, %v2516
    %v3693 = vpack.c.b16 %v2521, %v2517
    %v3694 = vpack.c.b16 %v2522, %v2518
    %v3695 = vpack.c.b16 %v2527, %v2523
    %v3696 = vpack.c.b16 %v2528, %v2524
    %v3697 = vpack.c.b16 %v2529, %v2525
    %v3698 = vpack.c.b16 %v2530, %v2526
    %v3699 = vpack.c.b16 %v2535, %v2531
    %v3700 = vpack.c.b16 %v2536, %v2532
    %v3701 = vpack.c.b16 %v2537, %v2533
    %v3702 = vpack.c.b16 %v2538, %v2534
    %v3703 = vpack.c.b16 %v2543, %v2539
    %v3704 = vpack.c.b16 %v2544, %v2540
    %v3705 = vpack.c.b16 %v2545, %v2541
    %v3706 = vpack.c.b16 %v2546, %v2542
    %v3707 = vpack.c.b16 %v2551, %v2547
    %v3708 = vpack.c.b16 %v2552, %v2548
    %v3709 = vpack.c.b16 %v2553, %v2549
    %v3710 = vpack.c.b16 %v2554, %v2550
    %v3711 = vpack.c.b16 %v2559, %v2555
    %v3712 = vpack.c.b16 %v2560, %v2556
    %v3713 = vpack.c.b16 %v2561, %v2557
    %v3714 = vpack.c.b16 %v2562, %v2558
    %v3715 = vpack.c.b16 %v2567, %v2563
    %v3716 = vpack.c.b16 %v2568, %v2564
    %v3717 = vpack.c.b16 %v2569, %v2565
    %v3718 = vpack.c.b16 %v2570, %v2566
    %v3719 = vpack.c.b16 %v2575, %v2571
    %v3720 = vpack.c.b16 %v2576, %v2572
    %v3721 = vpack.c.b16 %v2577, %v2573
    %v3722 = vpack.c.b16 %v2578, %v2574
    %v3723 = vpack.c.b16 %v2583, %v2579
    %v3724 = vpack.c.b16 %v2584, %v2580
    %v3725 = vpack.c.b16 %v2585, %v2581
    %v3726 = vpack.c.b16 %v2586, %v2582
    %v3727 = vpack.c.b16 %v2591, %v2587
    %v3728 = vpack.c.b16 %v2592, %v2588
    %v3729 = vpack.c.b16 %v2593, %v2589
    %v3730 = vpack.c.b16 %v2594, %v2590
    %v3731 = vpack.c.b16 %v2599, %v2595
    %v3732 = vpack.c.b16 %v2600, %v2596
    %v3733 = vpack.c.b16 %v2601, %v2597
    %v3734 = vpack.c.b16 %v2602, %v2598
    %v3735 = vpack.c.b16 %v2607, %v2603
    %v3736 = vpack.c.b16 %v2608, %v2604
    %v3737 = vpack.c.b16 %v2609, %v2605
    %v3738 = vpack.c.b16 %v2610, %v2606
    %v3739 = vpack.c.b16 %v2615, %v2611
    %v3740 = vpack.c.b16 %v2616, %v2612
    %v3741 = vpack.c.b16 %v2617, %v2613
    %v3742 = vpack.c.b16 %v2618, %v2614
    %v3743 = vpack.c.b16 %v2623, %v2619
    %v3744 = vpack.c.b16 %v2624, %v2620
    %v3745 = vpack.c.b16 %v2625, %v2621
    %v3746 = vpack.c.b16 %v2626, %v2622
    %v3747 = vpack.c.b16 %v2631, %v2627
    %v3748 = vpack.c.b16 %v2632, %v2628
    %v3749 = vpack.c.b16 %v2633, %v2629
    %v3750 = vpack.c.b16 %v2634, %v2630
    %v3751 = vpack.c.b16 %v2639, %v2635
    %v3752 = vpack.c.b16 %v2640, %v2636
    %v3753 = vpack.c.b16 %v2641, %v2637
    %v3754 = vpack.c.b16 %v2642, %v2638
    %v3755 = vpack.c.b16 %v2647, %v2643
    %v3756 = vpack.c.b16 %v2648, %v2644
    %v3757 = vpack.c.b16 %v2649, %v2645
    %v3758 = vpack.c.b16 %v2650, %v2646
    %v3759 = vpack.c.b16 %v2655, %v2651
    %v3760 = vpack.c.b16 %v2656, %v2652
    %v3761 = vpack.c.b16 %v2657, %v2653
    %v3762 = vpack.c.b16 %v2658, %v2654
    %v3763 = vpack.c.b16 %v2663, %v2659
    %v3764 = vpack.c.b16 %v2664, %v2660
    %v3765 = vpack.c.b16 %v2665, %v2661
    %v3766 = vpack.c.b16 %v2666, %v2662
    %v3767 = vpack.c.b16 %v2671, %v2667
    %v3768 = vpack.c.b16 %v2672, %v2668
    %v3769 = vpack.c.b16 %v2673, %v2669
    %v3770 = vpack.c.b16 %v2674, %v2670
    %v3771 = vpack.c.b16 %v2679, %v2675
    %v3772 = vpack.c.b16 %v2680, %v2676
    %v3773 = vpack.c.b16 %v2681, %v2677
    %v3774 = vpack.c.b16 %v2682, %v2678
    %v3775 = vpack.c.b16 %v2687, %v2683
    %v3776 = vpack.c.b16 %v2688, %v2684
    %v3777 = vpack.c.b16 %v2689, %v2685
    %v3778 = vpack.c.b16 %v2690, %v2686
    %v3779 = vpack.c.b16 %v2695, %v2691
    %v3780 = vpack.c.b16 %v2696, %v2692
    %v3781 = vpack.c.b16 %v2697, %v2693
    %v3782 = vpack.c.b16 %v2698, %v2694
    %v3783 = vpack.c.b16 %v2703, %v2699
    %v3784 = vpack.c.b16 %v2704, %v2700
    %v3785 = vpack.c.b16 %v2705, %v2701
    %v3786 = vpack.c.b16 %v2706, %v2702
    %v3787 = vpack.c.b16 %v2711, %v2707
    %v3788 = vpack.c.b16 %v2712, %v2708
    %v3789 = vpack.c.b16 %v2713, %v2709
    %v3790 = vpack.c.b16 %v2714, %v2710
    %v3791 = vpack.c.b16 %v2719, %v2715
    %v3792 = vpack.c.b16 %v2720, %v2716
    %v3793 = vpack.c.b16 %v2721, %v2717
    %v3794 = vpack.c.b16 %v2722, %v2718
    %v3795 = vpack.c.b16 %v2727, %v2723
    %v3796 = vpack.c.b16 %v2728, %v2724
    %v3797 = vpack.c.b16 %v2729, %v2725
    %v3798 = vpack.c.b16 %v2730, %v2726
    %v3799 = vpack.c.b16 %v2735, %v2731
    %v3800 = vpack.c.b16 %v2736, %v2732
    %v3801 = vpack.c.b16 %v2737, %v2733
    %v3802 = vpack.c.b16 %v2738, %v2734
    %v3803 = vpack.c.b16 %v2743, %v2739
    %v3804 = vpack.c.b16 %v2744, %v2740
    %v3805 = vpack.c.b16 %v2745, %v2741
    %v3806 = vpack.c.b16 %v2746, %v2742
    %v3807 = vpack.c.b16 %v2751, %v2747
    %v3808 = vpack.c.b16 %v2752, %v2748
    %v3809 = vpack.c.b16 %v2753, %v2749
    %v3810 = vpack.c.b16 %v2754, %v2750
    %v3811 = vpack.c.b16 %v2759, %v2755
    %v3812 = vpack.c.b16 %v2760, %v2756
    %v3813 = vpack.c.b16 %v2761, %v2757
    %v3814 = vpack.c.b16 %v2762, %v2758
    %v3815 = vpack.c.b16 %v2767, %v2763
    %v3816 = vpack.c.b16 %v2768, %v2764
    %v3817 = vpack.c.b16 %v2769, %v2765
    %v3818 = vpack.c.b16 %v2770, %v2766
    %v3819 = vpack.c.b16 %v2775, %v2771
    %v3820 = vpack.c.b16 %v2776, %v2772
    %v3821 = vpack.c.b16 %v2777, %v2773
    %v3822 = vpack.c.b16 %v2778, %v2774
    %v3823 = vpack.c.b16 %v2783, %v2779
    %v3824 = vpack.c.b16 %v2784, %v2780
    %v3825 = vpack.c.b16 %v2785, %v2781
    %v3826 = vpack.c.b16 %v2786, %v2782
    %v3827 = vpack.c.b16 %v2791, %v2787
    %v3828 = vpack.c.b16 %v2792, %v2788
    %v3829 = vpack.c.b16 %v2793, %v2789
    %v3830 = vpack.c.b16 %v2794, %v2790
    %v3831 = vpack.c.b16 %v2799, %v2795
    %v3832 = vpack.c.b16 %v2800, %v2796
    %v3833 = vpack.c.b16 %v2801, %v2797
    %v3834 = vpack.c.b16 %v2802, %v2798
    %v3835 = vpack.c.b16 %v2807, %v2803
    %v3836 = vpack.c.b16 %v2808, %v2804
    %v3837 = vpack.c.b16 %v2809, %v2805
    %v3838 = vpack.c.b16 %v2810, %v2806
    %v3839 = vpack.c.b16 %v2815, %v2811
    %v3840 = vpack.c.b16 %v2816, %v2812
    %v3841 = vpack.c.b16 %v2817, %v2813
    %v3842 = vpack.c.b16 %v2818, %v2814
    %v3843 = vpack.c.b16 %v2823, %v2819
    %v3844 = vpack.c.b16 %v2824, %v2820
    %v3845 = vpack.c.b16 %v2825, %v2821
    %v3846 = vpack.c.b16 %v2826, %v2822
    %v3847 = vpack.c.b16 %v2831, %v2827
    %v3848 = vpack.c.b16 %v2832, %v2828
    %v3849 = vpack.c.b16 %v2833, %v2829
    %v3850 = vpack.c.b16 %v2834, %v2830
    %v3851 = vpack.c.b16 %v2839, %v2835
    %v3852 = vpack.c.b16 %v2840, %v2836
    %v3853 = vpack.c.b16 %v2841, %v2837
    %v3854 = vpack.c.b16 %v2842, %v2838
    %v3855 = vpack.c.b16 %v2847, %v2843
    %v3856 = vpack.c.b16 %v2848, %v2844
    %v3857 = vpack.c.b16 %v2849, %v2845
    %v3858 = vpack.c.b16 %v2850, %v2846
    %v3859 = vpack.c.b16 %v2855, %v2851
    %v3860 = vpack.c.b16 %v2856, %v2852
    %v3861 = vpack.c.b16 %v2857, %v2853
    %v3862 = vpack.c.b16 %v2858, %v2854
    %v3863 = vpack.c.b16 %v2863, %v2859
    %v3864 = vpack.c.b16 %v2864, %v2860
    %v3865 = vpack.c.b16 %v2865, %v2861
    %v3866 = vpack.c.b16 %v2866, %v2862
    %v3867 = vpack.c.b16 %v2871, %v2867
    %v3868 = vpack.c.b16 %v2872, %v2868
    %v3869 = vpack.c.b16 %v2873, %v2869
    %v3870 = vpack.c.b16 %v2874, %v2870
    %v3871 = vpack.c.b16 %v2879, %v2875
    %v3872 = vpack.c.b16 %v2880, %v2876
    %v3873 = vpack.c.b16 %v2881, %v2877
    %v3874 = vpack.c.b16 %v2882, %v2878
    %v3875 = vpack.c.b16 %v2887, %v2883
    %v3876 = vpack.c.b16 %v2888, %v2884
    %v3877 = vpack.c.b16 %v2889, %v2885
    %v3878 = vpack.c.b16 %v2890, %v2886
    %v3879 = vpack.c.b16 %v2895, %v2891
    %v3880 = vpack.c.b16 %v2896, %v2892
    %v3881 = vpack.c.b16 %v2897, %v2893
    %v3882 = vpack.c.b16 %v2898, %v2894
    %v3883 = vpack.c.b16 %v2903, %v2899
    %v3884 = vpack.c.b16 %v2904, %v2900
    %v3885 = vpack.c.b16 %v2905, %v2901
    %v3886 = vpack.c.b16 %v2906, %v2902
    %v3887 = vpack.c.b16 %v2911, %v2907
    %v3888 = vpack.c.b16 %v2912, %v2908
    %v3889 = vpack.c.b16 %v2913, %v2909
    %v3890 = vpack.c.b16 %v2914, %v2910
    %v3891 = vpack.c.b16 %v2919, %v2915
    %v3892 = vpack.c.b16 %v2920, %v2916
    %v3893 = vpack.c.b16 %v2921, %v2917
    %v3894 = vpack.c.b16 %v2922, %v2918
    %v3895 = vpack.c.b16 %v2927, %v2923
    %v3896 = vpack.c.b16 %v2928, %v2924
    %v3897 = vpack.c.b16 %v2929, %v2925
    %v3898 = vpack.c.b16 %v2930, %v2926
    %v3899 = vpack.c.b16 %v2935, %v2931
    %v3900 = vpack.c.b16 %v2936, %v2932
    %v3901 = vpack.c.b16 %v2937, %v2933
    %v3902 = vpack.c.b16 %v2938, %v2934
    %v3903 = vpack.c.b16 %v2943, %v2939
    %v3904 = vpack.c.b16 %v2944, %v2940
    %v3905 = vpack.c.b16 %v2945, %v2941
    %v3906 = vpack.c.b16 %v2946, %v2942
    %v3907 = vpack.c.b16 %v2951, %v2947
    %v3908 = vpack.c.b16 %v2952, %v2948
    %v3909 = vpack.c.b16 %v2953, %v2949
    %v3910 = vpack.c.b16 %v2954, %v2950
    %v3911 = vpack.c.b16 %v2959, %v2955
    %v3912 = vpack.c.b16 %v2960, %v2956
    %v3913 = vpack.c.b16 %v2961, %v2957
    %v3914 = vpack.c.b16 %v2962, %v2958
    %v3915 = vpack.c.b16 %v2967, %v2963
    %v3916 = vpack.c.b16 %v2968, %v2964
    %v3917 = vpack.c.b16 %v2969, %v2965
    %v3918 = vpack.c.b16 %v2970, %v2966
    %v3919 = vpack.c.b16 %v2975, %v2971
    %v3920 = vpack.c.b16 %v2976, %v2972
    %v3921 = vpack.c.b16 %v2977, %v2973
    %v3922 = vpack.c.b16 %v2978, %v2974
    %v3923 = vpack.c.b16 %v2983, %v2979
    %v3924 = vpack.c.b16 %v2984, %v2980
    %v3925 = vpack.c.b16 %v2985, %v2981
    %v3926 = vpack.c.b16 %v2986, %v2982
    %v3927 = vpack.c.b16 %v2991, %v2987
    %v3928 = vpack.c.b16 %v2992, %v2988
    %v3929 = vpack.c.b16 %v2993, %v2989
    %v3930 = vpack.c.b16 %v2994, %v2990
    %v3931 = vpack.c.b16 %v2999, %v2995
    %v3932 = vpack.c.b16 %v3000, %v2996
    %v3933 = vpack.c.b16 %v3001, %v2997
    %v3934 = vpack.c.b16 %v3002, %v2998
    %v3935 = vpack.c.b16 %v3007, %v3003
    %v3936 = vpack.c.b16 %v3008, %v3004
    %v3937 = vpack.c.b16 %v3009, %v3005
    %v3938 = vpack.c.b16 %v3010, %v3006
    %v3939 = vpack.c.b16 %v3015, %v3011
    %v3940 = vpack.c.b16 %v3016, %v3012
    %v3941 = vpack.c.b16 %v3017, %v3013
    %v3942 = vpack.c.b16 %v3018, %v3014
    %v3943 = vpack.c.b16 %v3023, %v3019
    %v3944 = vpack.c.b16 %v3024, %v3020
    %v3945 = vpack.c.b16 %v3025, %v3021
    %v3946 = vpack.c.b16 %v3026, %v3022
    %v3947 = vpack.c.b16 %v3031, %v3027
    %v3948 = vpack.c.b16 %v3032, %v3028
    %v3949 = vpack.c.b16 %v3033, %v3029
    %v3950 = vpack.c.b16 %v3034, %v3030
    %v3951 = vpack.c.b16 %v3039, %v3035
    %v3952 = vpack.c.b16 %v3040, %v3036
    %v3953 = vpack.c.b16 %v3041, %v3037
    %v3954 = vpack.c.b16 %v3042, %v3038
    %v3955 = vpack.c.b16 %v3047, %v3043
    %v3956 = vpack.c.b16 %v3048, %v3044
    %v3957 = vpack.c.b16 %v3049, %v3045
    %v3958 = vpack.c.b16 %v3050, %v3046
    %v3959 = vpack.c.b16 %v3055, %v3051
    %v3960 = vpack.c.b16 %v3056, %v3052
    %v3961 = vpack.c.b16 %v3057, %v3053
    %v3962 = vpack.c.b16 %v3058, %v3054
    %v3963 = vpack.c.b16 %v3063, %v3059
    %v3964 = vpack.c.b16 %v3064, %v3060
    %v3965 = vpack.c.b16 %v3065, %v3061
    %v3966 = vpack.c.b16 %v3066, %v3062
    %v3967 = vpack.c.b16 %v3071, %v3067
    %v3968 = vpack.c.b16 %v3072, %v3068
    %v3969 = vpack.c.b16 %v3073, %v3069
    %v3970 = vpack.c.b16 %v3074, %v3070
    %v3971 = vpack.c.b16 %v3079, %v3075
    %v3972 = vpack.c.b16 %v3080, %v3076
    %v3973 = vpack.c.b16 %v3081, %v3077
    %v3974 = vpack.c.b16 %v3082, %v3078
    %v3975 = vpack.c.b16 %v3087, %v3083
    %v3976 = vpack.c.b16 %v3088, %v3084
    %v3977 = vpack.c.b16 %v3089, %v3085
    %v3978 = vpack.c.b16 %v3090, %v3086
    %v3979 = vpack.c.b16 %v3095, %v3091
    %v3980 = vpack.c.b16 %v3096, %v3092
    %v3981 = vpack.c.b16 %v3097, %v3093
    %v3982 = vpack.c.b16 %v3098, %v3094
    %v3983 = vpack.c.b16 %v3103, %v3099
    %v3984 = vpack.c.b16 %v3104, %v3100
    %v3985 = vpack.c.b16 %v3105, %v3101
    %v3986 = vpack.c.b16 %v3106, %v3102
    %v3987 = vpack.c.b16 %v3111, %v3107
    %v3988 = vpack.c.b16 %v3112, %v3108
    %v3989 = vpack.c.b16 %v3113, %v3109
    %v3990 = vpack.c.b16 %v3114, %v3110
    %v3991 = vpack.c.b16 %v3119, %v3115
    %v3992 = vpack.c.b16 %v3120, %v3116
    %v3993 = vpack.c.b16 %v3121, %v3117
    %v3994 = vpack.c.b16 %v3122, %v3118
    %v3995 = vpack.c.b16 %v3127, %v3123
    %v3996 = vpack.c.b16 %v3128, %v3124
    %v3997 = vpack.c.b16 %v3129, %v3125
    %v3998 = vpack.c.b16 %v3130, %v3126
    %v3999 = vpack.c.b16 %v3135, %v3131
    %v4000 = vpack.c.b16 %v3136, %v3132
    %v4001 = vpack.c.b16 %v3137, %v3133
    %v4002 = vpack.c.b16 %v3138, %v3134
    %v4003 = vpack.c.b16 %v3143, %v3139
    %v4004 = vpack.c.b16 %v3144, %v3140
    %v4005 = vpack.c.b16 %v3145, %v3141
    %v4006 = vpack.c.b16 %v3146, %v3142
    %v4007 = vpack.c.b16 %v3151, %v3147
    %v4008 = vpack.c.b16 %v3152, %v3148
    %v4009 = vpack.c.b16 %v3153, %v3149
    %v4010 = vpack.c.b16 %v3154, %v3150
    %v4011 = vpack.c.b16 %v3159, %v3155
    %v4012 = vpack.c.b16 %v3160, %v3156
    %v4013 = vpack.c.b16 %v3161, %v3157
    %v4014 = vpack.c.b16 %v3162, %v3158
    %v4015 = vpack.c.b16 %v3167, %v3163
    %v4016 = vpack.c.b16 %v3168, %v3164
    %v4017 = vpack.c.b16 %v3169, %v3165
    %v4018 = vpack.c.b16 %v3170, %v3166
    %v4019 = vpack.c.b16 %v3175, %v3171
    %v4020 = vpack.c.b16 %v3176, %v3172
    %v4021 = vpack.c.b16 %v3177, %v3173
    %v4022 = vpack.c.b16 %v3178, %v3174
    %v4023 = vpack.c.b16 %v3183, %v3179
    %v4024 = vpack.c.b16 %v3184, %v3180
    %v4025 = vpack.c.b16 %v3185, %v3181
    %v4026 = vpack.c.b16 %v3186, %v3182
    %v4027 = vpack.c.b16 %v3191, %v3187
    %v4028 = vpack.c.b16 %v3192, %v3188
    %v4029 = vpack.c.b16 %v3193, %v3189
    %v4030 = vpack.c.b16 %v3194, %v3190
    %v4031 = vpack.c.b16 %v3199, %v3195
    %v4032 = vpack.c.b16 %v3200, %v3196
    %v4033 = vpack.c.b16 %v3201, %v3197
    %v4034 = vpack.c.b16 %v3202, %v3198
    %v4035 = vpack.c.b16 %v3207, %v3203
    %v4036 = vpack.c.b16 %v3208, %v3204
    %v4037 = vpack.c.b16 %v3209, %v3205
    %v4038 = vpack.c.b16 %v3210, %v3206
    %v4039 = vpack.c.b16 %v3215, %v3211
    %v4040 = vpack.c.b16 %v3216, %v3212
    %v4041 = vpack.c.b16 %v3217, %v3213
    %v4042 = vpack.c.b16 %v3218, %v3214
    %v4043 = vpack.c.b16 %v3223, %v3219
    %v4044 = vpack.c.b16 %v3224, %v3220
    %v4045 = vpack.c.b16 %v3225, %v3221
    %v4046 = vpack.c.b16 %v3226, %v3222
    %v4047 = vpack.c.b16 %v3231, %v3227
    %v4048 = vpack.c.b16 %v3232, %v3228
    %v4049 = vpack.c.b16 %v3233, %v3229
    %v4050 = vpack.c.b16 %v3234, %v3230
    %v4051 = vpack.c.b16 %v3239, %v3235
    %v4052 = vpack.c.b16 %v3240, %v3236
    %v4053 = vpack.c.b16 %v3241, %v3237
    %v4054 = vpack.c.b16 %v3242, %v3238
    %v4055 = vpack.c.b16 %v3247, %v3243
    %v4056 = vpack.c.b16 %v3248, %v3244
    %v4057 = vpack.c.b16 %v3249, %v3245
    %v4058 = vpack.c.b16 %v3250, %v3246
    %v4059 = vpack.c.b16 %v3255, %v3251
    %v4060 = vpack.c.b16 %v3256, %v3252
    %v4061 = vpack.c.b16 %v3257, %v3253
    %v4062 = vpack.c.b16 %v3258, %v3254
    %v4063 = vpack.c.b16 %v3263, %v3259
    %v4064 = vpack.c.b16 %v3264, %v3260
    %v4065 = vpack.c.b16 %v3265, %v3261
    %v4066 = vpack.c.b16 %v3266, %v3262
    %v4067 = vpack.c.b16 %v3271, %v3267
    %v4068 = vpack.c.b16 %v3272, %v3268
    %v4069 = vpack.c.b16 %v3273, %v3269
    %v4070 = vpack.c.b16 %v3274, %v3270
    %v4071 = vpack.c.b16 %v3279, %v3275
    %v4072 = vpack.c.b16 %v3280, %v3276
    %v4073 = vpack.c.b16 %v3281, %v3277
    %v4074 = vpack.c.b16 %v3282, %v3278
    %v4075 = vpack.c.b16 %v3287, %v3283
    %v4076 = vpack.c.b16 %v3288, %v3284
    %v4077 = vpack.c.b16 %v3289, %v3285
    %v4078 = vpack.c.b16 %v3290, %v3286
    %v4079 = vpack.c.b16 %v3295, %v3291
    %v4080 = vpack.c.b16 %v3296, %v3292
    %v4081 = vpack.c.b16 %v3297, %v3293
    %v4082 = vpack.c.b16 %v3298, %v3294
    %v4083 = vpack.c.b16 %v3303, %v3299
    %v4084 = vpack.c.b16 %v3304, %v3300
    %v4085 = vpack.c.b16 %v3305, %v3301
    %v4086 = vpack.c.b16 %v3306, %v3302
    %v4087 = vpack.c.b16 %v3311, %v3307
    %v4088 = vpack.c.b16 %v3312, %v3308
    %v4089 = vpack.c.b16 %v3313, %v3309
    %v4090 = vpack.c.b16 %v3314, %v3310
    %v4091 = vpack.c.b16 %v3319, %v3315
    %v4092 = vpack.c.b16 %v3320, %v3316
    %v4093 = vpack.c.b16 %v3321, %v3317
    %v4094 = vpack.c.b16 %v3322, %v3318
    %v4095 = vpack.c.b16 %v3327, %v3323
    %v4096 = vpack.c.b16 %v3328, %v3324
    %v4097 = vpack.c.b16 %v3329, %v3325
    %v4098 = vpack.c.b16 %v3330, %v3326
    %4867 = vmatprep.subr.bf16.mxu0 %v3360
    %4868 = vmatpush1.bf16.msra.mxu0 %v3359
    %4869 = vmatprep.subr.bf16.mxu0 %v3356
    %4870 = vmatpush1.bf16.msra.mxu0 %v3355
    %4871 = vmatprep.subr.bf16.mxu0 %v3352
    %4872 = vmatpush1.bf16.msra.mxu0 %v3351
    %4873 = vmatprep.subr.bf16.mxu0 %v3348
    %4874 = vmatpush1.bf16.msra.mxu0 %v3347
    %4875 = vmatprep.subr.bf16.mxu0 %v3344
    %4876 = vmatpush1.bf16.msra.mxu0 %v3343
    %4877 = vmatprep.subr.bf16.mxu0 %v3340
    %4878 = vmatpush1.bf16.msra.mxu0 %v3339
    %4879 = vmatprep.subr.bf16.mxu0 %v3336
    %4880 = vmatpush1.bf16.msra.mxu0 %v3335
    %4881 = vmatprep.subr.bf16.mxu0 %v3332
    %4882 = vmatpush1.bf16.msra.mxu0 %v3331
    %4883 = vmatprep.subr.bf16.mxu0 %v3392
    %4884 = vmatpush2.bf16.msra.mxu0 %v3391
    %4885 = vmatprep.subr.bf16.mxu0 %v3388
    %4886 = vmatpush2.bf16.msra.mxu0 %v3387
    %4887 = vmatprep.subr.bf16.mxu0 %v3384
    %4888 = vmatpush2.bf16.msra.mxu0 %v3383
    %4889 = vmatprep.subr.bf16.mxu0 %v3380
    %4890 = vmatpush2.bf16.msra.mxu0 %v3379
    %4891 = vmatprep.subr.bf16.mxu0 %v3376
    %4892 = vmatpush2.bf16.msra.mxu0 %v3375
    %4893 = vmatprep.subr.bf16.mxu0 %v3372
    %4894 = vmatpush2.bf16.msra.mxu0 %v3371
    %4895 = vmatprep.subr.bf16.mxu0 %v3368
    %4896 = vmatpush2.bf16.msra.mxu0 %v3367
    %4897 = vmatprep.subr.bf16.mxu0 %v3364
    %4898 = vmatpush2.bf16.msra.mxu0 %v3363
    %4899 = vmatprep.mubr.bf16.mxu0 %v214
    %4900 = vmatmul.mubr.bf16.gmra.mxu0 %v213
    %v4901 = vpop.f32.mrf.mxu0
    %v4902 = vadd.f32 %v1010, %v4901
    %v4903 = vpop.f32.mrf.mxu0
    %v4904 = vadd.f32 %v1014, %v4903
    %v4905 = vpop.f32.mrf.mxu0
    %v4906 = vadd.f32 %v1010, %v4905
    %v4907 = vpop.f32.mrf.mxu0
    %v4908 = vadd.f32 %v1014, %v4907
    %4909 = vdwg.mxu0
    %4910 = vmatprep.subr.bf16.mxu0 %v3424
    %4911 = vmatpush1.bf16.msra.mxu0 %v3423
    %4912 = vmatprep.subr.bf16.mxu0 %v3420
    %4913 = vmatpush1.bf16.msra.mxu0 %v3419
    %4914 = vmatprep.subr.bf16.mxu0 %v3416
    %4915 = vmatpush1.bf16.msra.mxu0 %v3415
    %4916 = vmatprep.subr.bf16.mxu0 %v3412
    %4917 = vmatpush1.bf16.msra.mxu0 %v3411
    %4918 = vmatprep.subr.bf16.mxu0 %v3408
    %4919 = vmatpush1.bf16.msra.mxu0 %v3407
    %4920 = vmatprep.subr.bf16.mxu0 %v3404
    %4921 = vmatpush1.bf16.msra.mxu0 %v3403
    %4922 = vmatprep.subr.bf16.mxu0 %v3400
    %4923 = vmatpush1.bf16.msra.mxu0 %v3399
    %4924 = vmatprep.subr.bf16.mxu0 %v3396
    %4925 = vmatpush1.bf16.msra.mxu0 %v3395
    %4926 = vmatprep.subr.bf16.mxu0 %v3456
    %4927 = vmatpush2.bf16.msra.mxu0 %v3455
    %4928 = vmatprep.subr.bf16.mxu0 %v3452
    %4929 = vmatpush2.bf16.msra.mxu0 %v3451
    %4930 = vmatprep.subr.bf16.mxu0 %v3448
    %4931 = vmatpush2.bf16.msra.mxu0 %v3447
    %4932 = vmatprep.subr.bf16.mxu0 %v3444
    %4933 = vmatpush2.bf16.msra.mxu0 %v3443
    %4934 = vmatprep.subr.bf16.mxu0 %v3440
    %4935 = vmatpush2.bf16.msra.mxu0 %v3439
    %4936 = vmatprep.subr.bf16.mxu0 %v3436
    %4937 = vmatpush2.bf16.msra.mxu0 %v3435
    %4938 = vmatprep.subr.bf16.mxu0 %v3432
    %4939 = vmatpush2.bf16.msra.mxu0 %v3431
    %4940 = vmatprep.subr.bf16.mxu0 %v3428
    %4941 = vmatpush2.bf16.msra.mxu0 %v3427
    %4942 = vmatprep.mubr.bf16.mxu0 %v216
    %4943 = vmatmul.mubr.bf16.gmra.mxu0 %v215
    %v4944 = vpop.f32.mrf.mxu0
    %v4945 = vadd.f32 %v4902, %v4944
    %v4946 = vpop.f32.mrf.mxu0
    %v4947 = vadd.f32 %v4904, %v4946
    %v4948 = vpop.f32.mrf.mxu0
    %v4949 = vadd.f32 %v4906, %v4948
    %v4950 = vpop.f32.mrf.mxu0
    %v4951 = vadd.f32 %v4908, %v4950
    %4952 = vdwg.mxu0
    %4953 = vmatprep.subr.bf16.mxu0 %v3488
    %4954 = vmatpush1.bf16.msra.mxu0 %v3487
    %4955 = vmatprep.subr.bf16.mxu0 %v3484
    %4956 = vmatpush1.bf16.msra.mxu0 %v3483
    %4957 = vmatprep.subr.bf16.mxu0 %v3480
    %4958 = vmatpush1.bf16.msra.mxu0 %v3479
    %4959 = vmatprep.subr.bf16.mxu0 %v3476
    %4960 = vmatpush1.bf16.msra.mxu0 %v3475
    %4961 = vmatprep.subr.bf16.mxu0 %v3472
    %4962 = vmatpush1.bf16.msra.mxu0 %v3471
    %4963 = vmatprep.subr.bf16.mxu0 %v3468
    %4964 = vmatpush1.bf16.msra.mxu0 %v3467
    %4965 = vmatprep.subr.bf16.mxu0 %v3464
    %4966 = vmatpush1.bf16.msra.mxu0 %v3463
    %4967 = vmatprep.subr.bf16.mxu0 %v3460
    %4968 = vmatpush1.bf16.msra.mxu0 %v3459
    %4969 = vmatprep.subr.bf16.mxu0 %v3520
    %4970 = vmatpush2.bf16.msra.mxu0 %v3519
    %4971 = vmatprep.subr.bf16.mxu0 %v3516
    %4972 = vmatpush2.bf16.msra.mxu0 %v3515
    %4973 = vmatprep.subr.bf16.mxu0 %v3512
    %4974 = vmatpush2.bf16.msra.mxu0 %v3511
    %4975 = vmatprep.subr.bf16.mxu0 %v3508
    %4976 = vmatpush2.bf16.msra.mxu0 %v3507
    %4977 = vmatprep.subr.bf16.mxu0 %v3504
    %4978 = vmatpush2.bf16.msra.mxu0 %v3503
    %4979 = vmatprep.subr.bf16.mxu0 %v3500
    %4980 = vmatpush2.bf16.msra.mxu0 %v3499
    %4981 = vmatprep.subr.bf16.mxu0 %v3496
    %4982 = vmatpush2.bf16.msra.mxu0 %v3495
    %4983 = vmatprep.subr.bf16.mxu0 %v3492
    %4984 = vmatpush2.bf16.msra.mxu0 %v3491
    %4985 = vmatprep.mubr.bf16.mxu0 %v218
    %4986 = vmatmul.mubr.bf16.gmra.mxu0 %v217
    %v4987 = vpop.f32.mrf.mxu0
    %v4988 = vadd.f32 %v4945, %v4987
    %v4989 = vpop.f32.mrf.mxu0
    %v4990 = vadd.f32 %v4947, %v4989
    %v4991 = vpop.f32.mrf.mxu0
    %v4992 = vadd.f32 %v4949, %v4991
    %v4993 = vpop.f32.mrf.mxu0
    %v4994 = vadd.f32 %v4951, %v4993
    %4995 = vdwg.mxu0
    %4996 = vmatprep.subr.bf16.mxu0 %v3552
    %4997 = vmatpush1.bf16.msra.mxu0 %v3551
    %4998 = vmatprep.subr.bf16.mxu0 %v3548
    %4999 = vmatpush1.bf16.msra.mxu0 %v3547
    %5000 = vmatprep.subr.bf16.mxu0 %v3544
    %5001 = vmatpush1.bf16.msra.mxu0 %v3543
    %5002 = vmatprep.subr.bf16.mxu0 %v3540
    %5003 = vmatpush1.bf16.msra.mxu0 %v3539
    %5004 = vmatprep.subr.bf16.mxu0 %v3536
    %5005 = vmatpush1.bf16.msra.mxu0 %v3535
    %5006 = vmatprep.subr.bf16.mxu0 %v3532
    %5007 = vmatpush1.bf16.msra.mxu0 %v3531
    %5008 = vmatprep.subr.bf16.mxu0 %v3528
    %5009 = vmatpush1.bf16.msra.mxu0 %v3527
    %5010 = vmatprep.subr.bf16.mxu0 %v3524
    %5011 = vmatpush1.bf16.msra.mxu0 %v3523
    %5012 = vmatprep.subr.bf16.mxu0 %v3584
    %5013 = vmatpush2.bf16.msra.mxu0 %v3583
    %5014 = vmatprep.subr.bf16.mxu0 %v3580
    %5015 = vmatpush2.bf16.msra.mxu0 %v3579
    %5016 = vmatprep.subr.bf16.mxu0 %v3576
    %5017 = vmatpush2.bf16.msra.mxu0 %v3575
    %5018 = vmatprep.subr.bf16.mxu0 %v3572
    %5019 = vmatpush2.bf16.msra.mxu0 %v3571
    %5020 = vmatprep.subr.bf16.mxu0 %v3568
    %5021 = vmatpush2.bf16.msra.mxu0 %v3567
    %5022 = vmatprep.subr.bf16.mxu0 %v3564
    %5023 = vmatpush2.bf16.msra.mxu0 %v3563
    %5024 = vmatprep.subr.bf16.mxu0 %v3560
    %5025 = vmatpush2.bf16.msra.mxu0 %v3559
    %5026 = vmatprep.subr.bf16.mxu0 %v3556
    %5027 = vmatpush2.bf16.msra.mxu0 %v3555
    %5028 = vmatprep.mubr.bf16.mxu0 %v220
    %5029 = vmatmul.mubr.bf16.gmra.mxu0 %v219
    %v5030 = vpop.f32.mrf.mxu0
    %v5031 = vadd.f32 %v4988, %v5030
    %v5032 = vpop.f32.mrf.mxu0
    %v5033 = vadd.f32 %v4990, %v5032
    %v5034 = vpop.f32.mrf.mxu0
    %v5035 = vadd.f32 %v4992, %v5034
    %v5036 = vpop.f32.mrf.mxu0
    %v5037 = vadd.f32 %v4994, %v5036
    %5038 = vdwg.mxu0
    %5039 = vmatprep.subr.bf16.mxu0 %v3616
    %5040 = vmatpush1.bf16.msra.mxu0 %v3615
    %5041 = vmatprep.subr.bf16.mxu0 %v3612
    %5042 = vmatpush1.bf16.msra.mxu0 %v3611
    %5043 = vmatprep.subr.bf16.mxu0 %v3608
    %5044 = vmatpush1.bf16.msra.mxu0 %v3607
    %5045 = vmatprep.subr.bf16.mxu0 %v3604
    %5046 = vmatpush1.bf16.msra.mxu0 %v3603
    %5047 = vmatprep.subr.bf16.mxu0 %v3600
    %5048 = vmatpush1.bf16.msra.mxu0 %v3599
    %5049 = vmatprep.subr.bf16.mxu0 %v3596
    %5050 = vmatpush1.bf16.msra.mxu0 %v3595
    %5051 = vmatprep.subr.bf16.mxu0 %v3592
    %5052 = vmatpush1.bf16.msra.mxu0 %v3591
    %5053 = vmatprep.subr.bf16.mxu0 %v3588
    %5054 = vmatpush1.bf16.msra.mxu0 %v3587
    %5055 = vmatprep.subr.bf16.mxu0 %v3648
    %5056 = vmatpush2.bf16.msra.mxu0 %v3647
    %5057 = vmatprep.subr.bf16.mxu0 %v3644
    %5058 = vmatpush2.bf16.msra.mxu0 %v3643
    %5059 = vmatprep.subr.bf16.mxu0 %v3640
    %5060 = vmatpush2.bf16.msra.mxu0 %v3639
    %5061 = vmatprep.subr.bf16.mxu0 %v3636
    %5062 = vmatpush2.bf16.msra.mxu0 %v3635
    %5063 = vmatprep.subr.bf16.mxu0 %v3632
    %5064 = vmatpush2.bf16.msra.mxu0 %v3631
    %5065 = vmatprep.subr.bf16.mxu0 %v3628
    %5066 = vmatpush2.bf16.msra.mxu0 %v3627
    %5067 = vmatprep.subr.bf16.mxu0 %v3624
    %5068 = vmatpush2.bf16.msra.mxu0 %v3623
    %5069 = vmatprep.subr.bf16.mxu0 %v3620
    %5070 = vmatpush2.bf16.msra.mxu0 %v3619
    %5071 = vmatprep.mubr.bf16.mxu0 %v222
    %5072 = vmatmul.mubr.bf16.gmra.mxu0 %v221
    %v5073 = vpop.f32.mrf.mxu0
    %v5074 = vadd.f32 %v5031, %v5073
    %v5075 = vpop.f32.mrf.mxu0
    %v5076 = vadd.f32 %v5033, %v5075
    %v5077 = vpop.f32.mrf.mxu0
    %v5078 = vadd.f32 %v5035, %v5077
    %v5079 = vpop.f32.mrf.mxu0
    %v5080 = vadd.f32 %v5037, %v5079
    %5081 = vdwg.mxu0
    %5082 = vmatprep.subr.bf16.mxu0 %v3680
    %5083 = vmatpush1.bf16.msra.mxu0 %v3679
    %5084 = vmatprep.subr.bf16.mxu0 %v3676
    %5085 = vmatpush1.bf16.msra.mxu0 %v3675
    %5086 = vmatprep.subr.bf16.mxu0 %v3672
    %5087 = vmatpush1.bf16.msra.mxu0 %v3671
    %5088 = vmatprep.subr.bf16.mxu0 %v3668
    %5089 = vmatpush1.bf16.msra.mxu0 %v3667
    %5090 = vmatprep.subr.bf16.mxu0 %v3664
    %5091 = vmatpush1.bf16.msra.mxu0 %v3663
    %5092 = vmatprep.subr.bf16.mxu0 %v3660
    %5093 = vmatpush1.bf16.msra.mxu0 %v3659
    %5094 = vmatprep.subr.bf16.mxu0 %v3656
    %5095 = vmatpush1.bf16.msra.mxu0 %v3655
    %5096 = vmatprep.subr.bf16.mxu0 %v3652
    %5097 = vmatpush1.bf16.msra.mxu0 %v3651
    %5098 = vmatprep.subr.bf16.mxu0 %v3712
    %5099 = vmatpush2.bf16.msra.mxu0 %v3711
    %5100 = vmatprep.subr.bf16.mxu0 %v3708
    %5101 = vmatpush2.bf16.msra.mxu0 %v3707
    %5102 = vmatprep.subr.bf16.mxu0 %v3704
    %5103 = vmatpush2.bf16.msra.mxu0 %v3703
    %5104 = vmatprep.subr.bf16.mxu0 %v3700
    %5105 = vmatpush2.bf16.msra.mxu0 %v3699
    %5106 = vmatprep.subr.bf16.mxu0 %v3696
    %5107 = vmatpush2.bf16.msra.mxu0 %v3695
    %5108 = vmatprep.subr.bf16.mxu0 %v3692
    %5109 = vmatpush2.bf16.msra.mxu0 %v3691
    %5110 = vmatprep.subr.bf16.mxu0 %v3688
    %5111 = vmatpush2.bf16.msra.mxu0 %v3687
    %5112 = vmatprep.subr.bf16.mxu0 %v3684
    %5113 = vmatpush2.bf16.msra.mxu0 %v3683
    %5114 = vmatprep.mubr.bf16.mxu0 %v224
    %5115 = vmatmul.mubr.bf16.gmra.mxu0 %v223
    %v5116 = vpop.f32.mrf.mxu0
    %v5117 = vadd.f32 %v5074, %v5116
    %v5118 = vpop.f32.mrf.mxu0
    %v5119 = vadd.f32 %v5076, %v5118
    %v5120 = vpop.f32.mrf.mxu0
    %v5121 = vadd.f32 %v5078, %v5120
    %v5122 = vpop.f32.mrf.mxu0
    %v5123 = vadd.f32 %v5080, %v5122
    %5124 = vdwg.mxu0
    %5125 = vmatprep.subr.bf16.mxu0 %v3744
    %5126 = vmatpush1.bf16.msra.mxu0 %v3743
    %5127 = vmatprep.subr.bf16.mxu0 %v3740
    %5128 = vmatpush1.bf16.msra.mxu0 %v3739
    %5129 = vmatprep.subr.bf16.mxu0 %v3736
    %5130 = vmatpush1.bf16.msra.mxu0 %v3735
    %5131 = vmatprep.subr.bf16.mxu0 %v3732
    %5132 = vmatpush1.bf16.msra.mxu0 %v3731
    %5133 = vmatprep.subr.bf16.mxu0 %v3728
    %5134 = vmatpush1.bf16.msra.mxu0 %v3727
    %5135 = vmatprep.subr.bf16.mxu0 %v3724
    %5136 = vmatpush1.bf16.msra.mxu0 %v3723
    %5137 = vmatprep.subr.bf16.mxu0 %v3720
    %5138 = vmatpush1.bf16.msra.mxu0 %v3719
    %5139 = vmatprep.subr.bf16.mxu0 %v3716
    %5140 = vmatpush1.bf16.msra.mxu0 %v3715
    %5141 = vmatprep.subr.bf16.mxu0 %v3776
    %5142 = vmatpush2.bf16.msra.mxu0 %v3775
    %5143 = vmatprep.subr.bf16.mxu0 %v3772
    %5144 = vmatpush2.bf16.msra.mxu0 %v3771
    %5145 = vmatprep.subr.bf16.mxu0 %v3768
    %5146 = vmatpush2.bf16.msra.mxu0 %v3767
    %5147 = vmatprep.subr.bf16.mxu0 %v3764
    %5148 = vmatpush2.bf16.msra.mxu0 %v3763
    %5149 = vmatprep.subr.bf16.mxu0 %v3760
    %5150 = vmatpush2.bf16.msra.mxu0 %v3759
    %5151 = vmatprep.subr.bf16.mxu0 %v3756
    %5152 = vmatpush2.bf16.msra.mxu0 %v3755
    %5153 = vmatprep.subr.bf16.mxu0 %v3752
    %5154 = vmatpush2.bf16.msra.mxu0 %v3751
    %5155 = vmatprep.subr.bf16.mxu0 %v3748
    %5156 = vmatpush2.bf16.msra.mxu0 %v3747
    %5157 = vmatprep.mubr.bf16.mxu0 %v226
    %5158 = vmatmul.mubr.bf16.gmra.mxu0 %v225
    %v5159 = vpop.f32.mrf.mxu0
    %v5160 = vadd.f32 %v5117, %v5159
    %v5161 = vpop.f32.mrf.mxu0
    %v5162 = vadd.f32 %v5119, %v5161
    %v5163 = vpop.f32.mrf.mxu0
    %v5164 = vadd.f32 %v5121, %v5163
    %v5165 = vpop.f32.mrf.mxu0
    %v5166 = vadd.f32 %v5123, %v5165
    %5167 = vdwg.mxu0
    %5168 = vmatprep.subr.bf16.mxu0 %v3808
    %5169 = vmatpush1.bf16.msra.mxu0 %v3807
    %5170 = vmatprep.subr.bf16.mxu0 %v3804
    %5171 = vmatpush1.bf16.msra.mxu0 %v3803
    %5172 = vmatprep.subr.bf16.mxu0 %v3800
    %5173 = vmatpush1.bf16.msra.mxu0 %v3799
    %5174 = vmatprep.subr.bf16.mxu0 %v3796
    %5175 = vmatpush1.bf16.msra.mxu0 %v3795
    %5176 = vmatprep.subr.bf16.mxu0 %v3792
    %5177 = vmatpush1.bf16.msra.mxu0 %v3791
    %5178 = vmatprep.subr.bf16.mxu0 %v3788
    %5179 = vmatpush1.bf16.msra.mxu0 %v3787
    %5180 = vmatprep.subr.bf16.mxu0 %v3784
    %5181 = vmatpush1.bf16.msra.mxu0 %v3783
    %5182 = vmatprep.subr.bf16.mxu0 %v3780
    %5183 = vmatpush1.bf16.msra.mxu0 %v3779
    %5184 = vmatprep.subr.bf16.mxu0 %v3840
    %5185 = vmatpush2.bf16.msra.mxu0 %v3839
    %5186 = vmatprep.subr.bf16.mxu0 %v3836
    %5187 = vmatpush2.bf16.msra.mxu0 %v3835
    %5188 = vmatprep.subr.bf16.mxu0 %v3832
    %5189 = vmatpush2.bf16.msra.mxu0 %v3831
    %5190 = vmatprep.subr.bf16.mxu0 %v3828
    %5191 = vmatpush2.bf16.msra.mxu0 %v3827
    %5192 = vmatprep.subr.bf16.mxu0 %v3824
    %5193 = vmatpush2.bf16.msra.mxu0 %v3823
    %5194 = vmatprep.subr.bf16.mxu0 %v3820
    %5195 = vmatpush2.bf16.msra.mxu0 %v3819
    %5196 = vmatprep.subr.bf16.mxu0 %v3816
    %5197 = vmatpush2.bf16.msra.mxu0 %v3815
    %5198 = vmatprep.subr.bf16.mxu0 %v3812
    %5199 = vmatpush2.bf16.msra.mxu0 %v3811
    %5200 = vmatprep.mubr.bf16.mxu0 %v228
    %5201 = vmatmul.mubr.bf16.gmra.mxu0 %v227
    %v5202 = vpop.f32.mrf.mxu0
    %v5203 = vadd.f32 %v5160, %v5202
    %v5204 = vpop.f32.mrf.mxu0
    %v5205 = vadd.f32 %v5162, %v5204
    %v5206 = vpop.f32.mrf.mxu0
    %v5207 = vadd.f32 %v5164, %v5206
    %v5208 = vpop.f32.mrf.mxu0
    %v5209 = vadd.f32 %v5166, %v5208
    %5210 = vdwg.mxu0
    %5211 = vmatprep.subr.bf16.mxu0 %v3872
    %5212 = vmatpush1.bf16.msra.mxu0 %v3871
    %5213 = vmatprep.subr.bf16.mxu0 %v3868
    %5214 = vmatpush1.bf16.msra.mxu0 %v3867
    %5215 = vmatprep.subr.bf16.mxu0 %v3864
    %5216 = vmatpush1.bf16.msra.mxu0 %v3863
    %5217 = vmatprep.subr.bf16.mxu0 %v3860
    %5218 = vmatpush1.bf16.msra.mxu0 %v3859
    %5219 = vmatprep.subr.bf16.mxu0 %v3856
    %5220 = vmatpush1.bf16.msra.mxu0 %v3855
    %5221 = vmatprep.subr.bf16.mxu0 %v3852
    %5222 = vmatpush1.bf16.msra.mxu0 %v3851
    %5223 = vmatprep.subr.bf16.mxu0 %v3848
    %5224 = vmatpush1.bf16.msra.mxu0 %v3847
    %5225 = vmatprep.subr.bf16.mxu0 %v3844
    %5226 = vmatpush1.bf16.msra.mxu0 %v3843
    %5227 = vmatprep.subr.bf16.mxu0 %v3904
    %5228 = vmatpush2.bf16.msra.mxu0 %v3903
    %5229 = vmatprep.subr.bf16.mxu0 %v3900
    %5230 = vmatpush2.bf16.msra.mxu0 %v3899
    %5231 = vmatprep.subr.bf16.mxu0 %v3896
    %5232 = vmatpush2.bf16.msra.mxu0 %v3895
    %5233 = vmatprep.subr.bf16.mxu0 %v3892
    %5234 = vmatpush2.bf16.msra.mxu0 %v3891
    %5235 = vmatprep.subr.bf16.mxu0 %v3888
    %5236 = vmatpush2.bf16.msra.mxu0 %v3887
    %5237 = vmatprep.subr.bf16.mxu0 %v3884
    %5238 = vmatpush2.bf16.msra.mxu0 %v3883
    %5239 = vmatprep.subr.bf16.mxu0 %v3880
    %5240 = vmatpush2.bf16.msra.mxu0 %v3879
    %5241 = vmatprep.subr.bf16.mxu0 %v3876
    %5242 = vmatpush2.bf16.msra.mxu0 %v3875
    %5243 = vmatprep.mubr.bf16.mxu0 %v230
    %5244 = vmatmul.mubr.bf16.gmra.mxu0 %v229
    %v5245 = vpop.f32.mrf.mxu0
    %v5246 = vadd.f32 %v5203, %v5245
    %v5247 = vpop.f32.mrf.mxu0
    %v5248 = vadd.f32 %v5205, %v5247
    %v5249 = vpop.f32.mrf.mxu0
    %v5250 = vadd.f32 %v5207, %v5249
    %v5251 = vpop.f32.mrf.mxu0
    %v5252 = vadd.f32 %v5209, %v5251
    %5253 = vdwg.mxu0
    %5254 = vmatprep.subr.bf16.mxu0 %v3936
    %5255 = vmatpush1.bf16.msra.mxu0 %v3935
    %5256 = vmatprep.subr.bf16.mxu0 %v3932
    %5257 = vmatpush1.bf16.msra.mxu0 %v3931
    %5258 = vmatprep.subr.bf16.mxu0 %v3928
    %5259 = vmatpush1.bf16.msra.mxu0 %v3927
    %5260 = vmatprep.subr.bf16.mxu0 %v3924
    %5261 = vmatpush1.bf16.msra.mxu0 %v3923
    %5262 = vmatprep.subr.bf16.mxu0 %v3920
    %5263 = vmatpush1.bf16.msra.mxu0 %v3919
    %5264 = vmatprep.subr.bf16.mxu0 %v3916
    %5265 = vmatpush1.bf16.msra.mxu0 %v3915
    %5266 = vmatprep.subr.bf16.mxu0 %v3912
    %5267 = vmatpush1.bf16.msra.mxu0 %v3911
    %5268 = vmatprep.subr.bf16.mxu0 %v3908
    %5269 = vmatpush1.bf16.msra.mxu0 %v3907
    %5270 = vmatprep.subr.bf16.mxu0 %v3968
    %5271 = vmatpush2.bf16.msra.mxu0 %v3967
    %5272 = vmatprep.subr.bf16.mxu0 %v3964
    %5273 = vmatpush2.bf16.msra.mxu0 %v3963
    %5274 = vmatprep.subr.bf16.mxu0 %v3960
    %5275 = vmatpush2.bf16.msra.mxu0 %v3959
    %5276 = vmatprep.subr.bf16.mxu0 %v3956
    %5277 = vmatpush2.bf16.msra.mxu0 %v3955
    %5278 = vmatprep.subr.bf16.mxu0 %v3952
    %5279 = vmatpush2.bf16.msra.mxu0 %v3951
    %5280 = vmatprep.subr.bf16.mxu0 %v3948
    %5281 = vmatpush2.bf16.msra.mxu0 %v3947
    %5282 = vmatprep.subr.bf16.mxu0 %v3944
    %5283 = vmatpush2.bf16.msra.mxu0 %v3943
    %5284 = vmatprep.subr.bf16.mxu0 %v3940
    %5285 = vmatpush2.bf16.msra.mxu0 %v3939
    %5286 = vmatprep.mubr.bf16.mxu0 %v232
    %5287 = vmatmul.mubr.bf16.gmra.mxu0 %v231
    %v5288 = vpop.f32.mrf.mxu0
    %v5289 = vadd.f32 %v5246, %v5288
    %v5290 = vpop.f32.mrf.mxu0
    %v5291 = vadd.f32 %v5248, %v5290
    %v5292 = vpop.f32.mrf.mxu0
    %v5293 = vadd.f32 %v5250, %v5292
    %v5294 = vpop.f32.mrf.mxu0
    %v5295 = vadd.f32 %v5252, %v5294
    %5296 = vdwg.mxu0
    %5297 = vmatprep.subr.bf16.mxu0 %v4000
    %5298 = vmatpush1.bf16.msra.mxu0 %v3999
    %5299 = vmatprep.subr.bf16.mxu0 %v3996
    %5300 = vmatpush1.bf16.msra.mxu0 %v3995
    %5301 = vmatprep.subr.bf16.mxu0 %v3992
    %5302 = vmatpush1.bf16.msra.mxu0 %v3991
    %5303 = vmatprep.subr.bf16.mxu0 %v3988
    %5304 = vmatpush1.bf16.msra.mxu0 %v3987
    %5305 = vmatprep.subr.bf16.mxu0 %v3984
    %5306 = vmatpush1.bf16.msra.mxu0 %v3983
    %5307 = vmatprep.subr.bf16.mxu0 %v3980
    %5308 = vmatpush1.bf16.msra.mxu0 %v3979
    %5309 = vmatprep.subr.bf16.mxu0 %v3976
    %5310 = vmatpush1.bf16.msra.mxu0 %v3975
    %5311 = vmatprep.subr.bf16.mxu0 %v3972
    %5312 = vmatpush1.bf16.msra.mxu0 %v3971
    %5313 = vmatprep.subr.bf16.mxu0 %v4032
    %5314 = vmatpush2.bf16.msra.mxu0 %v4031
    %5315 = vmatprep.subr.bf16.mxu0 %v4028
    %5316 = vmatpush2.bf16.msra.mxu0 %v4027
    %5317 = vmatprep.subr.bf16.mxu0 %v4024
    %5318 = vmatpush2.bf16.msra.mxu0 %v4023
    %5319 = vmatprep.subr.bf16.mxu0 %v4020
    %5320 = vmatpush2.bf16.msra.mxu0 %v4019
    %5321 = vmatprep.subr.bf16.mxu0 %v4016
    %5322 = vmatpush2.bf16.msra.mxu0 %v4015
    %5323 = vmatprep.subr.bf16.mxu0 %v4012
    %5324 = vmatpush2.bf16.msra.mxu0 %v4011
    %5325 = vmatprep.subr.bf16.mxu0 %v4008
    %5326 = vmatpush2.bf16.msra.mxu0 %v4007
    %5327 = vmatprep.subr.bf16.mxu0 %v4004
    %5328 = vmatpush2.bf16.msra.mxu0 %v4003
    %5329 = vmatprep.mubr.bf16.mxu0 %v234
    %5330 = vmatmul.mubr.bf16.gmra.mxu0 %v233
    %v5331 = vpop.f32.mrf.mxu0
    %v5332 = vadd.f32 %v5289, %v5331
    %v5333 = vpop.f32.mrf.mxu0
    %v5334 = vadd.f32 %v5291, %v5333
    %v5335 = vpop.f32.mrf.mxu0
    %v5336 = vadd.f32 %v5293, %v5335
    %v5337 = vpop.f32.mrf.mxu0
    %v5338 = vadd.f32 %v5295, %v5337
    %5339 = vdwg.mxu0
    %5340 = vmatprep.subr.bf16.mxu0 %v4064
    %5341 = vmatpush1.bf16.msra.mxu0 %v4063
    %5342 = vmatprep.subr.bf16.mxu0 %v4060
    %5343 = vmatpush1.bf16.msra.mxu0 %v4059
    %5344 = vmatprep.subr.bf16.mxu0 %v4056
    %5345 = vmatpush1.bf16.msra.mxu0 %v4055
    %5346 = vmatprep.subr.bf16.mxu0 %v4052
    %5347 = vmatpush1.bf16.msra.mxu0 %v4051
    %5348 = vmatprep.subr.bf16.mxu0 %v4048
    %5349 = vmatpush1.bf16.msra.mxu0 %v4047
    %5350 = vmatprep.subr.bf16.mxu0 %v4044
    %5351 = vmatpush1.bf16.msra.mxu0 %v4043
    %5352 = vmatprep.subr.bf16.mxu0 %v4040
    %5353 = vmatpush1.bf16.msra.mxu0 %v4039
    %5354 = vmatprep.subr.bf16.mxu0 %v4036
    %5355 = vmatpush1.bf16.msra.mxu0 %v4035
    %5356 = vmatprep.subr.bf16.mxu0 %v4096
    %5357 = vmatpush2.bf16.msra.mxu0 %v4095
    %5358 = vmatprep.subr.bf16.mxu0 %v4092
    %5359 = vmatpush2.bf16.msra.mxu0 %v4091
    %5360 = vmatprep.subr.bf16.mxu0 %v4088
    %5361 = vmatpush2.bf16.msra.mxu0 %v4087
    %5362 = vmatprep.subr.bf16.mxu0 %v4084
    %5363 = vmatpush2.bf16.msra.mxu0 %v4083
    %5364 = vmatprep.subr.bf16.mxu0 %v4080
    %5365 = vmatpush2.bf16.msra.mxu0 %v4079
    %5366 = vmatprep.subr.bf16.mxu0 %v4076
    %5367 = vmatpush2.bf16.msra.mxu0 %v4075
    %5368 = vmatprep.subr.bf16.mxu0 %v4072
    %5369 = vmatpush2.bf16.msra.mxu0 %v4071
    %5370 = vmatprep.subr.bf16.mxu0 %v4068
    %5371 = vmatpush2.bf16.msra.mxu0 %v4067
    %5372 = vmatprep.mubr.bf16.mxu0 %v236
    %5373 = vmatmul.mubr.bf16.gmra.mxu0 %v235
    %v5374 = vpop.f32.mrf.mxu0
    %v5375 = vadd.f32 %v5332, %v5374
    %v5376 = vpop.f32.mrf.mxu0
    %v5377 = vadd.f32 %v5334, %v5376
    %v5378 = vpop.f32.mrf.mxu0
    %v5379 = vadd.f32 %v5336, %v5378
    %v5380 = vpop.f32.mrf.mxu0
    %v5381 = vadd.f32 %v5338, %v5380
    %5382 = vdwg.mxu0
    %5383 = vmatprep.subr.bf16.mxu0 %v3362
    %5384 = vmatpush1.bf16.msra.mxu0 %v3361
    %5385 = vmatprep.subr.bf16.mxu0 %v3358
    %5386 = vmatpush1.bf16.msra.mxu0 %v3357
    %5387 = vmatprep.subr.bf16.mxu0 %v3354
    %5388 = vmatpush1.bf16.msra.mxu0 %v3353
    %5389 = vmatprep.subr.bf16.mxu0 %v3350
    %5390 = vmatpush1.bf16.msra.mxu0 %v3349
    %5391 = vmatprep.subr.bf16.mxu0 %v3346
    %5392 = vmatpush1.bf16.msra.mxu0 %v3345
    %5393 = vmatprep.subr.bf16.mxu0 %v3342
    %5394 = vmatpush1.bf16.msra.mxu0 %v3341
    %5395 = vmatprep.subr.bf16.mxu0 %v3338
    %5396 = vmatpush1.bf16.msra.mxu0 %v3337
    %5397 = vmatprep.subr.bf16.mxu0 %v3334
    %5398 = vmatpush1.bf16.msra.mxu0 %v3333
    %5399 = vmatprep.subr.bf16.mxu0 %v3394
    %5400 = vmatpush2.bf16.msra.mxu0 %v3393
    %5401 = vmatprep.subr.bf16.mxu0 %v3390
    %5402 = vmatpush2.bf16.msra.mxu0 %v3389
    %5403 = vmatprep.subr.bf16.mxu0 %v3386
    %5404 = vmatpush2.bf16.msra.mxu0 %v3385
    %5405 = vmatprep.subr.bf16.mxu0 %v3382
    %5406 = vmatpush2.bf16.msra.mxu0 %v3381
    %5407 = vmatprep.subr.bf16.mxu0 %v3378
    %5408 = vmatpush2.bf16.msra.mxu0 %v3377
    %5409 = vmatprep.subr.bf16.mxu0 %v3374
    %5410 = vmatpush2.bf16.msra.mxu0 %v3373
    %5411 = vmatprep.subr.bf16.mxu0 %v3370
    %5412 = vmatpush2.bf16.msra.mxu0 %v3369
    %5413 = vmatprep.subr.bf16.mxu0 %v3366
    %5414 = vmatpush2.bf16.msra.mxu0 %v3365
    %5415 = vmatprep.mubr.bf16.mxu0 %v214
    %5416 = vmatmul.mubr.bf16.gmra.mxu0 %v213
    %v5417 = vpop.f32.mrf.mxu0
    %v5418 = vadd.f32 %v1018, %v5417
    %v5419 = vpop.f32.mrf.mxu0
    %v5420 = vadd.f32 %v1022, %v5419
    %v5421 = vpop.f32.mrf.mxu0
    %v5422 = vadd.f32 %v1018, %v5421
    %v5423 = vpop.f32.mrf.mxu0
    %v5424 = vadd.f32 %v1022, %v5423
    %5425 = vdwg.mxu0
    %5426 = vmatprep.subr.bf16.mxu0 %v3426
    %5427 = vmatpush1.bf16.msra.mxu0 %v3425
    %5428 = vmatprep.subr.bf16.mxu0 %v3422
    %5429 = vmatpush1.bf16.msra.mxu0 %v3421
    %5430 = vmatprep.subr.bf16.mxu0 %v3418
    %5431 = vmatpush1.bf16.msra.mxu0 %v3417
    %5432 = vmatprep.subr.bf16.mxu0 %v3414
    %5433 = vmatpush1.bf16.msra.mxu0 %v3413
    %5434 = vmatprep.subr.bf16.mxu0 %v3410
    %5435 = vmatpush1.bf16.msra.mxu0 %v3409
    %5436 = vmatprep.subr.bf16.mxu0 %v3406
    %5437 = vmatpush1.bf16.msra.mxu0 %v3405
    %5438 = vmatprep.subr.bf16.mxu0 %v3402
    %5439 = vmatpush1.bf16.msra.mxu0 %v3401
    %5440 = vmatprep.subr.bf16.mxu0 %v3398
    %5441 = vmatpush1.bf16.msra.mxu0 %v3397
    %5442 = vmatprep.subr.bf16.mxu0 %v3458
    %5443 = vmatpush2.bf16.msra.mxu0 %v3457
    %5444 = vmatprep.subr.bf16.mxu0 %v3454
    %5445 = vmatpush2.bf16.msra.mxu0 %v3453
    %5446 = vmatprep.subr.bf16.mxu0 %v3450
    %5447 = vmatpush2.bf16.msra.mxu0 %v3449
    %5448 = vmatprep.subr.bf16.mxu0 %v3446
    %5449 = vmatpush2.bf16.msra.mxu0 %v3445
    %5450 = vmatprep.subr.bf16.mxu0 %v3442
    %5451 = vmatpush2.bf16.msra.mxu0 %v3441
    %5452 = vmatprep.subr.bf16.mxu0 %v3438
    %5453 = vmatpush2.bf16.msra.mxu0 %v3437
    %5454 = vmatprep.subr.bf16.mxu0 %v3434
    %5455 = vmatpush2.bf16.msra.mxu0 %v3433
    %5456 = vmatprep.subr.bf16.mxu0 %v3430
    %5457 = vmatpush2.bf16.msra.mxu0 %v3429
    %5458 = vmatprep.mubr.bf16.mxu0 %v216
    %5459 = vmatmul.mubr.bf16.gmra.mxu0 %v215
    %v5460 = vpop.f32.mrf.mxu0
    %v5461 = vadd.f32 %v5418, %v5460
    %v5462 = vpop.f32.mrf.mxu0
    %v5463 = vadd.f32 %v5420, %v5462
    %v5464 = vpop.f32.mrf.mxu0
    %v5465 = vadd.f32 %v5422, %v5464
    %v5466 = vpop.f32.mrf.mxu0
    %v5467 = vadd.f32 %v5424, %v5466
    %5468 = vdwg.mxu0
    %5469 = vmatprep.subr.bf16.mxu0 %v3490
    %5470 = vmatpush1.bf16.msra.mxu0 %v3489
    %5471 = vmatprep.subr.bf16.mxu0 %v3486
    %5472 = vmatpush1.bf16.msra.mxu0 %v3485
    %5473 = vmatprep.subr.bf16.mxu0 %v3482
    %5474 = vmatpush1.bf16.msra.mxu0 %v3481
    %5475 = vmatprep.subr.bf16.mxu0 %v3478
    %5476 = vmatpush1.bf16.msra.mxu0 %v3477
    %5477 = vmatprep.subr.bf16.mxu0 %v3474
    %5478 = vmatpush1.bf16.msra.mxu0 %v3473
    %5479 = vmatprep.subr.bf16.mxu0 %v3470
    %5480 = vmatpush1.bf16.msra.mxu0 %v3469
    %5481 = vmatprep.subr.bf16.mxu0 %v3466
    %5482 = vmatpush1.bf16.msra.mxu0 %v3465
    %5483 = vmatprep.subr.bf16.mxu0 %v3462
    %5484 = vmatpush1.bf16.msra.mxu0 %v3461
    %5485 = vmatprep.subr.bf16.mxu0 %v3522
    %5486 = vmatpush2.bf16.msra.mxu0 %v3521
    %5487 = vmatprep.subr.bf16.mxu0 %v3518
    %5488 = vmatpush2.bf16.msra.mxu0 %v3517
    %5489 = vmatprep.subr.bf16.mxu0 %v3514
    %5490 = vmatpush2.bf16.msra.mxu0 %v3513
    %5491 = vmatprep.subr.bf16.mxu0 %v3510
    %5492 = vmatpush2.bf16.msra.mxu0 %v3509
    %5493 = vmatprep.subr.bf16.mxu0 %v3506
    %5494 = vmatpush2.bf16.msra.mxu0 %v3505
    %5495 = vmatprep.subr.bf16.mxu0 %v3502
    %5496 = vmatpush2.bf16.msra.mxu0 %v3501
    %5497 = vmatprep.subr.bf16.mxu0 %v3498
    %5498 = vmatpush2.bf16.msra.mxu0 %v3497
    %5499 = vmatprep.subr.bf16.mxu0 %v3494
    %5500 = vmatpush2.bf16.msra.mxu0 %v3493
    %5501 = vmatprep.mubr.bf16.mxu0 %v218
    %5502 = vmatmul.mubr.bf16.gmra.mxu0 %v217
    %v5503 = vpop.f32.mrf.mxu0
    %v5504 = vadd.f32 %v5461, %v5503
    %v5505 = vpop.f32.mrf.mxu0
    %v5506 = vadd.f32 %v5463, %v5505
    %v5507 = vpop.f32.mrf.mxu0
    %v5508 = vadd.f32 %v5465, %v5507
    %v5509 = vpop.f32.mrf.mxu0
    %v5510 = vadd.f32 %v5467, %v5509
    %5511 = vdwg.mxu0
    %5512 = vmatprep.subr.bf16.mxu0 %v3554
    %5513 = vmatpush1.bf16.msra.mxu0 %v3553
    %5514 = vmatprep.subr.bf16.mxu0 %v3550
    %5515 = vmatpush1.bf16.msra.mxu0 %v3549
    %5516 = vmatprep.subr.bf16.mxu0 %v3546
    %5517 = vmatpush1.bf16.msra.mxu0 %v3545
    %5518 = vmatprep.subr.bf16.mxu0 %v3542
    %5519 = vmatpush1.bf16.msra.mxu0 %v3541
    %5520 = vmatprep.subr.bf16.mxu0 %v3538
    %5521 = vmatpush1.bf16.msra.mxu0 %v3537
    %5522 = vmatprep.subr.bf16.mxu0 %v3534
    %5523 = vmatpush1.bf16.msra.mxu0 %v3533
    %5524 = vmatprep.subr.bf16.mxu0 %v3530
    %5525 = vmatpush1.bf16.msra.mxu0 %v3529
    %5526 = vmatprep.subr.bf16.mxu0 %v3526
    %5527 = vmatpush1.bf16.msra.mxu0 %v3525
    %5528 = vmatprep.subr.bf16.mxu0 %v3586
    %5529 = vmatpush2.bf16.msra.mxu0 %v3585
    %5530 = vmatprep.subr.bf16.mxu0 %v3582
    %5531 = vmatpush2.bf16.msra.mxu0 %v3581
    %5532 = vmatprep.subr.bf16.mxu0 %v3578
    %5533 = vmatpush2.bf16.msra.mxu0 %v3577
    %5534 = vmatprep.subr.bf16.mxu0 %v3574
    %5535 = vmatpush2.bf16.msra.mxu0 %v3573
    %5536 = vmatprep.subr.bf16.mxu0 %v3570
    %5537 = vmatpush2.bf16.msra.mxu0 %v3569
    %5538 = vmatprep.subr.bf16.mxu0 %v3566
    %5539 = vmatpush2.bf16.msra.mxu0 %v3565
    %5540 = vmatprep.subr.bf16.mxu0 %v3562
    %5541 = vmatpush2.bf16.msra.mxu0 %v3561
    %5542 = vmatprep.subr.bf16.mxu0 %v3558
    %5543 = vmatpush2.bf16.msra.mxu0 %v3557
    %5544 = vmatprep.mubr.bf16.mxu0 %v220
    %5545 = vmatmul.mubr.bf16.gmra.mxu0 %v219
    %v5546 = vpop.f32.mrf.mxu0
    %v5547 = vadd.f32 %v5504, %v5546
    %v5548 = vpop.f32.mrf.mxu0
    %v5549 = vadd.f32 %v5506, %v5548
    %v5550 = vpop.f32.mrf.mxu0
    %v5551 = vadd.f32 %v5508, %v5550
    %v5552 = vpop.f32.mrf.mxu0
    %v5553 = vadd.f32 %v5510, %v5552
    %5554 = vdwg.mxu0
    %5555 = vmatprep.subr.bf16.mxu0 %v3618
    %5556 = vmatpush1.bf16.msra.mxu0 %v3617
    %5557 = vmatprep.subr.bf16.mxu0 %v3614
    %5558 = vmatpush1.bf16.msra.mxu0 %v3613
    %5559 = vmatprep.subr.bf16.mxu0 %v3610
    %5560 = vmatpush1.bf16.msra.mxu0 %v3609
    %5561 = vmatprep.subr.bf16.mxu0 %v3606
    %5562 = vmatpush1.bf16.msra.mxu0 %v3605
    %5563 = vmatprep.subr.bf16.mxu0 %v3602
    %5564 = vmatpush1.bf16.msra.mxu0 %v3601
    %5565 = vmatprep.subr.bf16.mxu0 %v3598
    %5566 = vmatpush1.bf16.msra.mxu0 %v3597
    %5567 = vmatprep.subr.bf16.mxu0 %v3594
    %5568 = vmatpush1.bf16.msra.mxu0 %v3593
    %5569 = vmatprep.subr.bf16.mxu0 %v3590
    %5570 = vmatpush1.bf16.msra.mxu0 %v3589
    %5571 = vmatprep.subr.bf16.mxu0 %v3650
    %5572 = vmatpush2.bf16.msra.mxu0 %v3649
    %5573 = vmatprep.subr.bf16.mxu0 %v3646
    %5574 = vmatpush2.bf16.msra.mxu0 %v3645
    %5575 = vmatprep.subr.bf16.mxu0 %v3642
    %5576 = vmatpush2.bf16.msra.mxu0 %v3641
    %5577 = vmatprep.subr.bf16.mxu0 %v3638
    %5578 = vmatpush2.bf16.msra.mxu0 %v3637
    %5579 = vmatprep.subr.bf16.mxu0 %v3634
    %5580 = vmatpush2.bf16.msra.mxu0 %v3633
    %5581 = vmatprep.subr.bf16.mxu0 %v3630
    %5582 = vmatpush2.bf16.msra.mxu0 %v3629
    %5583 = vmatprep.subr.bf16.mxu0 %v3626
    %5584 = vmatpush2.bf16.msra.mxu0 %v3625
    %5585 = vmatprep.subr.bf16.mxu0 %v3622
    %5586 = vmatpush2.bf16.msra.mxu0 %v3621
    %5587 = vmatprep.mubr.bf16.mxu0 %v222
    %5588 = vmatmul.mubr.bf16.gmra.mxu0 %v221
    %v5589 = vpop.f32.mrf.mxu0
    %v5590 = vadd.f32 %v5547, %v5589
    %v5591 = vpop.f32.mrf.mxu0
    %v5592 = vadd.f32 %v5549, %v5591
    %v5593 = vpop.f32.mrf.mxu0
    %v5594 = vadd.f32 %v5551, %v5593
    %v5595 = vpop.f32.mrf.mxu0
    %v5596 = vadd.f32 %v5553, %v5595
    %5597 = vdwg.mxu0
    %5598 = vmatprep.subr.bf16.mxu0 %v3682
    %5599 = vmatpush1.bf16.msra.mxu0 %v3681
    %5600 = vmatprep.subr.bf16.mxu0 %v3678
    %5601 = vmatpush1.bf16.msra.mxu0 %v3677
    %5602 = vmatprep.subr.bf16.mxu0 %v3674
    %5603 = vmatpush1.bf16.msra.mxu0 %v3673
    %5604 = vmatprep.subr.bf16.mxu0 %v3670
    %5605 = vmatpush1.bf16.msra.mxu0 %v3669
    %5606 = vmatprep.subr.bf16.mxu0 %v3666
    %5607 = vmatpush1.bf16.msra.mxu0 %v3665
    %5608 = vmatprep.subr.bf16.mxu0 %v3662
    %5609 = vmatpush1.bf16.msra.mxu0 %v3661
    %5610 = vmatprep.subr.bf16.mxu0 %v3658
    %5611 = vmatpush1.bf16.msra.mxu0 %v3657
    %5612 = vmatprep.subr.bf16.mxu0 %v3654
    %5613 = vmatpush1.bf16.msra.mxu0 %v3653
    %5614 = vmatprep.subr.bf16.mxu0 %v3714
    %5615 = vmatpush2.bf16.msra.mxu0 %v3713
    %5616 = vmatprep.subr.bf16.mxu0 %v3710
    %5617 = vmatpush2.bf16.msra.mxu0 %v3709
    %5618 = vmatprep.subr.bf16.mxu0 %v3706
    %5619 = vmatpush2.bf16.msra.mxu0 %v3705
    %5620 = vmatprep.subr.bf16.mxu0 %v3702
    %5621 = vmatpush2.bf16.msra.mxu0 %v3701
    %5622 = vmatprep.subr.bf16.mxu0 %v3698
    %5623 = vmatpush2.bf16.msra.mxu0 %v3697
    %5624 = vmatprep.subr.bf16.mxu0 %v3694
    %5625 = vmatpush2.bf16.msra.mxu0 %v3693
    %5626 = vmatprep.subr.bf16.mxu0 %v3690
    %5627 = vmatpush2.bf16.msra.mxu0 %v3689
    %5628 = vmatprep.subr.bf16.mxu0 %v3686
    %5629 = vmatpush2.bf16.msra.mxu0 %v3685
    %5630 = vmatprep.mubr.bf16.mxu0 %v224
    %5631 = vmatmul.mubr.bf16.gmra.mxu0 %v223
    %v5632 = vpop.f32.mrf.mxu0
    %v5633 = vadd.f32 %v5590, %v5632
    %v5634 = vpop.f32.mrf.mxu0
    %v5635 = vadd.f32 %v5592, %v5634
    %v5636 = vpop.f32.mrf.mxu0
    %v5637 = vadd.f32 %v5594, %v5636
    %v5638 = vpop.f32.mrf.mxu0
    %v5639 = vadd.f32 %v5596, %v5638
    %5640 = vdwg.mxu0
    %5641 = vmatprep.subr.bf16.mxu0 %v3746
    %5642 = vmatpush1.bf16.msra.mxu0 %v3745
    %5643 = vmatprep.subr.bf16.mxu0 %v3742
    %5644 = vmatpush1.bf16.msra.mxu0 %v3741
    %5645 = vmatprep.subr.bf16.mxu0 %v3738
    %5646 = vmatpush1.bf16.msra.mxu0 %v3737
    %5647 = vmatprep.subr.bf16.mxu0 %v3734
    %5648 = vmatpush1.bf16.msra.mxu0 %v3733
    %5649 = vmatprep.subr.bf16.mxu0 %v3730
    %5650 = vmatpush1.bf16.msra.mxu0 %v3729
    %5651 = vmatprep.subr.bf16.mxu0 %v3726
    %5652 = vmatpush1.bf16.msra.mxu0 %v3725
    %5653 = vmatprep.subr.bf16.mxu0 %v3722
    %5654 = vmatpush1.bf16.msra.mxu0 %v3721
    %5655 = vmatprep.subr.bf16.mxu0 %v3718
    %5656 = vmatpush1.bf16.msra.mxu0 %v3717
    %5657 = vmatprep.subr.bf16.mxu0 %v3778
    %5658 = vmatpush2.bf16.msra.mxu0 %v3777
    %5659 = vmatprep.subr.bf16.mxu0 %v3774
    %5660 = vmatpush2.bf16.msra.mxu0 %v3773
    %5661 = vmatprep.subr.bf16.mxu0 %v3770
    %5662 = vmatpush2.bf16.msra.mxu0 %v3769
    %5663 = vmatprep.subr.bf16.mxu0 %v3766
    %5664 = vmatpush2.bf16.msra.mxu0 %v3765
    %5665 = vmatprep.subr.bf16.mxu0 %v3762
    %5666 = vmatpush2.bf16.msra.mxu0 %v3761
    %5667 = vmatprep.subr.bf16.mxu0 %v3758
    %5668 = vmatpush2.bf16.msra.mxu0 %v3757
    %5669 = vmatprep.subr.bf16.mxu0 %v3754
    %5670 = vmatpush2.bf16.msra.mxu0 %v3753
    %5671 = vmatprep.subr.bf16.mxu0 %v3750
    %5672 = vmatpush2.bf16.msra.mxu0 %v3749
    %5673 = vmatprep.mubr.bf16.mxu0 %v226
    %5674 = vmatmul.mubr.bf16.gmra.mxu0 %v225
    %v5675 = vpop.f32.mrf.mxu0
    %v5676 = vadd.f32 %v5633, %v5675
    %v5677 = vpop.f32.mrf.mxu0
    %v5678 = vadd.f32 %v5635, %v5677
    %v5679 = vpop.f32.mrf.mxu0
    %v5680 = vadd.f32 %v5637, %v5679
    %v5681 = vpop.f32.mrf.mxu0
    %v5682 = vadd.f32 %v5639, %v5681
    %5683 = vdwg.mxu0
    %5684 = vmatprep.subr.bf16.mxu0 %v3810
    %5685 = vmatpush1.bf16.msra.mxu0 %v3809
    %5686 = vmatprep.subr.bf16.mxu0 %v3806
    %5687 = vmatpush1.bf16.msra.mxu0 %v3805
    %5688 = vmatprep.subr.bf16.mxu0 %v3802
    %5689 = vmatpush1.bf16.msra.mxu0 %v3801
    %5690 = vmatprep.subr.bf16.mxu0 %v3798
    %5691 = vmatpush1.bf16.msra.mxu0 %v3797
    %5692 = vmatprep.subr.bf16.mxu0 %v3794
    %5693 = vmatpush1.bf16.msra.mxu0 %v3793
    %5694 = vmatprep.subr.bf16.mxu0 %v3790
    %5695 = vmatpush1.bf16.msra.mxu0 %v3789
    %5696 = vmatprep.subr.bf16.mxu0 %v3786
    %5697 = vmatpush1.bf16.msra.mxu0 %v3785
    %5698 = vmatprep.subr.bf16.mxu0 %v3782
    %5699 = vmatpush1.bf16.msra.mxu0 %v3781
    %5700 = vmatprep.subr.bf16.mxu0 %v3842
    %5701 = vmatpush2.bf16.msra.mxu0 %v3841
    %5702 = vmatprep.subr.bf16.mxu0 %v3838
    %5703 = vmatpush2.bf16.msra.mxu0 %v3837
    %5704 = vmatprep.subr.bf16.mxu0 %v3834
    %5705 = vmatpush2.bf16.msra.mxu0 %v3833
    %5706 = vmatprep.subr.bf16.mxu0 %v3830
    %5707 = vmatpush2.bf16.msra.mxu0 %v3829
    %5708 = vmatprep.subr.bf16.mxu0 %v3826
    %5709 = vmatpush2.bf16.msra.mxu0 %v3825
    %5710 = vmatprep.subr.bf16.mxu0 %v3822
    %5711 = vmatpush2.bf16.msra.mxu0 %v3821
    %5712 = vmatprep.subr.bf16.mxu0 %v3818
    %5713 = vmatpush2.bf16.msra.mxu0 %v3817
    %5714 = vmatprep.subr.bf16.mxu0 %v3814
    %5715 = vmatpush2.bf16.msra.mxu0 %v3813
    %5716 = vmatprep.mubr.bf16.mxu0 %v228
    %5717 = vmatmul.mubr.bf16.gmra.mxu0 %v227
    %v5718 = vpop.f32.mrf.mxu0
    %v5719 = vadd.f32 %v5676, %v5718
    %v5720 = vpop.f32.mrf.mxu0
    %v5721 = vadd.f32 %v5678, %v5720
    %v5722 = vpop.f32.mrf.mxu0
    %v5723 = vadd.f32 %v5680, %v5722
    %v5724 = vpop.f32.mrf.mxu0
    %v5725 = vadd.f32 %v5682, %v5724
    %5726 = vdwg.mxu0
    %5727 = vmatprep.subr.bf16.mxu0 %v3874
    %5728 = vmatpush1.bf16.msra.mxu0 %v3873
    %5729 = vmatprep.subr.bf16.mxu0 %v3870
    %5730 = vmatpush1.bf16.msra.mxu0 %v3869
    %5731 = vmatprep.subr.bf16.mxu0 %v3866
    %5732 = vmatpush1.bf16.msra.mxu0 %v3865
    %5733 = vmatprep.subr.bf16.mxu0 %v3862
    %5734 = vmatpush1.bf16.msra.mxu0 %v3861
    %5735 = vmatprep.subr.bf16.mxu0 %v3858
    %5736 = vmatpush1.bf16.msra.mxu0 %v3857
    %5737 = vmatprep.subr.bf16.mxu0 %v3854
    %5738 = vmatpush1.bf16.msra.mxu0 %v3853
    %5739 = vmatprep.subr.bf16.mxu0 %v3850
    %5740 = vmatpush1.bf16.msra.mxu0 %v3849
    %5741 = vmatprep.subr.bf16.mxu0 %v3846
    %5742 = vmatpush1.bf16.msra.mxu0 %v3845
    %5743 = vmatprep.subr.bf16.mxu0 %v3906
    %5744 = vmatpush2.bf16.msra.mxu0 %v3905
    %5745 = vmatprep.subr.bf16.mxu0 %v3902
    %5746 = vmatpush2.bf16.msra.mxu0 %v3901
    %5747 = vmatprep.subr.bf16.mxu0 %v3898
    %5748 = vmatpush2.bf16.msra.mxu0 %v3897
    %5749 = vmatprep.subr.bf16.mxu0 %v3894
    %5750 = vmatpush2.bf16.msra.mxu0 %v3893
    %5751 = vmatprep.subr.bf16.mxu0 %v3890
    %5752 = vmatpush2.bf16.msra.mxu0 %v3889
    %5753 = vmatprep.subr.bf16.mxu0 %v3886
    %5754 = vmatpush2.bf16.msra.mxu0 %v3885
    %5755 = vmatprep.subr.bf16.mxu0 %v3882
    %5756 = vmatpush2.bf16.msra.mxu0 %v3881
    %5757 = vmatprep.subr.bf16.mxu0 %v3878
    %5758 = vmatpush2.bf16.msra.mxu0 %v3877
    %5759 = vmatprep.mubr.bf16.mxu0 %v230
    %5760 = vmatmul.mubr.bf16.gmra.mxu0 %v229
    %v5761 = vpop.f32.mrf.mxu0
    %v5762 = vadd.f32 %v5719, %v5761
    %v5763 = vpop.f32.mrf.mxu0
    %v5764 = vadd.f32 %v5721, %v5763
    %v5765 = vpop.f32.mrf.mxu0
    %v5766 = vadd.f32 %v5723, %v5765
    %v5767 = vpop.f32.mrf.mxu0
    %v5768 = vadd.f32 %v5725, %v5767
    %5769 = vdwg.mxu0
    %5770 = vmatprep.subr.bf16.mxu0 %v3938
    %5771 = vmatpush1.bf16.msra.mxu0 %v3937
    %5772 = vmatprep.subr.bf16.mxu0 %v3934
    %5773 = vmatpush1.bf16.msra.mxu0 %v3933
    %5774 = vmatprep.subr.bf16.mxu0 %v3930
    %5775 = vmatpush1.bf16.msra.mxu0 %v3929
    %5776 = vmatprep.subr.bf16.mxu0 %v3926
    %5777 = vmatpush1.bf16.msra.mxu0 %v3925
    %5778 = vmatprep.subr.bf16.mxu0 %v3922
    %5779 = vmatpush1.bf16.msra.mxu0 %v3921
    %5780 = vmatprep.subr.bf16.mxu0 %v3918
    %5781 = vmatpush1.bf16.msra.mxu0 %v3917
    %5782 = vmatprep.subr.bf16.mxu0 %v3914
    %5783 = vmatpush1.bf16.msra.mxu0 %v3913
    %5784 = vmatprep.subr.bf16.mxu0 %v3910
    %5785 = vmatpush1.bf16.msra.mxu0 %v3909
    %5786 = vmatprep.subr.bf16.mxu0 %v3970
    %5787 = vmatpush2.bf16.msra.mxu0 %v3969
    %5788 = vmatprep.subr.bf16.mxu0 %v3966
    %5789 = vmatpush2.bf16.msra.mxu0 %v3965
    %5790 = vmatprep.subr.bf16.mxu0 %v3962
    %5791 = vmatpush2.bf16.msra.mxu0 %v3961
    %5792 = vmatprep.subr.bf16.mxu0 %v3958
    %5793 = vmatpush2.bf16.msra.mxu0 %v3957
    %5794 = vmatprep.subr.bf16.mxu0 %v3954
    %5795 = vmatpush2.bf16.msra.mxu0 %v3953
    %5796 = vmatprep.subr.bf16.mxu0 %v3950
    %5797 = vmatpush2.bf16.msra.mxu0 %v3949
    %5798 = vmatprep.subr.bf16.mxu0 %v3946
    %5799 = vmatpush2.bf16.msra.mxu0 %v3945
    %5800 = vmatprep.subr.bf16.mxu0 %v3942
    %5801 = vmatpush2.bf16.msra.mxu0 %v3941
    %5802 = vmatprep.mubr.bf16.mxu0 %v232
    %5803 = vmatmul.mubr.bf16.gmra.mxu0 %v231
    %v5804 = vpop.f32.mrf.mxu0
    %v5805 = vadd.f32 %v5762, %v5804
    %v5806 = vpop.f32.mrf.mxu0
    %v5807 = vadd.f32 %v5764, %v5806
    %v5808 = vpop.f32.mrf.mxu0
    %v5809 = vadd.f32 %v5766, %v5808
    %v5810 = vpop.f32.mrf.mxu0
    %v5811 = vadd.f32 %v5768, %v5810
    %5812 = vdwg.mxu0
    %5813 = vmatprep.subr.bf16.mxu0 %v4002
    %5814 = vmatpush1.bf16.msra.mxu0 %v4001
    %5815 = vmatprep.subr.bf16.mxu0 %v3998
    %5816 = vmatpush1.bf16.msra.mxu0 %v3997
    %5817 = vmatprep.subr.bf16.mxu0 %v3994
    %5818 = vmatpush1.bf16.msra.mxu0 %v3993
    %5819 = vmatprep.subr.bf16.mxu0 %v3990
    %5820 = vmatpush1.bf16.msra.mxu0 %v3989
    %5821 = vmatprep.subr.bf16.mxu0 %v3986
    %5822 = vmatpush1.bf16.msra.mxu0 %v3985
    %5823 = vmatprep.subr.bf16.mxu0 %v3982
    %5824 = vmatpush1.bf16.msra.mxu0 %v3981
    %5825 = vmatprep.subr.bf16.mxu0 %v3978
    %5826 = vmatpush1.bf16.msra.mxu0 %v3977
    %5827 = vmatprep.subr.bf16.mxu0 %v3974
    %5828 = vmatpush1.bf16.msra.mxu0 %v3973
    %5829 = vmatprep.subr.bf16.mxu0 %v4034
    %5830 = vmatpush2.bf16.msra.mxu0 %v4033
    %5831 = vmatprep.subr.bf16.mxu0 %v4030
    %5832 = vmatpush2.bf16.msra.mxu0 %v4029
    %5833 = vmatprep.subr.bf16.mxu0 %v4026
    %5834 = vmatpush2.bf16.msra.mxu0 %v4025
    %5835 = vmatprep.subr.bf16.mxu0 %v4022
    %5836 = vmatpush2.bf16.msra.mxu0 %v4021
    %5837 = vmatprep.subr.bf16.mxu0 %v4018
    %5838 = vmatpush2.bf16.msra.mxu0 %v4017
    %5839 = vmatprep.subr.bf16.mxu0 %v4014
    %5840 = vmatpush2.bf16.msra.mxu0 %v4013
    %5841 = vmatprep.subr.bf16.mxu0 %v4010
    %5842 = vmatpush2.bf16.msra.mxu0 %v4009
    %5843 = vmatprep.subr.bf16.mxu0 %v4006
    %5844 = vmatpush2.bf16.msra.mxu0 %v4005
    %5845 = vmatprep.mubr.bf16.mxu0 %v234
    %5846 = vmatmul.mubr.bf16.gmra.mxu0 %v233
    %v5847 = vpop.f32.mrf.mxu0
    %v5848 = vadd.f32 %v5805, %v5847
    %v5849 = vpop.f32.mrf.mxu0
    %v5850 = vadd.f32 %v5807, %v5849
    %v5851 = vpop.f32.mrf.mxu0
    %v5852 = vadd.f32 %v5809, %v5851
    %v5853 = vpop.f32.mrf.mxu0
    %v5854 = vadd.f32 %v5811, %v5853
    %5855 = vdwg.mxu0
    %5856 = vmatprep.subr.bf16.mxu0 %v4066
    %5857 = vmatpush1.bf16.msra.mxu0 %v4065
    %5858 = vmatprep.subr.bf16.mxu0 %v4062
    %5859 = vmatpush1.bf16.msra.mxu0 %v4061
    %5860 = vmatprep.subr.bf16.mxu0 %v4058
    %5861 = vmatpush1.bf16.msra.mxu0 %v4057
    %5862 = vmatprep.subr.bf16.mxu0 %v4054
    %5863 = vmatpush1.bf16.msra.mxu0 %v4053
    %5864 = vmatprep.subr.bf16.mxu0 %v4050
    %5865 = vmatpush1.bf16.msra.mxu0 %v4049
    %5866 = vmatprep.subr.bf16.mxu0 %v4046
    %5867 = vmatpush1.bf16.msra.mxu0 %v4045
    %5868 = vmatprep.subr.bf16.mxu0 %v4042
    %5869 = vmatpush1.bf16.msra.mxu0 %v4041
    %5870 = vmatprep.subr.bf16.mxu0 %v4038
    %5871 = vmatpush1.bf16.msra.mxu0 %v4037
    %5872 = vmatprep.subr.bf16.mxu0 %v4098
    %5873 = vmatpush2.bf16.msra.mxu0 %v4097
    %5874 = vmatprep.subr.bf16.mxu0 %v4094
    %5875 = vmatpush2.bf16.msra.mxu0 %v4093
    %5876 = vmatprep.subr.bf16.mxu0 %v4090
    %5877 = vmatpush2.bf16.msra.mxu0 %v4089
    %5878 = vmatprep.subr.bf16.mxu0 %v4086
    %5879 = vmatpush2.bf16.msra.mxu0 %v4085
    %5880 = vmatprep.subr.bf16.mxu0 %v4082
    %5881 = vmatpush2.bf16.msra.mxu0 %v4081
    %5882 = vmatprep.subr.bf16.mxu0 %v4078
    %5883 = vmatpush2.bf16.msra.mxu0 %v4077
    %5884 = vmatprep.subr.bf16.mxu0 %v4074
    %5885 = vmatpush2.bf16.msra.mxu0 %v4073
    %5886 = vmatprep.subr.bf16.mxu0 %v4070
    %5887 = vmatpush2.bf16.msra.mxu0 %v4069
    %5888 = vmatprep.mubr.bf16.mxu0 %v236
    %5889 = vmatmul.mubr.bf16.gmra.mxu0 %v235
    %v5890 = vpop.f32.mrf.mxu0
    %v5891 = vadd.f32 %v5848, %v5890
    %v5892 = vpop.f32.mrf.mxu0
    %v5893 = vadd.f32 %v5850, %v5892
    %v5894 = vpop.f32.mrf.mxu0
    %v5895 = vadd.f32 %v5852, %v5894
    %v5896 = vpop.f32.mrf.mxu0
    %v5897 = vadd.f32 %v5854, %v5896
    %5898 = vdwg.mxu0
    %v5899 = vmax.f32 %v5375, 0.0
    %v5900 = vmax.f32 %v5377, 0.0
    %v5901 = vmax.f32 %v5891, 0.0
    %v5902 = vmax.f32 %v5893, 0.0
    %v5903 = vmax.f32 %v5379, 0.0
    %v5904 = vmax.f32 %v5381, 0.0
    %v5905 = vmax.f32 %v5895, 0.0
    %v5906 = vmax.f32 %v5897, 0.0
    %v5907 = vpack.c.bf16 %v5903, %v5899
    %v5908 = vpack.c.bf16 %v5904, %v5900
    %v5909 = vpack.c.bf16 %v5905, %v5901
    %v5910 = vpack.c.bf16 %v5906, %v5902
    %v5911 = vld [vmem:[#allocation6] sm:$0xff]
    %v5912 = vld [vmem:[#allocation6 + $0x8] sm:$0xff]
    %v5913 = vld [vmem:[#allocation6 + $0x10] sm:$0xff]
    %v5914 = vld [vmem:[#allocation6 + $0x18] sm:$0xff]
    %v5915 = vld [vmem:[#allocation6 + $0x20] sm:$0xff]
    %v5916 = vld [vmem:[#allocation6 + $0x28] sm:$0xff]
    %v5917 = vld [vmem:[#allocation6 + $0x30] sm:$0xff]
    %v5918 = vld [vmem:[#allocation6 + $0x38] sm:$0xff]
    %v5919 = vld [vmem:[#allocation6 + $0x40] sm:$0xff]
    %v5920 = vld [vmem:[#allocation6 + $0x48] sm:$0xff]
    %v5921 = vld [vmem:[#allocation6 + $0x50] sm:$0xff]
    %v5922 = vld [vmem:[#allocation6 + $0x58] sm:$0xff]
    %v5923 = vld [vmem:[#allocation6 + $0x60] sm:$0xff]
    %v5924 = vld [vmem:[#allocation6 + $0x68] sm:$0xff]
    %v5925 = vld [vmem:[#allocation6 + $0x70] sm:$0xff]
    %v5926 = vld [vmem:[#allocation6 + $0x78] sm:$0xff]
    %v5927 = vld [vmem:[#allocation6 + $0x80] sm:$0xff]
    %v5928 = vld [vmem:[#allocation6 + $0x88] sm:$0xff]
    %v5929 = vld [vmem:[#allocation6 + $0x90] sm:$0xff]
    %v5930 = vld [vmem:[#allocation6 + $0x98] sm:$0xff]
    %v5931 = vld [vmem:[#allocation6 + $0xa0] sm:$0xff]
    %v5932 = vld [vmem:[#allocation6 + $0xa8] sm:$0xff]
    %v5933 = vld [vmem:[#allocation6 + $0xb0] sm:$0xff]
    %v5934 = vld [vmem:[#allocation6 + $0xb8] sm:$0xff]
    %v5935 = vld [vmem:[#allocation6 + $0xc0] sm:$0xff]
    %v5936 = vld [vmem:[#allocation6 + $0xc8] sm:$0xff]
    %v5937 = vld [vmem:[#allocation6 + $0xd0] sm:$0xff]
    %v5938 = vld [vmem:[#allocation6 + $0xd8] sm:$0xff]
    %v5939 = vld [vmem:[#allocation6 + $0xe0] sm:$0xff]
    %v5940 = vld [vmem:[#allocation6 + $0xe8] sm:$0xff]
    %v5941 = vld [vmem:[#allocation6 + $0xf0] sm:$0xff]
    %v5942 = vld [vmem:[#allocation6 + $0xf8] sm:$0xff]
    %v5943 = vld [vmem:[#allocation6 + $0x100] sm:$0xff]
    %v5944 = vld [vmem:[#allocation6 + $0x108] sm:$0xff]
    %v5945 = vld [vmem:[#allocation6 + $0x110] sm:$0xff]
    %v5946 = vld [vmem:[#allocation6 + $0x118] sm:$0xff]
    %v5947 = vld [vmem:[#allocation6 + $0x120] sm:$0xff]
    %v5948 = vld [vmem:[#allocation6 + $0x128] sm:$0xff]
    %v5949 = vld [vmem:[#allocation6 + $0x130] sm:$0xff]
    %v5950 = vld [vmem:[#allocation6 + $0x138] sm:$0xff]
    %v5951 = vld [vmem:[#allocation6 + $0x140] sm:$0xff]
    %v5952 = vld [vmem:[#allocation6 + $0x148] sm:$0xff]
    %v5953 = vld [vmem:[#allocation6 + $0x150] sm:$0xff]
    %v5954 = vld [vmem:[#allocation6 + $0x158] sm:$0xff]
    %v5955 = vld [vmem:[#allocation6 + $0x160] sm:$0xff]
    %v5956 = vld [vmem:[#allocation6 + $0x168] sm:$0xff]
    %v5957 = vld [vmem:[#allocation6 + $0x170] sm:$0xff]
    %v5958 = vld [vmem:[#allocation6 + $0x178] sm:$0xff]
    %v5959 = vld [vmem:[#allocation6 + $0x180] sm:$0xff]
    %v5960 = vld [vmem:[#allocation6 + $0x188] sm:$0xff]
    %v5961 = vld [vmem:[#allocation6 + $0x190] sm:$0xff]
    %v5962 = vld [vmem:[#allocation6 + $0x198] sm:$0xff]
    %v5963 = vld [vmem:[#allocation6 + $0x1a0] sm:$0xff]
    %v5964 = vld [vmem:[#allocation6 + $0x1a8] sm:$0xff]
    %v5965 = vld [vmem:[#allocation6 + $0x1b0] sm:$0xff]
    %v5966 = vld [vmem:[#allocation6 + $0x1b8] sm:$0xff]
    %v5967 = vld [vmem:[#allocation6 + $0x1c0] sm:$0xff]
    %v5968 = vld [vmem:[#allocation6 + $0x1c8] sm:$0xff]
    %v5969 = vld [vmem:[#allocation6 + $0x1d0] sm:$0xff]
    %v5970 = vld [vmem:[#allocation6 + $0x1d8] sm:$0xff]
    %v5971 = vld [vmem:[#allocation6 + $0x1e0] sm:$0xff]
    %v5972 = vld [vmem:[#allocation6 + $0x1e8] sm:$0xff]
    %v5973 = vld [vmem:[#allocation6 + $0x1f0] sm:$0xff]
    %v5974 = vld [vmem:[#allocation6 + $0x1f8] sm:$0xff]
    %v5975 = vld [vmem:[#allocation6 + $0x200] sm:$0xff]
    %v5976 = vld [vmem:[#allocation6 + $0x208] sm:$0xff]
    %v5977 = vld [vmem:[#allocation6 + $0x210] sm:$0xff]
    %v5978 = vld [vmem:[#allocation6 + $0x218] sm:$0xff]
    %v5979 = vld [vmem:[#allocation6 + $0x220] sm:$0xff]
    %v5980 = vld [vmem:[#allocation6 + $0x228] sm:$0xff]
    %v5981 = vld [vmem:[#allocation6 + $0x230] sm:$0xff]
    %v5982 = vld [vmem:[#allocation6 + $0x238] sm:$0xff]
    %v5983 = vld [vmem:[#allocation6 + $0x240] sm:$0xff]
    %v5984 = vld [vmem:[#allocation6 + $0x248] sm:$0xff]
    %v5985 = vld [vmem:[#allocation6 + $0x250] sm:$0xff]
    %v5986 = vld [vmem:[#allocation6 + $0x258] sm:$0xff]
    %v5987 = vld [vmem:[#allocation6 + $0x260] sm:$0xff]
    %v5988 = vld [vmem:[#allocation6 + $0x268] sm:$0xff]
    %v5989 = vld [vmem:[#allocation6 + $0x270] sm:$0xff]
    %v5990 = vld [vmem:[#allocation6 + $0x278] sm:$0xff]
    %v5991 = vld [vmem:[#allocation6 + $0x280] sm:$0xff]
    %v5992 = vld [vmem:[#allocation6 + $0x288] sm:$0xff]
    %v5993 = vld [vmem:[#allocation6 + $0x290] sm:$0xff]
    %v5994 = vld [vmem:[#allocation6 + $0x298] sm:$0xff]
    %v5995 = vld [vmem:[#allocation6 + $0x2a0] sm:$0xff]
    %v5996 = vld [vmem:[#allocation6 + $0x2a8] sm:$0xff]
    %v5997 = vld [vmem:[#allocation6 + $0x2b0] sm:$0xff]
    %v5998 = vld [vmem:[#allocation6 + $0x2b8] sm:$0xff]
    %v5999 = vld [vmem:[#allocation6 + $0x2c0] sm:$0xff]
    %v6000 = vld [vmem:[#allocation6 + $0x2c8] sm:$0xff]
    %v6001 = vld [vmem:[#allocation6 + $0x2d0] sm:$0xff]
    %v6002 = vld [vmem:[#allocation6 + $0x2d8] sm:$0xff]
    %v6003 = vld [vmem:[#allocation6 + $0x2e0] sm:$0xff]
    %v6004 = vld [vmem:[#allocation6 + $0x2e8] sm:$0xff]
    %v6005 = vld [vmem:[#allocation6 + $0x2f0] sm:$0xff]
    %v6006 = vld [vmem:[#allocation6 + $0x2f8] sm:$0xff]
    %v6007 = vld [vmem:[#allocation6 + $0x300] sm:$0xff]
    %v6008 = vld [vmem:[#allocation6 + $0x308] sm:$0xff]
    %v6009 = vld [vmem:[#allocation6 + $0x310] sm:$0xff]
    %v6010 = vld [vmem:[#allocation6 + $0x318] sm:$0xff]
    %v6011 = vld [vmem:[#allocation6 + $0x320] sm:$0xff]
    %v6012 = vld [vmem:[#allocation6 + $0x328] sm:$0xff]
    %v6013 = vld [vmem:[#allocation6 + $0x330] sm:$0xff]
    %v6014 = vld [vmem:[#allocation6 + $0x338] sm:$0xff]
    %v6015 = vld [vmem:[#allocation6 + $0x340] sm:$0xff]
    %v6016 = vld [vmem:[#allocation6 + $0x348] sm:$0xff]
    %v6017 = vld [vmem:[#allocation6 + $0x350] sm:$0xff]
    %v6018 = vld [vmem:[#allocation6 + $0x358] sm:$0xff]
    %v6019 = vld [vmem:[#allocation6 + $0x360] sm:$0xff]
    %v6020 = vld [vmem:[#allocation6 + $0x368] sm:$0xff]
    %v6021 = vld [vmem:[#allocation6 + $0x370] sm:$0xff]
    %v6022 = vld [vmem:[#allocation6 + $0x378] sm:$0xff]
    %v6023 = vld [vmem:[#allocation6 + $0x380] sm:$0xff]
    %v6024 = vld [vmem:[#allocation6 + $0x388] sm:$0xff]
    %v6025 = vld [vmem:[#allocation6 + $0x390] sm:$0xff]
    %v6026 = vld [vmem:[#allocation6 + $0x398] sm:$0xff]
    %v6027 = vld [vmem:[#allocation6 + $0x3a0] sm:$0xff]
    %v6028 = vld [vmem:[#allocation6 + $0x3a8] sm:$0xff]
    %v6029 = vld [vmem:[#allocation6 + $0x3b0] sm:$0xff]
    %v6030 = vld [vmem:[#allocation6 + $0x3b8] sm:$0xff]
    %v6031 = vld [vmem:[#allocation6 + $0x3c0] sm:$0xff]
    %v6032 = vld [vmem:[#allocation6 + $0x3c8] sm:$0xff]
    %v6033 = vld [vmem:[#allocation6 + $0x3d0] sm:$0xff]
    %v6034 = vld [vmem:[#allocation6 + $0x3d8] sm:$0xff]
    %v6035 = vld [vmem:[#allocation6 + $0x3e0] sm:$0xff]
    %v6036 = vld [vmem:[#allocation6 + $0x3e8] sm:$0xff]
    %v6037 = vld [vmem:[#allocation6 + $0x3f0] sm:$0xff]
    %v6038 = vld [vmem:[#allocation6 + $0x3f8] sm:$0xff]
    %v6039 = vld [vmem:[#allocation7] sm:$0xf]
    %v6041 = vlaneseq
    %v6042 = vshrl.u32 %v6041, 7
    %v6043 = vsub.s32 0, %v6042
    %v6044 = vrot.slane %v6039, %v6043
    %v6045 = vlaneseq
    %v6046 = vshrl.u32 %v6045, 7
    %v6047 = vsub.s32 1, %v6046
    %v6048 = vrot.slane %v6039, %v6047
    %v6049 = vlaneseq
    %v6050 = vshrl.u32 %v6049, 7
    %v6051 = vsub.s32 2, %v6050
    %v6052 = vrot.slane %v6039, %v6051
    %v6053 = vlaneseq
    %v6054 = vshrl.u32 %v6053, 7
    %v6055 = vsub.s32 3, %v6054
    %v6056 = vrot.slane %v6039, %v6055
    %v6189 = vunpack.c.l.b16 %v5911
    %v6190 = vunpack.c.h.b16 %v5911
    %v6191 = vunpack.c.l.b16 %v5912
    %v6192 = vunpack.c.h.b16 %v5912
    %v6193 = vunpack.c.l.b16 %v5913
    %v6194 = vunpack.c.h.b16 %v5913
    %v6195 = vunpack.c.l.b16 %v5914
    %v6196 = vunpack.c.h.b16 %v5914
    %v6197 = vunpack.c.l.b16 %v5915
    %v6198 = vunpack.c.h.b16 %v5915
    %v6199 = vunpack.c.l.b16 %v5916
    %v6200 = vunpack.c.h.b16 %v5916
    %v6201 = vunpack.c.l.b16 %v5917
    %v6202 = vunpack.c.h.b16 %v5917
    %v6203 = vunpack.c.l.b16 %v5918
    %v6204 = vunpack.c.h.b16 %v5918
    %v6205 = vunpack.c.l.b16 %v5919
    %v6206 = vunpack.c.h.b16 %v5919
    %v6207 = vunpack.c.l.b16 %v5920
    %v6208 = vunpack.c.h.b16 %v5920
    %v6209 = vunpack.c.l.b16 %v5921
    %v6210 = vunpack.c.h.b16 %v5921
    %v6211 = vunpack.c.l.b16 %v5922
    %v6212 = vunpack.c.h.b16 %v5922
    %v6213 = vunpack.c.l.b16 %v5923
    %v6214 = vunpack.c.h.b16 %v5923
    %v6215 = vunpack.c.l.b16 %v5924
    %v6216 = vunpack.c.h.b16 %v5924
    %v6217 = vunpack.c.l.b16 %v5925
    %v6218 = vunpack.c.h.b16 %v5925
    %v6219 = vunpack.c.l.b16 %v5926
    %v6220 = vunpack.c.h.b16 %v5926
    %v6221 = vunpack.c.l.b16 %v5927
    %v6222 = vunpack.c.h.b16 %v5927
    %v6223 = vunpack.c.l.b16 %v5928
    %v6224 = vunpack.c.h.b16 %v5928
    %v6225 = vunpack.c.l.b16 %v5929
    %v6226 = vunpack.c.h.b16 %v5929
    %v6227 = vunpack.c.l.b16 %v5930
    %v6228 = vunpack.c.h.b16 %v5930
    %v6229 = vunpack.c.l.b16 %v5931
    %v6230 = vunpack.c.h.b16 %v5931
    %v6231 = vunpack.c.l.b16 %v5932
    %v6232 = vunpack.c.h.b16 %v5932
    %v6233 = vunpack.c.l.b16 %v5933
    %v6234 = vunpack.c.h.b16 %v5933
    %v6235 = vunpack.c.l.b16 %v5934
    %v6236 = vunpack.c.h.b16 %v5934
    %v6237 = vunpack.c.l.b16 %v5935
    %v6238 = vunpack.c.h.b16 %v5935
    %v6239 = vunpack.c.l.b16 %v5936
    %v6240 = vunpack.c.h.b16 %v5936
    %v6241 = vunpack.c.l.b16 %v5937
    %v6242 = vunpack.c.h.b16 %v5937
    %v6243 = vunpack.c.l.b16 %v5938
    %v6244 = vunpack.c.h.b16 %v5938
    %v6245 = vunpack.c.l.b16 %v5939
    %v6246 = vunpack.c.h.b16 %v5939
    %v6247 = vunpack.c.l.b16 %v5940
    %v6248 = vunpack.c.h.b16 %v5940
    %v6249 = vunpack.c.l.b16 %v5941
    %v6250 = vunpack.c.h.b16 %v5941
    %v6251 = vunpack.c.l.b16 %v5942
    %v6252 = vunpack.c.h.b16 %v5942
    %v6253 = vunpack.c.l.b16 %v5943
    %v6254 = vunpack.c.h.b16 %v5943
    %v6255 = vunpack.c.l.b16 %v5944
    %v6256 = vunpack.c.h.b16 %v5944
    %v6257 = vunpack.c.l.b16 %v5945
    %v6258 = vunpack.c.h.b16 %v5945
    %v6259 = vunpack.c.l.b16 %v5946
    %v6260 = vunpack.c.h.b16 %v5946
    %v6261 = vunpack.c.l.b16 %v5947
    %v6262 = vunpack.c.h.b16 %v5947
    %v6263 = vunpack.c.l.b16 %v5948
    %v6264 = vunpack.c.h.b16 %v5948
    %v6265 = vunpack.c.l.b16 %v5949
    %v6266 = vunpack.c.h.b16 %v5949
    %v6267 = vunpack.c.l.b16 %v5950
    %v6268 = vunpack.c.h.b16 %v5950
    %v6269 = vunpack.c.l.b16 %v5951
    %v6270 = vunpack.c.h.b16 %v5951
    %v6271 = vunpack.c.l.b16 %v5952
    %v6272 = vunpack.c.h.b16 %v5952
    %v6273 = vunpack.c.l.b16 %v5953
    %v6274 = vunpack.c.h.b16 %v5953
    %v6275 = vunpack.c.l.b16 %v5954
    %v6276 = vunpack.c.h.b16 %v5954
    %v6277 = vunpack.c.l.b16 %v5955
    %v6278 = vunpack.c.h.b16 %v5955
    %v6279 = vunpack.c.l.b16 %v5956
    %v6280 = vunpack.c.h.b16 %v5956
    %v6281 = vunpack.c.l.b16 %v5957
    %v6282 = vunpack.c.h.b16 %v5957
    %v6283 = vunpack.c.l.b16 %v5958
    %v6284 = vunpack.c.h.b16 %v5958
    %v6285 = vunpack.c.l.b16 %v5959
    %v6286 = vunpack.c.h.b16 %v5959
    %v6287 = vunpack.c.l.b16 %v5960
    %v6288 = vunpack.c.h.b16 %v5960
    %v6289 = vunpack.c.l.b16 %v5961
    %v6290 = vunpack.c.h.b16 %v5961
    %v6291 = vunpack.c.l.b16 %v5962
    %v6292 = vunpack.c.h.b16 %v5962
    %v6293 = vunpack.c.l.b16 %v5963
    %v6294 = vunpack.c.h.b16 %v5963
    %v6295 = vunpack.c.l.b16 %v5964
    %v6296 = vunpack.c.h.b16 %v5964
    %v6297 = vunpack.c.l.b16 %v5965
    %v6298 = vunpack.c.h.b16 %v5965
    %v6299 = vunpack.c.l.b16 %v5966
    %v6300 = vunpack.c.h.b16 %v5966
    %v6301 = vunpack.c.l.b16 %v5967
    %v6302 = vunpack.c.h.b16 %v5967
    %v6303 = vunpack.c.l.b16 %v5968
    %v6304 = vunpack.c.h.b16 %v5968
    %v6305 = vunpack.c.l.b16 %v5969
    %v6306 = vunpack.c.h.b16 %v5969
    %v6307 = vunpack.c.l.b16 %v5970
    %v6308 = vunpack.c.h.b16 %v5970
    %v6309 = vunpack.c.l.b16 %v5971
    %v6310 = vunpack.c.h.b16 %v5971
    %v6311 = vunpack.c.l.b16 %v5972
    %v6312 = vunpack.c.h.b16 %v5972
    %v6313 = vunpack.c.l.b16 %v5973
    %v6314 = vunpack.c.h.b16 %v5973
    %v6315 = vunpack.c.l.b16 %v5974
    %v6316 = vunpack.c.h.b16 %v5974
    %v6317 = vunpack.c.l.b16 %v5975
    %v6318 = vunpack.c.h.b16 %v5975
    %v6319 = vunpack.c.l.b16 %v5976
    %v6320 = vunpack.c.h.b16 %v5976
    %v6321 = vunpack.c.l.b16 %v5977
    %v6322 = vunpack.c.h.b16 %v5977
    %v6323 = vunpack.c.l.b16 %v5978
    %v6324 = vunpack.c.h.b16 %v5978
    %v6325 = vunpack.c.l.b16 %v5979
    %v6326 = vunpack.c.h.b16 %v5979
    %v6327 = vunpack.c.l.b16 %v5980
    %v6328 = vunpack.c.h.b16 %v5980
    %v6329 = vunpack.c.l.b16 %v5981
    %v6330 = vunpack.c.h.b16 %v5981
    %v6331 = vunpack.c.l.b16 %v5982
    %v6332 = vunpack.c.h.b16 %v5982
    %v6333 = vunpack.c.l.b16 %v5983
    %v6334 = vunpack.c.h.b16 %v5983
    %v6335 = vunpack.c.l.b16 %v5984
    %v6336 = vunpack.c.h.b16 %v5984
    %v6337 = vunpack.c.l.b16 %v5985
    %v6338 = vunpack.c.h.b16 %v5985
    %v6339 = vunpack.c.l.b16 %v5986
    %v6340 = vunpack.c.h.b16 %v5986
    %v6341 = vunpack.c.l.b16 %v5987
    %v6342 = vunpack.c.h.b16 %v5987
    %v6343 = vunpack.c.l.b16 %v5988
    %v6344 = vunpack.c.h.b16 %v5988
    %v6345 = vunpack.c.l.b16 %v5989
    %v6346 = vunpack.c.h.b16 %v5989
    %v6347 = vunpack.c.l.b16 %v5990
    %v6348 = vunpack.c.h.b16 %v5990
    %v6349 = vunpack.c.l.b16 %v5991
    %v6350 = vunpack.c.h.b16 %v5991
    %v6351 = vunpack.c.l.b16 %v5992
    %v6352 = vunpack.c.h.b16 %v5992
    %v6353 = vunpack.c.l.b16 %v5993
    %v6354 = vunpack.c.h.b16 %v5993
    %v6355 = vunpack.c.l.b16 %v5994
    %v6356 = vunpack.c.h.b16 %v5994
    %v6357 = vunpack.c.l.b16 %v5995
    %v6358 = vunpack.c.h.b16 %v5995
    %v6359 = vunpack.c.l.b16 %v5996
    %v6360 = vunpack.c.h.b16 %v5996
    %v6361 = vunpack.c.l.b16 %v5997
    %v6362 = vunpack.c.h.b16 %v5997
    %v6363 = vunpack.c.l.b16 %v5998
    %v6364 = vunpack.c.h.b16 %v5998
    %v6365 = vunpack.c.l.b16 %v5999
    %v6366 = vunpack.c.h.b16 %v5999
    %v6367 = vunpack.c.l.b16 %v6000
    %v6368 = vunpack.c.h.b16 %v6000
    %v6369 = vunpack.c.l.b16 %v6001
    %v6370 = vunpack.c.h.b16 %v6001
    %v6371 = vunpack.c.l.b16 %v6002
    %v6372 = vunpack.c.h.b16 %v6002
    %v6373 = vunpack.c.l.b16 %v6003
    %v6374 = vunpack.c.h.b16 %v6003
    %v6375 = vunpack.c.l.b16 %v6004
    %v6376 = vunpack.c.h.b16 %v6004
    %v6377 = vunpack.c.l.b16 %v6005
    %v6378 = vunpack.c.h.b16 %v6005
    %v6379 = vunpack.c.l.b16 %v6006
    %v6380 = vunpack.c.h.b16 %v6006
    %v6381 = vunpack.c.l.b16 %v6007
    %v6382 = vunpack.c.h.b16 %v6007
    %v6383 = vunpack.c.l.b16 %v6008
    %v6384 = vunpack.c.h.b16 %v6008
    %v6385 = vunpack.c.l.b16 %v6009
    %v6386 = vunpack.c.h.b16 %v6009
    %v6387 = vunpack.c.l.b16 %v6010
    %v6388 = vunpack.c.h.b16 %v6010
    %v6389 = vunpack.c.l.b16 %v6011
    %v6390 = vunpack.c.h.b16 %v6011
    %v6391 = vunpack.c.l.b16 %v6012
    %v6392 = vunpack.c.h.b16 %v6012
    %v6393 = vunpack.c.l.b16 %v6013
    %v6394 = vunpack.c.h.b16 %v6013
    %v6395 = vunpack.c.l.b16 %v6014
    %v6396 = vunpack.c.h.b16 %v6014
    %v6397 = vunpack.c.l.b16 %v6015
    %v6398 = vunpack.c.h.b16 %v6015
    %v6399 = vunpack.c.l.b16 %v6016
    %v6400 = vunpack.c.h.b16 %v6016
    %v6401 = vunpack.c.l.b16 %v6017
    %v6402 = vunpack.c.h.b16 %v6017
    %v6403 = vunpack.c.l.b16 %v6018
    %v6404 = vunpack.c.h.b16 %v6018
    %v6405 = vunpack.c.l.b16 %v6019
    %v6406 = vunpack.c.h.b16 %v6019
    %v6407 = vunpack.c.l.b16 %v6020
    %v6408 = vunpack.c.h.b16 %v6020
    %v6409 = vunpack.c.l.b16 %v6021
    %v6410 = vunpack.c.h.b16 %v6021
    %v6411 = vunpack.c.l.b16 %v6022
    %v6412 = vunpack.c.h.b16 %v6022
    %v6413 = vunpack.c.l.b16 %v6023
    %v6414 = vunpack.c.h.b16 %v6023
    %v6415 = vunpack.c.l.b16 %v6024
    %v6416 = vunpack.c.h.b16 %v6024
    %v6417 = vunpack.c.l.b16 %v6025
    %v6418 = vunpack.c.h.b16 %v6025
    %v6419 = vunpack.c.l.b16 %v6026
    %v6420 = vunpack.c.h.b16 %v6026
    %v6421 = vunpack.c.l.b16 %v6027
    %v6422 = vunpack.c.h.b16 %v6027
    %v6423 = vunpack.c.l.b16 %v6028
    %v6424 = vunpack.c.h.b16 %v6028
    %v6425 = vunpack.c.l.b16 %v6029
    %v6426 = vunpack.c.h.b16 %v6029
    %v6427 = vunpack.c.l.b16 %v6030
    %v6428 = vunpack.c.h.b16 %v6030
    %v6429 = vunpack.c.l.b16 %v6031
    %v6430 = vunpack.c.h.b16 %v6031
    %v6431 = vunpack.c.l.b16 %v6032
    %v6432 = vunpack.c.h.b16 %v6032
    %v6433 = vunpack.c.l.b16 %v6033
    %v6434 = vunpack.c.h.b16 %v6033
    %v6435 = vunpack.c.l.b16 %v6034
    %v6436 = vunpack.c.h.b16 %v6034
    %v6437 = vunpack.c.l.b16 %v6035
    %v6438 = vunpack.c.h.b16 %v6035
    %v6439 = vunpack.c.l.b16 %v6036
    %v6440 = vunpack.c.h.b16 %v6036
    %v6441 = vunpack.c.l.b16 %v6037
    %v6442 = vunpack.c.h.b16 %v6037
    %v6443 = vunpack.c.l.b16 %v6038
    %v6444 = vunpack.c.h.b16 %v6038
    %v6445 = vpack.c.b16 %v6193, %v6189
    %v6446 = vpack.c.b16 %v6194, %v6190
    %v6447 = vpack.c.b16 %v6195, %v6191
    %v6448 = vpack.c.b16 %v6196, %v6192
    %v6449 = vpack.c.b16 %v6201, %v6197
    %v6450 = vpack.c.b16 %v6202, %v6198
    %v6451 = vpack.c.b16 %v6203, %v6199
    %v6452 = vpack.c.b16 %v6204, %v6200
    %v6453 = vpack.c.b16 %v6209, %v6205
    %v6454 = vpack.c.b16 %v6210, %v6206
    %v6455 = vpack.c.b16 %v6211, %v6207
    %v6456 = vpack.c.b16 %v6212, %v6208
    %v6457 = vpack.c.b16 %v6217, %v6213
    %v6458 = vpack.c.b16 %v6218, %v6214
    %v6459 = vpack.c.b16 %v6219, %v6215
    %v6460 = vpack.c.b16 %v6220, %v6216
    %v6461 = vpack.c.b16 %v6225, %v6221
    %v6462 = vpack.c.b16 %v6226, %v6222
    %v6463 = vpack.c.b16 %v6227, %v6223
    %v6464 = vpack.c.b16 %v6228, %v6224
    %v6465 = vpack.c.b16 %v6233, %v6229
    %v6466 = vpack.c.b16 %v6234, %v6230
    %v6467 = vpack.c.b16 %v6235, %v6231
    %v6468 = vpack.c.b16 %v6236, %v6232
    %v6469 = vpack.c.b16 %v6241, %v6237
    %v6470 = vpack.c.b16 %v6242, %v6238
    %v6471 = vpack.c.b16 %v6243, %v6239
    %v6472 = vpack.c.b16 %v6244, %v6240
    %v6473 = vpack.c.b16 %v6249, %v6245
    %v6474 = vpack.c.b16 %v6250, %v6246
    %v6475 = vpack.c.b16 %v6251, %v6247
    %v6476 = vpack.c.b16 %v6252, %v6248
    %v6477 = vpack.c.b16 %v6257, %v6253
    %v6478 = vpack.c.b16 %v6258, %v6254
    %v6479 = vpack.c.b16 %v6259, %v6255
    %v6480 = vpack.c.b16 %v6260, %v6256
    %v6481 = vpack.c.b16 %v6265, %v6261
    %v6482 = vpack.c.b16 %v6266, %v6262
    %v6483 = vpack.c.b16 %v6267, %v6263
    %v6484 = vpack.c.b16 %v6268, %v6264
    %v6485 = vpack.c.b16 %v6273, %v6269
    %v6486 = vpack.c.b16 %v6274, %v6270
    %v6487 = vpack.c.b16 %v6275, %v6271
    %v6488 = vpack.c.b16 %v6276, %v6272
    %v6489 = vpack.c.b16 %v6281, %v6277
    %v6490 = vpack.c.b16 %v6282, %v6278
    %v6491 = vpack.c.b16 %v6283, %v6279
    %v6492 = vpack.c.b16 %v6284, %v6280
    %v6493 = vpack.c.b16 %v6289, %v6285
    %v6494 = vpack.c.b16 %v6290, %v6286
    %v6495 = vpack.c.b16 %v6291, %v6287
    %v6496 = vpack.c.b16 %v6292, %v6288
    %v6497 = vpack.c.b16 %v6297, %v6293
    %v6498 = vpack.c.b16 %v6298, %v6294
    %v6499 = vpack.c.b16 %v6299, %v6295
    %v6500 = vpack.c.b16 %v6300, %v6296
    %v6501 = vpack.c.b16 %v6305, %v6301
    %v6502 = vpack.c.b16 %v6306, %v6302
    %v6503 = vpack.c.b16 %v6307, %v6303
    %v6504 = vpack.c.b16 %v6308, %v6304
    %v6505 = vpack.c.b16 %v6313, %v6309
    %v6506 = vpack.c.b16 %v6314, %v6310
    %v6507 = vpack.c.b16 %v6315, %v6311
    %v6508 = vpack.c.b16 %v6316, %v6312
    %v6509 = vpack.c.b16 %v6321, %v6317
    %v6510 = vpack.c.b16 %v6322, %v6318
    %v6511 = vpack.c.b16 %v6323, %v6319
    %v6512 = vpack.c.b16 %v6324, %v6320
    %v6513 = vpack.c.b16 %v6329, %v6325
    %v6514 = vpack.c.b16 %v6330, %v6326
    %v6515 = vpack.c.b16 %v6331, %v6327
    %v6516 = vpack.c.b16 %v6332, %v6328
    %v6517 = vpack.c.b16 %v6337, %v6333
    %v6518 = vpack.c.b16 %v6338, %v6334
    %v6519 = vpack.c.b16 %v6339, %v6335
    %v6520 = vpack.c.b16 %v6340, %v6336
    %v6521 = vpack.c.b16 %v6345, %v6341
    %v6522 = vpack.c.b16 %v6346, %v6342
    %v6523 = vpack.c.b16 %v6347, %v6343
    %v6524 = vpack.c.b16 %v6348, %v6344
    %v6525 = vpack.c.b16 %v6353, %v6349
    %v6526 = vpack.c.b16 %v6354, %v6350
    %v6527 = vpack.c.b16 %v6355, %v6351
    %v6528 = vpack.c.b16 %v6356, %v6352
    %v6529 = vpack.c.b16 %v6361, %v6357
    %v6530 = vpack.c.b16 %v6362, %v6358
    %v6531 = vpack.c.b16 %v6363, %v6359
    %v6532 = vpack.c.b16 %v6364, %v6360
    %v6533 = vpack.c.b16 %v6369, %v6365
    %v6534 = vpack.c.b16 %v6370, %v6366
    %v6535 = vpack.c.b16 %v6371, %v6367
    %v6536 = vpack.c.b16 %v6372, %v6368
    %v6537 = vpack.c.b16 %v6377, %v6373
    %v6538 = vpack.c.b16 %v6378, %v6374
    %v6539 = vpack.c.b16 %v6379, %v6375
    %v6540 = vpack.c.b16 %v6380, %v6376
    %v6541 = vpack.c.b16 %v6385, %v6381
    %v6542 = vpack.c.b16 %v6386, %v6382
    %v6543 = vpack.c.b16 %v6387, %v6383
    %v6544 = vpack.c.b16 %v6388, %v6384
    %v6545 = vpack.c.b16 %v6393, %v6389
    %v6546 = vpack.c.b16 %v6394, %v6390
    %v6547 = vpack.c.b16 %v6395, %v6391
    %v6548 = vpack.c.b16 %v6396, %v6392
    %v6549 = vpack.c.b16 %v6401, %v6397
    %v6550 = vpack.c.b16 %v6402, %v6398
    %v6551 = vpack.c.b16 %v6403, %v6399
    %v6552 = vpack.c.b16 %v6404, %v6400
    %v6553 = vpack.c.b16 %v6409, %v6405
    %v6554 = vpack.c.b16 %v6410, %v6406
    %v6555 = vpack.c.b16 %v6411, %v6407
    %v6556 = vpack.c.b16 %v6412, %v6408
    %v6557 = vpack.c.b16 %v6417, %v6413
    %v6558 = vpack.c.b16 %v6418, %v6414
    %v6559 = vpack.c.b16 %v6419, %v6415
    %v6560 = vpack.c.b16 %v6420, %v6416
    %v6561 = vpack.c.b16 %v6425, %v6421
    %v6562 = vpack.c.b16 %v6426, %v6422
    %v6563 = vpack.c.b16 %v6427, %v6423
    %v6564 = vpack.c.b16 %v6428, %v6424
    %v6565 = vpack.c.b16 %v6433, %v6429
    %v6566 = vpack.c.b16 %v6434, %v6430
    %v6567 = vpack.c.b16 %v6435, %v6431
    %v6568 = vpack.c.b16 %v6436, %v6432
    %v6569 = vpack.c.b16 %v6441, %v6437
    %v6570 = vpack.c.b16 %v6442, %v6438
    %v6571 = vpack.c.b16 %v6443, %v6439
    %v6572 = vpack.c.b16 %v6444, %v6440
    %6701 = vmatprep.subr.bf16.mxu0 %v6474
    %6702 = vmatpush1.bf16.msra.mxu0 %v6473
    %6703 = vmatprep.subr.bf16.mxu0 %v6470
    %6704 = vmatpush1.bf16.msra.mxu0 %v6469
    %6705 = vmatprep.subr.bf16.mxu0 %v6466
    %6706 = vmatpush1.bf16.msra.mxu0 %v6465
    %6707 = vmatprep.subr.bf16.mxu0 %v6462
    %6708 = vmatpush1.bf16.msra.mxu0 %v6461
    %6709 = vmatprep.subr.bf16.mxu0 %v6458
    %6710 = vmatpush1.bf16.msra.mxu0 %v6457
    %6711 = vmatprep.subr.bf16.mxu0 %v6454
    %6712 = vmatpush1.bf16.msra.mxu0 %v6453
    %6713 = vmatprep.subr.bf16.mxu0 %v6450
    %6714 = vmatpush1.bf16.msra.mxu0 %v6449
    %6715 = vmatprep.subr.bf16.mxu0 %v6446
    %6716 = vmatpush1.bf16.msra.mxu0 %v6445
    %6717 = vmatprep.subr.bf16.mxu0 %v6506
    %6718 = vmatpush2.bf16.msra.mxu0 %v6505
    %6719 = vmatprep.subr.bf16.mxu0 %v6502
    %6720 = vmatpush2.bf16.msra.mxu0 %v6501
    %6721 = vmatprep.subr.bf16.mxu0 %v6498
    %6722 = vmatpush2.bf16.msra.mxu0 %v6497
    %6723 = vmatprep.subr.bf16.mxu0 %v6494
    %6724 = vmatpush2.bf16.msra.mxu0 %v6493
    %6725 = vmatprep.subr.bf16.mxu0 %v6490
    %6726 = vmatpush2.bf16.msra.mxu0 %v6489
    %6727 = vmatprep.subr.bf16.mxu0 %v6486
    %6728 = vmatpush2.bf16.msra.mxu0 %v6485
    %6729 = vmatprep.subr.bf16.mxu0 %v6482
    %6730 = vmatpush2.bf16.msra.mxu0 %v6481
    %6731 = vmatprep.subr.bf16.mxu0 %v6478
    %6732 = vmatpush2.bf16.msra.mxu0 %v6477
    %6733 = vmatprep.mubr.bf16.mxu0 %v5908
    %6734 = vmatmul.mubr.bf16.gmra.mxu0 %v5907
    %v6735 = vpop.f32.mrf.mxu0
    %v6736 = vadd.f32 %v6044, %v6735
    %v6737 = vpop.f32.mrf.mxu0
    %v6738 = vadd.f32 %v6048, %v6737
    %v6739 = vpop.f32.mrf.mxu0
    %v6740 = vadd.f32 %v6044, %v6739
    %v6741 = vpop.f32.mrf.mxu0
    %v6742 = vadd.f32 %v6048, %v6741
    %6743 = vdwg.mxu0
    %6744 = vmatprep.subr.bf16.mxu0 %v6538
    %6745 = vmatpush1.bf16.msra.mxu0 %v6537
    %6746 = vmatprep.subr.bf16.mxu0 %v6534
    %6747 = vmatpush1.bf16.msra.mxu0 %v6533
    %6748 = vmatprep.subr.bf16.mxu0 %v6530
    %6749 = vmatpush1.bf16.msra.mxu0 %v6529
    %6750 = vmatprep.subr.bf16.mxu0 %v6526
    %6751 = vmatpush1.bf16.msra.mxu0 %v6525
    %6752 = vmatprep.subr.bf16.mxu0 %v6522
    %6753 = vmatpush1.bf16.msra.mxu0 %v6521
    %6754 = vmatprep.subr.bf16.mxu0 %v6518
    %6755 = vmatpush1.bf16.msra.mxu0 %v6517
    %6756 = vmatprep.subr.bf16.mxu0 %v6514
    %6757 = vmatpush1.bf16.msra.mxu0 %v6513
    %6758 = vmatprep.subr.bf16.mxu0 %v6510
    %6759 = vmatpush1.bf16.msra.mxu0 %v6509
    %6760 = vmatprep.subr.bf16.mxu0 %v6570
    %6761 = vmatpush2.bf16.msra.mxu0 %v6569
    %6762 = vmatprep.subr.bf16.mxu0 %v6566
    %6763 = vmatpush2.bf16.msra.mxu0 %v6565
    %6764 = vmatprep.subr.bf16.mxu0 %v6562
    %6765 = vmatpush2.bf16.msra.mxu0 %v6561
    %6766 = vmatprep.subr.bf16.mxu0 %v6558
    %6767 = vmatpush2.bf16.msra.mxu0 %v6557
    %6768 = vmatprep.subr.bf16.mxu0 %v6554
    %6769 = vmatpush2.bf16.msra.mxu0 %v6553
    %6770 = vmatprep.subr.bf16.mxu0 %v6550
    %6771 = vmatpush2.bf16.msra.mxu0 %v6549
    %6772 = vmatprep.subr.bf16.mxu0 %v6546
    %6773 = vmatpush2.bf16.msra.mxu0 %v6545
    %6774 = vmatprep.subr.bf16.mxu0 %v6542
    %6775 = vmatpush2.bf16.msra.mxu0 %v6541
    %6776 = vmatprep.mubr.bf16.mxu0 %v5910
    %6777 = vmatmul.mubr.bf16.gmra.mxu0 %v5909
    %v6778 = vpop.f32.mrf.mxu0
    %v6779 = vadd.f32 %v6736, %v6778
    %v6780 = vpop.f32.mrf.mxu0
    %v6781 = vadd.f32 %v6738, %v6780
    %v6782 = vpop.f32.mrf.mxu0
    %v6783 = vadd.f32 %v6740, %v6782
    %v6784 = vpop.f32.mrf.mxu0
    %v6785 = vadd.f32 %v6742, %v6784
    %6786 = vdwg.mxu0
    %6787 = vmatprep.subr.bf16.mxu0 %v6476
    %6788 = vmatpush1.bf16.msra.mxu0 %v6475
    %6789 = vmatprep.subr.bf16.mxu0 %v6472
    %6790 = vmatpush1.bf16.msra.mxu0 %v6471
    %6791 = vmatprep.subr.bf16.mxu0 %v6468
    %6792 = vmatpush1.bf16.msra.mxu0 %v6467
    %6793 = vmatprep.subr.bf16.mxu0 %v6464
    %6794 = vmatpush1.bf16.msra.mxu0 %v6463
    %6795 = vmatprep.subr.bf16.mxu0 %v6460
    %6796 = vmatpush1.bf16.msra.mxu0 %v6459
    %6797 = vmatprep.subr.bf16.mxu0 %v6456
    %6798 = vmatpush1.bf16.msra.mxu0 %v6455
    %6799 = vmatprep.subr.bf16.mxu0 %v6452
    %6800 = vmatpush1.bf16.msra.mxu0 %v6451
    %6801 = vmatprep.subr.bf16.mxu0 %v6448
    %6802 = vmatpush1.bf16.msra.mxu0 %v6447
    %6803 = vmatprep.subr.bf16.mxu0 %v6508
    %6804 = vmatpush2.bf16.msra.mxu0 %v6507
    %6805 = vmatprep.subr.bf16.mxu0 %v6504
    %6806 = vmatpush2.bf16.msra.mxu0 %v6503
    %6807 = vmatprep.subr.bf16.mxu0 %v6500
    %6808 = vmatpush2.bf16.msra.mxu0 %v6499
    %6809 = vmatprep.subr.bf16.mxu0 %v6496
    %6810 = vmatpush2.bf16.msra.mxu0 %v6495
    %6811 = vmatprep.subr.bf16.mxu0 %v6492
    %6812 = vmatpush2.bf16.msra.mxu0 %v6491
    %6813 = vmatprep.subr.bf16.mxu0 %v6488
    %6814 = vmatpush2.bf16.msra.mxu0 %v6487
    %6815 = vmatprep.subr.bf16.mxu0 %v6484
    %6816 = vmatpush2.bf16.msra.mxu0 %v6483
    %6817 = vmatprep.subr.bf16.mxu0 %v6480
    %6818 = vmatpush2.bf16.msra.mxu0 %v6479
    %6819 = vmatprep.mubr.bf16.mxu0 %v5908
    %6820 = vmatmul.mubr.bf16.gmra.mxu0 %v5907
    %v6821 = vpop.f32.mrf.mxu0
    %v6822 = vadd.f32 %v6052, %v6821
    %v6823 = vpop.f32.mrf.mxu0
    %v6824 = vadd.f32 %v6056, %v6823
    %v6825 = vpop.f32.mrf.mxu0
    %v6826 = vadd.f32 %v6052, %v6825
    %v6827 = vpop.f32.mrf.mxu0
    %v6828 = vadd.f32 %v6056, %v6827
    %6829 = vdwg.mxu0
    %6830 = vmatprep.subr.bf16.mxu0 %v6540
    %6831 = vmatpush1.bf16.msra.mxu0 %v6539
    %6832 = vmatprep.subr.bf16.mxu0 %v6536
    %6833 = vmatpush1.bf16.msra.mxu0 %v6535
    %6834 = vmatprep.subr.bf16.mxu0 %v6532
    %6835 = vmatpush1.bf16.msra.mxu0 %v6531
    %6836 = vmatprep.subr.bf16.mxu0 %v6528
    %6837 = vmatpush1.bf16.msra.mxu0 %v6527
    %6838 = vmatprep.subr.bf16.mxu0 %v6524
    %6839 = vmatpush1.bf16.msra.mxu0 %v6523
    %6840 = vmatprep.subr.bf16.mxu0 %v6520
    %6841 = vmatpush1.bf16.msra.mxu0 %v6519
    %6842 = vmatprep.subr.bf16.mxu0 %v6516
    %6843 = vmatpush1.bf16.msra.mxu0 %v6515
    %6844 = vmatprep.subr.bf16.mxu0 %v6512
    %6845 = vmatpush1.bf16.msra.mxu0 %v6511
    %6846 = vmatprep.subr.bf16.mxu0 %v6572
    %6847 = vmatpush2.bf16.msra.mxu0 %v6571
    %6848 = vmatprep.subr.bf16.mxu0 %v6568
    %6849 = vmatpush2.bf16.msra.mxu0 %v6567
    %6850 = vmatprep.subr.bf16.mxu0 %v6564
    %6851 = vmatpush2.bf16.msra.mxu0 %v6563
    %6852 = vmatprep.subr.bf16.mxu0 %v6560
    %6853 = vmatpush2.bf16.msra.mxu0 %v6559
    %6854 = vmatprep.subr.bf16.mxu0 %v6556
    %6855 = vmatpush2.bf16.msra.mxu0 %v6555
    %6856 = vmatprep.subr.bf16.mxu0 %v6552
    %6857 = vmatpush2.bf16.msra.mxu0 %v6551
    %6858 = vmatprep.subr.bf16.mxu0 %v6548
    %6859 = vmatpush2.bf16.msra.mxu0 %v6547
    %6860 = vmatprep.subr.bf16.mxu0 %v6544
    %6861 = vmatpush2.bf16.msra.mxu0 %v6543
    %6862 = vmatprep.mubr.bf16.mxu0 %v5910
    %6863 = vmatmul.mubr.bf16.gmra.mxu0 %v5909
    %v6864 = vpop.f32.mrf.mxu0
    %v6865 = vadd.f32 %v6822, %v6864
    %v6866 = vpop.f32.mrf.mxu0
    %v6867 = vadd.f32 %v6824, %v6866
    %v6868 = vpop.f32.mrf.mxu0
    %v6869 = vadd.f32 %v6826, %v6868
    %v6870 = vpop.f32.mrf.mxu0
    %v6871 = vadd.f32 %v6828, %v6870
    %6872 = vdwg.mxu0
    %v6873 = vmax.f32 %v6779, 0.0
    %v6874 = vmax.f32 %v6781, 0.0
    %v6875 = vmax.f32 %v6865, 0.0
    %v6876 = vmax.f32 %v6867, 0.0
    %v6877 = vmax.f32 %v6783, 0.0
    %v6878 = vmax.f32 %v6785, 0.0
    %v6879 = vmax.f32 %v6869, 0.0
    %v6880 = vmax.f32 %v6871, 0.0
    %v6881 = vpack.c.bf16 %v6877, %v6873
    %v6882 = vpack.c.bf16 %v6878, %v6874
    %v6883 = vpack.c.bf16 %v6879, %v6875
    %v6884 = vpack.c.bf16 %v6880, %v6876
    %v6885 = vld [vmem:[#allocation9] sm:$0xff]
    %v6886 = vld [vmem:[#allocation9 + $0x8] sm:$0xff]
    %v6887 = vld [vmem:[#allocation9 + $0x10] sm:$0xff]
    %v6888 = vld [vmem:[#allocation9 + $0x18] sm:$0xff]
    %v6889 = vld [vmem:[#allocation9 + $0x20] sm:$0xff]
    %v6890 = vld [vmem:[#allocation9 + $0x28] sm:$0xff]
    %v6891 = vld [vmem:[#allocation9 + $0x30] sm:$0xff]
    %v6892 = vld [vmem:[#allocation9 + $0x38] sm:$0xff]
    %v6893 = vld [vmem:[#allocation9 + $0x40] sm:$0xff]
    %v6894 = vld [vmem:[#allocation9 + $0x48] sm:$0xff]
    %v6895 = vld [vmem:[#allocation9 + $0x50] sm:$0xff]
    %v6896 = vld [vmem:[#allocation9 + $0x58] sm:$0xff]
    %v6897 = vld [vmem:[#allocation9 + $0x60] sm:$0xff]
    %v6898 = vld [vmem:[#allocation9 + $0x68] sm:$0xff]
    %v6899 = vld [vmem:[#allocation9 + $0x70] sm:$0xff]
    %v6900 = vld [vmem:[#allocation9 + $0x78] sm:$0xff]
    %v6901 = vld [vmem:[#allocation9 + $0x80] sm:$0xff]
    %v6902 = vld [vmem:[#allocation9 + $0x88] sm:$0xff]
    %v6903 = vld [vmem:[#allocation9 + $0x90] sm:$0xff]
    %v6904 = vld [vmem:[#allocation9 + $0x98] sm:$0xff]
    %v6905 = vld [vmem:[#allocation9 + $0xa0] sm:$0xff]
    %v6906 = vld [vmem:[#allocation9 + $0xa8] sm:$0xff]
    %v6907 = vld [vmem:[#allocation9 + $0xb0] sm:$0xff]
    %v6908 = vld [vmem:[#allocation9 + $0xb8] sm:$0xff]
    %v6909 = vld [vmem:[#allocation9 + $0xc0] sm:$0xff]
    %v6910 = vld [vmem:[#allocation9 + $0xc8] sm:$0xff]
    %v6911 = vld [vmem:[#allocation9 + $0xd0] sm:$0xff]
    %v6912 = vld [vmem:[#allocation9 + $0xd8] sm:$0xff]
    %v6913 = vld [vmem:[#allocation9 + $0xe0] sm:$0xff]
    %v6914 = vld [vmem:[#allocation9 + $0xe8] sm:$0xff]
    %v6915 = vld [vmem:[#allocation9 + $0xf0] sm:$0xff]
    %v6916 = vld [vmem:[#allocation9 + $0xf8] sm:$0xff]
    %v6917 = vld [vmem:[#allocation9 + $0x100] sm:$0xff]
    %v6918 = vld [vmem:[#allocation9 + $0x108] sm:$0xff]
    %v6919 = vld [vmem:[#allocation9 + $0x110] sm:$0xff]
    %v6920 = vld [vmem:[#allocation9 + $0x118] sm:$0xff]
    %v6921 = vld [vmem:[#allocation9 + $0x120] sm:$0xff]
    %v6922 = vld [vmem:[#allocation9 + $0x128] sm:$0xff]
    %v6923 = vld [vmem:[#allocation9 + $0x130] sm:$0xff]
    %v6924 = vld [vmem:[#allocation9 + $0x138] sm:$0xff]
    %v6925 = vld [vmem:[#allocation9 + $0x140] sm:$0xff]
    %v6926 = vld [vmem:[#allocation9 + $0x148] sm:$0xff]
    %v6927 = vld [vmem:[#allocation9 + $0x150] sm:$0xff]
    %v6928 = vld [vmem:[#allocation9 + $0x158] sm:$0xff]
    %v6929 = vld [vmem:[#allocation9 + $0x160] sm:$0xff]
    %v6930 = vld [vmem:[#allocation9 + $0x168] sm:$0xff]
    %v6931 = vld [vmem:[#allocation9 + $0x170] sm:$0xff]
    %v6932 = vld [vmem:[#allocation9 + $0x178] sm:$0xff]
    %v6933 = vld [vmem:[#allocation9 + $0x180] sm:$0xff]
    %v6934 = vld [vmem:[#allocation9 + $0x188] sm:$0xff]
    %v6935 = vld [vmem:[#allocation9 + $0x190] sm:$0xff]
    %v6936 = vld [vmem:[#allocation9 + $0x198] sm:$0xff]
    %v6937 = vld [vmem:[#allocation9 + $0x1a0] sm:$0xff]
    %v6938 = vld [vmem:[#allocation9 + $0x1a8] sm:$0xff]
    %v6939 = vld [vmem:[#allocation9 + $0x1b0] sm:$0xff]
    %v6940 = vld [vmem:[#allocation9 + $0x1b8] sm:$0xff]
    %v6941 = vld [vmem:[#allocation9 + $0x1c0] sm:$0xff]
    %v6942 = vld [vmem:[#allocation9 + $0x1c8] sm:$0xff]
    %v6943 = vld [vmem:[#allocation9 + $0x1d0] sm:$0xff]
    %v6944 = vld [vmem:[#allocation9 + $0x1d8] sm:$0xff]
    %v6945 = vld [vmem:[#allocation9 + $0x1e0] sm:$0xff]
    %v6946 = vld [vmem:[#allocation9 + $0x1e8] sm:$0xff]
    %v6947 = vld [vmem:[#allocation9 + $0x1f0] sm:$0xff]
    %v6948 = vld [vmem:[#allocation9 + $0x1f8] sm:$0xff]
    %v6949 = vld [vmem:[#allocation9 + $0x200] sm:$0xff]
    %v6950 = vld [vmem:[#allocation9 + $0x208] sm:$0xff]
    %v6951 = vld [vmem:[#allocation9 + $0x210] sm:$0xff]
    %v6952 = vld [vmem:[#allocation9 + $0x218] sm:$0xff]
    %v6953 = vld [vmem:[#allocation9 + $0x220] sm:$0xff]
    %v6954 = vld [vmem:[#allocation9 + $0x228] sm:$0xff]
    %v6955 = vld [vmem:[#allocation9 + $0x230] sm:$0xff]
    %v6956 = vld [vmem:[#allocation9 + $0x238] sm:$0xff]
    %v6957 = vld [vmem:[#allocation9 + $0x240] sm:$0xff]
    %v6958 = vld [vmem:[#allocation9 + $0x248] sm:$0xff]
    %v6959 = vld [vmem:[#allocation9 + $0x250] sm:$0xff]
    %v6960 = vld [vmem:[#allocation9 + $0x258] sm:$0xff]
    %v6961 = vld [vmem:[#allocation9 + $0x260] sm:$0xff]
    %v6962 = vld [vmem:[#allocation9 + $0x268] sm:$0xff]
    %v6963 = vld [vmem:[#allocation9 + $0x270] sm:$0xff]
    %v6964 = vld [vmem:[#allocation9 + $0x278] sm:$0xff]
    %v6965 = vld [vmem:[#allocation9 + $0x280] sm:$0xff]
    %v6966 = vld [vmem:[#allocation9 + $0x288] sm:$0xff]
    %v6967 = vld [vmem:[#allocation9 + $0x290] sm:$0xff]
    %v6968 = vld [vmem:[#allocation9 + $0x298] sm:$0xff]
    %v6969 = vld [vmem:[#allocation9 + $0x2a0] sm:$0xff]
    %v6970 = vld [vmem:[#allocation9 + $0x2a8] sm:$0xff]
    %v6971 = vld [vmem:[#allocation9 + $0x2b0] sm:$0xff]
    %v6972 = vld [vmem:[#allocation9 + $0x2b8] sm:$0xff]
    %v6973 = vld [vmem:[#allocation9 + $0x2c0] sm:$0xff]
    %v6974 = vld [vmem:[#allocation9 + $0x2c8] sm:$0xff]
    %v6975 = vld [vmem:[#allocation9 + $0x2d0] sm:$0xff]
    %v6976 = vld [vmem:[#allocation9 + $0x2d8] sm:$0xff]
    %v6977 = vld [vmem:[#allocation9 + $0x2e0] sm:$0xff]
    %v6978 = vld [vmem:[#allocation9 + $0x2e8] sm:$0xff]
    %v6979 = vld [vmem:[#allocation9 + $0x2f0] sm:$0xff]
    %v6980 = vld [vmem:[#allocation9 + $0x2f8] sm:$0xff]
    %v6981 = vld [vmem:[#allocation9 + $0x300] sm:$0xff]
    %v6982 = vld [vmem:[#allocation9 + $0x308] sm:$0xff]
    %v6983 = vld [vmem:[#allocation9 + $0x310] sm:$0xff]
    %v6984 = vld [vmem:[#allocation9 + $0x318] sm:$0xff]
    %v6985 = vld [vmem:[#allocation9 + $0x320] sm:$0xff]
    %v6986 = vld [vmem:[#allocation9 + $0x328] sm:$0xff]
    %v6987 = vld [vmem:[#allocation9 + $0x330] sm:$0xff]
    %v6988 = vld [vmem:[#allocation9 + $0x338] sm:$0xff]
    %v6989 = vld [vmem:[#allocation9 + $0x340] sm:$0xff]
    %v6990 = vld [vmem:[#allocation9 + $0x348] sm:$0xff]
    %v6991 = vld [vmem:[#allocation9 + $0x350] sm:$0xff]
    %v6992 = vld [vmem:[#allocation9 + $0x358] sm:$0xff]
    %v6993 = vld [vmem:[#allocation9 + $0x360] sm:$0xff]
    %v6994 = vld [vmem:[#allocation9 + $0x368] sm:$0xff]
    %v6995 = vld [vmem:[#allocation9 + $0x370] sm:$0xff]
    %v6996 = vld [vmem:[#allocation9 + $0x378] sm:$0xff]
    %v6997 = vld [vmem:[#allocation9 + $0x380] sm:$0xff]
    %v6998 = vld [vmem:[#allocation9 + $0x388] sm:$0xff]
    %v6999 = vld [vmem:[#allocation9 + $0x390] sm:$0xff]
    %v7000 = vld [vmem:[#allocation9 + $0x398] sm:$0xff]
    %v7001 = vld [vmem:[#allocation9 + $0x3a0] sm:$0xff]
    %v7002 = vld [vmem:[#allocation9 + $0x3a8] sm:$0xff]
    %v7003 = vld [vmem:[#allocation9 + $0x3b0] sm:$0xff]
    %v7004 = vld [vmem:[#allocation9 + $0x3b8] sm:$0xff]
    %v7005 = vld [vmem:[#allocation9 + $0x3c0] sm:$0xff]
    %v7006 = vld [vmem:[#allocation9 + $0x3c8] sm:$0xff]
    %v7007 = vld [vmem:[#allocation9 + $0x3d0] sm:$0xff]
    %v7008 = vld [vmem:[#allocation9 + $0x3d8] sm:$0xff]
    %v7009 = vld [vmem:[#allocation9 + $0x3e0] sm:$0xff]
    %v7010 = vld [vmem:[#allocation9 + $0x3e8] sm:$0xff]
    %v7011 = vld [vmem:[#allocation9 + $0x3f0] sm:$0xff]
    %v7012 = vld [vmem:[#allocation9 + $0x3f8] sm:$0xff]
    %v7013 = vld [vmem:[#allocation10] sm:$0xf]
    %v7015 = vlaneseq
    %v7016 = vshrl.u32 %v7015, 7
    %v7017 = vsub.s32 0, %v7016
    %v7018 = vrot.slane %v7013, %v7017
    %v7019 = vlaneseq
    %v7020 = vshrl.u32 %v7019, 7
    %v7021 = vsub.s32 1, %v7020
    %v7022 = vrot.slane %v7013, %v7021
    %v7023 = vlaneseq
    %v7024 = vshrl.u32 %v7023, 7
    %v7025 = vsub.s32 2, %v7024
    %v7026 = vrot.slane %v7013, %v7025
    %v7027 = vlaneseq
    %v7028 = vshrl.u32 %v7027, 7
    %v7029 = vsub.s32 3, %v7028
    %v7030 = vrot.slane %v7013, %v7029
    %v7163 = vunpack.c.l.b16 %v6885
    %v7164 = vunpack.c.h.b16 %v6885
    %v7165 = vunpack.c.l.b16 %v6886
    %v7166 = vunpack.c.h.b16 %v6886
    %v7167 = vunpack.c.l.b16 %v6887
    %v7168 = vunpack.c.h.b16 %v6887
    %v7169 = vunpack.c.l.b16 %v6888
    %v7170 = vunpack.c.h.b16 %v6888
    %v7171 = vunpack.c.l.b16 %v6889
    %v7172 = vunpack.c.h.b16 %v6889
    %v7173 = vunpack.c.l.b16 %v6890
    %v7174 = vunpack.c.h.b16 %v6890
    %v7175 = vunpack.c.l.b16 %v6891
    %v7176 = vunpack.c.h.b16 %v6891
    %v7177 = vunpack.c.l.b16 %v6892
    %v7178 = vunpack.c.h.b16 %v6892
    %v7179 = vunpack.c.l.b16 %v6893
    %v7180 = vunpack.c.h.b16 %v6893
    %v7181 = vunpack.c.l.b16 %v6894
    %v7182 = vunpack.c.h.b16 %v6894
    %v7183 = vunpack.c.l.b16 %v6895
    %v7184 = vunpack.c.h.b16 %v6895
    %v7185 = vunpack.c.l.b16 %v6896
    %v7186 = vunpack.c.h.b16 %v6896
    %v7187 = vunpack.c.l.b16 %v6897
    %v7188 = vunpack.c.h.b16 %v6897
    %v7189 = vunpack.c.l.b16 %v6898
    %v7190 = vunpack.c.h.b16 %v6898
    %v7191 = vunpack.c.l.b16 %v6899
    %v7192 = vunpack.c.h.b16 %v6899
    %v7193 = vunpack.c.l.b16 %v6900
    %v7194 = vunpack.c.h.b16 %v6900
    %v7195 = vunpack.c.l.b16 %v6901
    %v7196 = vunpack.c.h.b16 %v6901
    %v7197 = vunpack.c.l.b16 %v6902
    %v7198 = vunpack.c.h.b16 %v6902
    %v7199 = vunpack.c.l.b16 %v6903
    %v7200 = vunpack.c.h.b16 %v6903
    %v7201 = vunpack.c.l.b16 %v6904
    %v7202 = vunpack.c.h.b16 %v6904
    %v7203 = vunpack.c.l.b16 %v6905
    %v7204 = vunpack.c.h.b16 %v6905
    %v7205 = vunpack.c.l.b16 %v6906
    %v7206 = vunpack.c.h.b16 %v6906
    %v7207 = vunpack.c.l.b16 %v6907
    %v7208 = vunpack.c.h.b16 %v6907
    %v7209 = vunpack.c.l.b16 %v6908
    %v7210 = vunpack.c.h.b16 %v6908
    %v7211 = vunpack.c.l.b16 %v6909
    %v7212 = vunpack.c.h.b16 %v6909
    %v7213 = vunpack.c.l.b16 %v6910
    %v7214 = vunpack.c.h.b16 %v6910
    %v7215 = vunpack.c.l.b16 %v6911
    %v7216 = vunpack.c.h.b16 %v6911
    %v7217 = vunpack.c.l.b16 %v6912
    %v7218 = vunpack.c.h.b16 %v6912
    %v7219 = vunpack.c.l.b16 %v6913
    %v7220 = vunpack.c.h.b16 %v6913
    %v7221 = vunpack.c.l.b16 %v6914
    %v7222 = vunpack.c.h.b16 %v6914
    %v7223 = vunpack.c.l.b16 %v6915
    %v7224 = vunpack.c.h.b16 %v6915
    %v7225 = vunpack.c.l.b16 %v6916
    %v7226 = vunpack.c.h.b16 %v6916
    %v7227 = vunpack.c.l.b16 %v6917
    %v7228 = vunpack.c.h.b16 %v6917
    %v7229 = vunpack.c.l.b16 %v6918
    %v7230 = vunpack.c.h.b16 %v6918
    %v7231 = vunpack.c.l.b16 %v6919
    %v7232 = vunpack.c.h.b16 %v6919
    %v7233 = vunpack.c.l.b16 %v6920
    %v7234 = vunpack.c.h.b16 %v6920
    %v7235 = vunpack.c.l.b16 %v6921
    %v7236 = vunpack.c.h.b16 %v6921
    %v7237 = vunpack.c.l.b16 %v6922
    %v7238 = vunpack.c.h.b16 %v6922
    %v7239 = vunpack.c.l.b16 %v6923
    %v7240 = vunpack.c.h.b16 %v6923
    %v7241 = vunpack.c.l.b16 %v6924
    %v7242 = vunpack.c.h.b16 %v6924
    %v7243 = vunpack.c.l.b16 %v6925
    %v7244 = vunpack.c.h.b16 %v6925
    %v7245 = vunpack.c.l.b16 %v6926
    %v7246 = vunpack.c.h.b16 %v6926
    %v7247 = vunpack.c.l.b16 %v6927
    %v7248 = vunpack.c.h.b16 %v6927
    %v7249 = vunpack.c.l.b16 %v6928
    %v7250 = vunpack.c.h.b16 %v6928
    %v7251 = vunpack.c.l.b16 %v6929
    %v7252 = vunpack.c.h.b16 %v6929
    %v7253 = vunpack.c.l.b16 %v6930
    %v7254 = vunpack.c.h.b16 %v6930
    %v7255 = vunpack.c.l.b16 %v6931
    %v7256 = vunpack.c.h.b16 %v6931
    %v7257 = vunpack.c.l.b16 %v6932
    %v7258 = vunpack.c.h.b16 %v6932
    %v7259 = vunpack.c.l.b16 %v6933
    %v7260 = vunpack.c.h.b16 %v6933
    %v7261 = vunpack.c.l.b16 %v6934
    %v7262 = vunpack.c.h.b16 %v6934
    %v7263 = vunpack.c.l.b16 %v6935
    %v7264 = vunpack.c.h.b16 %v6935
    %v7265 = vunpack.c.l.b16 %v6936
    %v7266 = vunpack.c.h.b16 %v6936
    %v7267 = vunpack.c.l.b16 %v6937
    %v7268 = vunpack.c.h.b16 %v6937
    %v7269 = vunpack.c.l.b16 %v6938
    %v7270 = vunpack.c.h.b16 %v6938
    %v7271 = vunpack.c.l.b16 %v6939
    %v7272 = vunpack.c.h.b16 %v6939
    %v7273 = vunpack.c.l.b16 %v6940
    %v7274 = vunpack.c.h.b16 %v6940
    %v7275 = vunpack.c.l.b16 %v6941
    %v7276 = vunpack.c.h.b16 %v6941
    %v7277 = vunpack.c.l.b16 %v6942
    %v7278 = vunpack.c.h.b16 %v6942
    %v7279 = vunpack.c.l.b16 %v6943
    %v7280 = vunpack.c.h.b16 %v6943
    %v7281 = vunpack.c.l.b16 %v6944
    %v7282 = vunpack.c.h.b16 %v6944
    %v7283 = vunpack.c.l.b16 %v6945
    %v7284 = vunpack.c.h.b16 %v6945
    %v7285 = vunpack.c.l.b16 %v6946
    %v7286 = vunpack.c.h.b16 %v6946
    %v7287 = vunpack.c.l.b16 %v6947
    %v7288 = vunpack.c.h.b16 %v6947
    %v7289 = vunpack.c.l.b16 %v6948
    %v7290 = vunpack.c.h.b16 %v6948
    %v7291 = vunpack.c.l.b16 %v6949
    %v7292 = vunpack.c.h.b16 %v6949
    %v7293 = vunpack.c.l.b16 %v6950
    %v7294 = vunpack.c.h.b16 %v6950
    %v7295 = vunpack.c.l.b16 %v6951
    %v7296 = vunpack.c.h.b16 %v6951
    %v7297 = vunpack.c.l.b16 %v6952
    %v7298 = vunpack.c.h.b16 %v6952
    %v7299 = vunpack.c.l.b16 %v6953
    %v7300 = vunpack.c.h.b16 %v6953
    %v7301 = vunpack.c.l.b16 %v6954
    %v7302 = vunpack.c.h.b16 %v6954
    %v7303 = vunpack.c.l.b16 %v6955
    %v7304 = vunpack.c.h.b16 %v6955
    %v7305 = vunpack.c.l.b16 %v6956
    %v7306 = vunpack.c.h.b16 %v6956
    %v7307 = vunpack.c.l.b16 %v6957
    %v7308 = vunpack.c.h.b16 %v6957
    %v7309 = vunpack.c.l.b16 %v6958
    %v7310 = vunpack.c.h.b16 %v6958
    %v7311 = vunpack.c.l.b16 %v6959
    %v7312 = vunpack.c.h.b16 %v6959
    %v7313 = vunpack.c.l.b16 %v6960
    %v7314 = vunpack.c.h.b16 %v6960
    %v7315 = vunpack.c.l.b16 %v6961
    %v7316 = vunpack.c.h.b16 %v6961
    %v7317 = vunpack.c.l.b16 %v6962
    %v7318 = vunpack.c.h.b16 %v6962
    %v7319 = vunpack.c.l.b16 %v6963
    %v7320 = vunpack.c.h.b16 %v6963
    %v7321 = vunpack.c.l.b16 %v6964
    %v7322 = vunpack.c.h.b16 %v6964
    %v7323 = vunpack.c.l.b16 %v6965
    %v7324 = vunpack.c.h.b16 %v6965
    %v7325 = vunpack.c.l.b16 %v6966
    %v7326 = vunpack.c.h.b16 %v6966
    %v7327 = vunpack.c.l.b16 %v6967
    %v7328 = vunpack.c.h.b16 %v6967
    %v7329 = vunpack.c.l.b16 %v6968
    %v7330 = vunpack.c.h.b16 %v6968
    %v7331 = vunpack.c.l.b16 %v6969
    %v7332 = vunpack.c.h.b16 %v6969
    %v7333 = vunpack.c.l.b16 %v6970
    %v7334 = vunpack.c.h.b16 %v6970
    %v7335 = vunpack.c.l.b16 %v6971
    %v7336 = vunpack.c.h.b16 %v6971
    %v7337 = vunpack.c.l.b16 %v6972
    %v7338 = vunpack.c.h.b16 %v6972
    %v7339 = vunpack.c.l.b16 %v6973
    %v7340 = vunpack.c.h.b16 %v6973
    %v7341 = vunpack.c.l.b16 %v6974
    %v7342 = vunpack.c.h.b16 %v6974
    %v7343 = vunpack.c.l.b16 %v6975
    %v7344 = vunpack.c.h.b16 %v6975
    %v7345 = vunpack.c.l.b16 %v6976
    %v7346 = vunpack.c.h.b16 %v6976
    %v7347 = vunpack.c.l.b16 %v6977
    %v7348 = vunpack.c.h.b16 %v6977
    %v7349 = vunpack.c.l.b16 %v6978
    %v7350 = vunpack.c.h.b16 %v6978
    %v7351 = vunpack.c.l.b16 %v6979
    %v7352 = vunpack.c.h.b16 %v6979
    %v7353 = vunpack.c.l.b16 %v6980
    %v7354 = vunpack.c.h.b16 %v6980
    %v7355 = vunpack.c.l.b16 %v6981
    %v7356 = vunpack.c.h.b16 %v6981
    %v7357 = vunpack.c.l.b16 %v6982
    %v7358 = vunpack.c.h.b16 %v6982
    %v7359 = vunpack.c.l.b16 %v6983
    %v7360 = vunpack.c.h.b16 %v6983
    %v7361 = vunpack.c.l.b16 %v6984
    %v7362 = vunpack.c.h.b16 %v6984
    %v7363 = vunpack.c.l.b16 %v6985
    %v7364 = vunpack.c.h.b16 %v6985
    %v7365 = vunpack.c.l.b16 %v6986
    %v7366 = vunpack.c.h.b16 %v6986
    %v7367 = vunpack.c.l.b16 %v6987
    %v7368 = vunpack.c.h.b16 %v6987
    %v7369 = vunpack.c.l.b16 %v6988
    %v7370 = vunpack.c.h.b16 %v6988
    %v7371 = vunpack.c.l.b16 %v6989
    %v7372 = vunpack.c.h.b16 %v6989
    %v7373 = vunpack.c.l.b16 %v6990
    %v7374 = vunpack.c.h.b16 %v6990
    %v7375 = vunpack.c.l.b16 %v6991
    %v7376 = vunpack.c.h.b16 %v6991
    %v7377 = vunpack.c.l.b16 %v6992
    %v7378 = vunpack.c.h.b16 %v6992
    %v7379 = vunpack.c.l.b16 %v6993
    %v7380 = vunpack.c.h.b16 %v6993
    %v7381 = vunpack.c.l.b16 %v6994
    %v7382 = vunpack.c.h.b16 %v6994
    %v7383 = vunpack.c.l.b16 %v6995
    %v7384 = vunpack.c.h.b16 %v6995
    %v7385 = vunpack.c.l.b16 %v6996
    %v7386 = vunpack.c.h.b16 %v6996
    %v7387 = vunpack.c.l.b16 %v6997
    %v7388 = vunpack.c.h.b16 %v6997
    %v7389 = vunpack.c.l.b16 %v6998
    %v7390 = vunpack.c.h.b16 %v6998
    %v7391 = vunpack.c.l.b16 %v6999
    %v7392 = vunpack.c.h.b16 %v6999
    %v7393 = vunpack.c.l.b16 %v7000
    %v7394 = vunpack.c.h.b16 %v7000
    %v7395 = vunpack.c.l.b16 %v7001
    %v7396 = vunpack.c.h.b16 %v7001
    %v7397 = vunpack.c.l.b16 %v7002
    %v7398 = vunpack.c.h.b16 %v7002
    %v7399 = vunpack.c.l.b16 %v7003
    %v7400 = vunpack.c.h.b16 %v7003
    %v7401 = vunpack.c.l.b16 %v7004
    %v7402 = vunpack.c.h.b16 %v7004
    %v7403 = vunpack.c.l.b16 %v7005
    %v7404 = vunpack.c.h.b16 %v7005
    %v7405 = vunpack.c.l.b16 %v7006
    %v7406 = vunpack.c.h.b16 %v7006
    %v7407 = vunpack.c.l.b16 %v7007
    %v7408 = vunpack.c.h.b16 %v7007
    %v7409 = vunpack.c.l.b16 %v7008
    %v7410 = vunpack.c.h.b16 %v7008
    %v7411 = vunpack.c.l.b16 %v7009
    %v7412 = vunpack.c.h.b16 %v7009
    %v7413 = vunpack.c.l.b16 %v7010
    %v7414 = vunpack.c.h.b16 %v7010
    %v7415 = vunpack.c.l.b16 %v7011
    %v7416 = vunpack.c.h.b16 %v7011
    %v7417 = vunpack.c.l.b16 %v7012
    %v7418 = vunpack.c.h.b16 %v7012
    %v7419 = vpack.c.b16 %v7167, %v7163
    %v7420 = vpack.c.b16 %v7168, %v7164
    %v7421 = vpack.c.b16 %v7169, %v7165
    %v7422 = vpack.c.b16 %v7170, %v7166
    %v7423 = vpack.c.b16 %v7175, %v7171
    %v7424 = vpack.c.b16 %v7176, %v7172
    %v7425 = vpack.c.b16 %v7177, %v7173
    %v7426 = vpack.c.b16 %v7178, %v7174
    %v7427 = vpack.c.b16 %v7183, %v7179
    %v7428 = vpack.c.b16 %v7184, %v7180
    %v7429 = vpack.c.b16 %v7185, %v7181
    %v7430 = vpack.c.b16 %v7186, %v7182
    %v7431 = vpack.c.b16 %v7191, %v7187
    %v7432 = vpack.c.b16 %v7192, %v7188
    %v7433 = vpack.c.b16 %v7193, %v7189
    %v7434 = vpack.c.b16 %v7194, %v7190
    %v7435 = vpack.c.b16 %v7199, %v7195
    %v7436 = vpack.c.b16 %v7200, %v7196
    %v7437 = vpack.c.b16 %v7201, %v7197
    %v7438 = vpack.c.b16 %v7202, %v7198
    %v7439 = vpack.c.b16 %v7207, %v7203
    %v7440 = vpack.c.b16 %v7208, %v7204
    %v7441 = vpack.c.b16 %v7209, %v7205
    %v7442 = vpack.c.b16 %v7210, %v7206
    %v7443 = vpack.c.b16 %v7215, %v7211
    %v7444 = vpack.c.b16 %v7216, %v7212
    %v7445 = vpack.c.b16 %v7217, %v7213
    %v7446 = vpack.c.b16 %v7218, %v7214
    %v7447 = vpack.c.b16 %v7223, %v7219
    %v7448 = vpack.c.b16 %v7224, %v7220
    %v7449 = vpack.c.b16 %v7225, %v7221
    %v7450 = vpack.c.b16 %v7226, %v7222
    %v7451 = vpack.c.b16 %v7231, %v7227
    %v7452 = vpack.c.b16 %v7232, %v7228
    %v7453 = vpack.c.b16 %v7233, %v7229
    %v7454 = vpack.c.b16 %v7234, %v7230
    %v7455 = vpack.c.b16 %v7239, %v7235
    %v7456 = vpack.c.b16 %v7240, %v7236
    %v7457 = vpack.c.b16 %v7241, %v7237
    %v7458 = vpack.c.b16 %v7242, %v7238
    %v7459 = vpack.c.b16 %v7247, %v7243
    %v7460 = vpack.c.b16 %v7248, %v7244
    %v7461 = vpack.c.b16 %v7249, %v7245
    %v7462 = vpack.c.b16 %v7250, %v7246
    %v7463 = vpack.c.b16 %v7255, %v7251
    %v7464 = vpack.c.b16 %v7256, %v7252
    %v7465 = vpack.c.b16 %v7257, %v7253
    %v7466 = vpack.c.b16 %v7258, %v7254
    %v7467 = vpack.c.b16 %v7263, %v7259
    %v7468 = vpack.c.b16 %v7264, %v7260
    %v7469 = vpack.c.b16 %v7265, %v7261
    %v7470 = vpack.c.b16 %v7266, %v7262
    %v7471 = vpack.c.b16 %v7271, %v7267
    %v7472 = vpack.c.b16 %v7272, %v7268
    %v7473 = vpack.c.b16 %v7273, %v7269
    %v7474 = vpack.c.b16 %v7274, %v7270
    %v7475 = vpack.c.b16 %v7279, %v7275
    %v7476 = vpack.c.b16 %v7280, %v7276
    %v7477 = vpack.c.b16 %v7281, %v7277
    %v7478 = vpack.c.b16 %v7282, %v7278
    %v7479 = vpack.c.b16 %v7287, %v7283
    %v7480 = vpack.c.b16 %v7288, %v7284
    %v7481 = vpack.c.b16 %v7289, %v7285
    %v7482 = vpack.c.b16 %v7290, %v7286
    %v7483 = vpack.c.b16 %v7295, %v7291
    %v7484 = vpack.c.b16 %v7296, %v7292
    %v7485 = vpack.c.b16 %v7297, %v7293
    %v7486 = vpack.c.b16 %v7298, %v7294
    %v7487 = vpack.c.b16 %v7303, %v7299
    %v7488 = vpack.c.b16 %v7304, %v7300
    %v7489 = vpack.c.b16 %v7305, %v7301
    %v7490 = vpack.c.b16 %v7306, %v7302
    %v7491 = vpack.c.b16 %v7311, %v7307
    %v7492 = vpack.c.b16 %v7312, %v7308
    %v7493 = vpack.c.b16 %v7313, %v7309
    %v7494 = vpack.c.b16 %v7314, %v7310
    %v7495 = vpack.c.b16 %v7319, %v7315
    %v7496 = vpack.c.b16 %v7320, %v7316
    %v7497 = vpack.c.b16 %v7321, %v7317
    %v7498 = vpack.c.b16 %v7322, %v7318
    %v7499 = vpack.c.b16 %v7327, %v7323
    %v7500 = vpack.c.b16 %v7328, %v7324
    %v7501 = vpack.c.b16 %v7329, %v7325
    %v7502 = vpack.c.b16 %v7330, %v7326
    %v7503 = vpack.c.b16 %v7335, %v7331
    %v7504 = vpack.c.b16 %v7336, %v7332
    %v7505 = vpack.c.b16 %v7337, %v7333
    %v7506 = vpack.c.b16 %v7338, %v7334
    %v7507 = vpack.c.b16 %v7343, %v7339
    %v7508 = vpack.c.b16 %v7344, %v7340
    %v7509 = vpack.c.b16 %v7345, %v7341
    %v7510 = vpack.c.b16 %v7346, %v7342
    %v7511 = vpack.c.b16 %v7351, %v7347
    %v7512 = vpack.c.b16 %v7352, %v7348
    %v7513 = vpack.c.b16 %v7353, %v7349
    %v7514 = vpack.c.b16 %v7354, %v7350
    %v7515 = vpack.c.b16 %v7359, %v7355
    %v7516 = vpack.c.b16 %v7360, %v7356
    %v7517 = vpack.c.b16 %v7361, %v7357
    %v7518 = vpack.c.b16 %v7362, %v7358
    %v7519 = vpack.c.b16 %v7367, %v7363
    %v7520 = vpack.c.b16 %v7368, %v7364
    %v7521 = vpack.c.b16 %v7369, %v7365
    %v7522 = vpack.c.b16 %v7370, %v7366
    %v7523 = vpack.c.b16 %v7375, %v7371
    %v7524 = vpack.c.b16 %v7376, %v7372
    %v7525 = vpack.c.b16 %v7377, %v7373
    %v7526 = vpack.c.b16 %v7378, %v7374
    %v7527 = vpack.c.b16 %v7383, %v7379
    %v7528 = vpack.c.b16 %v7384, %v7380
    %v7529 = vpack.c.b16 %v7385, %v7381
    %v7530 = vpack.c.b16 %v7386, %v7382
    %v7531 = vpack.c.b16 %v7391, %v7387
    %v7532 = vpack.c.b16 %v7392, %v7388
    %v7533 = vpack.c.b16 %v7393, %v7389
    %v7534 = vpack.c.b16 %v7394, %v7390
    %v7535 = vpack.c.b16 %v7399, %v7395
    %v7536 = vpack.c.b16 %v7400, %v7396
    %v7537 = vpack.c.b16 %v7401, %v7397
    %v7538 = vpack.c.b16 %v7402, %v7398
    %v7539 = vpack.c.b16 %v7407, %v7403
    %v7540 = vpack.c.b16 %v7408, %v7404
    %v7541 = vpack.c.b16 %v7409, %v7405
    %v7542 = vpack.c.b16 %v7410, %v7406
    %v7543 = vpack.c.b16 %v7415, %v7411
    %v7544 = vpack.c.b16 %v7416, %v7412
    %v7545 = vpack.c.b16 %v7417, %v7413
    %v7546 = vpack.c.b16 %v7418, %v7414
    %7675 = vmatprep.subr.bf16.mxu0 %v7448
    %7676 = vmatpush1.bf16.msra.mxu0 %v7447
    %7677 = vmatprep.subr.bf16.mxu0 %v7444
    %7678 = vmatpush1.bf16.msra.mxu0 %v7443
    %7679 = vmatprep.subr.bf16.mxu0 %v7440
    %7680 = vmatpush1.bf16.msra.mxu0 %v7439
    %7681 = vmatprep.subr.bf16.mxu0 %v7436
    %7682 = vmatpush1.bf16.msra.mxu0 %v7435
    %7683 = vmatprep.subr.bf16.mxu0 %v7432
    %7684 = vmatpush1.bf16.msra.mxu0 %v7431
    %7685 = vmatprep.subr.bf16.mxu0 %v7428
    %7686 = vmatpush1.bf16.msra.mxu0 %v7427
    %7687 = vmatprep.subr.bf16.mxu0 %v7424
    %7688 = vmatpush1.bf16.msra.mxu0 %v7423
    %7689 = vmatprep.subr.bf16.mxu0 %v7420
    %7690 = vmatpush1.bf16.msra.mxu0 %v7419
    %7691 = vmatprep.subr.bf16.mxu0 %v7480
    %7692 = vmatpush2.bf16.msra.mxu0 %v7479
    %7693 = vmatprep.subr.bf16.mxu0 %v7476
    %7694 = vmatpush2.bf16.msra.mxu0 %v7475
    %7695 = vmatprep.subr.bf16.mxu0 %v7472
    %7696 = vmatpush2.bf16.msra.mxu0 %v7471
    %7697 = vmatprep.subr.bf16.mxu0 %v7468
    %7698 = vmatpush2.bf16.msra.mxu0 %v7467
    %7699 = vmatprep.subr.bf16.mxu0 %v7464
    %7700 = vmatpush2.bf16.msra.mxu0 %v7463
    %7701 = vmatprep.subr.bf16.mxu0 %v7460
    %7702 = vmatpush2.bf16.msra.mxu0 %v7459
    %7703 = vmatprep.subr.bf16.mxu0 %v7456
    %7704 = vmatpush2.bf16.msra.mxu0 %v7455
    %7705 = vmatprep.subr.bf16.mxu0 %v7452
    %7706 = vmatpush2.bf16.msra.mxu0 %v7451
    %7707 = vmatprep.mubr.bf16.mxu0 %v6882
    %7708 = vmatmul.mubr.bf16.gmra.mxu0 %v6881
    %v7709 = vpop.f32.mrf.mxu0
    %v7710 = vadd.f32 %v7018, %v7709
    %v7711 = vpop.f32.mrf.mxu0
    %v7712 = vadd.f32 %v7022, %v7711
    %v7713 = vpop.f32.mrf.mxu0
    %v7714 = vadd.f32 %v7018, %v7713
    %v7715 = vpop.f32.mrf.mxu0
    %v7716 = vadd.f32 %v7022, %v7715
    %7717 = vdwg.mxu0
    %7718 = vmatprep.subr.bf16.mxu0 %v7512
    %7719 = vmatpush1.bf16.msra.mxu0 %v7511
    %7720 = vmatprep.subr.bf16.mxu0 %v7508
    %7721 = vmatpush1.bf16.msra.mxu0 %v7507
    %7722 = vmatprep.subr.bf16.mxu0 %v7504
    %7723 = vmatpush1.bf16.msra.mxu0 %v7503
    %7724 = vmatprep.subr.bf16.mxu0 %v7500
    %7725 = vmatpush1.bf16.msra.mxu0 %v7499
    %7726 = vmatprep.subr.bf16.mxu0 %v7496
    %7727 = vmatpush1.bf16.msra.mxu0 %v7495
    %7728 = vmatprep.subr.bf16.mxu0 %v7492
    %7729 = vmatpush1.bf16.msra.mxu0 %v7491
    %7730 = vmatprep.subr.bf16.mxu0 %v7488
    %7731 = vmatpush1.bf16.msra.mxu0 %v7487
    %7732 = vmatprep.subr.bf16.mxu0 %v7484
    %7733 = vmatpush1.bf16.msra.mxu0 %v7483
    %7734 = vmatprep.subr.bf16.mxu0 %v7544
    %7735 = vmatpush2.bf16.msra.mxu0 %v7543
    %7736 = vmatprep.subr.bf16.mxu0 %v7540
    %7737 = vmatpush2.bf16.msra.mxu0 %v7539
    %7738 = vmatprep.subr.bf16.mxu0 %v7536
    %7739 = vmatpush2.bf16.msra.mxu0 %v7535
    %7740 = vmatprep.subr.bf16.mxu0 %v7532
    %7741 = vmatpush2.bf16.msra.mxu0 %v7531
    %7742 = vmatprep.subr.bf16.mxu0 %v7528
    %7743 = vmatpush2.bf16.msra.mxu0 %v7527
    %7744 = vmatprep.subr.bf16.mxu0 %v7524
    %7745 = vmatpush2.bf16.msra.mxu0 %v7523
    %7746 = vmatprep.subr.bf16.mxu0 %v7520
    %7747 = vmatpush2.bf16.msra.mxu0 %v7519
    %7748 = vmatprep.subr.bf16.mxu0 %v7516
    %7749 = vmatpush2.bf16.msra.mxu0 %v7515
    %7750 = vmatprep.mubr.bf16.mxu0 %v6884
    %7751 = vmatmul.mubr.bf16.gmra.mxu0 %v6883
    %v7752 = vpop.f32.mrf.mxu0
    %v7753 = vadd.f32 %v7710, %v7752
    %v7754 = vpop.f32.mrf.mxu0
    %v7755 = vadd.f32 %v7712, %v7754
    %v7756 = vpop.f32.mrf.mxu0
    %v7757 = vadd.f32 %v7714, %v7756
    %v7758 = vpop.f32.mrf.mxu0
    %v7759 = vadd.f32 %v7716, %v7758
    %7760 = vdwg.mxu0
    %7761 = vmatprep.subr.bf16.mxu0 %v7450
    %7762 = vmatpush1.bf16.msra.mxu0 %v7449
    %7763 = vmatprep.subr.bf16.mxu0 %v7446
    %7764 = vmatpush1.bf16.msra.mxu0 %v7445
    %7765 = vmatprep.subr.bf16.mxu0 %v7442
    %7766 = vmatpush1.bf16.msra.mxu0 %v7441
    %7767 = vmatprep.subr.bf16.mxu0 %v7438
    %7768 = vmatpush1.bf16.msra.mxu0 %v7437
    %7769 = vmatprep.subr.bf16.mxu0 %v7434
    %7770 = vmatpush1.bf16.msra.mxu0 %v7433
    %7771 = vmatprep.subr.bf16.mxu0 %v7430
    %7772 = vmatpush1.bf16.msra.mxu0 %v7429
    %7773 = vmatprep.subr.bf16.mxu0 %v7426
    %7774 = vmatpush1.bf16.msra.mxu0 %v7425
    %7775 = vmatprep.subr.bf16.mxu0 %v7422
    %7776 = vmatpush1.bf16.msra.mxu0 %v7421
    %7777 = vmatprep.subr.bf16.mxu0 %v7482
    %7778 = vmatpush2.bf16.msra.mxu0 %v7481
    %7779 = vmatprep.subr.bf16.mxu0 %v7478
    %7780 = vmatpush2.bf16.msra.mxu0 %v7477
    %7781 = vmatprep.subr.bf16.mxu0 %v7474
    %7782 = vmatpush2.bf16.msra.mxu0 %v7473
    %7783 = vmatprep.subr.bf16.mxu0 %v7470
    %7784 = vmatpush2.bf16.msra.mxu0 %v7469
    %7785 = vmatprep.subr.bf16.mxu0 %v7466
    %7786 = vmatpush2.bf16.msra.mxu0 %v7465
    %7787 = vmatprep.subr.bf16.mxu0 %v7462
    %7788 = vmatpush2.bf16.msra.mxu0 %v7461
    %7789 = vmatprep.subr.bf16.mxu0 %v7458
    %7790 = vmatpush2.bf16.msra.mxu0 %v7457
    %7791 = vmatprep.subr.bf16.mxu0 %v7454
    %7792 = vmatpush2.bf16.msra.mxu0 %v7453
    %7793 = vmatprep.mubr.bf16.mxu0 %v6882
    %7794 = vmatmul.mubr.bf16.gmra.mxu0 %v6881
    %v7795 = vpop.f32.mrf.mxu0
    %v7796 = vadd.f32 %v7026, %v7795
    %v7797 = vpop.f32.mrf.mxu0
    %v7798 = vadd.f32 %v7030, %v7797
    %v7799 = vpop.f32.mrf.mxu0
    %v7800 = vadd.f32 %v7026, %v7799
    %v7801 = vpop.f32.mrf.mxu0
    %v7802 = vadd.f32 %v7030, %v7801
    %7803 = vdwg.mxu0
    %7804 = vmatprep.subr.bf16.mxu0 %v7514
    %7805 = vmatpush1.bf16.msra.mxu0 %v7513
    %7806 = vmatprep.subr.bf16.mxu0 %v7510
    %7807 = vmatpush1.bf16.msra.mxu0 %v7509
    %7808 = vmatprep.subr.bf16.mxu0 %v7506
    %7809 = vmatpush1.bf16.msra.mxu0 %v7505
    %7810 = vmatprep.subr.bf16.mxu0 %v7502
    %7811 = vmatpush1.bf16.msra.mxu0 %v7501
    %7812 = vmatprep.subr.bf16.mxu0 %v7498
    %7813 = vmatpush1.bf16.msra.mxu0 %v7497
    %7814 = vmatprep.subr.bf16.mxu0 %v7494
    %7815 = vmatpush1.bf16.msra.mxu0 %v7493
    %7816 = vmatprep.subr.bf16.mxu0 %v7490
    %7817 = vmatpush1.bf16.msra.mxu0 %v7489
    %7818 = vmatprep.subr.bf16.mxu0 %v7486
    %7819 = vmatpush1.bf16.msra.mxu0 %v7485
    %7820 = vmatprep.subr.bf16.mxu0 %v7546
    %7821 = vmatpush2.bf16.msra.mxu0 %v7545
    %7822 = vmatprep.subr.bf16.mxu0 %v7542
    %7823 = vmatpush2.bf16.msra.mxu0 %v7541
    %7824 = vmatprep.subr.bf16.mxu0 %v7538
    %7825 = vmatpush2.bf16.msra.mxu0 %v7537
    %7826 = vmatprep.subr.bf16.mxu0 %v7534
    %7827 = vmatpush2.bf16.msra.mxu0 %v7533
    %7828 = vmatprep.subr.bf16.mxu0 %v7530
    %7829 = vmatpush2.bf16.msra.mxu0 %v7529
    %7830 = vmatprep.subr.bf16.mxu0 %v7526
    %7831 = vmatpush2.bf16.msra.mxu0 %v7525
    %7832 = vmatprep.subr.bf16.mxu0 %v7522
    %7833 = vmatpush2.bf16.msra.mxu0 %v7521
    %7834 = vmatprep.subr.bf16.mxu0 %v7518
    %7835 = vmatpush2.bf16.msra.mxu0 %v7517
    %7836 = vmatprep.mubr.bf16.mxu0 %v6884
    %7837 = vmatmul.mubr.bf16.gmra.mxu0 %v6883
    %v7838 = vpop.f32.mrf.mxu0
    %v7839 = vadd.f32 %v7796, %v7838
    %v7840 = vpop.f32.mrf.mxu0
    %v7841 = vadd.f32 %v7798, %v7840
    %v7842 = vpop.f32.mrf.mxu0
    %v7843 = vadd.f32 %v7800, %v7842
    %v7844 = vpop.f32.mrf.mxu0
    %v7845 = vadd.f32 %v7802, %v7844
    %7846 = vdwg.mxu0
    %v7847 = vmax.f32 %v7753, 0.0
    %v7848 = vmax.f32 %v7755, 0.0
    %v7849 = vmax.f32 %v7839, 0.0
    %v7850 = vmax.f32 %v7841, 0.0
    %v7851 = vmax.f32 %v7757, 0.0
    %v7852 = vmax.f32 %v7759, 0.0
    %v7853 = vmax.f32 %v7843, 0.0
    %v7854 = vmax.f32 %v7845, 0.0
    %v7855 = vpack.c.bf16 %v7851, %v7847
    %v7856 = vpack.c.bf16 %v7852, %v7848
    %v7857 = vpack.c.bf16 %v7853, %v7849
    %v7858 = vpack.c.bf16 %v7854, %v7850
    %v7859 = vld [vmem:[#allocation12] sm:$0xff]
    %v7860 = vld [vmem:[#allocation12 + $0x8] sm:$0xff]
    %v7861 = vld [vmem:[#allocation12 + $0x10] sm:$0xff]
    %v7862 = vld [vmem:[#allocation12 + $0x18] sm:$0xff]
    %v7863 = vld [vmem:[#allocation12 + $0x20] sm:$0xff]
    %v7864 = vld [vmem:[#allocation12 + $0x28] sm:$0xff]
    %v7865 = vld [vmem:[#allocation12 + $0x30] sm:$0xff]
    %v7866 = vld [vmem:[#allocation12 + $0x38] sm:$0xff]
    %v7867 = vld [vmem:[#allocation12 + $0x40] sm:$0xff]
    %v7868 = vld [vmem:[#allocation12 + $0x48] sm:$0xff]
    %v7869 = vld [vmem:[#allocation12 + $0x50] sm:$0xff]
    %v7870 = vld [vmem:[#allocation12 + $0x58] sm:$0xff]
    %v7871 = vld [vmem:[#allocation12 + $0x60] sm:$0xff]
    %v7872 = vld [vmem:[#allocation12 + $0x68] sm:$0xff]
    %v7873 = vld [vmem:[#allocation12 + $0x70] sm:$0xff]
    %v7874 = vld [vmem:[#allocation12 + $0x78] sm:$0xff]
    %v7875 = vld [vmem:[#allocation12 + $0x80] sm:$0xff]
    %v7876 = vld [vmem:[#allocation12 + $0x88] sm:$0xff]
    %v7877 = vld [vmem:[#allocation12 + $0x90] sm:$0xff]
    %v7878 = vld [vmem:[#allocation12 + $0x98] sm:$0xff]
    %v7879 = vld [vmem:[#allocation12 + $0xa0] sm:$0xff]
    %v7880 = vld [vmem:[#allocation12 + $0xa8] sm:$0xff]
    %v7881 = vld [vmem:[#allocation12 + $0xb0] sm:$0xff]
    %v7882 = vld [vmem:[#allocation12 + $0xb8] sm:$0xff]
    %v7883 = vld [vmem:[#allocation12 + $0xc0] sm:$0xff]
    %v7884 = vld [vmem:[#allocation12 + $0xc8] sm:$0xff]
    %v7885 = vld [vmem:[#allocation12 + $0xd0] sm:$0xff]
    %v7886 = vld [vmem:[#allocation12 + $0xd8] sm:$0xff]
    %v7887 = vld [vmem:[#allocation12 + $0xe0] sm:$0xff]
    %v7888 = vld [vmem:[#allocation12 + $0xe8] sm:$0xff]
    %v7889 = vld [vmem:[#allocation12 + $0xf0] sm:$0xff]
    %v7890 = vld [vmem:[#allocation12 + $0xf8] sm:$0xff]
    %v7891 = vld [vmem:[#allocation12 + $0x100] sm:$0xff]
    %v7892 = vld [vmem:[#allocation12 + $0x108] sm:$0xff]
    %v7893 = vld [vmem:[#allocation12 + $0x110] sm:$0xff]
    %v7894 = vld [vmem:[#allocation12 + $0x118] sm:$0xff]
    %v7895 = vld [vmem:[#allocation12 + $0x120] sm:$0xff]
    %v7896 = vld [vmem:[#allocation12 + $0x128] sm:$0xff]
    %v7897 = vld [vmem:[#allocation12 + $0x130] sm:$0xff]
    %v7898 = vld [vmem:[#allocation12 + $0x138] sm:$0xff]
    %v7899 = vld [vmem:[#allocation12 + $0x140] sm:$0xff]
    %v7900 = vld [vmem:[#allocation12 + $0x148] sm:$0xff]
    %v7901 = vld [vmem:[#allocation12 + $0x150] sm:$0xff]
    %v7902 = vld [vmem:[#allocation12 + $0x158] sm:$0xff]
    %v7903 = vld [vmem:[#allocation12 + $0x160] sm:$0xff]
    %v7904 = vld [vmem:[#allocation12 + $0x168] sm:$0xff]
    %v7905 = vld [vmem:[#allocation12 + $0x170] sm:$0xff]
    %v7906 = vld [vmem:[#allocation12 + $0x178] sm:$0xff]
    %v7907 = vld [vmem:[#allocation12 + $0x180] sm:$0xff]
    %v7908 = vld [vmem:[#allocation12 + $0x188] sm:$0xff]
    %v7909 = vld [vmem:[#allocation12 + $0x190] sm:$0xff]
    %v7910 = vld [vmem:[#allocation12 + $0x198] sm:$0xff]
    %v7911 = vld [vmem:[#allocation12 + $0x1a0] sm:$0xff]
    %v7912 = vld [vmem:[#allocation12 + $0x1a8] sm:$0xff]
    %v7913 = vld [vmem:[#allocation12 + $0x1b0] sm:$0xff]
    %v7914 = vld [vmem:[#allocation12 + $0x1b8] sm:$0xff]
    %v7915 = vld [vmem:[#allocation12 + $0x1c0] sm:$0xff]
    %v7916 = vld [vmem:[#allocation12 + $0x1c8] sm:$0xff]
    %v7917 = vld [vmem:[#allocation12 + $0x1d0] sm:$0xff]
    %v7918 = vld [vmem:[#allocation12 + $0x1d8] sm:$0xff]
    %v7919 = vld [vmem:[#allocation12 + $0x1e0] sm:$0xff]
    %v7920 = vld [vmem:[#allocation12 + $0x1e8] sm:$0xff]
    %v7921 = vld [vmem:[#allocation12 + $0x1f0] sm:$0xff]
    %v7922 = vld [vmem:[#allocation12 + $0x1f8] sm:$0xff]
    %v7923 = vld [vmem:[#allocation12 + $0x200] sm:$0xff]
    %v7924 = vld [vmem:[#allocation12 + $0x208] sm:$0xff]
    %v7925 = vld [vmem:[#allocation12 + $0x210] sm:$0xff]
    %v7926 = vld [vmem:[#allocation12 + $0x218] sm:$0xff]
    %v7927 = vld [vmem:[#allocation12 + $0x220] sm:$0xff]
    %v7928 = vld [vmem:[#allocation12 + $0x228] sm:$0xff]
    %v7929 = vld [vmem:[#allocation12 + $0x230] sm:$0xff]
    %v7930 = vld [vmem:[#allocation12 + $0x238] sm:$0xff]
    %v7931 = vld [vmem:[#allocation12 + $0x240] sm:$0xff]
    %v7932 = vld [vmem:[#allocation12 + $0x248] sm:$0xff]
    %v7933 = vld [vmem:[#allocation12 + $0x250] sm:$0xff]
    %v7934 = vld [vmem:[#allocation12 + $0x258] sm:$0xff]
    %v7935 = vld [vmem:[#allocation12 + $0x260] sm:$0xff]
    %v7936 = vld [vmem:[#allocation12 + $0x268] sm:$0xff]
    %v7937 = vld [vmem:[#allocation12 + $0x270] sm:$0xff]
    %v7938 = vld [vmem:[#allocation12 + $0x278] sm:$0xff]
    %v7939 = vld [vmem:[#allocation12 + $0x280] sm:$0xff]
    %v7940 = vld [vmem:[#allocation12 + $0x288] sm:$0xff]
    %v7941 = vld [vmem:[#allocation12 + $0x290] sm:$0xff]
    %v7942 = vld [vmem:[#allocation12 + $0x298] sm:$0xff]
    %v7943 = vld [vmem:[#allocation12 + $0x2a0] sm:$0xff]
    %v7944 = vld [vmem:[#allocation12 + $0x2a8] sm:$0xff]
    %v7945 = vld [vmem:[#allocation12 + $0x2b0] sm:$0xff]
    %v7946 = vld [vmem:[#allocation12 + $0x2b8] sm:$0xff]
    %v7947 = vld [vmem:[#allocation12 + $0x2c0] sm:$0xff]
    %v7948 = vld [vmem:[#allocation12 + $0x2c8] sm:$0xff]
    %v7949 = vld [vmem:[#allocation12 + $0x2d0] sm:$0xff]
    %v7950 = vld [vmem:[#allocation12 + $0x2d8] sm:$0xff]
    %v7951 = vld [vmem:[#allocation12 + $0x2e0] sm:$0xff]
    %v7952 = vld [vmem:[#allocation12 + $0x2e8] sm:$0xff]
    %v7953 = vld [vmem:[#allocation12 + $0x2f0] sm:$0xff]
    %v7954 = vld [vmem:[#allocation12 + $0x2f8] sm:$0xff]
    %v7955 = vld [vmem:[#allocation12 + $0x300] sm:$0xff]
    %v7956 = vld [vmem:[#allocation12 + $0x308] sm:$0xff]
    %v7957 = vld [vmem:[#allocation12 + $0x310] sm:$0xff]
    %v7958 = vld [vmem:[#allocation12 + $0x318] sm:$0xff]
    %v7959 = vld [vmem:[#allocation12 + $0x320] sm:$0xff]
    %v7960 = vld [vmem:[#allocation12 + $0x328] sm:$0xff]
    %v7961 = vld [vmem:[#allocation12 + $0x330] sm:$0xff]
    %v7962 = vld [vmem:[#allocation12 + $0x338] sm:$0xff]
    %v7963 = vld [vmem:[#allocation12 + $0x340] sm:$0xff]
    %v7964 = vld [vmem:[#allocation12 + $0x348] sm:$0xff]
    %v7965 = vld [vmem:[#allocation12 + $0x350] sm:$0xff]
    %v7966 = vld [vmem:[#allocation12 + $0x358] sm:$0xff]
    %v7967 = vld [vmem:[#allocation12 + $0x360] sm:$0xff]
    %v7968 = vld [vmem:[#allocation12 + $0x368] sm:$0xff]
    %v7969 = vld [vmem:[#allocation12 + $0x370] sm:$0xff]
    %v7970 = vld [vmem:[#allocation12 + $0x378] sm:$0xff]
    %v7971 = vld [vmem:[#allocation12 + $0x380] sm:$0xff]
    %v7972 = vld [vmem:[#allocation12 + $0x388] sm:$0xff]
    %v7973 = vld [vmem:[#allocation12 + $0x390] sm:$0xff]
    %v7974 = vld [vmem:[#allocation12 + $0x398] sm:$0xff]
    %v7975 = vld [vmem:[#allocation12 + $0x3a0] sm:$0xff]
    %v7976 = vld [vmem:[#allocation12 + $0x3a8] sm:$0xff]
    %v7977 = vld [vmem:[#allocation12 + $0x3b0] sm:$0xff]
    %v7978 = vld [vmem:[#allocation12 + $0x3b8] sm:$0xff]
    %v7979 = vld [vmem:[#allocation12 + $0x3c0] sm:$0xff]
    %v7980 = vld [vmem:[#allocation12 + $0x3c8] sm:$0xff]
    %v7981 = vld [vmem:[#allocation12 + $0x3d0] sm:$0xff]
    %v7982 = vld [vmem:[#allocation12 + $0x3d8] sm:$0xff]
    %v7983 = vld [vmem:[#allocation12 + $0x3e0] sm:$0xff]
    %v7984 = vld [vmem:[#allocation12 + $0x3e8] sm:$0xff]
    %v7985 = vld [vmem:[#allocation12 + $0x3f0] sm:$0xff]
    %v7986 = vld [vmem:[#allocation12 + $0x3f8] sm:$0xff]
    %v7987 = vld [vmem:[#allocation13] sm:$0xf]
    %v7989 = vlaneseq
    %v7990 = vshrl.u32 %v7989, 7
    %v7991 = vsub.s32 0, %v7990
    %v7992 = vrot.slane %v7987, %v7991
    %v7993 = vlaneseq
    %v7994 = vshrl.u32 %v7993, 7
    %v7995 = vsub.s32 1, %v7994
    %v7996 = vrot.slane %v7987, %v7995
    %v7997 = vlaneseq
    %v7998 = vshrl.u32 %v7997, 7
    %v7999 = vsub.s32 2, %v7998
    %v8000 = vrot.slane %v7987, %v7999
    %v8001 = vlaneseq
    %v8002 = vshrl.u32 %v8001, 7
    %v8003 = vsub.s32 3, %v8002
    %v8004 = vrot.slane %v7987, %v8003
    %v8137 = vunpack.c.l.b16 %v7859
    %v8138 = vunpack.c.h.b16 %v7859
    %v8139 = vunpack.c.l.b16 %v7860
    %v8140 = vunpack.c.h.b16 %v7860
    %v8141 = vunpack.c.l.b16 %v7861
    %v8142 = vunpack.c.h.b16 %v7861
    %v8143 = vunpack.c.l.b16 %v7862
    %v8144 = vunpack.c.h.b16 %v7862
    %v8145 = vunpack.c.l.b16 %v7863
    %v8146 = vunpack.c.h.b16 %v7863
    %v8147 = vunpack.c.l.b16 %v7864
    %v8148 = vunpack.c.h.b16 %v7864
    %v8149 = vunpack.c.l.b16 %v7865
    %v8150 = vunpack.c.h.b16 %v7865
    %v8151 = vunpack.c.l.b16 %v7866
    %v8152 = vunpack.c.h.b16 %v7866
    %v8153 = vunpack.c.l.b16 %v7867
    %v8154 = vunpack.c.h.b16 %v7867
    %v8155 = vunpack.c.l.b16 %v7868
    %v8156 = vunpack.c.h.b16 %v7868
    %v8157 = vunpack.c.l.b16 %v7869
    %v8158 = vunpack.c.h.b16 %v7869
    %v8159 = vunpack.c.l.b16 %v7870
    %v8160 = vunpack.c.h.b16 %v7870
    %v8161 = vunpack.c.l.b16 %v7871
    %v8162 = vunpack.c.h.b16 %v7871
    %v8163 = vunpack.c.l.b16 %v7872
    %v8164 = vunpack.c.h.b16 %v7872
    %v8165 = vunpack.c.l.b16 %v7873
    %v8166 = vunpack.c.h.b16 %v7873
    %v8167 = vunpack.c.l.b16 %v7874
    %v8168 = vunpack.c.h.b16 %v7874
    %v8169 = vunpack.c.l.b16 %v7875
    %v8170 = vunpack.c.h.b16 %v7875
    %v8171 = vunpack.c.l.b16 %v7876
    %v8172 = vunpack.c.h.b16 %v7876
    %v8173 = vunpack.c.l.b16 %v7877
    %v8174 = vunpack.c.h.b16 %v7877
    %v8175 = vunpack.c.l.b16 %v7878
    %v8176 = vunpack.c.h.b16 %v7878
    %v8177 = vunpack.c.l.b16 %v7879
    %v8178 = vunpack.c.h.b16 %v7879
    %v8179 = vunpack.c.l.b16 %v7880
    %v8180 = vunpack.c.h.b16 %v7880
    %v8181 = vunpack.c.l.b16 %v7881
    %v8182 = vunpack.c.h.b16 %v7881
    %v8183 = vunpack.c.l.b16 %v7882
    %v8184 = vunpack.c.h.b16 %v7882
    %v8185 = vunpack.c.l.b16 %v7883
    %v8186 = vunpack.c.h.b16 %v7883
    %v8187 = vunpack.c.l.b16 %v7884
    %v8188 = vunpack.c.h.b16 %v7884
    %v8189 = vunpack.c.l.b16 %v7885
    %v8190 = vunpack.c.h.b16 %v7885
    %v8191 = vunpack.c.l.b16 %v7886
    %v8192 = vunpack.c.h.b16 %v7886
    %v8193 = vunpack.c.l.b16 %v7887
    %v8194 = vunpack.c.h.b16 %v7887
    %v8195 = vunpack.c.l.b16 %v7888
    %v8196 = vunpack.c.h.b16 %v7888
    %v8197 = vunpack.c.l.b16 %v7889
    %v8198 = vunpack.c.h.b16 %v7889
    %v8199 = vunpack.c.l.b16 %v7890
    %v8200 = vunpack.c.h.b16 %v7890
    %v8201 = vunpack.c.l.b16 %v7891
    %v8202 = vunpack.c.h.b16 %v7891
    %v8203 = vunpack.c.l.b16 %v7892
    %v8204 = vunpack.c.h.b16 %v7892
    %v8205 = vunpack.c.l.b16 %v7893
    %v8206 = vunpack.c.h.b16 %v7893
    %v8207 = vunpack.c.l.b16 %v7894
    %v8208 = vunpack.c.h.b16 %v7894
    %v8209 = vunpack.c.l.b16 %v7895
    %v8210 = vunpack.c.h.b16 %v7895
    %v8211 = vunpack.c.l.b16 %v7896
    %v8212 = vunpack.c.h.b16 %v7896
    %v8213 = vunpack.c.l.b16 %v7897
    %v8214 = vunpack.c.h.b16 %v7897
    %v8215 = vunpack.c.l.b16 %v7898
    %v8216 = vunpack.c.h.b16 %v7898
    %v8217 = vunpack.c.l.b16 %v7899
    %v8218 = vunpack.c.h.b16 %v7899
    %v8219 = vunpack.c.l.b16 %v7900
    %v8220 = vunpack.c.h.b16 %v7900
    %v8221 = vunpack.c.l.b16 %v7901
    %v8222 = vunpack.c.h.b16 %v7901
    %v8223 = vunpack.c.l.b16 %v7902
    %v8224 = vunpack.c.h.b16 %v7902
    %v8225 = vunpack.c.l.b16 %v7903
    %v8226 = vunpack.c.h.b16 %v7903
    %v8227 = vunpack.c.l.b16 %v7904
    %v8228 = vunpack.c.h.b16 %v7904
    %v8229 = vunpack.c.l.b16 %v7905
    %v8230 = vunpack.c.h.b16 %v7905
    %v8231 = vunpack.c.l.b16 %v7906
    %v8232 = vunpack.c.h.b16 %v7906
    %v8233 = vunpack.c.l.b16 %v7907
    %v8234 = vunpack.c.h.b16 %v7907
    %v8235 = vunpack.c.l.b16 %v7908
    %v8236 = vunpack.c.h.b16 %v7908
    %v8237 = vunpack.c.l.b16 %v7909
    %v8238 = vunpack.c.h.b16 %v7909
    %v8239 = vunpack.c.l.b16 %v7910
    %v8240 = vunpack.c.h.b16 %v7910
    %v8241 = vunpack.c.l.b16 %v7911
    %v8242 = vunpack.c.h.b16 %v7911
    %v8243 = vunpack.c.l.b16 %v7912
    %v8244 = vunpack.c.h.b16 %v7912
    %v8245 = vunpack.c.l.b16 %v7913
    %v8246 = vunpack.c.h.b16 %v7913
    %v8247 = vunpack.c.l.b16 %v7914
    %v8248 = vunpack.c.h.b16 %v7914
    %v8249 = vunpack.c.l.b16 %v7915
    %v8250 = vunpack.c.h.b16 %v7915
    %v8251 = vunpack.c.l.b16 %v7916
    %v8252 = vunpack.c.h.b16 %v7916
    %v8253 = vunpack.c.l.b16 %v7917
    %v8254 = vunpack.c.h.b16 %v7917
    %v8255 = vunpack.c.l.b16 %v7918
    %v8256 = vunpack.c.h.b16 %v7918
    %v8257 = vunpack.c.l.b16 %v7919
    %v8258 = vunpack.c.h.b16 %v7919
    %v8259 = vunpack.c.l.b16 %v7920
    %v8260 = vunpack.c.h.b16 %v7920
    %v8261 = vunpack.c.l.b16 %v7921
    %v8262 = vunpack.c.h.b16 %v7921
    %v8263 = vunpack.c.l.b16 %v7922
    %v8264 = vunpack.c.h.b16 %v7922
    %v8265 = vunpack.c.l.b16 %v7923
    %v8266 = vunpack.c.h.b16 %v7923
    %v8267 = vunpack.c.l.b16 %v7924
    %v8268 = vunpack.c.h.b16 %v7924
    %v8269 = vunpack.c.l.b16 %v7925
    %v8270 = vunpack.c.h.b16 %v7925
    %v8271 = vunpack.c.l.b16 %v7926
    %v8272 = vunpack.c.h.b16 %v7926
    %v8273 = vunpack.c.l.b16 %v7927
    %v8274 = vunpack.c.h.b16 %v7927
    %v8275 = vunpack.c.l.b16 %v7928
    %v8276 = vunpack.c.h.b16 %v7928
    %v8277 = vunpack.c.l.b16 %v7929
    %v8278 = vunpack.c.h.b16 %v7929
    %v8279 = vunpack.c.l.b16 %v7930
    %v8280 = vunpack.c.h.b16 %v7930
    %v8281 = vunpack.c.l.b16 %v7931
    %v8282 = vunpack.c.h.b16 %v7931
    %v8283 = vunpack.c.l.b16 %v7932
    %v8284 = vunpack.c.h.b16 %v7932
    %v8285 = vunpack.c.l.b16 %v7933
    %v8286 = vunpack.c.h.b16 %v7933
    %v8287 = vunpack.c.l.b16 %v7934
    %v8288 = vunpack.c.h.b16 %v7934
    %v8289 = vunpack.c.l.b16 %v7935
    %v8290 = vunpack.c.h.b16 %v7935
    %v8291 = vunpack.c.l.b16 %v7936
    %v8292 = vunpack.c.h.b16 %v7936
    %v8293 = vunpack.c.l.b16 %v7937
    %v8294 = vunpack.c.h.b16 %v7937
    %v8295 = vunpack.c.l.b16 %v7938
    %v8296 = vunpack.c.h.b16 %v7938
    %v8297 = vunpack.c.l.b16 %v7939
    %v8298 = vunpack.c.h.b16 %v7939
    %v8299 = vunpack.c.l.b16 %v7940
    %v8300 = vunpack.c.h.b16 %v7940
    %v8301 = vunpack.c.l.b16 %v7941
    %v8302 = vunpack.c.h.b16 %v7941
    %v8303 = vunpack.c.l.b16 %v7942
    %v8304 = vunpack.c.h.b16 %v7942
    %v8305 = vunpack.c.l.b16 %v7943
    %v8306 = vunpack.c.h.b16 %v7943
    %v8307 = vunpack.c.l.b16 %v7944
    %v8308 = vunpack.c.h.b16 %v7944
    %v8309 = vunpack.c.l.b16 %v7945
    %v8310 = vunpack.c.h.b16 %v7945
    %v8311 = vunpack.c.l.b16 %v7946
    %v8312 = vunpack.c.h.b16 %v7946
    %v8313 = vunpack.c.l.b16 %v7947
    %v8314 = vunpack.c.h.b16 %v7947
    %v8315 = vunpack.c.l.b16 %v7948
    %v8316 = vunpack.c.h.b16 %v7948
    %v8317 = vunpack.c.l.b16 %v7949
    %v8318 = vunpack.c.h.b16 %v7949
    %v8319 = vunpack.c.l.b16 %v7950
    %v8320 = vunpack.c.h.b16 %v7950
    %v8321 = vunpack.c.l.b16 %v7951
    %v8322 = vunpack.c.h.b16 %v7951
    %v8323 = vunpack.c.l.b16 %v7952
    %v8324 = vunpack.c.h.b16 %v7952
    %v8325 = vunpack.c.l.b16 %v7953
    %v8326 = vunpack.c.h.b16 %v7953
    %v8327 = vunpack.c.l.b16 %v7954
    %v8328 = vunpack.c.h.b16 %v7954
    %v8329 = vunpack.c.l.b16 %v7955
    %v8330 = vunpack.c.h.b16 %v7955
    %v8331 = vunpack.c.l.b16 %v7956
    %v8332 = vunpack.c.h.b16 %v7956
    %v8333 = vunpack.c.l.b16 %v7957
    %v8334 = vunpack.c.h.b16 %v7957
    %v8335 = vunpack.c.l.b16 %v7958
    %v8336 = vunpack.c.h.b16 %v7958
    %v8337 = vunpack.c.l.b16 %v7959
    %v8338 = vunpack.c.h.b16 %v7959
    %v8339 = vunpack.c.l.b16 %v7960
    %v8340 = vunpack.c.h.b16 %v7960
    %v8341 = vunpack.c.l.b16 %v7961
    %v8342 = vunpack.c.h.b16 %v7961
    %v8343 = vunpack.c.l.b16 %v7962
    %v8344 = vunpack.c.h.b16 %v7962
    %v8345 = vunpack.c.l.b16 %v7963
    %v8346 = vunpack.c.h.b16 %v7963
    %v8347 = vunpack.c.l.b16 %v7964
    %v8348 = vunpack.c.h.b16 %v7964
    %v8349 = vunpack.c.l.b16 %v7965
    %v8350 = vunpack.c.h.b16 %v7965
    %v8351 = vunpack.c.l.b16 %v7966
    %v8352 = vunpack.c.h.b16 %v7966
    %v8353 = vunpack.c.l.b16 %v7967
    %v8354 = vunpack.c.h.b16 %v7967
    %v8355 = vunpack.c.l.b16 %v7968
    %v8356 = vunpack.c.h.b16 %v7968
    %v8357 = vunpack.c.l.b16 %v7969
    %v8358 = vunpack.c.h.b16 %v7969
    %v8359 = vunpack.c.l.b16 %v7970
    %v8360 = vunpack.c.h.b16 %v7970
    %v8361 = vunpack.c.l.b16 %v7971
    %v8362 = vunpack.c.h.b16 %v7971
    %v8363 = vunpack.c.l.b16 %v7972
    %v8364 = vunpack.c.h.b16 %v7972
    %v8365 = vunpack.c.l.b16 %v7973
    %v8366 = vunpack.c.h.b16 %v7973
    %v8367 = vunpack.c.l.b16 %v7974
    %v8368 = vunpack.c.h.b16 %v7974
    %v8369 = vunpack.c.l.b16 %v7975
    %v8370 = vunpack.c.h.b16 %v7975
    %v8371 = vunpack.c.l.b16 %v7976
    %v8372 = vunpack.c.h.b16 %v7976
    %v8373 = vunpack.c.l.b16 %v7977
    %v8374 = vunpack.c.h.b16 %v7977
    %v8375 = vunpack.c.l.b16 %v7978
    %v8376 = vunpack.c.h.b16 %v7978
    %v8377 = vunpack.c.l.b16 %v7979
    %v8378 = vunpack.c.h.b16 %v7979
    %v8379 = vunpack.c.l.b16 %v7980
    %v8380 = vunpack.c.h.b16 %v7980
    %v8381 = vunpack.c.l.b16 %v7981
    %v8382 = vunpack.c.h.b16 %v7981
    %v8383 = vunpack.c.l.b16 %v7982
    %v8384 = vunpack.c.h.b16 %v7982
    %v8385 = vunpack.c.l.b16 %v7983
    %v8386 = vunpack.c.h.b16 %v7983
    %v8387 = vunpack.c.l.b16 %v7984
    %v8388 = vunpack.c.h.b16 %v7984
    %v8389 = vunpack.c.l.b16 %v7985
    %v8390 = vunpack.c.h.b16 %v7985
    %v8391 = vunpack.c.l.b16 %v7986
    %v8392 = vunpack.c.h.b16 %v7986
    %v8393 = vpack.c.b16 %v8141, %v8137
    %v8394 = vpack.c.b16 %v8142, %v8138
    %v8395 = vpack.c.b16 %v8143, %v8139
    %v8396 = vpack.c.b16 %v8144, %v8140
    %v8397 = vpack.c.b16 %v8149, %v8145
    %v8398 = vpack.c.b16 %v8150, %v8146
    %v8399 = vpack.c.b16 %v8151, %v8147
    %v8400 = vpack.c.b16 %v8152, %v8148
    %v8401 = vpack.c.b16 %v8157, %v8153
    %v8402 = vpack.c.b16 %v8158, %v8154
    %v8403 = vpack.c.b16 %v8159, %v8155
    %v8404 = vpack.c.b16 %v8160, %v8156
    %v8405 = vpack.c.b16 %v8165, %v8161
    %v8406 = vpack.c.b16 %v8166, %v8162
    %v8407 = vpack.c.b16 %v8167, %v8163
    %v8408 = vpack.c.b16 %v8168, %v8164
    %v8409 = vpack.c.b16 %v8173, %v8169
    %v8410 = vpack.c.b16 %v8174, %v8170
    %v8411 = vpack.c.b16 %v8175, %v8171
    %v8412 = vpack.c.b16 %v8176, %v8172
    %v8413 = vpack.c.b16 %v8181, %v8177
    %v8414 = vpack.c.b16 %v8182, %v8178
    %v8415 = vpack.c.b16 %v8183, %v8179
    %v8416 = vpack.c.b16 %v8184, %v8180
    %v8417 = vpack.c.b16 %v8189, %v8185
    %v8418 = vpack.c.b16 %v8190, %v8186
    %v8419 = vpack.c.b16 %v8191, %v8187
    %v8420 = vpack.c.b16 %v8192, %v8188
    %v8421 = vpack.c.b16 %v8197, %v8193
    %v8422 = vpack.c.b16 %v8198, %v8194
    %v8423 = vpack.c.b16 %v8199, %v8195
    %v8424 = vpack.c.b16 %v8200, %v8196
    %v8425 = vpack.c.b16 %v8205, %v8201
    %v8426 = vpack.c.b16 %v8206, %v8202
    %v8427 = vpack.c.b16 %v8207, %v8203
    %v8428 = vpack.c.b16 %v8208, %v8204
    %v8429 = vpack.c.b16 %v8213, %v8209
    %v8430 = vpack.c.b16 %v8214, %v8210
    %v8431 = vpack.c.b16 %v8215, %v8211
    %v8432 = vpack.c.b16 %v8216, %v8212
    %v8433 = vpack.c.b16 %v8221, %v8217
    %v8434 = vpack.c.b16 %v8222, %v8218
    %v8435 = vpack.c.b16 %v8223, %v8219
    %v8436 = vpack.c.b16 %v8224, %v8220
    %v8437 = vpack.c.b16 %v8229, %v8225
    %v8438 = vpack.c.b16 %v8230, %v8226
    %v8439 = vpack.c.b16 %v8231, %v8227
    %v8440 = vpack.c.b16 %v8232, %v8228
    %v8441 = vpack.c.b16 %v8237, %v8233
    %v8442 = vpack.c.b16 %v8238, %v8234
    %v8443 = vpack.c.b16 %v8239, %v8235
    %v8444 = vpack.c.b16 %v8240, %v8236
    %v8445 = vpack.c.b16 %v8245, %v8241
    %v8446 = vpack.c.b16 %v8246, %v8242
    %v8447 = vpack.c.b16 %v8247, %v8243
    %v8448 = vpack.c.b16 %v8248, %v8244
    %v8449 = vpack.c.b16 %v8253, %v8249
    %v8450 = vpack.c.b16 %v8254, %v8250
    %v8451 = vpack.c.b16 %v8255, %v8251
    %v8452 = vpack.c.b16 %v8256, %v8252
    %v8453 = vpack.c.b16 %v8261, %v8257
    %v8454 = vpack.c.b16 %v8262, %v8258
    %v8455 = vpack.c.b16 %v8263, %v8259
    %v8456 = vpack.c.b16 %v8264, %v8260
    %v8457 = vpack.c.b16 %v8269, %v8265
    %v8458 = vpack.c.b16 %v8270, %v8266
    %v8459 = vpack.c.b16 %v8271, %v8267
    %v8460 = vpack.c.b16 %v8272, %v8268
    %v8461 = vpack.c.b16 %v8277, %v8273
    %v8462 = vpack.c.b16 %v8278, %v8274
    %v8463 = vpack.c.b16 %v8279, %v8275
    %v8464 = vpack.c.b16 %v8280, %v8276
    %v8465 = vpack.c.b16 %v8285, %v8281
    %v8466 = vpack.c.b16 %v8286, %v8282
    %v8467 = vpack.c.b16 %v8287, %v8283
    %v8468 = vpack.c.b16 %v8288, %v8284
    %v8469 = vpack.c.b16 %v8293, %v8289
    %v8470 = vpack.c.b16 %v8294, %v8290
    %v8471 = vpack.c.b16 %v8295, %v8291
    %v8472 = vpack.c.b16 %v8296, %v8292
    %v8473 = vpack.c.b16 %v8301, %v8297
    %v8474 = vpack.c.b16 %v8302, %v8298
    %v8475 = vpack.c.b16 %v8303, %v8299
    %v8476 = vpack.c.b16 %v8304, %v8300
    %v8477 = vpack.c.b16 %v8309, %v8305
    %v8478 = vpack.c.b16 %v8310, %v8306
    %v8479 = vpack.c.b16 %v8311, %v8307
    %v8480 = vpack.c.b16 %v8312, %v8308
    %v8481 = vpack.c.b16 %v8317, %v8313
    %v8482 = vpack.c.b16 %v8318, %v8314
    %v8483 = vpack.c.b16 %v8319, %v8315
    %v8484 = vpack.c.b16 %v8320, %v8316
    %v8485 = vpack.c.b16 %v8325, %v8321
    %v8486 = vpack.c.b16 %v8326, %v8322
    %v8487 = vpack.c.b16 %v8327, %v8323
    %v8488 = vpack.c.b16 %v8328, %v8324
    %v8489 = vpack.c.b16 %v8333, %v8329
    %v8490 = vpack.c.b16 %v8334, %v8330
    %v8491 = vpack.c.b16 %v8335, %v8331
    %v8492 = vpack.c.b16 %v8336, %v8332
    %v8493 = vpack.c.b16 %v8341, %v8337
    %v8494 = vpack.c.b16 %v8342, %v8338
    %v8495 = vpack.c.b16 %v8343, %v8339
    %v8496 = vpack.c.b16 %v8344, %v8340
    %v8497 = vpack.c.b16 %v8349, %v8345
    %v8498 = vpack.c.b16 %v8350, %v8346
    %v8499 = vpack.c.b16 %v8351, %v8347
    %v8500 = vpack.c.b16 %v8352, %v8348
    %v8501 = vpack.c.b16 %v8357, %v8353
    %v8502 = vpack.c.b16 %v8358, %v8354
    %v8503 = vpack.c.b16 %v8359, %v8355
    %v8504 = vpack.c.b16 %v8360, %v8356
    %v8505 = vpack.c.b16 %v8365, %v8361
    %v8506 = vpack.c.b16 %v8366, %v8362
    %v8507 = vpack.c.b16 %v8367, %v8363
    %v8508 = vpack.c.b16 %v8368, %v8364
    %v8509 = vpack.c.b16 %v8373, %v8369
    %v8510 = vpack.c.b16 %v8374, %v8370
    %v8511 = vpack.c.b16 %v8375, %v8371
    %v8512 = vpack.c.b16 %v8376, %v8372
    %v8513 = vpack.c.b16 %v8381, %v8377
    %v8514 = vpack.c.b16 %v8382, %v8378
    %v8515 = vpack.c.b16 %v8383, %v8379
    %v8516 = vpack.c.b16 %v8384, %v8380
    %v8517 = vpack.c.b16 %v8389, %v8385
    %v8518 = vpack.c.b16 %v8390, %v8386
    %v8519 = vpack.c.b16 %v8391, %v8387
    %v8520 = vpack.c.b16 %v8392, %v8388
    %8649 = vmatprep.subr.bf16.mxu0 %v8422
    %8650 = vmatpush1.bf16.msra.mxu0 %v8421
    %8651 = vmatprep.subr.bf16.mxu0 %v8418
    %8652 = vmatpush1.bf16.msra.mxu0 %v8417
    %8653 = vmatprep.subr.bf16.mxu0 %v8414
    %8654 = vmatpush1.bf16.msra.mxu0 %v8413
    %8655 = vmatprep.subr.bf16.mxu0 %v8410
    %8656 = vmatpush1.bf16.msra.mxu0 %v8409
    %8657 = vmatprep.subr.bf16.mxu0 %v8406
    %8658 = vmatpush1.bf16.msra.mxu0 %v8405
    %8659 = vmatprep.subr.bf16.mxu0 %v8402
    %8660 = vmatpush1.bf16.msra.mxu0 %v8401
    %8661 = vmatprep.subr.bf16.mxu0 %v8398
    %8662 = vmatpush1.bf16.msra.mxu0 %v8397
    %8663 = vmatprep.subr.bf16.mxu0 %v8394
    %8664 = vmatpush1.bf16.msra.mxu0 %v8393
    %8665 = vmatprep.subr.bf16.mxu0 %v8454
    %8666 = vmatpush2.bf16.msra.mxu0 %v8453
    %8667 = vmatprep.subr.bf16.mxu0 %v8450
    %8668 = vmatpush2.bf16.msra.mxu0 %v8449
    %8669 = vmatprep.subr.bf16.mxu0 %v8446
    %8670 = vmatpush2.bf16.msra.mxu0 %v8445
    %8671 = vmatprep.subr.bf16.mxu0 %v8442
    %8672 = vmatpush2.bf16.msra.mxu0 %v8441
    %8673 = vmatprep.subr.bf16.mxu0 %v8438
    %8674 = vmatpush2.bf16.msra.mxu0 %v8437
    %8675 = vmatprep.subr.bf16.mxu0 %v8434
    %8676 = vmatpush2.bf16.msra.mxu0 %v8433
    %8677 = vmatprep.subr.bf16.mxu0 %v8430
    %8678 = vmatpush2.bf16.msra.mxu0 %v8429
    %8679 = vmatprep.subr.bf16.mxu0 %v8426
    %8680 = vmatpush2.bf16.msra.mxu0 %v8425
    %8681 = vmatprep.mubr.bf16.mxu0 %v7856
    %8682 = vmatmul.mubr.bf16.gmra.mxu0 %v7855
    %v8683 = vpop.f32.mrf.mxu0
    %v8684 = vadd.f32 %v7992, %v8683
    %v8685 = vpop.f32.mrf.mxu0
    %v8686 = vadd.f32 %v7996, %v8685
    %v8687 = vpop.f32.mrf.mxu0
    %v8688 = vadd.f32 %v7992, %v8687
    %v8689 = vpop.f32.mrf.mxu0
    %v8690 = vadd.f32 %v7996, %v8689
    %8691 = vdwg.mxu0
    %8692 = vmatprep.subr.bf16.mxu0 %v8486
    %8693 = vmatpush1.bf16.msra.mxu0 %v8485
    %8694 = vmatprep.subr.bf16.mxu0 %v8482
    %8695 = vmatpush1.bf16.msra.mxu0 %v8481
    %8696 = vmatprep.subr.bf16.mxu0 %v8478
    %8697 = vmatpush1.bf16.msra.mxu0 %v8477
    %8698 = vmatprep.subr.bf16.mxu0 %v8474
    %8699 = vmatpush1.bf16.msra.mxu0 %v8473
    %8700 = vmatprep.subr.bf16.mxu0 %v8470
    %8701 = vmatpush1.bf16.msra.mxu0 %v8469
    %8702 = vmatprep.subr.bf16.mxu0 %v8466
    %8703 = vmatpush1.bf16.msra.mxu0 %v8465
    %8704 = vmatprep.subr.bf16.mxu0 %v8462
    %8705 = vmatpush1.bf16.msra.mxu0 %v8461
    %8706 = vmatprep.subr.bf16.mxu0 %v8458
    %8707 = vmatpush1.bf16.msra.mxu0 %v8457
    %8708 = vmatprep.subr.bf16.mxu0 %v8518
    %8709 = vmatpush2.bf16.msra.mxu0 %v8517
    %8710 = vmatprep.subr.bf16.mxu0 %v8514
    %8711 = vmatpush2.bf16.msra.mxu0 %v8513
    %8712 = vmatprep.subr.bf16.mxu0 %v8510
    %8713 = vmatpush2.bf16.msra.mxu0 %v8509
    %8714 = vmatprep.subr.bf16.mxu0 %v8506
    %8715 = vmatpush2.bf16.msra.mxu0 %v8505
    %8716 = vmatprep.subr.bf16.mxu0 %v8502
    %8717 = vmatpush2.bf16.msra.mxu0 %v8501
    %8718 = vmatprep.subr.bf16.mxu0 %v8498
    %8719 = vmatpush2.bf16.msra.mxu0 %v8497
    %8720 = vmatprep.subr.bf16.mxu0 %v8494
    %8721 = vmatpush2.bf16.msra.mxu0 %v8493
    %8722 = vmatprep.subr.bf16.mxu0 %v8490
    %8723 = vmatpush2.bf16.msra.mxu0 %v8489
    %8724 = vmatprep.mubr.bf16.mxu0 %v7858
    %8725 = vmatmul.mubr.bf16.gmra.mxu0 %v7857
    %v8726 = vpop.f32.mrf.mxu0
    %v8727 = vadd.f32 %v8684, %v8726
    %v8728 = vpop.f32.mrf.mxu0
    %v8729 = vadd.f32 %v8686, %v8728
    %v8730 = vpop.f32.mrf.mxu0
    %v8731 = vadd.f32 %v8688, %v8730
    %v8732 = vpop.f32.mrf.mxu0
    %v8733 = vadd.f32 %v8690, %v8732
    %8734 = vdwg.mxu0
    %8735 = vmatprep.subr.bf16.mxu0 %v8424
    %8736 = vmatpush1.bf16.msra.mxu0 %v8423
    %8737 = vmatprep.subr.bf16.mxu0 %v8420
    %8738 = vmatpush1.bf16.msra.mxu0 %v8419
    %8739 = vmatprep.subr.bf16.mxu0 %v8416
    %8740 = vmatpush1.bf16.msra.mxu0 %v8415
    %8741 = vmatprep.subr.bf16.mxu0 %v8412
    %8742 = vmatpush1.bf16.msra.mxu0 %v8411
    %8743 = vmatprep.subr.bf16.mxu0 %v8408
    %8744 = vmatpush1.bf16.msra.mxu0 %v8407
    %8745 = vmatprep.subr.bf16.mxu0 %v8404
    %8746 = vmatpush1.bf16.msra.mxu0 %v8403
    %8747 = vmatprep.subr.bf16.mxu0 %v8400
    %8748 = vmatpush1.bf16.msra.mxu0 %v8399
    %8749 = vmatprep.subr.bf16.mxu0 %v8396
    %8750 = vmatpush1.bf16.msra.mxu0 %v8395
    %8751 = vmatprep.subr.bf16.mxu0 %v8456
    %8752 = vmatpush2.bf16.msra.mxu0 %v8455
    %8753 = vmatprep.subr.bf16.mxu0 %v8452
    %8754 = vmatpush2.bf16.msra.mxu0 %v8451
    %8755 = vmatprep.subr.bf16.mxu0 %v8448
    %8756 = vmatpush2.bf16.msra.mxu0 %v8447
    %8757 = vmatprep.subr.bf16.mxu0 %v8444
    %8758 = vmatpush2.bf16.msra.mxu0 %v8443
    %8759 = vmatprep.subr.bf16.mxu0 %v8440
    %8760 = vmatpush2.bf16.msra.mxu0 %v8439
    %8761 = vmatprep.subr.bf16.mxu0 %v8436
    %8762 = vmatpush2.bf16.msra.mxu0 %v8435
    %8763 = vmatprep.subr.bf16.mxu0 %v8432
    %8764 = vmatpush2.bf16.msra.mxu0 %v8431
    %8765 = vmatprep.subr.bf16.mxu0 %v8428
    %8766 = vmatpush2.bf16.msra.mxu0 %v8427
    %8767 = vmatprep.mubr.bf16.mxu0 %v7856
    %8768 = vmatmul.mubr.bf16.gmra.mxu0 %v7855
    %v8769 = vpop.f32.mrf.mxu0
    %v8770 = vadd.f32 %v8000, %v8769
    %v8771 = vpop.f32.mrf.mxu0
    %v8772 = vadd.f32 %v8004, %v8771
    %v8773 = vpop.f32.mrf.mxu0
    %v8774 = vadd.f32 %v8000, %v8773
    %v8775 = vpop.f32.mrf.mxu0
    %v8776 = vadd.f32 %v8004, %v8775
    %8777 = vdwg.mxu0
    %8778 = vmatprep.subr.bf16.mxu0 %v8488
    %8779 = vmatpush1.bf16.msra.mxu0 %v8487
    %8780 = vmatprep.subr.bf16.mxu0 %v8484
    %8781 = vmatpush1.bf16.msra.mxu0 %v8483
    %8782 = vmatprep.subr.bf16.mxu0 %v8480
    %8783 = vmatpush1.bf16.msra.mxu0 %v8479
    %8784 = vmatprep.subr.bf16.mxu0 %v8476
    %8785 = vmatpush1.bf16.msra.mxu0 %v8475
    %8786 = vmatprep.subr.bf16.mxu0 %v8472
    %8787 = vmatpush1.bf16.msra.mxu0 %v8471
    %8788 = vmatprep.subr.bf16.mxu0 %v8468
    %8789 = vmatpush1.bf16.msra.mxu0 %v8467
    %8790 = vmatprep.subr.bf16.mxu0 %v8464
    %8791 = vmatpush1.bf16.msra.mxu0 %v8463
    %8792 = vmatprep.subr.bf16.mxu0 %v8460
    %8793 = vmatpush1.bf16.msra.mxu0 %v8459
    %8794 = vmatprep.subr.bf16.mxu0 %v8520
    %8795 = vmatpush2.bf16.msra.mxu0 %v8519
    %8796 = vmatprep.subr.bf16.mxu0 %v8516
    %8797 = vmatpush2.bf16.msra.mxu0 %v8515
    %8798 = vmatprep.subr.bf16.mxu0 %v8512
    %8799 = vmatpush2.bf16.msra.mxu0 %v8511
    %8800 = vmatprep.subr.bf16.mxu0 %v8508
    %8801 = vmatpush2.bf16.msra.mxu0 %v8507
    %8802 = vmatprep.subr.bf16.mxu0 %v8504
    %8803 = vmatpush2.bf16.msra.mxu0 %v8503
    %8804 = vmatprep.subr.bf16.mxu0 %v8500
    %8805 = vmatpush2.bf16.msra.mxu0 %v8499
    %8806 = vmatprep.subr.bf16.mxu0 %v8496
    %8807 = vmatpush2.bf16.msra.mxu0 %v8495
    %8808 = vmatprep.subr.bf16.mxu0 %v8492
    %8809 = vmatpush2.bf16.msra.mxu0 %v8491
    %8810 = vmatprep.mubr.bf16.mxu0 %v7858
    %8811 = vmatmul.mubr.bf16.gmra.mxu0 %v7857
    %v8812 = vpop.f32.mrf.mxu0
    %v8813 = vadd.f32 %v8770, %v8812
    %v8814 = vpop.f32.mrf.mxu0
    %v8815 = vadd.f32 %v8772, %v8814
    %v8816 = vpop.f32.mrf.mxu0
    %v8817 = vadd.f32 %v8774, %v8816
    %v8818 = vpop.f32.mrf.mxu0
    %v8819 = vadd.f32 %v8776, %v8818
    %8820 = vdwg.mxu0
    %v8821 = vmax.f32 %v8727, 0.0
    %v8822 = vmax.f32 %v8729, 0.0
    %v8823 = vmax.f32 %v8813, 0.0
    %v8824 = vmax.f32 %v8815, 0.0
    %v8825 = vmax.f32 %v8731, 0.0
    %v8826 = vmax.f32 %v8733, 0.0
    %v8827 = vmax.f32 %v8817, 0.0
    %v8828 = vmax.f32 %v8819, 0.0
    %v8829 = vpack.c.bf16 %v8825, %v8821
    %v8830 = vpack.c.bf16 %v8826, %v8822
    %v8831 = vpack.c.bf16 %v8827, %v8823
    %v8832 = vpack.c.bf16 %v8828, %v8824
    %v8833 = vld [vmem:[#allocation15] sm:$0xf]
    %v8834 = vld [vmem:[#allocation15 + $0x4] sm:$0xf]
    %v8835 = vld [vmem:[#allocation15 + $0x8] sm:$0xf]
    %v8836 = vld [vmem:[#allocation15 + $0xc] sm:$0xf]
    %v8837 = vld [vmem:[#allocation15 + $0x10] sm:$0xf]
    %v8838 = vld [vmem:[#allocation15 + $0x14] sm:$0xf]
    %v8839 = vld [vmem:[#allocation15 + $0x18] sm:$0xf]
    %v8840 = vld [vmem:[#allocation15 + $0x1c] sm:$0xf]
    %v8841 = vld [vmem:[#allocation15 + $0x20] sm:$0xf]
    %v8842 = vld [vmem:[#allocation15 + $0x24] sm:$0xf]
    %v8843 = vld [vmem:[#allocation15 + $0x28] sm:$0xf]
    %v8844 = vld [vmem:[#allocation15 + $0x2c] sm:$0xf]
    %v8845 = vld [vmem:[#allocation15 + $0x30] sm:$0xf]
    %v8846 = vld [vmem:[#allocation15 + $0x34] sm:$0xf]
    %v8847 = vld [vmem:[#allocation15 + $0x38] sm:$0xf]
    %v8848 = vld [vmem:[#allocation15 + $0x3c] sm:$0xf]
    %v8849 = vld [vmem:[#allocation15 + $0x40] sm:$0xf]
    %v8850 = vld [vmem:[#allocation15 + $0x44] sm:$0xf]
    %v8851 = vld [vmem:[#allocation15 + $0x48] sm:$0xf]
    %v8852 = vld [vmem:[#allocation15 + $0x4c] sm:$0xf]
    %v8853 = vld [vmem:[#allocation15 + $0x50] sm:$0xf]
    %v8854 = vld [vmem:[#allocation15 + $0x54] sm:$0xf]
    %v8855 = vld [vmem:[#allocation15 + $0x58] sm:$0xf]
    %v8856 = vld [vmem:[#allocation15 + $0x5c] sm:$0xf]
    %v8857 = vld [vmem:[#allocation15 + $0x60] sm:$0xf]
    %v8858 = vld [vmem:[#allocation15 + $0x64] sm:$0xf]
    %v8859 = vld [vmem:[#allocation15 + $0x68] sm:$0xf]
    %v8860 = vld [vmem:[#allocation15 + $0x6c] sm:$0xf]
    %v8861 = vld [vmem:[#allocation15 + $0x70] sm:$0xf]
    %v8862 = vld [vmem:[#allocation15 + $0x74] sm:$0xf]
    %v8863 = vld [vmem:[#allocation15 + $0x78] sm:$0xf]
    %v8864 = vld [vmem:[#allocation15 + $0x7c] sm:$0xf]
    %v8865 = vld [vmem:[#allocation15 + $0x80] sm:$0xf]
    %v8866 = vld [vmem:[#allocation15 + $0x84] sm:$0xf]
    %v8867 = vld [vmem:[#allocation15 + $0x88] sm:$0xf]
    %v8868 = vld [vmem:[#allocation15 + $0x8c] sm:$0xf]
    %v8869 = vld [vmem:[#allocation15 + $0x90] sm:$0xf]
    %v8870 = vld [vmem:[#allocation15 + $0x94] sm:$0xf]
    %v8871 = vld [vmem:[#allocation15 + $0x98] sm:$0xf]
    %v8872 = vld [vmem:[#allocation15 + $0x9c] sm:$0xf]
    %v8873 = vld [vmem:[#allocation15 + $0xa0] sm:$0xf]
    %v8874 = vld [vmem:[#allocation15 + $0xa4] sm:$0xf]
    %v8875 = vld [vmem:[#allocation15 + $0xa8] sm:$0xf]
    %v8876 = vld [vmem:[#allocation15 + $0xac] sm:$0xf]
    %v8877 = vld [vmem:[#allocation15 + $0xb0] sm:$0xf]
    %v8878 = vld [vmem:[#allocation15 + $0xb4] sm:$0xf]
    %v8879 = vld [vmem:[#allocation15 + $0xb8] sm:$0xf]
    %v8880 = vld [vmem:[#allocation15 + $0xbc] sm:$0xf]
    %v8881 = vld [vmem:[#allocation15 + $0xc0] sm:$0xf]
    %v8882 = vld [vmem:[#allocation15 + $0xc4] sm:$0xf]
    %v8883 = vld [vmem:[#allocation15 + $0xc8] sm:$0xf]
    %v8884 = vld [vmem:[#allocation15 + $0xcc] sm:$0xf]
    %v8885 = vld [vmem:[#allocation15 + $0xd0] sm:$0xf]
    %v8886 = vld [vmem:[#allocation15 + $0xd4] sm:$0xf]
    %v8887 = vld [vmem:[#allocation15 + $0xd8] sm:$0xf]
    %v8888 = vld [vmem:[#allocation15 + $0xdc] sm:$0xf]
    %v8889 = vld [vmem:[#allocation15 + $0xe0] sm:$0xf]
    %v8890 = vld [vmem:[#allocation15 + $0xe4] sm:$0xf]
    %v8891 = vld [vmem:[#allocation15 + $0xe8] sm:$0xf]
    %v8892 = vld [vmem:[#allocation15 + $0xec] sm:$0xf]
    %v8893 = vld [vmem:[#allocation15 + $0xf0] sm:$0xf]
    %v8894 = vld [vmem:[#allocation15 + $0xf4] sm:$0xf]
    %v8895 = vld [vmem:[#allocation15 + $0xf8] sm:$0xf]
    %v8896 = vld [vmem:[#allocation15 + $0xfc] sm:$0xf]
    %v8897 = vld [vmem:[#allocation16] sm:$0x1]
    %v8899 = vlaneseq
    %v8900 = vshrl.u32 %v8899, 7
    %v8901 = vsub.s32 0, %v8900
    %v8902 = vrot.slane %v8897, %v8901
    %v8968 = vunpack.c.l.b16 %v8833
    %v8969 = vunpack.c.l.b16 %v8834
    %v8970 = vunpack.c.l.b16 %v8835
    %v8971 = vunpack.c.l.b16 %v8836
    %v8972 = vunpack.c.l.b16 %v8837
    %v8973 = vunpack.c.l.b16 %v8838
    %v8974 = vunpack.c.l.b16 %v8839
    %v8975 = vunpack.c.l.b16 %v8840
    %v8976 = vunpack.c.l.b16 %v8841
    %v8977 = vunpack.c.l.b16 %v8842
    %v8978 = vunpack.c.l.b16 %v8843
    %v8979 = vunpack.c.l.b16 %v8844
    %v8980 = vunpack.c.l.b16 %v8845
    %v8981 = vunpack.c.l.b16 %v8846
    %v8982 = vunpack.c.l.b16 %v8847
    %v8983 = vunpack.c.l.b16 %v8848
    %v8984 = vunpack.c.l.b16 %v8849
    %v8985 = vunpack.c.l.b16 %v8850
    %v8986 = vunpack.c.l.b16 %v8851
    %v8987 = vunpack.c.l.b16 %v8852
    %v8988 = vunpack.c.l.b16 %v8853
    %v8989 = vunpack.c.l.b16 %v8854
    %v8990 = vunpack.c.l.b16 %v8855
    %v8991 = vunpack.c.l.b16 %v8856
    %v8992 = vunpack.c.l.b16 %v8857
    %v8993 = vunpack.c.l.b16 %v8858
    %v8994 = vunpack.c.l.b16 %v8859
    %v8995 = vunpack.c.l.b16 %v8860
    %v8996 = vunpack.c.l.b16 %v8861
    %v8997 = vunpack.c.l.b16 %v8862
    %v8998 = vunpack.c.l.b16 %v8863
    %v8999 = vunpack.c.l.b16 %v8864
    %v9000 = vunpack.c.l.b16 %v8865
    %v9001 = vunpack.c.l.b16 %v8866
    %v9002 = vunpack.c.l.b16 %v8867
    %v9003 = vunpack.c.l.b16 %v8868
    %v9004 = vunpack.c.l.b16 %v8869
    %v9005 = vunpack.c.l.b16 %v8870
    %v9006 = vunpack.c.l.b16 %v8871
    %v9007 = vunpack.c.l.b16 %v8872
    %v9008 = vunpack.c.l.b16 %v8873
    %v9009 = vunpack.c.l.b16 %v8874
    %v9010 = vunpack.c.l.b16 %v8875
    %v9011 = vunpack.c.l.b16 %v8876
    %v9012 = vunpack.c.l.b16 %v8877
    %v9013 = vunpack.c.l.b16 %v8878
    %v9014 = vunpack.c.l.b16 %v8879
    %v9015 = vunpack.c.l.b16 %v8880
    %v9016 = vunpack.c.l.b16 %v8881
    %v9017 = vunpack.c.l.b16 %v8882
    %v9018 = vunpack.c.l.b16 %v8883
    %v9019 = vunpack.c.l.b16 %v8884
    %v9020 = vunpack.c.l.b16 %v8885
    %v9021 = vunpack.c.l.b16 %v8886
    %v9022 = vunpack.c.l.b16 %v8887
    %v9023 = vunpack.c.l.b16 %v8888
    %v9024 = vunpack.c.l.b16 %v8889
    %v9025 = vunpack.c.l.b16 %v8890
    %v9026 = vunpack.c.l.b16 %v8891
    %v9027 = vunpack.c.l.b16 %v8892
    %v9028 = vunpack.c.l.b16 %v8893
    %v9029 = vunpack.c.l.b16 %v8894
    %v9030 = vunpack.c.l.b16 %v8895
    %v9031 = vunpack.c.l.b16 %v8896
    %v9032 = vpack.c.b16 %v8969, %v8968
    %v9033 = vpack.c.b16 %v8971, %v8970
    %v9034 = vpack.c.b16 %v8973, %v8972
    %v9035 = vpack.c.b16 %v8975, %v8974
    %v9036 = vpack.c.b16 %v8977, %v8976
    %v9037 = vpack.c.b16 %v8979, %v8978
    %v9038 = vpack.c.b16 %v8981, %v8980
    %v9039 = vpack.c.b16 %v8983, %v8982
    %v9040 = vpack.c.b16 %v8985, %v8984
    %v9041 = vpack.c.b16 %v8987, %v8986
    %v9042 = vpack.c.b16 %v8989, %v8988
    %v9043 = vpack.c.b16 %v8991, %v8990
    %v9044 = vpack.c.b16 %v8993, %v8992
    %v9045 = vpack.c.b16 %v8995, %v8994
    %v9046 = vpack.c.b16 %v8997, %v8996
    %v9047 = vpack.c.b16 %v8999, %v8998
    %v9048 = vpack.c.b16 %v9001, %v9000
    %v9049 = vpack.c.b16 %v9003, %v9002
    %v9050 = vpack.c.b16 %v9005, %v9004
    %v9051 = vpack.c.b16 %v9007, %v9006
    %v9052 = vpack.c.b16 %v9009, %v9008
    %v9053 = vpack.c.b16 %v9011, %v9010
    %v9054 = vpack.c.b16 %v9013, %v9012
    %v9055 = vpack.c.b16 %v9015, %v9014
    %v9056 = vpack.c.b16 %v9017, %v9016
    %v9057 = vpack.c.b16 %v9019, %v9018
    %v9058 = vpack.c.b16 %v9021, %v9020
    %v9059 = vpack.c.b16 %v9023, %v9022
    %v9060 = vpack.c.b16 %v9025, %v9024
    %v9061 = vpack.c.b16 %v9027, %v9026
    %v9062 = vpack.c.b16 %v9029, %v9028
    %v9063 = vpack.c.b16 %v9031, %v9030
    %9096 = vmatprep.subr.bf16.mxu0 0
    %9097 = vmatpush1.bf16.msra.mxu0 %v9039
    %9098 = vmatprep.subr.bf16.mxu0 0
    %9099 = vmatpush1.bf16.msra.mxu0 %v9038
    %9100 = vmatprep.subr.bf16.mxu0 0
    %9101 = vmatpush1.bf16.msra.mxu0 %v9037
    %9102 = vmatprep.subr.bf16.mxu0 0
    %9103 = vmatpush1.bf16.msra.mxu0 %v9036
    %9104 = vmatprep.subr.bf16.mxu0 0
    %9105 = vmatpush1.bf16.msra.mxu0 %v9035
    %9106 = vmatprep.subr.bf16.mxu0 0
    %9107 = vmatpush1.bf16.msra.mxu0 %v9034
    %9108 = vmatprep.subr.bf16.mxu0 0
    %9109 = vmatpush1.bf16.msra.mxu0 %v9033
    %9110 = vmatprep.subr.bf16.mxu0 0
    %9111 = vmatpush1.bf16.msra.mxu0 %v9032
    %9112 = vmatprep.subr.bf16.mxu0 0
    %9113 = vmatpush2.bf16.msra.mxu0 %v9047
    %9114 = vmatprep.subr.bf16.mxu0 0
    %9115 = vmatpush2.bf16.msra.mxu0 %v9046
    %9116 = vmatprep.subr.bf16.mxu0 0
    %9117 = vmatpush2.bf16.msra.mxu0 %v9045
    %9118 = vmatprep.subr.bf16.mxu0 0
    %9119 = vmatpush2.bf16.msra.mxu0 %v9044
    %9120 = vmatprep.subr.bf16.mxu0 0
    %9121 = vmatpush2.bf16.msra.mxu0 %v9043
    %9122 = vmatprep.subr.bf16.mxu0 0
    %9123 = vmatpush2.bf16.msra.mxu0 %v9042
    %9124 = vmatprep.subr.bf16.mxu0 0
    %9125 = vmatpush2.bf16.msra.mxu0 %v9041
    %9126 = vmatprep.subr.bf16.mxu0 0
    %9127 = vmatpush2.bf16.msra.mxu0 %v9040
    %9128 = vmatprep.mubr.bf16.mxu0 %v8830
    %9129 = vmatmul.mubr.bf16.gmra.mxu0 %v8829
    %v9130 = vpop.f32.mrf.mxu0
    %v9131 = vadd.f32 %v8902, %v9130
    %v9132 = vpop.f32.mrf.mxu0
    %v9133 = vpop.f32.mrf.mxu0
    %v9134 = vadd.f32 %v8902, %v9133
    %v9135 = vpop.f32.mrf.mxu0
    %9136 = vdwg.mxu0
    %9137 = vmatprep.subr.bf16.mxu0 0
    %9138 = vmatpush1.bf16.msra.mxu0 %v9055
    %9139 = vmatprep.subr.bf16.mxu0 0
    %9140 = vmatpush1.bf16.msra.mxu0 %v9054
    %9141 = vmatprep.subr.bf16.mxu0 0
    %9142 = vmatpush1.bf16.msra.mxu0 %v9053
    %9143 = vmatprep.subr.bf16.mxu0 0
    %9144 = vmatpush1.bf16.msra.mxu0 %v9052
    %9145 = vmatprep.subr.bf16.mxu0 0
    %9146 = vmatpush1.bf16.msra.mxu0 %v9051
    %9147 = vmatprep.subr.bf16.mxu0 0
    %9148 = vmatpush1.bf16.msra.mxu0 %v9050
    %9149 = vmatprep.subr.bf16.mxu0 0
    %9150 = vmatpush1.bf16.msra.mxu0 %v9049
    %9151 = vmatprep.subr.bf16.mxu0 0
    %9152 = vmatpush1.bf16.msra.mxu0 %v9048
    %9153 = vmatprep.subr.bf16.mxu0 0
    %9154 = vmatpush2.bf16.msra.mxu0 %v9063
    %9155 = vmatprep.subr.bf16.mxu0 0
    %9156 = vmatpush2.bf16.msra.mxu0 %v9062
    %9157 = vmatprep.subr.bf16.mxu0 0
    %9158 = vmatpush2.bf16.msra.mxu0 %v9061
    %9159 = vmatprep.subr.bf16.mxu0 0
    %9160 = vmatpush2.bf16.msra.mxu0 %v9060
    %9161 = vmatprep.subr.bf16.mxu0 0
    %9162 = vmatpush2.bf16.msra.mxu0 %v9059
    %9163 = vmatprep.subr.bf16.mxu0 0
    %9164 = vmatpush2.bf16.msra.mxu0 %v9058
    %9165 = vmatprep.subr.bf16.mxu0 0
    %9166 = vmatpush2.bf16.msra.mxu0 %v9057
    %9167 = vmatprep.subr.bf16.mxu0 0
    %9168 = vmatpush2.bf16.msra.mxu0 %v9056
    %9169 = vmatprep.mubr.bf16.mxu0 %v8832
    %9170 = vmatmul.mubr.bf16.gmra.mxu0 %v8831
    %v9171 = vpop.f32.mrf.mxu0
    %v9172 = vadd.f32 %v9131, %v9171
    %v9173 = vpop.f32.mrf.mxu0
    %v9174 = vpop.f32.mrf.mxu0
    %v9175 = vadd.f32 %v9134, %v9174
    %v9176 = vpop.f32.mrf.mxu0
    %9177 = vdwg.mxu0
    %9178 = vst [vmem:[%s11] sm:$0xff] %v9172
    %9179 = vst [vmem:[%s11 + $0x8] sm:$0xff] %v9175
    // Predicated region
    $region86: #{mod4_forward.1} parent=1 // pred_check
      _
    $region87: #{mod4_forward.1} parent=1 // pred_check_branch
      %9181 = sbr.rel (0) target = $region89
    $region88: #{mod4_forward.1} parent=1 // pred_region
      _
    $region89: #{mod4_forward.1} parent=1 // pred_fallthru
      _
    // Predicated region
    $region90: #{mod4_forward.1} parent=1 // pred_check
      _
    $region91: #{mod4_forward.1} parent=1 // pred_check_branch
      %9183 = sbr.rel (0) target = $region93
    $region92: #{mod4_forward.1} parent=1 // pred_region
      _
    $region93: #{mod4_forward.1} parent=1 // pred_fallthru
      _
    %9184 = vsyncpa [#allocation3], 1
    %9185 = vsyncpa [#allocation5], 1
    %9186 = vsyncpa [#allocation8], 1
    %9187 = vsyncpa [#allocation11], 1
    %9188 = vsyncpa [#allocation14], 1
    %9189 = vsyncpa [#allocation17], 1

</llo_original>
